<compile_context>
chip_gen: v5e
topology: v5e:2x2
jax: 0.10.0
libtpu: 0.0.40
codegen_flags: <defaults>
</compile_context>

<pallas_src>
import jax
import jax.numpy as jnp
from jax.experimental import pallas as pl
from jax.experimental.pallas import tpu as pltpu


_WEIGHT_ORDER = ("w_fc1", "b_fc1",
                 "w_r1a", "b_r1a", "w_r1b", "b_r1b",
                 "w_r2a", "b_r2a", "w_r2b", "b_r2b",
                 "w_fc2", "b_fc2")


def _round_up(n, m):
    return ((n + m - 1) // m) * m


def residual_mlp_kernel(x_ref,
                        w_fc1, b_fc1,
                        w_r1a, b_r1a, w_r1b, b_r1b,
                        w_r2a, b_r2a, w_r2b, b_r2b,
                        w_fc2, b_fc2,
                        out_ref):
    """One batch tile: fc1 -> residual block x2 -> fc2.

    Inter-layer activations are f32; each matmul input is cast to the weight dtype
    (bf16) so the MXU runs at bf16 rate with an f32 accumulator. Biases are f32.
    """
    def mm(a_f32, w_ref):
        return jnp.dot(a_f32.astype(w_ref.dtype), w_ref[...],
                       preferred_element_type=jnp.float32)

    x = x_ref[...]  # already in weight dtype (bf16), cast once in the wrapper

    # fc1 (no activation, matching the PyTorch forward)
    h = jnp.dot(x, w_fc1[...], preferred_element_type=jnp.float32) + b_fc1[...]

    # residual block 1
    res = h
    t = jnp.maximum(mm(h, w_r1a) + b_r1a[...], 0.0)
    t = mm(t, w_r1b) + b_r1b[...]
    h = jnp.maximum(t + res, 0.0)

    # residual block 2
    res = h
    t = jnp.maximum(mm(h, w_r2a) + b_r2a[...], 0.0)
    t = mm(t, w_r2b) + b_r2b[...]
    h = jnp.maximum(t + res, 0.0)

    # fc2
    out_ref[...] = mm(h, w_fc2) + b_fc2[...]


def residual_mlp(x, params, *, tb=None, single_buffer_weights=True):
    """x: (B, input_dim) float32. params: (in,out) weights (bf16) and (1,out) biases (f32)."""
    B, input_dim = x.shape
    hidden_dim = params["w_fc1"].shape[1]
    output_dim = params["w_fc2"].shape[1]
    weight_dtype = params["w_fc1"].dtype

    # Batch tile: fill the MXU (>=128 rows when the batch allows); for big batches
    # keep >=2 grid steps so v7x's two TensorCores both get work.
    if tb is None:
        if B >= 512:
            tb = 256
        else:
            tb = min(256, max(8, _round_up(B, 8)))

    B_pad = _round_up(B, tb)
    if B_pad != B:
        x = jnp.pad(x, ((0, B_pad - B), (0, 0)))
    x = x.astype(weight_dtype)  # single cast here instead of per-op inside the kernel

    weight_args = [params[name] for name in _WEIGHT_ORDER]

    def make_call(weight_pipeline_mode):
        def const_spec(shape):
            # Grid-invariant weights / biases: same block at every grid step.
            kwargs = {}
            if weight_pipeline_mode is not None:
                kwargs["pipeline_mode"] = weight_pipeline_mode
            return pl.BlockSpec(shape, lambda i: (0, 0), **kwargs)

        weight_specs = [const_spec(w.shape) for w in weight_args]

        # Explicit VMEM budget: double-buffered activation tiles + weight residency
        # (x1 when single-buffered, x2 otherwise) + f32 intermediates, with 2x
        # headroom; capped at 64 MiB so it is valid on v7x as well as v5e/v6e.
        wbufs = 1 if weight_pipeline_mode is not None else 2
        weight_bytes = sum(int(w.size) * w.dtype.itemsize for w in weight_args) * wbufs
        act_bytes = 2 * tb * input_dim * weight_dtype.itemsize + 2 * tb * output_dim * 4
        interm_bytes = 6 * tb * hidden_dim * 4
        vmem_limit = int(min(64 * 1024 * 1024,
                             max(32 * 1024 * 1024,
                                 2 * (weight_bytes + act_bytes + interm_bytes))))

        grid_spec = pltpu.PrefetchScalarGridSpec(
            num_scalar_prefetch=0,
            grid=(B_pad // tb,),
            in_specs=[pl.BlockSpec((tb, input_dim), lambda i: (i, 0))] + weight_specs,
            out_specs=pl.BlockSpec((tb, output_dim), lambda i: (i, 0)),
        )
        return pl.pallas_call(
            residual_mlp_kernel,
            out_shape=jax.ShapeDtypeStruct((B_pad, output_dim), jnp.float32),
            grid_spec=grid_spec,
            compiler_params=pltpu.CompilerParams(
                dimension_semantics=("parallel",),
                vmem_limit_bytes=vmem_limit),
        )

    if single_buffer_weights:
        try:
            out = make_call(pl.Buffered(1))(x, *weight_args)
        except Exception:
            # Fallback if this JAX version rejects single-buffering via pipeline_mode.
            out = make_call(None)(x, *weight_args)
    else:
        out = make_call(None)(x, *weight_args)

    return out[:B] if B_pad != B else out


def init_params(key, input_dim, hidden_dim, output_dim, *, weight_dtype=jnp.bfloat16):
    """Deterministic PyTorch-style (uniform +/- 1/sqrt(fan_in)) init.

    Weights stored as (in, out) in `weight_dtype` (bf16 for MXU throughput / halved
    VMEM residency); biases stay f32.
    """
    def linear(k, fan_in, fan_out):
        kw, kb = jax.random.split(k)
        bound = 1.0 / jnp.sqrt(jnp.float32(fan_in))
        w = jax.random.uniform(kw, (fan_in, fan_out), jnp.float32, -bound, bound)
        b = jax.random.uniform(kb, (1, fan_out), jnp.float32, -bound, bound)
        return w.astype(weight_dtype), b

    keys = jax.random.split(key, 6)
    params = {}
    params["w_fc1"], params["b_fc1"] = linear(keys[0], input_dim, hidden_dim)
    params["w_r1a"], params["b_r1a"] = linear(keys[1], hidden_dim, hidden_dim)
    params["w_r1b"], params["b_r1b"] = linear(keys[2], hidden_dim, hidden_dim)
    params["w_r2a"], params["b_r2a"] = linear(keys[3], hidden_dim, hidden_dim)
    params["w_r2b"], params["b_r2b"] = linear(keys[4], hidden_dim, hidden_dim)
    params["w_fc2"], params["b_fc2"] = linear(keys[5], hidden_dim, output_dim)
    return params


def residual_mlp_ref(x, p):
    """Pure-JAX reference with the same ops / mixed precision as the kernel.

    Matches the PyTorch forward (fc1 -> 2x residual block -> fc2); weights may be
    bf16, matmuls accumulate in f32.
    """
    def mm(a, w):
        return jnp.dot(a.astype(w.dtype), w, preferred_element_type=jnp.float32)

    h = mm(x, p["w_fc1"]) + p["b_fc1"]
    for a_name, b_name in (("r1a", "r1b"), ("r2a", "r2b")):
        res = h
        t = jnp.maximum(mm(h, p["w_" + a_name]) + p["b_" + a_name], 0.0)
        t = mm(t, p["w_" + b_name]) + p["b_" + b_name]
        h = jnp.maximum(t + res, 0.0)
    return mm(h, p["w_fc2"]) + p["b_fc2"]


if __name__ == "__main__":
    # Lane-aligned dims (multiples of 128) and an MXU-sized batch: tb=256, grid of 2.
    B, input_dim, hidden_dim, output_dim = 512, 128, 256, 128

    key = jax.random.PRNGKey(0)
    kx, kp = jax.random.split(key)
    x = jax.random.normal(kx, (B, input_dim), jnp.float32)
    params = init_params(kp, input_dim, hidden_dim, output_dim)

    out = jax.block_until_ready(residual_mlp(x, params))
    assert out.shape == (B, output_dim)
    assert out.dtype == jnp.float32

    ref = residual_mlp_ref(x, params)
    assert jnp.allclose(out, ref, atol=2e-3, rtol=2e-3), "mismatch vs reference"

    # Non-multiple batch size exercises the internal padding path.
    out_odd = jax.block_until_ready(residual_mlp(x[:37], params))
    assert out_odd.shape == (37, output_dim)
    assert jnp.allclose(out_odd, ref[:37], atol=2e-3, rtol=2e-3), "mismatch (padded batch)"

    print("KERNEL_OK")
</pallas_src>

<mosaic_0001>
module attributes {stable_mosaic.version = 11 : i64} {
  func.func @residual_mlp_kernel(%arg0: i32, %arg1: memref<256x128xbf16, #tpu.memory_space<vmem>>, %arg2: memref<128x256xbf16, #tpu.memory_space<vmem>>, %arg3: memref<1x256xf32, #tpu.memory_space<vmem>>, %arg4: memref<256x256xbf16, #tpu.memory_space<vmem>>, %arg5: memref<1x256xf32, #tpu.memory_space<vmem>>, %arg6: memref<256x256xbf16, #tpu.memory_space<vmem>>, %arg7: memref<1x256xf32, #tpu.memory_space<vmem>>, %arg8: memref<256x256xbf16, #tpu.memory_space<vmem>>, %arg9: memref<1x256xf32, #tpu.memory_space<vmem>>, %arg10: memref<256x256xbf16, #tpu.memory_space<vmem>>, %arg11: memref<1x256xf32, #tpu.memory_space<vmem>>, %arg12: memref<256x128xbf16, #tpu.memory_space<vmem>>, %arg13: memref<1x128xf32, #tpu.memory_space<vmem>>, %arg14: memref<256x128xf32, #tpu.memory_space<vmem>>) attributes {dimension_semantics = [#tpu.dimension_semantics<parallel>], iteration_bounds = array<i64: 2>, scalar_prefetch = 0 : i64, scratch_operands = 0 : i64, tpu.core_type = #tpu.core_type<tc>, window_params = [{transform_indices = @transform_0, window_bounds = array<i64: 256, 128>}, {pipeline_mode = #tpu.pipeline_mode<synchronous>, transform_indices = @transform_1, window_bounds = array<i64: 128, 256>}, {pipeline_mode = #tpu.pipeline_mode<synchronous>, transform_indices = @transform_2, window_bounds = array<i64: 1, 256>}, {pipeline_mode = #tpu.pipeline_mode<synchronous>, transform_indices = @transform_3, window_bounds = array<i64: 256, 256>}, {pipeline_mode = #tpu.pipeline_mode<synchronous>, transform_indices = @transform_4, window_bounds = array<i64: 1, 256>}, {pipeline_mode = #tpu.pipeline_mode<synchronous>, transform_indices = @transform_5, window_bounds = array<i64: 256, 256>}, {pipeline_mode = #tpu.pipeline_mode<synchronous>, transform_indices = @transform_6, window_bounds = array<i64: 1, 256>}, {pipeline_mode = #tpu.pipeline_mode<synchronous>, transform_indices = @transform_7, window_bounds = array<i64: 256, 256>}, {pipeline_mode = #tpu.pipeline_mode<synchronous>, transform_indices = @transform_8, window_bounds = array<i64: 1, 256>}, {pipeline_mode = #tpu.pipeline_mode<synchronous>, transform_indices = @transform_9, window_bounds = array<i64: 256, 256>}, {pipeline_mode = #tpu.pipeline_mode<synchronous>, transform_indices = @transform_10, window_bounds = array<i64: 1, 256>}, {pipeline_mode = #tpu.pipeline_mode<synchronous>, transform_indices = @transform_11, window_bounds = array<i64: 256, 128>}, {pipeline_mode = #tpu.pipeline_mode<synchronous>, transform_indices = @transform_12, window_bounds = array<i64: 1, 128>}, {transform_indices = @transform_13, window_bounds = array<i64: 256, 128>}]} {
    %c0 = arith.constant 0 : index
    %c0_0 = arith.constant 0 : index
    %0 = vector.load %arg1[%c0, %c0_0] : memref<256x128xbf16, #tpu.memory_space<vmem>>, vector<256x128xbf16>
    %c0_1 = arith.constant 0 : index
    %c0_2 = arith.constant 0 : index
    %1 = vector.load %arg2[%c0_1, %c0_2] : memref<128x256xbf16, #tpu.memory_space<vmem>>, vector<128x256xbf16>
    %cst = arith.constant dense<0.000000e+00> : vector<256x256xf32>
    %2 = tpu.matmul %0, %1, %cst {dimension_numbers = #tpu.dot_dimension_numbers<[1], [0], [0], [1], [0, 0, 1, 1], [], []>} : vector<256x128xbf16>, vector<128x256xbf16>, vector<256x256xf32> -> vector<256x256xf32>
    %c0_3 = arith.constant 0 : index
    %c0_4 = arith.constant 0 : index
    %3 = vector.load %arg3[%c0_3, %c0_4] : memref<1x256xf32, #tpu.memory_space<vmem>>, vector<1x256xf32>
    %4 = vector.broadcast %3 : vector<1x256xf32> to vector<256x256xf32>
    %5 = arith.addf %2, %4 : vector<256x256xf32>
    %6 = arith.truncf %5 : vector<256x256xf32> to vector<256x256xbf16>
    %c0_5 = arith.constant 0 : index
    %c0_6 = arith.constant 0 : index
    %7 = vector.load %arg4[%c0_5, %c0_6] : memref<256x256xbf16, #tpu.memory_space<vmem>>, vector<256x256xbf16>
    %cst_7 = arith.constant dense<0.000000e+00> : vector<256x256xf32>
    %8 = tpu.matmul %6, %7, %cst_7 {dimension_numbers = #tpu.dot_dimension_numbers<[1], [0], [0], [1], [0, 0, 1, 1], [], []>} : vector<256x256xbf16>, vector<256x256xbf16>, vector<256x256xf32> -> vector<256x256xf32>
    %c0_8 = arith.constant 0 : index
    %c0_9 = arith.constant 0 : index
    %9 = vector.load %arg5[%c0_8, %c0_9] : memref<1x256xf32, #tpu.memory_space<vmem>>, vector<1x256xf32>
    %10 = vector.broadcast %9 : vector<1x256xf32> to vector<256x256xf32>
    %11 = arith.addf %8, %10 : vector<256x256xf32>
    %cst_10 = arith.constant 0.000000e+00 : f32
    %12 = vector.broadcast %cst_10 : f32 to vector<256x256xf32>
    %13 = arith.maximumf %11, %12 : vector<256x256xf32>
    %14 = arith.truncf %13 : vector<256x256xf32> to vector<256x256xbf16>
    %c0_11 = arith.constant 0 : index
    %c0_12 = arith.constant 0 : index
    %15 = vector.load %arg6[%c0_11, %c0_12] : memref<256x256xbf16, #tpu.memory_space<vmem>>, vector<256x256xbf16>
    %cst_13 = arith.constant dense<0.000000e+00> : vector<256x256xf32>
    %16 = tpu.matmul %14, %15, %cst_13 {dimension_numbers = #tpu.dot_dimension_numbers<[1], [0], [0], [1], [0, 0, 1, 1], [], []>} : vector<256x256xbf16>, vector<256x256xbf16>, vector<256x256xf32> -> vector<256x256xf32>
    %c0_14 = arith.constant 0 : index
    %c0_15 = arith.constant 0 : index
    %17 = vector.load %arg7[%c0_14, %c0_15] : memref<1x256xf32, #tpu.memory_space<vmem>>, vector<1x256xf32>
    %18 = vector.broadcast %17 : vector<1x256xf32> to vector<256x256xf32>
    %19 = arith.addf %16, %18 : vector<256x256xf32>
    %20 = arith.addf %19, %5 : vector<256x256xf32>
    %cst_16 = arith.constant 0.000000e+00 : f32
    %21 = vector.broadcast %cst_16 : f32 to vector<256x256xf32>
    %22 = arith.maximumf %20, %21 : vector<256x256xf32>
    %23 = arith.truncf %22 : vector<256x256xf32> to vector<256x256xbf16>
    %c0_17 = arith.constant 0 : index
    %c0_18 = arith.constant 0 : index
    %24 = vector.load %arg8[%c0_17, %c0_18] : memref<256x256xbf16, #tpu.memory_space<vmem>>, vector<256x256xbf16>
    %cst_19 = arith.constant dense<0.000000e+00> : vector<256x256xf32>
    %25 = tpu.matmul %23, %24, %cst_19 {dimension_numbers = #tpu.dot_dimension_numbers<[1], [0], [0], [1], [0, 0, 1, 1], [], []>} : vector<256x256xbf16>, vector<256x256xbf16>, vector<256x256xf32> -> vector<256x256xf32>
    %c0_20 = arith.constant 0 : index
    %c0_21 = arith.constant 0 : index
    %26 = vector.load %arg9[%c0_20, %c0_21] : memref<1x256xf32, #tpu.memory_space<vmem>>, vector<1x256xf32>
    %27 = vector.broadcast %26 : vector<1x256xf32> to vector<256x256xf32>
    %28 = arith.addf %25, %27 : vector<256x256xf32>
    %cst_22 = arith.constant 0.000000e+00 : f32
    %29 = vector.broadcast %cst_22 : f32 to vector<256x256xf32>
    %30 = arith.maximumf %28, %29 : vector<256x256xf32>
    %31 = arith.truncf %30 : vector<256x256xf32> to vector<256x256xbf16>
    %c0_23 = arith.constant 0 : index
    %c0_24 = arith.constant 0 : index
    %32 = vector.load %arg10[%c0_23, %c0_24] : memref<256x256xbf16, #tpu.memory_space<vmem>>, vector<256x256xbf16>
    %cst_25 = arith.constant dense<0.000000e+00> : vector<256x256xf32>
    %33 = tpu.matmul %31, %32, %cst_25 {dimension_numbers = #tpu.dot_dimension_numbers<[1], [0], [0], [1], [0, 0, 1, 1], [], []>} : vector<256x256xbf16>, vector<256x256xbf16>, vector<256x256xf32> -> vector<256x256xf32>
    %c0_26 = arith.constant 0 : index
    %c0_27 = arith.constant 0 : index
    %34 = vector.load %arg11[%c0_26, %c0_27] : memref<1x256xf32, #tpu.memory_space<vmem>>, vector<1x256xf32>
    %35 = vector.broadcast %34 : vector<1x256xf32> to vector<256x256xf32>
    %36 = arith.addf %33, %35 : vector<256x256xf32>
    %37 = arith.addf %36, %22 : vector<256x256xf32>
    %cst_28 = arith.constant 0.000000e+00 : f32
    %38 = vector.broadcast %cst_28 : f32 to vector<256x256xf32>
    %39 = arith.maximumf %37, %38 : vector<256x256xf32>
    %40 = arith.truncf %39 : vector<256x256xf32> to vector<256x256xbf16>
    %c0_29 = arith.constant 0 : index
    %c0_30 = arith.constant 0 : index
    %41 = vector.load %arg12[%c0_29, %c0_30] : memref<256x128xbf16, #tpu.memory_space<vmem>>, vector<256x128xbf16>
    %cst_31 = arith.constant dense<0.000000e+00> : vector<256x128xf32>
    %42 = tpu.matmul %40, %41, %cst_31 {dimension_numbers = #tpu.dot_dimension_numbers<[1], [0], [0], [1], [0, 0, 1, 1], [], []>} : vector<256x256xbf16>, vector<256x128xbf16>, vector<256x128xf32> -> vector<256x128xf32>
    %c0_32 = arith.constant 0 : index
    %c0_33 = arith.constant 0 : index
    %43 = vector.load %arg13[%c0_32, %c0_33] : memref<1x128xf32, #tpu.memory_space<vmem>>, vector<1x128xf32>
    %44 = vector.broadcast %43 : vector<1x128xf32> to vector<256x128xf32>
    %45 = arith.addf %42, %44 : vector<256x128xf32>
    %c0_34 = arith.constant 0 : index
    %c0_35 = arith.constant 0 : index
    %46 = vector.load %arg14[%c0_34, %c0_35] : memref<256x128xf32, #tpu.memory_space<vmem>>, vector<256x128xf32>
    tpu.vector_store %arg14[%c0_34, %c0_35], %45 {strides = array<i32>} : memref<256x128xf32, #tpu.memory_space<vmem>>, vector<256x128xf32>,
    return
  }
  func.func @transform_0(%arg0: i32) -> (i32, i32) {
    %c0_i32 = arith.constant 0 : i32
    %c0_i32_0 = arith.constant 0 : i32
    return %arg0, %c0_i32 : i32, i32
  }
  func.func @transform_1(%arg0: i32) -> (i32, i32) {
    %c0_i32 = arith.constant 0 : i32
    %c0_i32_0 = arith.constant 0 : i32
    %c0_i32_1 = arith.constant 0 : i32
    return %c0_i32, %c0_i32_0 : i32, i32
  }
  func.func @transform_2(%arg0: i32) -> (i32, i32) {
    %c0_i32 = arith.constant 0 : i32
    %c0_i32_0 = arith.constant 0 : i32
    %c0_i32_1 = arith.constant 0 : i32
    return %c0_i32, %c0_i32_0 : i32, i32
  }
  func.func @transform_3(%arg0: i32) -> (i32, i32) {
    %c0_i32 = arith.constant 0 : i32
    %c0_i32_0 = arith.constant 0 : i32
    %c0_i32_1 = arith.constant 0 : i32
    return %c0_i32, %c0_i32_0 : i32, i32
  }
  func.func @transform_4(%arg0: i32) -> (i32, i32) {
    %c0_i32 = arith.constant 0 : i32
    %c0_i32_0 = arith.constant 0 : i32
    %c0_i32_1 = arith.constant 0 : i32
    return %c0_i32, %c0_i32_0 : i32, i32
  }
  func.func @transform_5(%arg0: i32) -> (i32, i32) {
    %c0_i32 = arith.constant 0 : i32
    %c0_i32_0 = arith.constant 0 : i32
    %c0_i32_1 = arith.constant 0 : i32
    return %c0_i32, %c0_i32_0 : i32, i32
  }
  func.func @transform_6(%arg0: i32) -> (i32, i32) {
    %c0_i32 = arith.constant 0 : i32
    %c0_i32_0 = arith.constant 0 : i32
    %c0_i32_1 = arith.constant 0 : i32
    return %c0_i32, %c0_i32_0 : i32, i32
  }
  func.func @transform_7(%arg0: i32) -> (i32, i32) {
    %c0_i32 = arith.constant 0 : i32
    %c0_i32_0 = arith.constant 0 : i32
    %c0_i32_1 = arith.constant 0 : i32
    return %c0_i32, %c0_i32_0 : i32, i32
  }
  func.func @transform_8(%arg0: i32) -> (i32, i32) {
    %c0_i32 = arith.constant 0 : i32
    %c0_i32_0 = arith.constant 0 : i32
    %c0_i32_1 = arith.constant 0 : i32
    return %c0_i32, %c0_i32_0 : i32, i32
  }
  func.func @transform_9(%arg0: i32) -> (i32, i32) {
    %c0_i32 = arith.constant 0 : i32
    %c0_i32_0 = arith.constant 0 : i32
    %c0_i32_1 = arith.constant 0 : i32
    return %c0_i32, %c0_i32_0 : i32, i32
  }
  func.func @transform_10(%arg0: i32) -> (i32, i32) {
    %c0_i32 = arith.constant 0 : i32
    %c0_i32_0 = arith.constant 0 : i32
    %c0_i32_1 = arith.constant 0 : i32
    return %c0_i32, %c0_i32_0 : i32, i32
  }
  func.func @transform_11(%arg0: i32) -> (i32, i32) {
    %c0_i32 = arith.constant 0 : i32
    %c0_i32_0 = arith.constant 0 : i32
    %c0_i32_1 = arith.constant 0 : i32
    return %c0_i32, %c0_i32_0 : i32, i32
  }
  func.func @transform_12(%arg0: i32) -> (i32, i32) {
    %c0_i32 = arith.constant 0 : i32
    %c0_i32_0 = arith.constant 0 : i32
    %c0_i32_1 = arith.constant 0 : i32
    return %c0_i32, %c0_i32_0 : i32, i32
  }
  func.func @transform_13(%arg0: i32) -> (i32, i32) {
    %c0_i32 = arith.constant 0 : i32
    %c0_i32_0 = arith.constant 0 : i32
    return %arg0, %c0_i32 : i32, i32
  }
}

module attributes {stable_mosaic.version = 11 : i64} {
  func.func @residual_mlp_kernel(%arg0: i32, %arg1: memref<256x128xbf16, #tpu.memory_space<vmem>>, %arg2: memref<128x256xbf16, #tpu.memory_space<vmem>>, %arg3: memref<1x256xf32, #tpu.memory_space<vmem>>, %arg4: memref<256x256xbf16, #tpu.memory_space<vmem>>, %arg5: memref<1x256xf32, #tpu.memory_space<vmem>>, %arg6: memref<256x256xbf16, #tpu.memory_space<vmem>>, %arg7: memref<1x256xf32, #tpu.memory_space<vmem>>, %arg8: memref<256x256xbf16, #tpu.memory_space<vmem>>, %arg9: memref<1x256xf32, #tpu.memory_space<vmem>>, %arg10: memref<256x256xbf16, #tpu.memory_space<vmem>>, %arg11: memref<1x256xf32, #tpu.memory_space<vmem>>, %arg12: memref<256x128xbf16, #tpu.memory_space<vmem>>, %arg13: memref<1x128xf32, #tpu.memory_space<vmem>>, %arg14: memref<256x128xf32, #tpu.memory_space<vmem>>) attributes {dimension_semantics = [#tpu.dimension_semantics<parallel>], iteration_bounds = array<i64: 2>, scalar_prefetch = 0 : i64, scratch_operands = 0 : i64, tpu.core_type = #tpu.core_type<tc>, window_params = [{transform_indices = @transform_0, window_bounds = array<i64: 256, 128>}, {pipeline_mode = #tpu.pipeline_mode<synchronous>, transform_indices = @transform_1, window_bounds = array<i64: 128, 256>}, {pipeline_mode = #tpu.pipeline_mode<synchronous>, transform_indices = @transform_2, window_bounds = array<i64: 1, 256>}, {pipeline_mode = #tpu.pipeline_mode<synchronous>, transform_indices = @transform_3, window_bounds = array<i64: 256, 256>}, {pipeline_mode = #tpu.pipeline_mode<synchronous>, transform_indices = @transform_4, window_bounds = array<i64: 1, 256>}, {pipeline_mode = #tpu.pipeline_mode<synchronous>, transform_indices = @transform_5, window_bounds = array<i64: 256, 256>}, {pipeline_mode = #tpu.pipeline_mode<synchronous>, transform_indices = @transform_6, window_bounds = array<i64: 1, 256>}, {pipeline_mode = #tpu.pipeline_mode<synchronous>, transform_indices = @transform_7, window_bounds = array<i64: 256, 256>}, {pipeline_mode = #tpu.pipeline_mode<synchronous>, transform_indices = @transform_8, window_bounds = array<i64: 1, 256>}, {pipeline_mode = #tpu.pipeline_mode<synchronous>, transform_indices = @transform_9, window_bounds = array<i64: 256, 256>}, {pipeline_mode = #tpu.pipeline_mode<synchronous>, transform_indices = @transform_10, window_bounds = array<i64: 1, 256>}, {pipeline_mode = #tpu.pipeline_mode<synchronous>, transform_indices = @transform_11, window_bounds = array<i64: 256, 128>}, {pipeline_mode = #tpu.pipeline_mode<synchronous>, transform_indices = @transform_12, window_bounds = array<i64: 1, 128>}, {transform_indices = @transform_13, window_bounds = array<i64: 256, 128>}]} {
    %c0 = arith.constant 0 : index
    %c0_0 = arith.constant 0 : index
    %0 = vector.load %arg1[%c0, %c0_0] : memref<256x128xbf16, #tpu.memory_space<vmem>>, vector<256x128xbf16>
    %c0_1 = arith.constant 0 : index
    %c0_2 = arith.constant 0 : index
    %1 = vector.load %arg2[%c0_1, %c0_2] : memref<128x256xbf16, #tpu.memory_space<vmem>>, vector<128x256xbf16>
    %cst = arith.constant dense<0.000000e+00> : vector<256x256xf32>
    %2 = tpu.matmul %0, %1, %cst {dimension_numbers = #tpu.dot_dimension_numbers<[1], [0], [0], [1], [0, 0, 1, 1], [], []>} : vector<256x128xbf16>, vector<128x256xbf16>, vector<256x256xf32> -> vector<256x256xf32>
    %c0_3 = arith.constant 0 : index
    %c0_4 = arith.constant 0 : index
    %3 = vector.load %arg3[%c0_3, %c0_4] : memref<1x256xf32, #tpu.memory_space<vmem>>, vector<1x256xf32>
    %4 = vector.broadcast %3 : vector<1x256xf32> to vector<256x256xf32>
    %5 = arith.addf %2, %4 : vector<256x256xf32>
    %6 = arith.truncf %5 : vector<256x256xf32> to vector<256x256xbf16>
    %c0_5 = arith.constant 0 : index
    %c0_6 = arith.constant 0 : index
    %7 = vector.load %arg4[%c0_5, %c0_6] : memref<256x256xbf16, #tpu.memory_space<vmem>>, vector<256x256xbf16>
    %cst_7 = arith.constant dense<0.000000e+00> : vector<256x256xf32>
    %8 = tpu.matmul %6, %7, %cst_7 {dimension_numbers = #tpu.dot_dimension_numbers<[1], [0], [0], [1], [0, 0, 1, 1], [], []>} : vector<256x256xbf16>, vector<256x256xbf16>, vector<256x256xf32> -> vector<256x256xf32>
    %c0_8 = arith.constant 0 : index
    %c0_9 = arith.constant 0 : index
    %9 = vector.load %arg5[%c0_8, %c0_9] : memref<1x256xf32, #tpu.memory_space<vmem>>, vector<1x256xf32>
    %10 = vector.broadcast %9 : vector<1x256xf32> to vector<256x256xf32>
    %11 = arith.addf %8, %10 : vector<256x256xf32>
    %cst_10 = arith.constant 0.000000e+00 : f32
    %12 = vector.broadcast %cst_10 : f32 to vector<256x256xf32>
    %13 = arith.maximumf %11, %12 : vector<256x256xf32>
    %14 = arith.truncf %13 : vector<256x256xf32> to vector<256x256xbf16>
    %c0_11 = arith.constant 0 : index
    %c0_12 = arith.constant 0 : index
    %15 = vector.load %arg6[%c0_11, %c0_12] : memref<256x256xbf16, #tpu.memory_space<vmem>>, vector<256x256xbf16>
    %cst_13 = arith.constant dense<0.000000e+00> : vector<256x256xf32>
    %16 = tpu.matmul %14, %15, %cst_13 {dimension_numbers = #tpu.dot_dimension_numbers<[1], [0], [0], [1], [0, 0, 1, 1], [], []>} : vector<256x256xbf16>, vector<256x256xbf16>, vector<256x256xf32> -> vector<256x256xf32>
    %c0_14 = arith.constant 0 : index
    %c0_15 = arith.constant 0 : index
    %17 = vector.load %arg7[%c0_14, %c0_15] : memref<1x256xf32, #tpu.memory_space<vmem>>, vector<1x256xf32>
    %18 = vector.broadcast %17 : vector<1x256xf32> to vector<256x256xf32>
    %19 = arith.addf %16, %18 : vector<256x256xf32>
    %20 = arith.addf %19, %5 : vector<256x256xf32>
    %cst_16 = arith.constant 0.000000e+00 : f32
    %21 = vector.broadcast %cst_16 : f32 to vector<256x256xf32>
    %22 = arith.maximumf %20, %21 : vector<256x256xf32>
    %23 = arith.truncf %22 : vector<256x256xf32> to vector<256x256xbf16>
    %c0_17 = arith.constant 0 : index
    %c0_18 = arith.constant 0 : index
    %24 = vector.load %arg8[%c0_17, %c0_18] : memref<256x256xbf16, #tpu.memory_space<vmem>>, vector<256x256xbf16>
    %cst_19 = arith.constant dense<0.000000e+00> : vector<256x256xf32>
    %25 = tpu.matmul %23, %24, %cst_19 {dimension_numbers = #tpu.dot_dimension_numbers<[1], [0], [0], [1], [0, 0, 1, 1], [], []>} : vector<256x256xbf16>, vector<256x256xbf16>, vector<256x256xf32> -> vector<256x256xf32>
    %c0_20 = arith.constant 0 : index
    %c0_21 = arith.constant 0 : index
    %26 = vector.load %arg9[%c0_20, %c0_21] : memref<1x256xf32, #tpu.memory_space<vmem>>, vector<1x256xf32>
    %27 = vector.broadcast %26 : vector<1x256xf32> to vector<256x256xf32>
    %28 = arith.addf %25, %27 : vector<256x256xf32>
    %cst_22 = arith.constant 0.000000e+00 : f32
    %29 = vector.broadcast %cst_22 : f32 to vector<256x256xf32>
    %30 = arith.maximumf %28, %29 : vector<256x256xf32>
    %31 = arith.truncf %30 : vector<256x256xf32> to vector<256x256xbf16>
    %c0_23 = arith.constant 0 : index
    %c0_24 = arith.constant 0 : index
    %32 = vector.load %arg10[%c0_23, %c0_24] : memref<256x256xbf16, #tpu.memory_space<vmem>>, vector<256x256xbf16>
    %cst_25 = arith.constant dense<0.000000e+00> : vector<256x256xf32>
    %33 = tpu.matmul %31, %32, %cst_25 {dimension_numbers = #tpu.dot_dimension_numbers<[1], [0], [0], [1], [0, 0, 1, 1], [], []>} : vector<256x256xbf16>, vector<256x256xbf16>, vector<256x256xf32> -> vector<256x256xf32>
    %c0_26 = arith.constant 0 : index
    %c0_27 = arith.constant 0 : index
    %34 = vector.load %arg11[%c0_26, %c0_27] : memref<1x256xf32, #tpu.memory_space<vmem>>, vector<1x256xf32>
    %35 = vector.broadcast %34 : vector<1x256xf32> to vector<256x256xf32>
    %36 = arith.addf %33, %35 : vector<256x256xf32>
    %37 = arith.addf %36, %22 : vector<256x256xf32>
    %cst_28 = arith.constant 0.000000e+00 : f32
    %38 = vector.broadcast %cst_28 : f32 to vector<256x256xf32>
    %39 = arith.maximumf %37, %38 : vector<256x256xf32>
    %40 = arith.truncf %39 : vector<256x256xf32> to vector<256x256xbf16>
    %c0_29 = arith.constant 0 : index
    %c0_30 = arith.constant 0 : index
    %41 = vector.load %arg12[%c0_29, %c0_30] : memref<256x128xbf16, #tpu.memory_space<vmem>>, vector<256x128xbf16>
    %cst_31 = arith.constant dense<0.000000e+00> : vector<256x128xf32>
    %42 = tpu.matmul %40, %41, %cst_31 {dimension_numbers = #tpu.dot_dimension_numbers<[1], [0], [0], [1], [0, 0, 1, 1], [], []>} : vector<256x256xbf16>, vector<256x128xbf16>, vector<256x128xf32> -> vector<256x128xf32>
    %c0_32 = arith.constant 0 : index
    %c0_33 = arith.constant 0 : index
    %43 = vector.load %arg13[%c0_32, %c0_33] : memref<1x128xf32, #tpu.memory_space<vmem>>, vector<1x128xf32>
    %44 = vector.broadcast %43 : vector<1x128xf32> to vector<256x128xf32>
    %45 = arith.addf %42, %44 : vector<256x128xf32>
    %c0_34 = arith.constant 0 : index
    %c0_35 = arith.constant 0 : index
    %46 = vector.load %arg14[%c0_34, %c0_35] : memref<256x128xf32, #tpu.memory_space<vmem>>, vector<256x128xf32>
    tpu.vector_store %arg14[%c0_34, %c0_35], %45 {strides = array<i32>} : memref<256x128xf32, #tpu.memory_space<vmem>>, vector<256x128xf32>,
    return
  }
  func.func @transform_0(%arg0: i32) -> (i32, i32) {
    %c0_i32 = arith.constant 0 : i32
    %c0_i32_0 = arith.constant 0 : i32
    return %arg0, %c0_i32 : i32, i32
  }
  func.func @transform_1(%arg0: i32) -> (i32, i32) {
    %c0_i32 = arith.constant 0 : i32
    %c0_i32_0 = arith.constant 0 : i32
    %c0_i32_1 = arith.constant 0 : i32
    return %c0_i32, %c0_i32_0 : i32, i32
  }
  func.func @transform_2(%arg0: i32) -> (i32, i32) {
    %c0_i32 = arith.constant 0 : i32
    %c0_i32_0 = arith.constant 0 : i32
    %c0_i32_1 = arith.constant 0 : i32
    return %c0_i32, %c0_i32_0 : i32, i32
  }
  func.func @transform_3(%arg0: i32) -> (i32, i32) {
    %c0_i32 = arith.constant 0 : i32
    %c0_i32_0 = arith.constant 0 : i32
    %c0_i32_1 = arith.constant 0 : i32
    return %c0_i32, %c0_i32_0 : i32, i32
  }
  func.func @transform_4(%arg0: i32) -> (i32, i32) {
    %c0_i32 = arith.constant 0 : i32
    %c0_i32_0 = arith.constant 0 : i32
    %c0_i32_1 = arith.constant 0 : i32
    return %c0_i32, %c0_i32_0 : i32, i32
  }
  func.func @transform_5(%arg0: i32) -> (i32, i32) {
    %c0_i32 = arith.constant 0 : i32
    %c0_i32_0 = arith.constant 0 : i32
    %c0_i32_1 = arith.constant 0 : i32
    return %c0_i32, %c0_i32_0 : i32, i32
  }
  func.func @transform_6(%arg0: i32) -> (i32, i32) {
    %c0_i32 = arith.constant 0 : i32
    %c0_i32_0 = arith.constant 0 : i32
    %c0_i32_1 = arith.constant 0 : i32
    return %c0_i32, %c0_i32_0 : i32, i32
  }
  func.func @transform_7(%arg0: i32) -> (i32, i32) {
    %c0_i32 = arith.constant 0 : i32
    %c0_i32_0 = arith.constant 0 : i32
    %c0_i32_1 = arith.constant 0 : i32
    return %c0_i32, %c0_i32_0 : i32, i32
  }
  func.func @transform_8(%arg0: i32) -> (i32, i32) {
    %c0_i32 = arith.constant 0 : i32
    %c0_i32_0 = arith.constant 0 : i32
    %c0_i32_1 = arith.constant 0 : i32
    return %c0_i32, %c0_i32_0 : i32, i32
  }
  func.func @transform_9(%arg0: i32) -> (i32, i32) {
    %c0_i32 = arith.constant 0 : i32
    %c0_i32_0 = arith.constant 0 : i32
    %c0_i32_1 = arith.constant 0 : i32
    return %c0_i32, %c0_i32_0 : i32, i32
  }
  func.func @transform_10(%arg0: i32) -> (i32, i32) {
    %c0_i32 = arith.constant 0 : i32
    %c0_i32_0 = arith.constant 0 : i32
    %c0_i32_1 = arith.constant 0 : i32
    return %c0_i32, %c0_i32_0 : i32, i32
  }
  func.func @transform_11(%arg0: i32) -> (i32, i32) {
    %c0_i32 = arith.constant 0 : i32
    %c0_i32_0 = arith.constant 0 : i32
    %c0_i32_1 = arith.constant 0 : i32
    return %c0_i32, %c0_i32_0 : i32, i32
  }
  func.func @transform_12(%arg0: i32) -> (i32, i32) {
    %c0_i32 = arith.constant 0 : i32
    %c0_i32_0 = arith.constant 0 : i32
    %c0_i32_1 = arith.constant 0 : i32
    return %c0_i32, %c0_i32_0 : i32, i32
  }
  func.func @transform_13(%arg0: i32) -> (i32, i32) {
    %c0_i32 = arith.constant 0 : i32
    %c0_i32_0 = arith.constant 0 : i32
    return %arg0, %c0_i32 : i32, i32
  }
}

</mosaic_0001>

<llo_original>
// kernel: tpu_custom_call.1
$region0: #{tpu_custom_call.1}
  #allocation0 [shape = 'u32[]', space=smem, size = 0x4, offset = 0x4, fixed_abs, tag = 'smem constant byte address 0x4 - core index']
  #allocation1 [shape = 'u32[72,128]{1,0:T(1,128)}', space=vmem, size = 0x9000, scoped, tag = 'internal scratch']
  %s0 = inlined_call_operand.hbm [shape: bf16[512,128], index: 0, kind: input, shape index: {}]
  %s1 = inlined_call_operand.hbm [shape: bf16[128,256], index: 1, kind: input, shape index: {}]
  %s2 = inlined_call_operand.hbm [shape: f32[1,256], index: 2, kind: input, shape index: {}]
  %s3 = inlined_call_operand.hbm [shape: bf16[256,256], index: 3, kind: input, shape index: {}]
  %s4 = inlined_call_operand.vmem [shape: f32[1,256], index: 4, kind: input, shape index: {}]
  %s5 = inlined_call_operand.hbm [shape: bf16[256,256], index: 5, kind: input, shape index: {}]
  %s6 = inlined_call_operand.vmem [shape: f32[1,256], index: 6, kind: input, shape index: {}]
  %s7 = inlined_call_operand.hbm [shape: bf16[256,256], index: 7, kind: input, shape index: {}]
  %s8 = inlined_call_operand.vmem [shape: f32[1,256], index: 8, kind: input, shape index: {}]
  %s9 = inlined_call_operand.hbm [shape: bf16[256,256], index: 9, kind: input, shape index: {}]
  %s10 = inlined_call_operand.vmem [shape: f32[1,256], index: 10, kind: input, shape index: {}]
  %s11 = inlined_call_operand.hbm [shape: bf16[256,128], index: 11, kind: input, shape index: {}]
  %s12 = inlined_call_operand.vmem [shape: f32[1,128], index: 12, kind: input, shape index: {}]
  %s13 = inlined_call_operand.hbm [shape: f32[512,128], index: 13, kind: output, shape index: {}]
  %s14 = sld [smem:[#allocation0]]
  $region117: #{tpu_custom_call.1} parent=0
    _
  %s16 = ssub.s32 1, %s14
  %s17 = scalar_select 0, %s16, %s14
  $region1: #{tpu_custom_call.1} parent=0
    #allocation2 [shape = 'u8[131072]{0}', space=vmem, size = 0x20000, scoped, tag = 'input window, operand 0']
    #allocation3 [shape = 's32[2]{0}', space=sflag, size = 0x8, scoped, tag = 'scoped memory for tpu_custom_call.1']
    #allocation4 [shape = 's32[2]{0}', space=sflag, size = 0x8, scoped, tag = 'scoped memory for tpu_custom_call.1']
    #allocation5 [shape = 'u8[65536]{0}', space=vmem, size = 0x10000, scoped, tag = 'input window, operand 1, single buffered']
    #allocation6 [shape = 's32[1]{0}', space=sflag, size = 0x4, scoped, tag = 'scoped memory for tpu_custom_call.1']
    #allocation7 [shape = 'u8[1024]{0}', space=vmem, size = 0x400, scoped, tag = 'input window, operand 2, single buffered']
    #allocation8 [shape = 'u8[131072]{0}', space=vmem, size = 0x20000, scoped, tag = 'input window, operand 3, single buffered']
    #allocation9 [shape = 's32[1]{0}', space=sflag, size = 0x4, scoped, tag = 'scoped memory for tpu_custom_call.1']
    #allocation10 [shape = 'u8[131072]{0}', space=vmem, size = 0x20000, scoped, tag = 'input window, operand 5, single buffered']
    #allocation11 [shape = 'u8[131072]{0}', space=vmem, size = 0x20000, scoped, tag = 'input window, operand 7, single buffered']
    #allocation12 [shape = 's32[1]{0}', space=sflag, size = 0x4, scoped, tag = 'scoped memory for tpu_custom_call.1']
    #allocation13 [shape = 'u8[131072]{0}', space=vmem, size = 0x20000, scoped, tag = 'input window, operand 9, single buffered']
    #allocation14 [shape = 'u8[65536]{0}', space=vmem, size = 0x10000, scoped, tag = 'input window, operand 11, single buffered']
    #allocation15 [shape = 's32[1]{0}', space=sflag, size = 0x4, scoped, tag = 'scoped memory for tpu_custom_call.1']
    #allocation16 [shape = 'u8[262144]{0}', space=vmem, size = 0x40000, scoped, tag = 'output window, operand 0']
    %18 = vsyncpa [#allocation3], 0
    %s19 = scalar_lea.sflag [#allocation3], 1
    %20 = vsyncpa %s19, 0
    %21 = vsyncpa [#allocation6], 0
    %22 = vsyncpa [#allocation9], 0
    %23 = vsyncpa [#allocation12], 0
    %24 = vsyncpa [#allocation15], 0
    %25 = vsyncpa [#allocation4], 0
    %s26 = scalar_lea.sflag [#allocation4], 1
    %27 = vsyncpa %s26, 0
    loop: start=0, step=1, limit=4
    $region2: #{tpu_custom_call.1} parent=1 // loop_pre_header
      _
    $region3: #{tpu_custom_call.1} parent=1 // loop_header
      %s29 = sphi 0, %s33
      %p30 = scmp.ge.s32.totalorder %s29, 4
      %s39 = sphi 0, %s41
      %s42 = sphi 0, %s39
      %s43 = sphi 0, %s42
      %s59 = sphi 0, %s43
      %s63 = sphi 0, %s63
      %s65 = sphi 0, %s63
      %s66 = sphi 0, %s65
      %s80 = sphi 0, %s66
      %s84 = sphi 0, %s84
      %s86 = sphi 0, %s84
      %s87 = sphi 0, %s86
      %s101 = sphi 0, %s87
      %s105 = sphi 0, %s105
      %s107 = sphi 0, %s105
      %s108 = sphi 0, %s107
      %s122 = sphi 0, %s108
      %s126 = sphi 0, %s126
      %s128 = sphi 0, %s126
      %s129 = sphi 0, %s128
      %s143 = sphi 0, %s129
      %s147 = sphi 0, %s147
      %s149 = sphi 0, %s147
      %s150 = sphi 0, %s149
      %s164 = sphi 0, %s150
      %s168 = sphi 0, %s168
      %s170 = sphi 0, %s168
      %s171 = sphi 0, %s170
      %s185 = sphi 0, %s171
      %s189 = sphi 0, %s189
      %s191 = sphi 0, %s189
      %s192 = sphi 0, %s191
      %s206 = sphi 0, %s192
      %s210 = sphi 0, %s210
      %s212 = sphi 0, %s210
      %s213 = sphi 0, %s212
      %s227 = sphi 0, %s213
      %s231 = sphi 0, %s231
      %s233 = sphi 0, %s231
      %s234 = sphi 0, %s233
      %s248 = sphi 0, %s234
      %s252 = sphi 0, %s252
      %s254 = sphi 0, %s252
      %s255 = sphi 0, %s254
      %s269 = sphi 0, %s255
      %s273 = sphi 0, %s273
      %s275 = sphi 0, %s273
      %s276 = sphi 0, %s275
      %s290 = sphi 0, %s276
      %s294 = sphi 0, %s294
      %s296 = sphi 0, %s294
      %s297 = sphi 0, %s296
      %s311 = sphi 0, %s297
      %s317 = sphi 0, %s319
      %s320 = sphi 0, %s317
      %s321 = sphi 0, %s320
      %s337 = sphi 0, %s321
    $region4: #{tpu_custom_call.1} parent=1 // loop_header_branch
      %32 = sbr.rel (%p30) target = $region8
    $region5: #{tpu_custom_call.1} parent=1 // loop_body
      %s34 = ssub.s32 %s29, 1
      %s35 = ssub.s32 %s29, 2
      %s36 = sadd.s32 %s29, 1
      %s37 = ssub.s32 %s29, %s36
      %p38 = scmp.eq.s32.totalorder %s37, 0
      %s40 = sadd.s32 %s39, 1
      %s41 = scalar_select %p38, %s39, %s40
      %p44 = pneg %p38
      %p45 = scmp.eq.s32.totalorder %s29, 1
      %p46 = por %p44, %p45
      %p47 = scmp.ne.s32.totalorder %s39, %s42
      %p48 = scmp.eq.s32.totalorder %s29, 0
      %p49 = por %p47, %p48
      %p50 = scmp.ne.s32.totalorder %s39, %s42
      %p51 = scmp.eq.s32.totalorder %s34, 1
      %p52 = por %p50, %p51
      %p53 = scmp.ne.s32.totalorder %s42, %s43
      %p54 = scmp.eq.s32.totalorder %s34, 0
      %p55 = por %p53, %p54
      %p56 = scmp.ne.s32.totalorder %s42, %s43
      %p57 = scmp.eq.s32.totalorder %s35, 1
      %p58 = por %p56, %p57
      %p60 = scmp.ne.s32.totalorder %s43, %s59
      %p61 = scmp.eq.s32.totalorder %s35, 0
      %p62 = por %p60, %p61
      %s64 = sadd.s32 %s63, 1
      %p67 = scmp.eq.s32.totalorder %s29, 1
      %p68 = scmp.ne.s32.totalorder %s63, %s65
      %p69 = scmp.eq.s32.totalorder %s29, 0
      %p70 = por %p68, %p69
      %p71 = scmp.ne.s32.totalorder %s63, %s65
      %p72 = scmp.eq.s32.totalorder %s34, 1
      %p73 = por %p71, %p72
      %p74 = scmp.ne.s32.totalorder %s65, %s66
      %p75 = scmp.eq.s32.totalorder %s34, 0
      %p76 = por %p74, %p75
      %p77 = scmp.ne.s32.totalorder %s65, %s66
      %p78 = scmp.eq.s32.totalorder %s35, 1
      %p79 = por %p77, %p78
      %p81 = scmp.ne.s32.totalorder %s66, %s80
      %p82 = scmp.eq.s32.totalorder %s35, 0
      %p83 = por %p81, %p82
      %s85 = sadd.s32 %s84, 1
      %p88 = scmp.eq.s32.totalorder %s29, 1
      %p89 = scmp.ne.s32.totalorder %s84, %s86
      %p90 = scmp.eq.s32.totalorder %s29, 0
      %p91 = por %p89, %p90
      %p92 = scmp.ne.s32.totalorder %s84, %s86
      %p93 = scmp.eq.s32.totalorder %s34, 1
      %p94 = por %p92, %p93
      %p95 = scmp.ne.s32.totalorder %s86, %s87
      %p96 = scmp.eq.s32.totalorder %s34, 0
      %p97 = por %p95, %p96
      %p98 = scmp.ne.s32.totalorder %s86, %s87
      %p99 = scmp.eq.s32.totalorder %s35, 1
      %p100 = por %p98, %p99
      %p102 = scmp.ne.s32.totalorder %s87, %s101
      %p103 = scmp.eq.s32.totalorder %s35, 0
      %p104 = por %p102, %p103
      %s106 = sadd.s32 %s105, 1
      %p109 = scmp.eq.s32.totalorder %s29, 1
      %p110 = scmp.ne.s32.totalorder %s105, %s107
      %p111 = scmp.eq.s32.totalorder %s29, 0
      %p112 = por %p110, %p111
      %p113 = scmp.ne.s32.totalorder %s105, %s107
      %p114 = scmp.eq.s32.totalorder %s34, 1
      %p115 = por %p113, %p114
      %p116 = scmp.ne.s32.totalorder %s107, %s108
      %p117 = scmp.eq.s32.totalorder %s34, 0
      %p118 = por %p116, %p117
      %p119 = scmp.ne.s32.totalorder %s107, %s108
      %p120 = scmp.eq.s32.totalorder %s35, 1
      %p121 = por %p119, %p120
      %p123 = scmp.ne.s32.totalorder %s108, %s122
      %p124 = scmp.eq.s32.totalorder %s35, 0
      %p125 = por %p123, %p124
      %s127 = sadd.s32 %s126, 1
      %p130 = scmp.eq.s32.totalorder %s29, 1
      %p131 = scmp.ne.s32.totalorder %s126, %s128
      %p132 = scmp.eq.s32.totalorder %s29, 0
      %p133 = por %p131, %p132
      %p134 = scmp.ne.s32.totalorder %s126, %s128
      %p135 = scmp.eq.s32.totalorder %s34, 1
      %p136 = por %p134, %p135
      %p137 = scmp.ne.s32.totalorder %s128, %s129
      %p138 = scmp.eq.s32.totalorder %s34, 0
      %p139 = por %p137, %p138
      %p140 = scmp.ne.s32.totalorder %s128, %s129
      %p141 = scmp.eq.s32.totalorder %s35, 1
      %p142 = por %p140, %p141
      %p144 = scmp.ne.s32.totalorder %s129, %s143
      %p145 = scmp.eq.s32.totalorder %s35, 0
      %p146 = por %p144, %p145
      %s148 = sadd.s32 %s147, 1
      %p151 = scmp.eq.s32.totalorder %s29, 1
      %p152 = scmp.ne.s32.totalorder %s147, %s149
      %p153 = scmp.eq.s32.totalorder %s29, 0
      %p154 = por %p152, %p153
      %p155 = scmp.ne.s32.totalorder %s147, %s149
      %p156 = scmp.eq.s32.totalorder %s34, 1
      %p157 = por %p155, %p156
      %p158 = scmp.ne.s32.totalorder %s149, %s150
      %p159 = scmp.eq.s32.totalorder %s34, 0
      %p160 = por %p158, %p159
      %p161 = scmp.ne.s32.totalorder %s149, %s150
      %p162 = scmp.eq.s32.totalorder %s35, 1
      %p163 = por %p161, %p162
      %p165 = scmp.ne.s32.totalorder %s150, %s164
      %p166 = scmp.eq.s32.totalorder %s35, 0
      %p167 = por %p165, %p166
      %s169 = sadd.s32 %s168, 1
      %p172 = scmp.eq.s32.totalorder %s29, 1
      %p173 = scmp.ne.s32.totalorder %s168, %s170
      %p174 = scmp.eq.s32.totalorder %s29, 0
      %p175 = por %p173, %p174
      %p176 = scmp.ne.s32.totalorder %s168, %s170
      %p177 = scmp.eq.s32.totalorder %s34, 1
      %p178 = por %p176, %p177
      %p179 = scmp.ne.s32.totalorder %s170, %s171
      %p180 = scmp.eq.s32.totalorder %s34, 0
      %p181 = por %p179, %p180
      %p182 = scmp.ne.s32.totalorder %s170, %s171
      %p183 = scmp.eq.s32.totalorder %s35, 1
      %p184 = por %p182, %p183
      %p186 = scmp.ne.s32.totalorder %s171, %s185
      %p187 = scmp.eq.s32.totalorder %s35, 0
      %p188 = por %p186, %p187
      %s190 = sadd.s32 %s189, 1
      %p193 = scmp.eq.s32.totalorder %s29, 1
      %p194 = scmp.ne.s32.totalorder %s189, %s191
      %p195 = scmp.eq.s32.totalorder %s29, 0
      %p196 = por %p194, %p195
      %p197 = scmp.ne.s32.totalorder %s189, %s191
      %p198 = scmp.eq.s32.totalorder %s34, 1
      %p199 = por %p197, %p198
      %p200 = scmp.ne.s32.totalorder %s191, %s192
      %p201 = scmp.eq.s32.totalorder %s34, 0
      %p202 = por %p200, %p201
      %p203 = scmp.ne.s32.totalorder %s191, %s192
      %p204 = scmp.eq.s32.totalorder %s35, 1
      %p205 = por %p203, %p204
      %p207 = scmp.ne.s32.totalorder %s192, %s206
      %p208 = scmp.eq.s32.totalorder %s35, 0
      %p209 = por %p207, %p208
      %s211 = sadd.s32 %s210, 1
      %p214 = scmp.eq.s32.totalorder %s29, 1
      %p215 = scmp.ne.s32.totalorder %s210, %s212
      %p216 = scmp.eq.s32.totalorder %s29, 0
      %p217 = por %p215, %p216
      %p218 = scmp.ne.s32.totalorder %s210, %s212
      %p219 = scmp.eq.s32.totalorder %s34, 1
      %p220 = por %p218, %p219
      %p221 = scmp.ne.s32.totalorder %s212, %s213
      %p222 = scmp.eq.s32.totalorder %s34, 0
      %p223 = por %p221, %p222
      %p224 = scmp.ne.s32.totalorder %s212, %s213
      %p225 = scmp.eq.s32.totalorder %s35, 1
      %p226 = por %p224, %p225
      %p228 = scmp.ne.s32.totalorder %s213, %s227
      %p229 = scmp.eq.s32.totalorder %s35, 0
      %p230 = por %p228, %p229
      %s232 = sadd.s32 %s231, 1
      %p235 = scmp.eq.s32.totalorder %s29, 1
      %p236 = scmp.ne.s32.totalorder %s231, %s233
      %p237 = scmp.eq.s32.totalorder %s29, 0
      %p238 = por %p236, %p237
      %p239 = scmp.ne.s32.totalorder %s231, %s233
      %p240 = scmp.eq.s32.totalorder %s34, 1
      %p241 = por %p239, %p240
      %p242 = scmp.ne.s32.totalorder %s233, %s234
      %p243 = scmp.eq.s32.totalorder %s34, 0
      %p244 = por %p242, %p243
      %p245 = scmp.ne.s32.totalorder %s233, %s234
      %p246 = scmp.eq.s32.totalorder %s35, 1
      %p247 = por %p245, %p246
      %p249 = scmp.ne.s32.totalorder %s234, %s248
      %p250 = scmp.eq.s32.totalorder %s35, 0
      %p251 = por %p249, %p250
      %s253 = sadd.s32 %s252, 1
      %p256 = scmp.eq.s32.totalorder %s29, 1
      %p257 = scmp.ne.s32.totalorder %s252, %s254
      %p258 = scmp.eq.s32.totalorder %s29, 0
      %p259 = por %p257, %p258
      %p260 = scmp.ne.s32.totalorder %s252, %s254
      %p261 = scmp.eq.s32.totalorder %s34, 1
      %p262 = por %p260, %p261
      %p263 = scmp.ne.s32.totalorder %s254, %s255
      %p264 = scmp.eq.s32.totalorder %s34, 0
      %p265 = por %p263, %p264
      %p266 = scmp.ne.s32.totalorder %s254, %s255
      %p267 = scmp.eq.s32.totalorder %s35, 1
      %p268 = por %p266, %p267
      %p270 = scmp.ne.s32.totalorder %s255, %s269
      %p271 = scmp.eq.s32.totalorder %s35, 0
      %p272 = por %p270, %p271
      %s274 = sadd.s32 %s273, 1
      %p277 = scmp.eq.s32.totalorder %s29, 1
      %p278 = scmp.ne.s32.totalorder %s273, %s275
      %p279 = scmp.eq.s32.totalorder %s29, 0
      %p280 = por %p278, %p279
      %p281 = scmp.ne.s32.totalorder %s273, %s275
      %p282 = scmp.eq.s32.totalorder %s34, 1
      %p283 = por %p281, %p282
      %p284 = scmp.ne.s32.totalorder %s275, %s276
      %p285 = scmp.eq.s32.totalorder %s34, 0
      %p286 = por %p284, %p285
      %p287 = scmp.ne.s32.totalorder %s275, %s276
      %p288 = scmp.eq.s32.totalorder %s35, 1
      %p289 = por %p287, %p288
      %p291 = scmp.ne.s32.totalorder %s276, %s290
      %p292 = scmp.eq.s32.totalorder %s35, 0
      %p293 = por %p291, %p292
      %s295 = sadd.s32 %s294, 1
      %p298 = scmp.eq.s32.totalorder %s29, 1
      %p299 = scmp.ne.s32.totalorder %s294, %s296
      %p300 = scmp.eq.s32.totalorder %s29, 0
      %p301 = por %p299, %p300
      %p302 = scmp.ne.s32.totalorder %s294, %s296
      %p303 = scmp.eq.s32.totalorder %s34, 1
      %p304 = por %p302, %p303
      %p305 = scmp.ne.s32.totalorder %s296, %s297
      %p306 = scmp.eq.s32.totalorder %s34, 0
      %p307 = por %p305, %p306
      %p308 = scmp.ne.s32.totalorder %s296, %s297
      %p309 = scmp.eq.s32.totalorder %s35, 1
      %p310 = por %p308, %p309
      %p312 = scmp.ne.s32.totalorder %s297, %s311
      %p313 = scmp.eq.s32.totalorder %s35, 0
      %p314 = por %p312, %p313
      %s315 = ssub.s32 %s29, %s36
      %p316 = scmp.eq.s32.totalorder %s315, 0
      %s318 = sadd.s32 %s317, 1
      %s319 = scalar_select %p316, %s317, %s318
      %p322 = pneg %p316
      %p323 = scmp.eq.s32.totalorder %s29, 1
      %p324 = por %p322, %p323
      %p325 = scmp.ne.s32.totalorder %s317, %s320
      %p326 = scmp.eq.s32.totalorder %s29, 0
      %p327 = por %p325, %p326
      %p328 = scmp.ne.s32.totalorder %s317, %s320
      %p329 = scmp.eq.s32.totalorder %s34, 1
      %p330 = por %p328, %p329
      %p331 = scmp.ne.s32.totalorder %s320, %s321
      %p332 = scmp.eq.s32.totalorder %s34, 0
      %p333 = por %p331, %p332
      %p334 = scmp.ne.s32.totalorder %s320, %s321
      %p335 = scmp.eq.s32.totalorder %s35, 1
      %p336 = por %p334, %p335
      %p338 = scmp.ne.s32.totalorder %s321, %s337
      %p339 = scmp.eq.s32.totalorder %s35, 0
      %p340 = por %p338, %p339
      %p341 = scmp.le.s32.totalorder 1, %s29
      %p342 = scmp.lt.s32.totalorder %s29, 3
      %p343 = pnand %p341, %p342
      %p344 = pneg %p343
      // Predicated region
      $region9: #{tpu_custom_call.1} parent=5 // pred_check
        _
      $region10: #{tpu_custom_call.1} parent=5 // pred_check_branch
        %346 = sbr.rel (%p343) target = $region12
      $region11: #{tpu_custom_call.1} parent=5 // pred_region
        %s347 = ssub.s32 %s29, 1
        // Predicated region
        $region13: #{tpu_custom_call.1} parent=11 // pred_check
          %p348 = pneg %p76
        $region14: #{tpu_custom_call.1} parent=11 // pred_check_branch
          %350 = sbr.rel (%p348) target = $region16
        $region15: #{tpu_custom_call.1} parent=11 // pred_region
          %352 = vsyncadd [#allocation6], 0
          %s353 = sshll.u32 %s1, 4
          %s354 = int_to_ptr.hbm [resolvable:$true] %s353
          %s355 = sshll.u32 [#allocation5], 4
          %s356 = int_to_ptr.vmem [resolvable:$true] %s355
          %361 = dma.hbm_to_vmem [thread:$0]  %s354, 2048, %s356, [#allocation6], 128, 128, 8
        $region16: #{tpu_custom_call.1} parent=11 // pred_fallthru
          _
        // Predicated region
        $region17: #{tpu_custom_call.1} parent=11 // pred_check
          %p362 = pneg %p97
        $region18: #{tpu_custom_call.1} parent=11 // pred_check_branch
          %364 = sbr.rel (%p362) target = $region20
        $region19: #{tpu_custom_call.1} parent=11 // pred_region
          %366 = vsyncadd [#allocation6], 0
          %s368 = sshll.u32 %s2, 4
          %s369 = int_to_ptr.hbm [resolvable:$true] %s368
          %s370 = sshll.u32 [#allocation7], 4
          %s371 = int_to_ptr.vmem [resolvable:$true] %s370
          %373 = dma.hbm_to_vmem [thread:$0]  %s369, 32, %s371, [#allocation6]
        $region20: #{tpu_custom_call.1} parent=11 // pred_fallthru
          _
        // Predicated region
        $region21: #{tpu_custom_call.1} parent=11 // pred_check
          %p374 = pneg %p118
        $region22: #{tpu_custom_call.1} parent=11 // pred_check_branch
          %376 = sbr.rel (%p374) target = $region24
        $region23: #{tpu_custom_call.1} parent=11 // pred_region
          %378 = vsyncadd [#allocation9], 0
          %s379 = sshll.u32 %s3, 4
          %s380 = int_to_ptr.hbm [resolvable:$true] %s379
          %s381 = sshll.u32 [#allocation8], 4
          %s382 = int_to_ptr.vmem [resolvable:$true] %s381
          %387 = dma.hbm_to_vmem [thread:$0]  %s380, 4096, %s382, [#allocation9], 128, 128, 8
        $region24: #{tpu_custom_call.1} parent=11 // pred_fallthru
          _
        // Predicated region
        $region25: #{tpu_custom_call.1} parent=11 // pred_check
          %p388 = pneg %p139
        $region26: #{tpu_custom_call.1} parent=11 // pred_check_branch
          %390 = sbr.rel (%p388) target = $region28
        $region27: #{tpu_custom_call.1} parent=11 // pred_region
          _
        $region28: #{tpu_custom_call.1} parent=11 // pred_fallthru
          _
        // Predicated region
        $region29: #{tpu_custom_call.1} parent=11 // pred_check
          %p391 = pneg %p160
        $region30: #{tpu_custom_call.1} parent=11 // pred_check_branch
          %393 = sbr.rel (%p391) target = $region32
        $region31: #{tpu_custom_call.1} parent=11 // pred_region
          %395 = vsyncadd [#allocation9], 0
          %s396 = sshll.u32 %s5, 4
          %s397 = int_to_ptr.hbm [resolvable:$true] %s396
          %s398 = sshll.u32 [#allocation10], 4
          %s399 = int_to_ptr.vmem [resolvable:$true] %s398
          %404 = dma.hbm_to_vmem [thread:$0]  %s397, 4096, %s399, [#allocation9], 128, 128, 8
        $region32: #{tpu_custom_call.1} parent=11 // pred_fallthru
          _
        // Predicated region
        $region33: #{tpu_custom_call.1} parent=11 // pred_check
          %p405 = pneg %p181
        $region34: #{tpu_custom_call.1} parent=11 // pred_check_branch
          %407 = sbr.rel (%p405) target = $region36
        $region35: #{tpu_custom_call.1} parent=11 // pred_region
          _
        $region36: #{tpu_custom_call.1} parent=11 // pred_fallthru
          _
        // Predicated region
        $region37: #{tpu_custom_call.1} parent=11 // pred_check
          %p408 = pneg %p202
        $region38: #{tpu_custom_call.1} parent=11 // pred_check_branch
          %410 = sbr.rel (%p408) target = $region40
        $region39: #{tpu_custom_call.1} parent=11 // pred_region
          %412 = vsyncadd [#allocation12], 0
          %s413 = sshll.u32 %s7, 4
          %s414 = int_to_ptr.hbm [resolvable:$true] %s413
          %s415 = sshll.u32 [#allocation11], 4
          %s416 = int_to_ptr.vmem [resolvable:$true] %s415
          %421 = dma.hbm_to_vmem [thread:$0]  %s414, 4096, %s416, [#allocation12], 128, 128, 8
        $region40: #{tpu_custom_call.1} parent=11 // pred_fallthru
          _
        // Predicated region
        $region41: #{tpu_custom_call.1} parent=11 // pred_check
          %p422 = pneg %p223
        $region42: #{tpu_custom_call.1} parent=11 // pred_check_branch
          %424 = sbr.rel (%p422) target = $region44
        $region43: #{tpu_custom_call.1} parent=11 // pred_region
          _
        $region44: #{tpu_custom_call.1} parent=11 // pred_fallthru
          _
        // Predicated region
        $region45: #{tpu_custom_call.1} parent=11 // pred_check
          %p425 = pneg %p244
        $region46: #{tpu_custom_call.1} parent=11 // pred_check_branch
          %427 = sbr.rel (%p425) target = $region48
        $region47: #{tpu_custom_call.1} parent=11 // pred_region
          %429 = vsyncadd [#allocation12], 0
          %s430 = sshll.u32 %s9, 4
          %s431 = int_to_ptr.hbm [resolvable:$true] %s430
          %s432 = sshll.u32 [#allocation13], 4
          %s433 = int_to_ptr.vmem [resolvable:$true] %s432
          %438 = dma.hbm_to_vmem [thread:$0]  %s431, 4096, %s433, [#allocation12], 128, 128, 8
        $region48: #{tpu_custom_call.1} parent=11 // pred_fallthru
          _
        // Predicated region
        $region49: #{tpu_custom_call.1} parent=11 // pred_check
          %p439 = pneg %p265
        $region50: #{tpu_custom_call.1} parent=11 // pred_check_branch
          %441 = sbr.rel (%p439) target = $region52
        $region51: #{tpu_custom_call.1} parent=11 // pred_region
          _
        $region52: #{tpu_custom_call.1} parent=11 // pred_fallthru
          _
        // Predicated region
        $region53: #{tpu_custom_call.1} parent=11 // pred_check
          %p442 = pneg %p286
        $region54: #{tpu_custom_call.1} parent=11 // pred_check_branch
          %444 = sbr.rel (%p442) target = $region56
        $region55: #{tpu_custom_call.1} parent=11 // pred_region
          %446 = vsyncadd [#allocation15], 0
          %s447 = sshll.u32 %s11, 4
          %s448 = int_to_ptr.hbm [resolvable:$true] %s447
          %s449 = sshll.u32 [#allocation14], 4
          %s450 = int_to_ptr.vmem [resolvable:$true] %s449
          %455 = dma.hbm_to_vmem [thread:$0]  %s448, 2048, %s450, [#allocation15], 64, 64, 4
        $region56: #{tpu_custom_call.1} parent=11 // pred_fallthru
          _
        // Predicated region
        $region57: #{tpu_custom_call.1} parent=11 // pred_check
          %p456 = pneg %p307
        $region58: #{tpu_custom_call.1} parent=11 // pred_check_branch
          %458 = sbr.rel (%p456) target = $region60
        $region59: #{tpu_custom_call.1} parent=11 // pred_region
          _
        $region60: #{tpu_custom_call.1} parent=11 // pred_fallthru
          _
      $region12: #{tpu_custom_call.1} parent=5 // pred_fallthru
        _
      %p459 = scmp.lt.s32.totalorder %s29, 2
      // Predicated region
      $region61: #{tpu_custom_call.1} parent=5 // pred_check
        %p460 = pneg %p459
      $region62: #{tpu_custom_call.1} parent=5 // pred_check_branch
        %462 = sbr.rel (%p460) target = $region64
      $region63: #{tpu_custom_call.1} parent=5 // pred_region
        // Predicated region
        $region65: #{tpu_custom_call.1} parent=63 // pred_check
          %p463 = pneg %p49
        $region66: #{tpu_custom_call.1} parent=63 // pred_check_branch
          %465 = sbr.rel (%p463) target = $region68
        $region67: #{tpu_custom_call.1} parent=63 // pred_region
          %s466 = sand.u32 %s39, 1
          %s467 = scalar_lea.sflag [#allocation3], %s466
          %s468 = sand.u32 %s39, 1
          %s469 = smul.addr %s468, 128
          %s470 = scalar_lea.vmem [#allocation2], %s469
          %s471 = smul.u32 32, %s29
          %473 = vsyncadd %s467, 0
          %s474 = smul.addr %s471, 4
          %s475 = scalar_lea.hbm %s0, %s474
          %s476 = sshll.u32 %s475, 4
          %s477 = int_to_ptr.hbm [resolvable:$true] %s476
          %s478 = sshll.u32 %s470, 4
          %s479 = int_to_ptr.vmem [resolvable:$true] %s478
          %484 = dma.hbm_to_vmem [thread:$0]  %s477, 2048, %s479, %s467, 64, 64, 4
        $region68: #{tpu_custom_call.1} parent=63 // pred_fallthru
          _
      $region64: #{tpu_custom_call.1} parent=5 // pred_fallthru
        _
      %p485 = scmp.le.s32.totalorder 1, %s29
      %p486 = scmp.lt.s32.totalorder %s29, 3
      %p487 = pnand %p485, %p486
      %p488 = pneg %p487
      // Predicated region
      $region69: #{tpu_custom_call.1} parent=5 // pred_check
        _
      $region70: #{tpu_custom_call.1} parent=5 // pred_check_branch
        %490 = sbr.rel (%p487) target = $region72
      $region71: #{tpu_custom_call.1} parent=5 // pred_region
        %s491 = ssub.s32 %s29, 1
        %s492 = sand.u32 %s42, 1
        %s493 = scalar_lea.sflag [#allocation3], %s492
        %s494 = sand.u32 %s42, 1
        %s495 = smul.addr %s494, 128
        %s496 = scalar_lea.vmem [#allocation2], %s495
        // Predicated region
        $region73: #{tpu_custom_call.1} parent=71 // pred_check
          %p497 = pneg %p55
        $region74: #{tpu_custom_call.1} parent=71 // pred_check_branch
          %499 = sbr.rel (%p497) target = $region76
        $region75: #{tpu_custom_call.1} parent=71 // pred_region
          %501 = dma.done %s493, 2048
        $region76: #{tpu_custom_call.1} parent=71 // pred_fallthru
          _
        // Predicated region
        $region77: #{tpu_custom_call.1} parent=71 // pred_check
          %p502 = pneg %p76
        $region78: #{tpu_custom_call.1} parent=71 // pred_check_branch
          %504 = sbr.rel (%p502) target = $region80
        $region79: #{tpu_custom_call.1} parent=71 // pred_region
          %506 = dma.done [#allocation6], 2048
        $region80: #{tpu_custom_call.1} parent=71 // pred_fallthru
          _
        // Predicated region
        $region81: #{tpu_custom_call.1} parent=71 // pred_check
          %p507 = pneg %p97
        $region82: #{tpu_custom_call.1} parent=71 // pred_check_branch
          %509 = sbr.rel (%p507) target = $region84
        $region83: #{tpu_custom_call.1} parent=71 // pred_region
          %511 = dma.done [#allocation6], 32
        $region84: #{tpu_custom_call.1} parent=71 // pred_fallthru
          _
        // Predicated region
        $region85: #{tpu_custom_call.1} parent=71 // pred_check
          %p512 = pneg %p118
        $region86: #{tpu_custom_call.1} parent=71 // pred_check_branch
          %514 = sbr.rel (%p512) target = $region88
        $region87: #{tpu_custom_call.1} parent=71 // pred_region
          %516 = dma.done [#allocation9], 4096
        $region88: #{tpu_custom_call.1} parent=71 // pred_fallthru
          _
        // Predicated region
        $region89: #{tpu_custom_call.1} parent=71 // pred_check
          %p517 = pneg %p160
        $region90: #{tpu_custom_call.1} parent=71 // pred_check_branch
          %519 = sbr.rel (%p517) target = $region92
        $region91: #{tpu_custom_call.1} parent=71 // pred_region
          %521 = dma.done [#allocation9], 4096
        $region92: #{tpu_custom_call.1} parent=71 // pred_fallthru
          _
        // Predicated region
        $region93: #{tpu_custom_call.1} parent=71 // pred_check
          %p522 = pneg %p202
        $region94: #{tpu_custom_call.1} parent=71 // pred_check_branch
          %524 = sbr.rel (%p522) target = $region96
        $region95: #{tpu_custom_call.1} parent=71 // pred_region
          %526 = dma.done [#allocation12], 4096
        $region96: #{tpu_custom_call.1} parent=71 // pred_fallthru
          _
        // Predicated region
        $region97: #{tpu_custom_call.1} parent=71 // pred_check
          %p527 = pneg %p244
        $region98: #{tpu_custom_call.1} parent=71 // pred_check_branch
          %529 = sbr.rel (%p527) target = $region100
        $region99: #{tpu_custom_call.1} parent=71 // pred_region
          %531 = dma.done [#allocation12], 4096
        $region100: #{tpu_custom_call.1} parent=71 // pred_fallthru
          _
        // Predicated region
        $region101: #{tpu_custom_call.1} parent=71 // pred_check
          %p532 = pneg %p286
        $region102: #{tpu_custom_call.1} parent=71 // pred_check_branch
          %534 = sbr.rel (%p532) target = $region104
        $region103: #{tpu_custom_call.1} parent=71 // pred_region
          %536 = dma.done [#allocation15], 2048
        $region104: #{tpu_custom_call.1} parent=71 // pred_fallthru
          _
        %s537 = sand.u32 %s42, 1
        %s538 = scalar_lea.sflag [#allocation3], %s537
        %s539 = sand.u32 %s42, 1
        %s540 = smul.addr %s539, 128
        %s541 = scalar_lea.vmem [#allocation2], %s540
        %p542 = pneg %p55
        %p543 = pneg %p52
        %p544 = pneg %p76
        %p545 = pneg %p73
        %p546 = pneg %p97
        %p547 = pneg %p94
        %p548 = pneg %p118
        %p549 = pneg %p115
        %p550 = pneg %p139
        %p551 = pneg %p136
        %p552 = pneg %p160
        %p553 = pneg %p157
        %p554 = pneg %p181
        %p555 = pneg %p178
        %p556 = pneg %p202
        %p557 = pneg %p199
        %p558 = pneg %p223
        %p559 = pneg %p220
        %p560 = pneg %p244
        %p561 = pneg %p241
        %p562 = pneg %p265
        %p563 = pneg %p262
        %p564 = pneg %p286
        %p565 = pneg %p283
        %p566 = pneg %p307
        %p567 = pneg %p304
        %p568 = pneg %p333
        %p569 = pneg %p330
        %s570 = sand.u32 %s320, 1
        %s571 = scalar_lea.sflag [#allocation4], %s570
        %s572 = sand.u32 %s320, 1
        %s573 = smul.addr %s572, 256
        %s574 = scalar_lea.vmem [#allocation16], %s573
        %s575 = smul.u32 32, %s34
        %s576 = smul.u32 32, %s34
        %v577 = vld [vmem:[%s496] sm:$0xf]
        %v578 = vld [vmem:[%s496 + $0x4] sm:$0xf]
        %v579 = vld [vmem:[%s496 + $0x8] sm:$0xf]
        %v580 = vld [vmem:[%s496 + $0xc] sm:$0xf]
        %v581 = vld [vmem:[%s496 + $0x10] sm:$0xf]
        %v582 = vld [vmem:[%s496 + $0x14] sm:$0xf]
        %v583 = vld [vmem:[%s496 + $0x18] sm:$0xf]
        %v584 = vld [vmem:[%s496 + $0x1c] sm:$0xf]
        %v585 = vld [vmem:[%s496 + $0x20] sm:$0xf]
        %v586 = vld [vmem:[%s496 + $0x24] sm:$0xf]
        %v587 = vld [vmem:[%s496 + $0x28] sm:$0xf]
        %v588 = vld [vmem:[%s496 + $0x2c] sm:$0xf]
        %v589 = vld [vmem:[%s496 + $0x30] sm:$0xf]
        %v590 = vld [vmem:[%s496 + $0x34] sm:$0xf]
        %v591 = vld [vmem:[%s496 + $0x38] sm:$0xf]
        %v592 = vld [vmem:[%s496 + $0x3c] sm:$0xf]
        %v593 = vld [vmem:[%s496 + $0x40] sm:$0xf]
        %v594 = vld [vmem:[%s496 + $0x44] sm:$0xf]
        %v595 = vld [vmem:[%s496 + $0x48] sm:$0xf]
        %v596 = vld [vmem:[%s496 + $0x4c] sm:$0xf]
        %v597 = vld [vmem:[%s496 + $0x50] sm:$0xf]
        %v598 = vld [vmem:[%s496 + $0x54] sm:$0xf]
        %v599 = vld [vmem:[%s496 + $0x58] sm:$0xf]
        %v600 = vld [vmem:[%s496 + $0x5c] sm:$0xf]
        %v601 = vld [vmem:[%s496 + $0x60] sm:$0xf]
        %v602 = vld [vmem:[%s496 + $0x64] sm:$0xf]
        %v603 = vld [vmem:[%s496 + $0x68] sm:$0xf]
        %v604 = vld [vmem:[%s496 + $0x6c] sm:$0xf]
        %v605 = vld [vmem:[%s496 + $0x70] sm:$0xf]
        %v606 = vld [vmem:[%s496 + $0x74] sm:$0xf]
        %v607 = vld [vmem:[%s496 + $0x78] sm:$0xf]
        %v608 = vld [vmem:[%s496 + $0x7c] sm:$0xf]
        %v609 = vld [vmem:[#allocation5] sm:$0xff]
        %v610 = vld [vmem:[#allocation5 + $0x8] sm:$0xff]
        %v611 = vld [vmem:[#allocation5 + $0x10] sm:$0xff]
        %v612 = vld [vmem:[#allocation5 + $0x18] sm:$0xff]
        %v613 = vld [vmem:[#allocation5 + $0x20] sm:$0xff]
        %v614 = vld [vmem:[#allocation5 + $0x28] sm:$0xff]
        %v615 = vld [vmem:[#allocation5 + $0x30] sm:$0xff]
        %v616 = vld [vmem:[#allocation5 + $0x38] sm:$0xff]
        %v617 = vld [vmem:[#allocation5 + $0x40] sm:$0xff]
        %v618 = vld [vmem:[#allocation5 + $0x48] sm:$0xff]
        %v619 = vld [vmem:[#allocation5 + $0x50] sm:$0xff]
        %v620 = vld [vmem:[#allocation5 + $0x58] sm:$0xff]
        %v621 = vld [vmem:[#allocation5 + $0x60] sm:$0xff]
        %v622 = vld [vmem:[#allocation5 + $0x68] sm:$0xff]
        %v623 = vld [vmem:[#allocation5 + $0x70] sm:$0xff]
        %v624 = vld [vmem:[#allocation5 + $0x78] sm:$0xff]
        %v625 = vld [vmem:[#allocation7] sm:$0x3]
        %v627 = vperm.slane %v625, 0
        %v628 = vperm.slane %v625, 1
        %v663 = vunpack.c.l.b16 %v577
        %v664 = vunpack.c.l.b16 %v578
        %v665 = vunpack.c.l.b16 %v579
        %v666 = vunpack.c.l.b16 %v580
        %v667 = vunpack.c.l.b16 %v581
        %v668 = vunpack.c.l.b16 %v582
        %v669 = vunpack.c.l.b16 %v583
        %v670 = vunpack.c.l.b16 %v584
        %v671 = vunpack.c.l.b16 %v585
        %v672 = vunpack.c.l.b16 %v586
        %v673 = vunpack.c.l.b16 %v587
        %v674 = vunpack.c.l.b16 %v588
        %v675 = vunpack.c.l.b16 %v589
        %v676 = vunpack.c.l.b16 %v590
        %v677 = vunpack.c.l.b16 %v591
        %v678 = vunpack.c.l.b16 %v592
        %v679 = vunpack.c.l.b16 %v593
        %v680 = vunpack.c.l.b16 %v594
        %v681 = vunpack.c.l.b16 %v595
        %v682 = vunpack.c.l.b16 %v596
        %v683 = vunpack.c.l.b16 %v597
        %v684 = vunpack.c.l.b16 %v598
        %v685 = vunpack.c.l.b16 %v599
        %v686 = vunpack.c.l.b16 %v600
        %v687 = vunpack.c.l.b16 %v601
        %v688 = vunpack.c.l.b16 %v602
        %v689 = vunpack.c.l.b16 %v603
        %v690 = vunpack.c.l.b16 %v604
        %v691 = vunpack.c.l.b16 %v605
        %v692 = vunpack.c.l.b16 %v606
        %v693 = vunpack.c.l.b16 %v607
        %v694 = vunpack.c.l.b16 %v608
        %v695 = vpack.c.b16 %v664, %v663
        %v696 = vpack.c.b16 %v666, %v665
        %v697 = vpack.c.b16 %v668, %v667
        %v698 = vpack.c.b16 %v670, %v669
        %v699 = vpack.c.b16 %v672, %v671
        %v700 = vpack.c.b16 %v674, %v673
        %v701 = vpack.c.b16 %v676, %v675
        %v702 = vpack.c.b16 %v678, %v677
        %v703 = vpack.c.b16 %v680, %v679
        %v704 = vpack.c.b16 %v682, %v681
        %v705 = vpack.c.b16 %v684, %v683
        %v706 = vpack.c.b16 %v686, %v685
        %v707 = vpack.c.b16 %v688, %v687
        %v708 = vpack.c.b16 %v690, %v689
        %v709 = vpack.c.b16 %v692, %v691
        %v710 = vpack.c.b16 %v694, %v693
        %v743 = vunpack.c.l.b16 %v609
        %v744 = vunpack.c.h.b16 %v609
        %v745 = vunpack.c.l.b16 %v610
        %v746 = vunpack.c.h.b16 %v610
        %v747 = vunpack.c.l.b16 %v611
        %v748 = vunpack.c.h.b16 %v611
        %v749 = vunpack.c.l.b16 %v612
        %v750 = vunpack.c.h.b16 %v612
        %v751 = vunpack.c.l.b16 %v613
        %v752 = vunpack.c.h.b16 %v613
        %v753 = vunpack.c.l.b16 %v614
        %v754 = vunpack.c.h.b16 %v614
        %v755 = vunpack.c.l.b16 %v615
        %v756 = vunpack.c.h.b16 %v615
        %v757 = vunpack.c.l.b16 %v616
        %v758 = vunpack.c.h.b16 %v616
        %v759 = vunpack.c.l.b16 %v617
        %v760 = vunpack.c.h.b16 %v617
        %v761 = vunpack.c.l.b16 %v618
        %v762 = vunpack.c.h.b16 %v618
        %v763 = vunpack.c.l.b16 %v619
        %v764 = vunpack.c.h.b16 %v619
        %v765 = vunpack.c.l.b16 %v620
        %v766 = vunpack.c.h.b16 %v620
        %v767 = vunpack.c.l.b16 %v621
        %v768 = vunpack.c.h.b16 %v621
        %v769 = vunpack.c.l.b16 %v622
        %v770 = vunpack.c.h.b16 %v622
        %v771 = vunpack.c.l.b16 %v623
        %v772 = vunpack.c.h.b16 %v623
        %v773 = vunpack.c.l.b16 %v624
        %v774 = vunpack.c.h.b16 %v624
        %v775 = vpack.c.b16 %v745, %v743
        %v776 = vpack.c.b16 %v746, %v744
        %v777 = vpack.c.b16 %v749, %v747
        %v778 = vpack.c.b16 %v750, %v748
        %v779 = vpack.c.b16 %v753, %v751
        %v780 = vpack.c.b16 %v754, %v752
        %v781 = vpack.c.b16 %v757, %v755
        %v782 = vpack.c.b16 %v758, %v756
        %v783 = vpack.c.b16 %v761, %v759
        %v784 = vpack.c.b16 %v762, %v760
        %v785 = vpack.c.b16 %v765, %v763
        %v786 = vpack.c.b16 %v766, %v764
        %v787 = vpack.c.b16 %v769, %v767
        %v788 = vpack.c.b16 %v770, %v768
        %v789 = vpack.c.b16 %v773, %v771
        %v790 = vpack.c.b16 %v774, %v772
        %807 = vmatpush.bf16.msra.mxu0 %v789
        %808 = vmatpush.bf16.msra.mxu0 %v787
        %809 = vmatpush.bf16.msra.mxu0 %v785
        %810 = vmatpush.bf16.msra.mxu0 %v783
        %811 = vmatpush.bf16.msra.mxu0 %v781
        %812 = vmatpush.bf16.msra.mxu0 %v779
        %813 = vmatpush.bf16.msra.mxu0 %v777
        %814 = vmatpush.bf16.msra.mxu0 %v775
        %815 = vmatmul.bf16.gmra.mxu0 %v695
        %v816 = vpop.f32.mrf.mxu0
        %v817 = vadd.f32 %v627, %v816
        %v818 = vpop.f32.mrf.mxu0
        %v819 = vadd.f32 %v627, %v818
        %820 = vmatmul.bf16.gmra.mxu0 %v696
        %v821 = vpop.f32.mrf.mxu0
        %v822 = vadd.f32 %v627, %v821
        %v823 = vpop.f32.mrf.mxu0
        %v824 = vadd.f32 %v627, %v823
        %825 = vmatmul.bf16.gmra.mxu0 %v697
        %v826 = vpop.f32.mrf.mxu0
        %v827 = vadd.f32 %v627, %v826
        %v828 = vpop.f32.mrf.mxu0
        %v829 = vadd.f32 %v627, %v828
        %830 = vmatmul.bf16.gmra.mxu0 %v698
        %v831 = vpop.f32.mrf.mxu0
        %v832 = vadd.f32 %v627, %v831
        %v833 = vpop.f32.mrf.mxu0
        %v834 = vadd.f32 %v627, %v833
        %835 = vmatmul.bf16.gmra.mxu0 %v699
        %v836 = vpop.f32.mrf.mxu0
        %v837 = vadd.f32 %v627, %v836
        %v838 = vpop.f32.mrf.mxu0
        %v839 = vadd.f32 %v627, %v838
        %840 = vmatmul.bf16.gmra.mxu0 %v700
        %v841 = vpop.f32.mrf.mxu0
        %v842 = vadd.f32 %v627, %v841
        %v843 = vpop.f32.mrf.mxu0
        %v844 = vadd.f32 %v627, %v843
        %845 = vmatmul.bf16.gmra.mxu0 %v701
        %v846 = vpop.f32.mrf.mxu0
        %v847 = vadd.f32 %v627, %v846
        %v848 = vpop.f32.mrf.mxu0
        %v849 = vadd.f32 %v627, %v848
        %850 = vmatmul.bf16.gmra.mxu0 %v702
        %v851 = vpop.f32.mrf.mxu0
        %v852 = vadd.f32 %v627, %v851
        %v853 = vpop.f32.mrf.mxu0
        %v854 = vadd.f32 %v627, %v853
        %855 = vmatmul.bf16.gmra.mxu0 %v703
        %v856 = vpop.f32.mrf.mxu0
        %v857 = vadd.f32 %v627, %v856
        %v858 = vpop.f32.mrf.mxu0
        %v859 = vadd.f32 %v627, %v858
        %860 = vmatmul.bf16.gmra.mxu0 %v704
        %v861 = vpop.f32.mrf.mxu0
        %v862 = vadd.f32 %v627, %v861
        %v863 = vpop.f32.mrf.mxu0
        %v864 = vadd.f32 %v627, %v863
        %865 = vmatmul.bf16.gmra.mxu0 %v705
        %v866 = vpop.f32.mrf.mxu0
        %v867 = vadd.f32 %v627, %v866
        %v868 = vpop.f32.mrf.mxu0
        %v869 = vadd.f32 %v627, %v868
        %870 = vmatmul.bf16.gmra.mxu0 %v706
        %v871 = vpop.f32.mrf.mxu0
        %v872 = vadd.f32 %v627, %v871
        %v873 = vpop.f32.mrf.mxu0
        %v874 = vadd.f32 %v627, %v873
        %875 = vmatmul.bf16.gmra.mxu0 %v707
        %v876 = vpop.f32.mrf.mxu0
        %v877 = vadd.f32 %v627, %v876
        %v878 = vpop.f32.mrf.mxu0
        %v879 = vadd.f32 %v627, %v878
        %880 = vmatmul.bf16.gmra.mxu0 %v708
        %v881 = vpop.f32.mrf.mxu0
        %v882 = vadd.f32 %v627, %v881
        %v883 = vpop.f32.mrf.mxu0
        %v884 = vadd.f32 %v627, %v883
        %885 = vmatmul.bf16.gmra.mxu0 %v709
        %v886 = vpop.f32.mrf.mxu0
        %v887 = vadd.f32 %v627, %v886
        %v888 = vpop.f32.mrf.mxu0
        %v889 = vadd.f32 %v627, %v888
        %890 = vmatmul.bf16.gmra.mxu0 %v710
        %v891 = vpop.f32.mrf.mxu0
        %v892 = vadd.f32 %v627, %v891
        %v893 = vpop.f32.mrf.mxu0
        %v894 = vadd.f32 %v627, %v893
        %895 = vdwg.mxu0
        %896 = vmatpush.bf16.msra.mxu0 %v790
        %897 = vmatpush.bf16.msra.mxu0 %v788
        %898 = vmatpush.bf16.msra.mxu0 %v786
        %899 = vmatpush.bf16.msra.mxu0 %v784
        %900 = vmatpush.bf16.msra.mxu0 %v782
        %901 = vmatpush.bf16.msra.mxu0 %v780
        %902 = vmatpush.bf16.msra.mxu0 %v778
        %903 = vmatpush.bf16.msra.mxu0 %v776
        %904 = vmatmul.bf16.gmra.mxu0 %v695
        %v905 = vpop.f32.mrf.mxu0
        %v906 = vadd.f32 %v628, %v905
        %v907 = vpop.f32.mrf.mxu0
        %v908 = vadd.f32 %v628, %v907
        %909 = vmatmul.bf16.gmra.mxu0 %v696
        %v910 = vpop.f32.mrf.mxu0
        %v911 = vadd.f32 %v628, %v910
        %v912 = vpop.f32.mrf.mxu0
        %v913 = vadd.f32 %v628, %v912
        %914 = vmatmul.bf16.gmra.mxu0 %v697
        %v915 = vpop.f32.mrf.mxu0
        %v916 = vadd.f32 %v628, %v915
        %v917 = vpop.f32.mrf.mxu0
        %v918 = vadd.f32 %v628, %v917
        %919 = vmatmul.bf16.gmra.mxu0 %v698
        %v920 = vpop.f32.mrf.mxu0
        %v921 = vadd.f32 %v628, %v920
        %v922 = vpop.f32.mrf.mxu0
        %v923 = vadd.f32 %v628, %v922
        %924 = vmatmul.bf16.gmra.mxu0 %v699
        %v925 = vpop.f32.mrf.mxu0
        %v926 = vadd.f32 %v628, %v925
        %v927 = vpop.f32.mrf.mxu0
        %v928 = vadd.f32 %v628, %v927
        %929 = vmatmul.bf16.gmra.mxu0 %v700
        %v930 = vpop.f32.mrf.mxu0
        %v931 = vadd.f32 %v628, %v930
        %v932 = vpop.f32.mrf.mxu0
        %v933 = vadd.f32 %v628, %v932
        %934 = vmatmul.bf16.gmra.mxu0 %v701
        %v935 = vpop.f32.mrf.mxu0
        %v936 = vadd.f32 %v628, %v935
        %v937 = vpop.f32.mrf.mxu0
        %v938 = vadd.f32 %v628, %v937
        %939 = vmatmul.bf16.gmra.mxu0 %v702
        %v940 = vpop.f32.mrf.mxu0
        %v941 = vadd.f32 %v628, %v940
        %v942 = vpop.f32.mrf.mxu0
        %v943 = vadd.f32 %v628, %v942
        %944 = vmatmul.bf16.gmra.mxu0 %v703
        %v945 = vpop.f32.mrf.mxu0
        %v946 = vadd.f32 %v628, %v945
        %v947 = vpop.f32.mrf.mxu0
        %v948 = vadd.f32 %v628, %v947
        %949 = vmatmul.bf16.gmra.mxu0 %v704
        %v950 = vpop.f32.mrf.mxu0
        %v951 = vadd.f32 %v628, %v950
        %v952 = vpop.f32.mrf.mxu0
        %v953 = vadd.f32 %v628, %v952
        %954 = vmatmul.bf16.gmra.mxu0 %v705
        %v955 = vpop.f32.mrf.mxu0
        %v956 = vadd.f32 %v628, %v955
        %v957 = vpop.f32.mrf.mxu0
        %v958 = vadd.f32 %v628, %v957
        %959 = vmatmul.bf16.gmra.mxu0 %v706
        %v960 = vpop.f32.mrf.mxu0
        %v961 = vadd.f32 %v628, %v960
        %v962 = vpop.f32.mrf.mxu0
        %v963 = vadd.f32 %v628, %v962
        %964 = vmatmul.bf16.gmra.mxu0 %v707
        %v965 = vpop.f32.mrf.mxu0
        %v966 = vadd.f32 %v628, %v965
        %v967 = vpop.f32.mrf.mxu0
        %v968 = vadd.f32 %v628, %v967
        %969 = vmatmul.bf16.gmra.mxu0 %v708
        %v970 = vpop.f32.mrf.mxu0
        %v971 = vadd.f32 %v628, %v970
        %v972 = vpop.f32.mrf.mxu0
        %v973 = vadd.f32 %v628, %v972
        %974 = vmatmul.bf16.gmra.mxu0 %v709
        %v975 = vpop.f32.mrf.mxu0
        %v976 = vadd.f32 %v628, %v975
        %v977 = vpop.f32.mrf.mxu0
        %v978 = vadd.f32 %v628, %v977
        %979 = vmatmul.bf16.gmra.mxu0 %v710
        %v980 = vpop.f32.mrf.mxu0
        %v981 = vadd.f32 %v628, %v980
        %v982 = vpop.f32.mrf.mxu0
        %v983 = vadd.f32 %v628, %v982
        %984 = vdwg.mxu0
        %v985 = vpack.c.bf16 %v819, %v817
        %v986 = vpack.c.bf16 %v908, %v906
        %v987 = vpack.c.bf16 %v824, %v822
        %v988 = vpack.c.bf16 %v913, %v911
        %v989 = vpack.c.bf16 %v829, %v827
        %v990 = vpack.c.bf16 %v918, %v916
        %v991 = vpack.c.bf16 %v834, %v832
        %v992 = vpack.c.bf16 %v923, %v921
        %v993 = vpack.c.bf16 %v839, %v837
        %v994 = vpack.c.bf16 %v928, %v926
        %v995 = vpack.c.bf16 %v844, %v842
        %v996 = vpack.c.bf16 %v933, %v931
        %v997 = vpack.c.bf16 %v849, %v847
        %v998 = vpack.c.bf16 %v938, %v936
        %v999 = vpack.c.bf16 %v854, %v852
        %v1000 = vpack.c.bf16 %v943, %v941
        %v1001 = vpack.c.bf16 %v859, %v857
        %v1002 = vpack.c.bf16 %v948, %v946
        %v1003 = vpack.c.bf16 %v864, %v862
        %v1004 = vpack.c.bf16 %v953, %v951
        %v1005 = vpack.c.bf16 %v869, %v867
        %v1006 = vpack.c.bf16 %v958, %v956
        %v1007 = vpack.c.bf16 %v874, %v872
        %v1008 = vpack.c.bf16 %v963, %v961
        %v1009 = vpack.c.bf16 %v879, %v877
        %v1010 = vpack.c.bf16 %v968, %v966
        %v1011 = vpack.c.bf16 %v884, %v882
        %v1012 = vpack.c.bf16 %v973, %v971
        %v1013 = vpack.c.bf16 %v889, %v887
        %v1014 = vpack.c.bf16 %v978, %v976
        %v1015 = vpack.c.bf16 %v894, %v892
        %v1016 = vpack.c.bf16 %v983, %v981
        %v1017 = vld [vmem:[#allocation8] sm:$0xff]
        %v1018 = vld [vmem:[#allocation8 + $0x8] sm:$0xff]
        %v1019 = vld [vmem:[#allocation8 + $0x10] sm:$0xff]
        %v1020 = vld [vmem:[#allocation8 + $0x18] sm:$0xff]
        %v1021 = vld [vmem:[#allocation8 + $0x20] sm:$0xff]
        %v1022 = vld [vmem:[#allocation8 + $0x28] sm:$0xff]
        %v1023 = vld [vmem:[#allocation8 + $0x30] sm:$0xff]
        %v1024 = vld [vmem:[#allocation8 + $0x38] sm:$0xff]
        %v1025 = vld [vmem:[#allocation8 + $0x40] sm:$0xff]
        %v1026 = vld [vmem:[#allocation8 + $0x48] sm:$0xff]
        %v1027 = vld [vmem:[#allocation8 + $0x50] sm:$0xff]
        %v1028 = vld [vmem:[#allocation8 + $0x58] sm:$0xff]
        %v1029 = vld [vmem:[#allocation8 + $0x60] sm:$0xff]
        %v1030 = vld [vmem:[#allocation8 + $0x68] sm:$0xff]
        %v1031 = vld [vmem:[#allocation8 + $0x70] sm:$0xff]
        %v1032 = vld [vmem:[#allocation8 + $0x78] sm:$0xff]
        %v1033 = vld [vmem:[#allocation8 + $0x80] sm:$0xff]
        %v1034 = vld [vmem:[#allocation8 + $0x88] sm:$0xff]
        %v1035 = vld [vmem:[#allocation8 + $0x90] sm:$0xff]
        %v1036 = vld [vmem:[#allocation8 + $0x98] sm:$0xff]
        %v1037 = vld [vmem:[#allocation8 + $0xa0] sm:$0xff]
        %v1038 = vld [vmem:[#allocation8 + $0xa8] sm:$0xff]
        %v1039 = vld [vmem:[#allocation8 + $0xb0] sm:$0xff]
        %v1040 = vld [vmem:[#allocation8 + $0xb8] sm:$0xff]
        %v1041 = vld [vmem:[#allocation8 + $0xc0] sm:$0xff]
        %v1042 = vld [vmem:[#allocation8 + $0xc8] sm:$0xff]
        %v1043 = vld [vmem:[#allocation8 + $0xd0] sm:$0xff]
        %v1044 = vld [vmem:[#allocation8 + $0xd8] sm:$0xff]
        %v1045 = vld [vmem:[#allocation8 + $0xe0] sm:$0xff]
        %v1046 = vld [vmem:[#allocation8 + $0xe8] sm:$0xff]
        %v1047 = vld [vmem:[#allocation8 + $0xf0] sm:$0xff]
        %v1048 = vld [vmem:[#allocation8 + $0xf8] sm:$0xff]
        %v1049 = vld [vmem:[%s4] sm:$0x3]
        %v1051 = vperm.slane %v1049, 0
        %v1052 = vperm.slane %v1049, 1
        %v1087 = vunpack.c.l.b16 %v1017
        %v1088 = vunpack.c.h.b16 %v1017
        %v1089 = vunpack.c.l.b16 %v1018
        %v1090 = vunpack.c.h.b16 %v1018
        %v1091 = vunpack.c.l.b16 %v1019
        %v1092 = vunpack.c.h.b16 %v1019
        %v1093 = vunpack.c.l.b16 %v1020
        %v1094 = vunpack.c.h.b16 %v1020
        %v1095 = vunpack.c.l.b16 %v1021
        %v1096 = vunpack.c.h.b16 %v1021
        %v1097 = vunpack.c.l.b16 %v1022
        %v1098 = vunpack.c.h.b16 %v1022
        %v1099 = vunpack.c.l.b16 %v1023
        %v1100 = vunpack.c.h.b16 %v1023
        %v1101 = vunpack.c.l.b16 %v1024
        %v1102 = vunpack.c.h.b16 %v1024
        %v1103 = vunpack.c.l.b16 %v1025
        %v1104 = vunpack.c.h.b16 %v1025
        %v1105 = vunpack.c.l.b16 %v1026
        %v1106 = vunpack.c.h.b16 %v1026
        %v1107 = vunpack.c.l.b16 %v1027
        %v1108 = vunpack.c.h.b16 %v1027
        %v1109 = vunpack.c.l.b16 %v1028
        %v1110 = vunpack.c.h.b16 %v1028
        %v1111 = vunpack.c.l.b16 %v1029
        %v1112 = vunpack.c.h.b16 %v1029
        %v1113 = vunpack.c.l.b16 %v1030
        %v1114 = vunpack.c.h.b16 %v1030
        %v1115 = vunpack.c.l.b16 %v1031
        %v1116 = vunpack.c.h.b16 %v1031
        %v1117 = vunpack.c.l.b16 %v1032
        %v1118 = vunpack.c.h.b16 %v1032
        %v1119 = vunpack.c.l.b16 %v1033
        %v1120 = vunpack.c.h.b16 %v1033
        %v1121 = vunpack.c.l.b16 %v1034
        %v1122 = vunpack.c.h.b16 %v1034
        %v1123 = vunpack.c.l.b16 %v1035
        %v1124 = vunpack.c.h.b16 %v1035
        %v1125 = vunpack.c.l.b16 %v1036
        %v1126 = vunpack.c.h.b16 %v1036
        %v1127 = vunpack.c.l.b16 %v1037
        %v1128 = vunpack.c.h.b16 %v1037
        %v1129 = vunpack.c.l.b16 %v1038
        %v1130 = vunpack.c.h.b16 %v1038
        %v1131 = vunpack.c.l.b16 %v1039
        %v1132 = vunpack.c.h.b16 %v1039
        %v1133 = vunpack.c.l.b16 %v1040
        %v1134 = vunpack.c.h.b16 %v1040
        %v1135 = vunpack.c.l.b16 %v1041
        %v1136 = vunpack.c.h.b16 %v1041
        %v1137 = vunpack.c.l.b16 %v1042
        %v1138 = vunpack.c.h.b16 %v1042
        %v1139 = vunpack.c.l.b16 %v1043
        %v1140 = vunpack.c.h.b16 %v1043
        %v1141 = vunpack.c.l.b16 %v1044
        %v1142 = vunpack.c.h.b16 %v1044
        %v1143 = vunpack.c.l.b16 %v1045
        %v1144 = vunpack.c.h.b16 %v1045
        %v1145 = vunpack.c.l.b16 %v1046
        %v1146 = vunpack.c.h.b16 %v1046
        %v1147 = vunpack.c.l.b16 %v1047
        %v1148 = vunpack.c.h.b16 %v1047
        %v1149 = vunpack.c.l.b16 %v1048
        %v1150 = vunpack.c.h.b16 %v1048
        %v1151 = vpack.c.b16 %v1089, %v1087
        %v1152 = vpack.c.b16 %v1090, %v1088
        %v1153 = vpack.c.b16 %v1093, %v1091
        %v1154 = vpack.c.b16 %v1094, %v1092
        %v1155 = vpack.c.b16 %v1097, %v1095
        %v1156 = vpack.c.b16 %v1098, %v1096
        %v1157 = vpack.c.b16 %v1101, %v1099
        %v1158 = vpack.c.b16 %v1102, %v1100
        %v1159 = vpack.c.b16 %v1105, %v1103
        %v1160 = vpack.c.b16 %v1106, %v1104
        %v1161 = vpack.c.b16 %v1109, %v1107
        %v1162 = vpack.c.b16 %v1110, %v1108
        %v1163 = vpack.c.b16 %v1113, %v1111
        %v1164 = vpack.c.b16 %v1114, %v1112
        %v1165 = vpack.c.b16 %v1117, %v1115
        %v1166 = vpack.c.b16 %v1118, %v1116
        %v1167 = vpack.c.b16 %v1121, %v1119
        %v1168 = vpack.c.b16 %v1122, %v1120
        %v1169 = vpack.c.b16 %v1125, %v1123
        %v1170 = vpack.c.b16 %v1126, %v1124
        %v1171 = vpack.c.b16 %v1129, %v1127
        %v1172 = vpack.c.b16 %v1130, %v1128
        %v1173 = vpack.c.b16 %v1133, %v1131
        %v1174 = vpack.c.b16 %v1134, %v1132
        %v1175 = vpack.c.b16 %v1137, %v1135
        %v1176 = vpack.c.b16 %v1138, %v1136
        %v1177 = vpack.c.b16 %v1141, %v1139
        %v1178 = vpack.c.b16 %v1142, %v1140
        %v1179 = vpack.c.b16 %v1145, %v1143
        %v1180 = vpack.c.b16 %v1146, %v1144
        %v1181 = vpack.c.b16 %v1149, %v1147
        %v1182 = vpack.c.b16 %v1150, %v1148
        %1215 = vmatpush.bf16.msra.mxu0 %v1165
        %1216 = vmatpush.bf16.msra.mxu0 %v1163
        %1217 = vmatpush.bf16.msra.mxu0 %v1161
        %1218 = vmatpush.bf16.msra.mxu0 %v1159
        %1219 = vmatpush.bf16.msra.mxu0 %v1157
        %1220 = vmatpush.bf16.msra.mxu0 %v1155
        %1221 = vmatpush.bf16.msra.mxu0 %v1153
        %1222 = vmatpush.bf16.msra.mxu0 %v1151
        %1223 = vmatmul.bf16.gmra.mxu0 %v985
        %v1224 = vpop.f32.mrf.mxu0
        %v1225 = vadd.f32 %v1051, %v1224
        %v1226 = vpop.f32.mrf.mxu0
        %v1227 = vadd.f32 %v1051, %v1226
        %1228 = vmatmul.bf16.gmra.mxu0 %v987
        %v1229 = vpop.f32.mrf.mxu0
        %v1230 = vadd.f32 %v1051, %v1229
        %v1231 = vpop.f32.mrf.mxu0
        %v1232 = vadd.f32 %v1051, %v1231
        %1233 = vmatmul.bf16.gmra.mxu0 %v989
        %v1234 = vpop.f32.mrf.mxu0
        %v1235 = vadd.f32 %v1051, %v1234
        %v1236 = vpop.f32.mrf.mxu0
        %v1237 = vadd.f32 %v1051, %v1236
        %1238 = vmatmul.bf16.gmra.mxu0 %v991
        %v1239 = vpop.f32.mrf.mxu0
        %v1240 = vadd.f32 %v1051, %v1239
        %v1241 = vpop.f32.mrf.mxu0
        %v1242 = vadd.f32 %v1051, %v1241
        %1243 = vmatmul.bf16.gmra.mxu0 %v993
        %v1244 = vpop.f32.mrf.mxu0
        %v1245 = vadd.f32 %v1051, %v1244
        %v1246 = vpop.f32.mrf.mxu0
        %v1247 = vadd.f32 %v1051, %v1246
        %1248 = vmatmul.bf16.gmra.mxu0 %v995
        %v1249 = vpop.f32.mrf.mxu0
        %v1250 = vadd.f32 %v1051, %v1249
        %v1251 = vpop.f32.mrf.mxu0
        %v1252 = vadd.f32 %v1051, %v1251
        %1253 = vmatmul.bf16.gmra.mxu0 %v997
        %v1254 = vpop.f32.mrf.mxu0
        %v1255 = vadd.f32 %v1051, %v1254
        %v1256 = vpop.f32.mrf.mxu0
        %v1257 = vadd.f32 %v1051, %v1256
        %1258 = vmatmul.bf16.gmra.mxu0 %v999
        %v1259 = vpop.f32.mrf.mxu0
        %v1260 = vadd.f32 %v1051, %v1259
        %v1261 = vpop.f32.mrf.mxu0
        %v1262 = vadd.f32 %v1051, %v1261
        %1263 = vmatmul.bf16.gmra.mxu0 %v1001
        %v1264 = vpop.f32.mrf.mxu0
        %v1265 = vadd.f32 %v1051, %v1264
        %v1266 = vpop.f32.mrf.mxu0
        %v1267 = vadd.f32 %v1051, %v1266
        %1268 = vmatmul.bf16.gmra.mxu0 %v1003
        %v1269 = vpop.f32.mrf.mxu0
        %v1270 = vadd.f32 %v1051, %v1269
        %v1271 = vpop.f32.mrf.mxu0
        %v1272 = vadd.f32 %v1051, %v1271
        %1273 = vmatmul.bf16.gmra.mxu0 %v1005
        %v1274 = vpop.f32.mrf.mxu0
        %v1275 = vadd.f32 %v1051, %v1274
        %v1276 = vpop.f32.mrf.mxu0
        %v1277 = vadd.f32 %v1051, %v1276
        %1278 = vmatmul.bf16.gmra.mxu0 %v1007
        %v1279 = vpop.f32.mrf.mxu0
        %v1280 = vadd.f32 %v1051, %v1279
        %v1281 = vpop.f32.mrf.mxu0
        %v1282 = vadd.f32 %v1051, %v1281
        %1283 = vmatmul.bf16.gmra.mxu0 %v1009
        %v1284 = vpop.f32.mrf.mxu0
        %v1285 = vadd.f32 %v1051, %v1284
        %v1286 = vpop.f32.mrf.mxu0
        %v1287 = vadd.f32 %v1051, %v1286
        %1288 = vmatmul.bf16.gmra.mxu0 %v1011
        %v1289 = vpop.f32.mrf.mxu0
        %v1290 = vadd.f32 %v1051, %v1289
        %v1291 = vpop.f32.mrf.mxu0
        %v1292 = vadd.f32 %v1051, %v1291
        %1293 = vmatmul.bf16.gmra.mxu0 %v1013
        %v1294 = vpop.f32.mrf.mxu0
        %v1295 = vadd.f32 %v1051, %v1294
        %v1296 = vpop.f32.mrf.mxu0
        %v1297 = vadd.f32 %v1051, %v1296
        %1298 = vmatmul.bf16.gmra.mxu0 %v1015
        %v1299 = vpop.f32.mrf.mxu0
        %v1300 = vadd.f32 %v1051, %v1299
        %v1301 = vpop.f32.mrf.mxu0
        %v1302 = vadd.f32 %v1051, %v1301
        %1303 = vdwg.mxu0
        %1304 = vmatpush.bf16.msra.mxu0 %v1181
        %1305 = vmatpush.bf16.msra.mxu0 %v1179
        %1306 = vmatpush.bf16.msra.mxu0 %v1177
        %1307 = vmatpush.bf16.msra.mxu0 %v1175
        %1308 = vmatpush.bf16.msra.mxu0 %v1173
        %1309 = vmatpush.bf16.msra.mxu0 %v1171
        %1310 = vmatpush.bf16.msra.mxu0 %v1169
        %1311 = vmatpush.bf16.msra.mxu0 %v1167
        %1312 = vmatmul.bf16.gmra.mxu0 %v986
        %v1313 = vpop.f32.mrf.mxu0
        %v1314 = vadd.f32 %v1225, %v1313
        %v1315 = vpop.f32.mrf.mxu0
        %v1316 = vadd.f32 %v1227, %v1315
        %1317 = vmatmul.bf16.gmra.mxu0 %v988
        %v1318 = vpop.f32.mrf.mxu0
        %v1319 = vadd.f32 %v1230, %v1318
        %v1320 = vpop.f32.mrf.mxu0
        %v1321 = vadd.f32 %v1232, %v1320
        %1322 = vmatmul.bf16.gmra.mxu0 %v990
        %v1323 = vpop.f32.mrf.mxu0
        %v1324 = vadd.f32 %v1235, %v1323
        %v1325 = vpop.f32.mrf.mxu0
        %v1326 = vadd.f32 %v1237, %v1325
        %1327 = vmatmul.bf16.gmra.mxu0 %v992
        %v1328 = vpop.f32.mrf.mxu0
        %v1329 = vadd.f32 %v1240, %v1328
        %v1330 = vpop.f32.mrf.mxu0
        %v1331 = vadd.f32 %v1242, %v1330
        %1332 = vmatmul.bf16.gmra.mxu0 %v994
        %v1333 = vpop.f32.mrf.mxu0
        %v1334 = vadd.f32 %v1245, %v1333
        %v1335 = vpop.f32.mrf.mxu0
        %v1336 = vadd.f32 %v1247, %v1335
        %1337 = vmatmul.bf16.gmra.mxu0 %v996
        %v1338 = vpop.f32.mrf.mxu0
        %v1339 = vadd.f32 %v1250, %v1338
        %v1340 = vpop.f32.mrf.mxu0
        %v1341 = vadd.f32 %v1252, %v1340
        %1342 = vmatmul.bf16.gmra.mxu0 %v998
        %v1343 = vpop.f32.mrf.mxu0
        %v1344 = vadd.f32 %v1255, %v1343
        %v1345 = vpop.f32.mrf.mxu0
        %v1346 = vadd.f32 %v1257, %v1345
        %1347 = vmatmul.bf16.gmra.mxu0 %v1000
        %v1348 = vpop.f32.mrf.mxu0
        %v1349 = vadd.f32 %v1260, %v1348
        %v1350 = vpop.f32.mrf.mxu0
        %v1351 = vadd.f32 %v1262, %v1350
        %1352 = vmatmul.bf16.gmra.mxu0 %v1002
        %v1353 = vpop.f32.mrf.mxu0
        %v1354 = vadd.f32 %v1265, %v1353
        %v1355 = vpop.f32.mrf.mxu0
        %v1356 = vadd.f32 %v1267, %v1355
        %1357 = vmatmul.bf16.gmra.mxu0 %v1004
        %v1358 = vpop.f32.mrf.mxu0
        %v1359 = vadd.f32 %v1270, %v1358
        %v1360 = vpop.f32.mrf.mxu0
        %v1361 = vadd.f32 %v1272, %v1360
        %1362 = vmatmul.bf16.gmra.mxu0 %v1006
        %v1363 = vpop.f32.mrf.mxu0
        %v1364 = vadd.f32 %v1275, %v1363
        %v1365 = vpop.f32.mrf.mxu0
        %v1366 = vadd.f32 %v1277, %v1365
        %1367 = vmatmul.bf16.gmra.mxu0 %v1008
        %v1368 = vpop.f32.mrf.mxu0
        %v1369 = vadd.f32 %v1280, %v1368
        %v1370 = vpop.f32.mrf.mxu0
        %v1371 = vadd.f32 %v1282, %v1370
        %1372 = vmatmul.bf16.gmra.mxu0 %v1010
        %v1373 = vpop.f32.mrf.mxu0
        %v1374 = vadd.f32 %v1285, %v1373
        %v1375 = vpop.f32.mrf.mxu0
        %v1376 = vadd.f32 %v1287, %v1375
        %1377 = vmatmul.bf16.gmra.mxu0 %v1012
        %v1378 = vpop.f32.mrf.mxu0
        %v1379 = vadd.f32 %v1290, %v1378
        %v1380 = vpop.f32.mrf.mxu0
        %v1381 = vadd.f32 %v1292, %v1380
        %1382 = vmatmul.bf16.gmra.mxu0 %v1014
        %v1383 = vpop.f32.mrf.mxu0
        %v1384 = vadd.f32 %v1295, %v1383
        %v1385 = vpop.f32.mrf.mxu0
        %v1386 = vadd.f32 %v1297, %v1385
        %1387 = vmatmul.bf16.gmra.mxu0 %v1016
        %v1388 = vpop.f32.mrf.mxu0
        %v1389 = vadd.f32 %v1300, %v1388
        %v1390 = vpop.f32.mrf.mxu0
        %v1391 = vadd.f32 %v1302, %v1390
        %1392 = vdwg.mxu0
        %1393 = vmatpush.bf16.msra.mxu0 %v1166
        %1394 = vmatpush.bf16.msra.mxu0 %v1164
        %1395 = vmatpush.bf16.msra.mxu0 %v1162
        %1396 = vmatpush.bf16.msra.mxu0 %v1160
        %1397 = vmatpush.bf16.msra.mxu0 %v1158
        %1398 = vmatpush.bf16.msra.mxu0 %v1156
        %1399 = vmatpush.bf16.msra.mxu0 %v1154
        %1400 = vmatpush.bf16.msra.mxu0 %v1152
        %1401 = vmatmul.bf16.gmra.mxu0 %v985
        %v1402 = vpop.f32.mrf.mxu0
        %v1403 = vadd.f32 %v1052, %v1402
        %v1404 = vpop.f32.mrf.mxu0
        %v1405 = vadd.f32 %v1052, %v1404
        %1406 = vmatmul.bf16.gmra.mxu0 %v987
        %v1407 = vpop.f32.mrf.mxu0
        %v1408 = vadd.f32 %v1052, %v1407
        %v1409 = vpop.f32.mrf.mxu0
        %v1410 = vadd.f32 %v1052, %v1409
        %1411 = vmatmul.bf16.gmra.mxu0 %v989
        %v1412 = vpop.f32.mrf.mxu0
        %v1413 = vadd.f32 %v1052, %v1412
        %v1414 = vpop.f32.mrf.mxu0
        %v1415 = vadd.f32 %v1052, %v1414
        %1416 = vmatmul.bf16.gmra.mxu0 %v991
        %v1417 = vpop.f32.mrf.mxu0
        %v1418 = vadd.f32 %v1052, %v1417
        %v1419 = vpop.f32.mrf.mxu0
        %v1420 = vadd.f32 %v1052, %v1419
        %1421 = vmatmul.bf16.gmra.mxu0 %v993
        %v1422 = vpop.f32.mrf.mxu0
        %v1423 = vadd.f32 %v1052, %v1422
        %v1424 = vpop.f32.mrf.mxu0
        %v1425 = vadd.f32 %v1052, %v1424
        %1426 = vmatmul.bf16.gmra.mxu0 %v995
        %v1427 = vpop.f32.mrf.mxu0
        %v1428 = vadd.f32 %v1052, %v1427
        %v1429 = vpop.f32.mrf.mxu0
        %v1430 = vadd.f32 %v1052, %v1429
        %1431 = vmatmul.bf16.gmra.mxu0 %v997
        %v1432 = vpop.f32.mrf.mxu0
        %v1433 = vadd.f32 %v1052, %v1432
        %v1434 = vpop.f32.mrf.mxu0
        %v1435 = vadd.f32 %v1052, %v1434
        %1436 = vmatmul.bf16.gmra.mxu0 %v999
        %v1437 = vpop.f32.mrf.mxu0
        %v1438 = vadd.f32 %v1052, %v1437
        %v1439 = vpop.f32.mrf.mxu0
        %v1440 = vadd.f32 %v1052, %v1439
        %1441 = vmatmul.bf16.gmra.mxu0 %v1001
        %v1442 = vpop.f32.mrf.mxu0
        %v1443 = vadd.f32 %v1052, %v1442
        %v1444 = vpop.f32.mrf.mxu0
        %v1445 = vadd.f32 %v1052, %v1444
        %1446 = vmatmul.bf16.gmra.mxu0 %v1003
        %v1447 = vpop.f32.mrf.mxu0
        %v1448 = vadd.f32 %v1052, %v1447
        %v1449 = vpop.f32.mrf.mxu0
        %v1450 = vadd.f32 %v1052, %v1449
        %1451 = vmatmul.bf16.gmra.mxu0 %v1005
        %v1452 = vpop.f32.mrf.mxu0
        %v1453 = vadd.f32 %v1052, %v1452
        %v1454 = vpop.f32.mrf.mxu0
        %v1455 = vadd.f32 %v1052, %v1454
        %1456 = vmatmul.bf16.gmra.mxu0 %v1007
        %v1457 = vpop.f32.mrf.mxu0
        %v1458 = vadd.f32 %v1052, %v1457
        %v1459 = vpop.f32.mrf.mxu0
        %v1460 = vadd.f32 %v1052, %v1459
        %1461 = vmatmul.bf16.gmra.mxu0 %v1009
        %v1462 = vpop.f32.mrf.mxu0
        %v1463 = vadd.f32 %v1052, %v1462
        %v1464 = vpop.f32.mrf.mxu0
        %v1465 = vadd.f32 %v1052, %v1464
        %1466 = vmatmul.bf16.gmra.mxu0 %v1011
        %v1467 = vpop.f32.mrf.mxu0
        %v1468 = vadd.f32 %v1052, %v1467
        %v1469 = vpop.f32.mrf.mxu0
        %v1470 = vadd.f32 %v1052, %v1469
        %1471 = vmatmul.bf16.gmra.mxu0 %v1013
        %v1472 = vpop.f32.mrf.mxu0
        %v1473 = vadd.f32 %v1052, %v1472
        %v1474 = vpop.f32.mrf.mxu0
        %v1475 = vadd.f32 %v1052, %v1474
        %1476 = vmatmul.bf16.gmra.mxu0 %v1015
        %v1477 = vpop.f32.mrf.mxu0
        %v1478 = vadd.f32 %v1052, %v1477
        %v1479 = vpop.f32.mrf.mxu0
        %v1480 = vadd.f32 %v1052, %v1479
        %1481 = vdwg.mxu0
        %1482 = vmatpush.bf16.msra.mxu0 %v1182
        %1483 = vmatpush.bf16.msra.mxu0 %v1180
        %1484 = vmatpush.bf16.msra.mxu0 %v1178
        %1485 = vmatpush.bf16.msra.mxu0 %v1176
        %1486 = vmatpush.bf16.msra.mxu0 %v1174
        %1487 = vmatpush.bf16.msra.mxu0 %v1172
        %1488 = vmatpush.bf16.msra.mxu0 %v1170
        %1489 = vmatpush.bf16.msra.mxu0 %v1168
        %1490 = vmatmul.bf16.gmra.mxu0 %v986
        %v1491 = vpop.f32.mrf.mxu0
        %v1492 = vadd.f32 %v1403, %v1491
        %v1493 = vpop.f32.mrf.mxu0
        %v1494 = vadd.f32 %v1405, %v1493
        %1495 = vmatmul.bf16.gmra.mxu0 %v988
        %v1496 = vpop.f32.mrf.mxu0
        %v1497 = vadd.f32 %v1408, %v1496
        %v1498 = vpop.f32.mrf.mxu0
        %v1499 = vadd.f32 %v1410, %v1498
        %1500 = vmatmul.bf16.gmra.mxu0 %v990
        %v1501 = vpop.f32.mrf.mxu0
        %v1502 = vadd.f32 %v1413, %v1501
        %v1503 = vpop.f32.mrf.mxu0
        %v1504 = vadd.f32 %v1415, %v1503
        %1505 = vmatmul.bf16.gmra.mxu0 %v992
        %v1506 = vpop.f32.mrf.mxu0
        %v1507 = vadd.f32 %v1418, %v1506
        %v1508 = vpop.f32.mrf.mxu0
        %v1509 = vadd.f32 %v1420, %v1508
        %1510 = vmatmul.bf16.gmra.mxu0 %v994
        %v1511 = vpop.f32.mrf.mxu0
        %v1512 = vadd.f32 %v1423, %v1511
        %v1513 = vpop.f32.mrf.mxu0
        %v1514 = vadd.f32 %v1425, %v1513
        %1515 = vmatmul.bf16.gmra.mxu0 %v996
        %v1516 = vpop.f32.mrf.mxu0
        %v1517 = vadd.f32 %v1428, %v1516
        %v1518 = vpop.f32.mrf.mxu0
        %v1519 = vadd.f32 %v1430, %v1518
        %1520 = vmatmul.bf16.gmra.mxu0 %v998
        %v1521 = vpop.f32.mrf.mxu0
        %v1522 = vadd.f32 %v1433, %v1521
        %v1523 = vpop.f32.mrf.mxu0
        %v1524 = vadd.f32 %v1435, %v1523
        %1525 = vmatmul.bf16.gmra.mxu0 %v1000
        %v1526 = vpop.f32.mrf.mxu0
        %v1527 = vadd.f32 %v1438, %v1526
        %v1528 = vpop.f32.mrf.mxu0
        %v1529 = vadd.f32 %v1440, %v1528
        %1530 = vmatmul.bf16.gmra.mxu0 %v1002
        %v1531 = vpop.f32.mrf.mxu0
        %v1532 = vadd.f32 %v1443, %v1531
        %v1533 = vpop.f32.mrf.mxu0
        %v1534 = vadd.f32 %v1445, %v1533
        %1535 = vmatmul.bf16.gmra.mxu0 %v1004
        %v1536 = vpop.f32.mrf.mxu0
        %v1537 = vadd.f32 %v1448, %v1536
        %v1538 = vpop.f32.mrf.mxu0
        %v1539 = vadd.f32 %v1450, %v1538
        %1540 = vmatmul.bf16.gmra.mxu0 %v1006
        %v1541 = vpop.f32.mrf.mxu0
        %v1542 = vadd.f32 %v1453, %v1541
        %v1543 = vpop.f32.mrf.mxu0
        %v1544 = vadd.f32 %v1455, %v1543
        %1545 = vmatmul.bf16.gmra.mxu0 %v1008
        %v1546 = vpop.f32.mrf.mxu0
        %v1547 = vadd.f32 %v1458, %v1546
        %v1548 = vpop.f32.mrf.mxu0
        %v1549 = vadd.f32 %v1460, %v1548
        %1550 = vmatmul.bf16.gmra.mxu0 %v1010
        %v1551 = vpop.f32.mrf.mxu0
        %v1552 = vadd.f32 %v1463, %v1551
        %v1553 = vpop.f32.mrf.mxu0
        %v1554 = vadd.f32 %v1465, %v1553
        %1555 = vmatmul.bf16.gmra.mxu0 %v1012
        %v1556 = vpop.f32.mrf.mxu0
        %v1557 = vadd.f32 %v1468, %v1556
        %v1558 = vpop.f32.mrf.mxu0
        %v1559 = vadd.f32 %v1470, %v1558
        %1560 = vmatmul.bf16.gmra.mxu0 %v1014
        %v1561 = vpop.f32.mrf.mxu0
        %v1562 = vadd.f32 %v1473, %v1561
        %v1563 = vpop.f32.mrf.mxu0
        %v1564 = vadd.f32 %v1475, %v1563
        %1565 = vmatmul.bf16.gmra.mxu0 %v1016
        %v1566 = vpop.f32.mrf.mxu0
        %v1567 = vadd.f32 %v1478, %v1566
        %v1568 = vpop.f32.mrf.mxu0
        %v1569 = vadd.f32 %v1480, %v1568
        %1570 = vdwg.mxu0
        %v1571 = vmax.f32 %v1314, 0.0
        %v1572 = vmax.f32 %v1492, 0.0
        %v1573 = vmax.f32 %v1316, 0.0
        %v1574 = vmax.f32 %v1494, 0.0
        %v1575 = vmax.f32 %v1319, 0.0
        %v1576 = vmax.f32 %v1497, 0.0
        %v1577 = vmax.f32 %v1321, 0.0
        %v1578 = vmax.f32 %v1499, 0.0
        %v1579 = vmax.f32 %v1324, 0.0
        %v1580 = vmax.f32 %v1502, 0.0
        %v1581 = vmax.f32 %v1326, 0.0
        %v1582 = vmax.f32 %v1504, 0.0
        %v1583 = vmax.f32 %v1329, 0.0
        %v1584 = vmax.f32 %v1507, 0.0
        %v1585 = vmax.f32 %v1331, 0.0
        %v1586 = vmax.f32 %v1509, 0.0
        %v1587 = vmax.f32 %v1334, 0.0
        %v1588 = vmax.f32 %v1512, 0.0
        %v1589 = vmax.f32 %v1336, 0.0
        %v1590 = vmax.f32 %v1514, 0.0
        %v1591 = vmax.f32 %v1339, 0.0
        %v1592 = vmax.f32 %v1517, 0.0
        %v1593 = vmax.f32 %v1341, 0.0
        %v1594 = vmax.f32 %v1519, 0.0
        %v1595 = vmax.f32 %v1344, 0.0
        %v1596 = vmax.f32 %v1522, 0.0
        %v1597 = vmax.f32 %v1346, 0.0
        %v1598 = vmax.f32 %v1524, 0.0
        %v1599 = vmax.f32 %v1349, 0.0
        %v1600 = vmax.f32 %v1527, 0.0
        %v1601 = vmax.f32 %v1351, 0.0
        %v1602 = vmax.f32 %v1529, 0.0
        %v1603 = vmax.f32 %v1354, 0.0
        %v1604 = vmax.f32 %v1532, 0.0
        %v1605 = vmax.f32 %v1356, 0.0
        %v1606 = vmax.f32 %v1534, 0.0
        %v1607 = vmax.f32 %v1359, 0.0
        %v1608 = vmax.f32 %v1537, 0.0
        %v1609 = vmax.f32 %v1361, 0.0
        %v1610 = vmax.f32 %v1539, 0.0
        %v1611 = vmax.f32 %v1364, 0.0
        %v1612 = vmax.f32 %v1542, 0.0
        %v1613 = vmax.f32 %v1366, 0.0
        %v1614 = vmax.f32 %v1544, 0.0
        %v1615 = vmax.f32 %v1369, 0.0
        %v1616 = vmax.f32 %v1547, 0.0
        %v1617 = vmax.f32 %v1371, 0.0
        %v1618 = vmax.f32 %v1549, 0.0
        %v1619 = vmax.f32 %v1374, 0.0
        %v1620 = vmax.f32 %v1552, 0.0
        %v1621 = vmax.f32 %v1376, 0.0
        %v1622 = vmax.f32 %v1554, 0.0
        %v1623 = vmax.f32 %v1379, 0.0
        %v1624 = vmax.f32 %v1557, 0.0
        %v1625 = vmax.f32 %v1381, 0.0
        %v1626 = vmax.f32 %v1559, 0.0
        %v1627 = vmax.f32 %v1384, 0.0
        %v1628 = vmax.f32 %v1562, 0.0
        %v1629 = vmax.f32 %v1386, 0.0
        %v1630 = vmax.f32 %v1564, 0.0
        %v1631 = vmax.f32 %v1389, 0.0
        %v1632 = vmax.f32 %v1567, 0.0
        %v1633 = vmax.f32 %v1391, 0.0
        %v1634 = vmax.f32 %v1569, 0.0
        %v1635 = vpack.c.bf16 %v1573, %v1571
        %v1636 = vpack.c.bf16 %v1574, %v1572
        %v1637 = vpack.c.bf16 %v1577, %v1575
        %v1638 = vpack.c.bf16 %v1578, %v1576
        %v1639 = vpack.c.bf16 %v1581, %v1579
        %v1640 = vpack.c.bf16 %v1582, %v1580
        %v1641 = vpack.c.bf16 %v1585, %v1583
        %v1642 = vpack.c.bf16 %v1586, %v1584
        %v1643 = vpack.c.bf16 %v1589, %v1587
        %v1644 = vpack.c.bf16 %v1590, %v1588
        %v1645 = vpack.c.bf16 %v1593, %v1591
        %v1646 = vpack.c.bf16 %v1594, %v1592
        %v1647 = vpack.c.bf16 %v1597, %v1595
        %v1648 = vpack.c.bf16 %v1598, %v1596
        %v1649 = vpack.c.bf16 %v1601, %v1599
        %v1650 = vpack.c.bf16 %v1602, %v1600
        %v1651 = vpack.c.bf16 %v1605, %v1603
        %v1652 = vpack.c.bf16 %v1606, %v1604
        %v1653 = vpack.c.bf16 %v1609, %v1607
        %v1654 = vpack.c.bf16 %v1610, %v1608
        %v1655 = vpack.c.bf16 %v1613, %v1611
        %v1656 = vpack.c.bf16 %v1614, %v1612
        %v1657 = vpack.c.bf16 %v1617, %v1615
        %v1658 = vpack.c.bf16 %v1618, %v1616
        %v1659 = vpack.c.bf16 %v1621, %v1619
        %v1660 = vpack.c.bf16 %v1622, %v1620
        %v1661 = vpack.c.bf16 %v1625, %v1623
        %v1662 = vpack.c.bf16 %v1626, %v1624
        %v1663 = vpack.c.bf16 %v1629, %v1627
        %v1664 = vpack.c.bf16 %v1630, %v1628
        %v1665 = vpack.c.bf16 %v1633, %v1631
        %v1666 = vpack.c.bf16 %v1634, %v1632
        %v1667 = vld [vmem:[#allocation10] sm:$0xff]
        %v1668 = vld [vmem:[#allocation10 + $0x8] sm:$0xff]
        %v1669 = vld [vmem:[#allocation10 + $0x10] sm:$0xff]
        %v1670 = vld [vmem:[#allocation10 + $0x18] sm:$0xff]
        %v1671 = vld [vmem:[#allocation10 + $0x20] sm:$0xff]
        %v1672 = vld [vmem:[#allocation10 + $0x28] sm:$0xff]
        %v1673 = vld [vmem:[#allocation10 + $0x30] sm:$0xff]
        %v1674 = vld [vmem:[#allocation10 + $0x38] sm:$0xff]
        %v1675 = vld [vmem:[#allocation10 + $0x40] sm:$0xff]
        %v1676 = vld [vmem:[#allocation10 + $0x48] sm:$0xff]
        %v1677 = vld [vmem:[#allocation10 + $0x50] sm:$0xff]
        %v1678 = vld [vmem:[#allocation10 + $0x58] sm:$0xff]
        %v1679 = vld [vmem:[#allocation10 + $0x60] sm:$0xff]
        %v1680 = vld [vmem:[#allocation10 + $0x68] sm:$0xff]
        %v1681 = vld [vmem:[#allocation10 + $0x70] sm:$0xff]
        %v1682 = vld [vmem:[#allocation10 + $0x78] sm:$0xff]
        %v1683 = vld [vmem:[#allocation10 + $0x80] sm:$0xff]
        %v1684 = vld [vmem:[#allocation10 + $0x88] sm:$0xff]
        %v1685 = vld [vmem:[#allocation10 + $0x90] sm:$0xff]
        %v1686 = vld [vmem:[#allocation10 + $0x98] sm:$0xff]
        %v1687 = vld [vmem:[#allocation10 + $0xa0] sm:$0xff]
        %v1688 = vld [vmem:[#allocation10 + $0xa8] sm:$0xff]
        %v1689 = vld [vmem:[#allocation10 + $0xb0] sm:$0xff]
        %v1690 = vld [vmem:[#allocation10 + $0xb8] sm:$0xff]
        %v1691 = vld [vmem:[#allocation10 + $0xc0] sm:$0xff]
        %v1692 = vld [vmem:[#allocation10 + $0xc8] sm:$0xff]
        %v1693 = vld [vmem:[#allocation10 + $0xd0] sm:$0xff]
        %v1694 = vld [vmem:[#allocation10 + $0xd8] sm:$0xff]
        %v1695 = vld [vmem:[#allocation10 + $0xe0] sm:$0xff]
        %v1696 = vld [vmem:[#allocation10 + $0xe8] sm:$0xff]
        %v1697 = vld [vmem:[#allocation10 + $0xf0] sm:$0xff]
        %v1698 = vld [vmem:[#allocation10 + $0xf8] sm:$0xff]
        %v1699 = vld [vmem:[%s6] sm:$0x3]
        %v1701 = vperm.slane %v1699, 0
        %v1702 = vperm.slane %v1699, 1
        %v1737 = vunpack.c.l.b16 %v1667
        %v1738 = vunpack.c.h.b16 %v1667
        %v1739 = vunpack.c.l.b16 %v1668
        %v1740 = vunpack.c.h.b16 %v1668
        %v1741 = vunpack.c.l.b16 %v1669
        %v1742 = vunpack.c.h.b16 %v1669
        %v1743 = vunpack.c.l.b16 %v1670
        %v1744 = vunpack.c.h.b16 %v1670
        %v1745 = vunpack.c.l.b16 %v1671
        %v1746 = vunpack.c.h.b16 %v1671
        %v1747 = vunpack.c.l.b16 %v1672
        %v1748 = vunpack.c.h.b16 %v1672
        %v1749 = vunpack.c.l.b16 %v1673
        %v1750 = vunpack.c.h.b16 %v1673
        %v1751 = vunpack.c.l.b16 %v1674
        %v1752 = vunpack.c.h.b16 %v1674
        %v1753 = vunpack.c.l.b16 %v1675
        %v1754 = vunpack.c.h.b16 %v1675
        %v1755 = vunpack.c.l.b16 %v1676
        %v1756 = vunpack.c.h.b16 %v1676
        %v1757 = vunpack.c.l.b16 %v1677
        %v1758 = vunpack.c.h.b16 %v1677
        %v1759 = vunpack.c.l.b16 %v1678
        %v1760 = vunpack.c.h.b16 %v1678
        %v1761 = vunpack.c.l.b16 %v1679
        %v1762 = vunpack.c.h.b16 %v1679
        %v1763 = vunpack.c.l.b16 %v1680
        %v1764 = vunpack.c.h.b16 %v1680
        %v1765 = vunpack.c.l.b16 %v1681
        %v1766 = vunpack.c.h.b16 %v1681
        %v1767 = vunpack.c.l.b16 %v1682
        %v1768 = vunpack.c.h.b16 %v1682
        %v1769 = vunpack.c.l.b16 %v1683
        %v1770 = vunpack.c.h.b16 %v1683
        %v1771 = vunpack.c.l.b16 %v1684
        %v1772 = vunpack.c.h.b16 %v1684
        %v1773 = vunpack.c.l.b16 %v1685
        %v1774 = vunpack.c.h.b16 %v1685
        %v1775 = vunpack.c.l.b16 %v1686
        %v1776 = vunpack.c.h.b16 %v1686
        %v1777 = vunpack.c.l.b16 %v1687
        %v1778 = vunpack.c.h.b16 %v1687
        %v1779 = vunpack.c.l.b16 %v1688
        %v1780 = vunpack.c.h.b16 %v1688
        %v1781 = vunpack.c.l.b16 %v1689
        %v1782 = vunpack.c.h.b16 %v1689
        %v1783 = vunpack.c.l.b16 %v1690
        %v1784 = vunpack.c.h.b16 %v1690
        %v1785 = vunpack.c.l.b16 %v1691
        %v1786 = vunpack.c.h.b16 %v1691
        %v1787 = vunpack.c.l.b16 %v1692
        %v1788 = vunpack.c.h.b16 %v1692
        %v1789 = vunpack.c.l.b16 %v1693
        %v1790 = vunpack.c.h.b16 %v1693
        %v1791 = vunpack.c.l.b16 %v1694
        %v1792 = vunpack.c.h.b16 %v1694
        %v1793 = vunpack.c.l.b16 %v1695
        %v1794 = vunpack.c.h.b16 %v1695
        %v1795 = vunpack.c.l.b16 %v1696
        %v1796 = vunpack.c.h.b16 %v1696
        %v1797 = vunpack.c.l.b16 %v1697
        %v1798 = vunpack.c.h.b16 %v1697
        %v1799 = vunpack.c.l.b16 %v1698
        %v1800 = vunpack.c.h.b16 %v1698
        %v1801 = vpack.c.b16 %v1739, %v1737
        %v1802 = vpack.c.b16 %v1740, %v1738
        %v1803 = vpack.c.b16 %v1743, %v1741
        %v1804 = vpack.c.b16 %v1744, %v1742
        %v1805 = vpack.c.b16 %v1747, %v1745
        %v1806 = vpack.c.b16 %v1748, %v1746
        %v1807 = vpack.c.b16 %v1751, %v1749
        %v1808 = vpack.c.b16 %v1752, %v1750
        %v1809 = vpack.c.b16 %v1755, %v1753
        %v1810 = vpack.c.b16 %v1756, %v1754
        %v1811 = vpack.c.b16 %v1759, %v1757
        %v1812 = vpack.c.b16 %v1760, %v1758
        %v1813 = vpack.c.b16 %v1763, %v1761
        %v1814 = vpack.c.b16 %v1764, %v1762
        %v1815 = vpack.c.b16 %v1767, %v1765
        %v1816 = vpack.c.b16 %v1768, %v1766
        %v1817 = vpack.c.b16 %v1771, %v1769
        %v1818 = vpack.c.b16 %v1772, %v1770
        %v1819 = vpack.c.b16 %v1775, %v1773
        %v1820 = vpack.c.b16 %v1776, %v1774
        %v1821 = vpack.c.b16 %v1779, %v1777
        %v1822 = vpack.c.b16 %v1780, %v1778
        %v1823 = vpack.c.b16 %v1783, %v1781
        %v1824 = vpack.c.b16 %v1784, %v1782
        %v1825 = vpack.c.b16 %v1787, %v1785
        %v1826 = vpack.c.b16 %v1788, %v1786
        %v1827 = vpack.c.b16 %v1791, %v1789
        %v1828 = vpack.c.b16 %v1792, %v1790
        %v1829 = vpack.c.b16 %v1795, %v1793
        %v1830 = vpack.c.b16 %v1796, %v1794
        %v1831 = vpack.c.b16 %v1799, %v1797
        %v1832 = vpack.c.b16 %v1800, %v1798
        %1865 = vmatpush.bf16.msra.mxu0 %v1815
        %1866 = vmatpush.bf16.msra.mxu0 %v1813
        %1867 = vmatpush.bf16.msra.mxu0 %v1811
        %1868 = vmatpush.bf16.msra.mxu0 %v1809
        %1869 = vmatpush.bf16.msra.mxu0 %v1807
        %1870 = vmatpush.bf16.msra.mxu0 %v1805
        %1871 = vmatpush.bf16.msra.mxu0 %v1803
        %1872 = vmatpush.bf16.msra.mxu0 %v1801
        %1873 = vmatmul.bf16.gmra.mxu0 %v1635
        %v1874 = vpop.f32.mrf.mxu0
        %v1875 = vadd.f32 %v1701, %v1874
        %v1876 = vpop.f32.mrf.mxu0
        %v1877 = vadd.f32 %v1701, %v1876
        %1878 = vmatmul.bf16.gmra.mxu0 %v1637
        %v1879 = vpop.f32.mrf.mxu0
        %v1880 = vadd.f32 %v1701, %v1879
        %v1881 = vpop.f32.mrf.mxu0
        %v1882 = vadd.f32 %v1701, %v1881
        %1883 = vmatmul.bf16.gmra.mxu0 %v1639
        %v1884 = vpop.f32.mrf.mxu0
        %v1885 = vadd.f32 %v1701, %v1884
        %v1886 = vpop.f32.mrf.mxu0
        %v1887 = vadd.f32 %v1701, %v1886
        %1888 = vmatmul.bf16.gmra.mxu0 %v1641
        %v1889 = vpop.f32.mrf.mxu0
        %v1890 = vadd.f32 %v1701, %v1889
        %v1891 = vpop.f32.mrf.mxu0
        %v1892 = vadd.f32 %v1701, %v1891
        %1893 = vmatmul.bf16.gmra.mxu0 %v1643
        %v1894 = vpop.f32.mrf.mxu0
        %v1895 = vadd.f32 %v1701, %v1894
        %v1896 = vpop.f32.mrf.mxu0
        %v1897 = vadd.f32 %v1701, %v1896
        %1898 = vmatmul.bf16.gmra.mxu0 %v1645
        %v1899 = vpop.f32.mrf.mxu0
        %v1900 = vadd.f32 %v1701, %v1899
        %v1901 = vpop.f32.mrf.mxu0
        %v1902 = vadd.f32 %v1701, %v1901
        %1903 = vmatmul.bf16.gmra.mxu0 %v1647
        %v1904 = vpop.f32.mrf.mxu0
        %v1905 = vadd.f32 %v1701, %v1904
        %v1906 = vpop.f32.mrf.mxu0
        %v1907 = vadd.f32 %v1701, %v1906
        %1908 = vmatmul.bf16.gmra.mxu0 %v1649
        %v1909 = vpop.f32.mrf.mxu0
        %v1910 = vadd.f32 %v1701, %v1909
        %v1911 = vpop.f32.mrf.mxu0
        %v1912 = vadd.f32 %v1701, %v1911
        %1913 = vmatmul.bf16.gmra.mxu0 %v1651
        %v1914 = vpop.f32.mrf.mxu0
        %v1915 = vadd.f32 %v1701, %v1914
        %v1916 = vpop.f32.mrf.mxu0
        %v1917 = vadd.f32 %v1701, %v1916
        %1918 = vmatmul.bf16.gmra.mxu0 %v1653
        %v1919 = vpop.f32.mrf.mxu0
        %v1920 = vadd.f32 %v1701, %v1919
        %v1921 = vpop.f32.mrf.mxu0
        %v1922 = vadd.f32 %v1701, %v1921
        %1923 = vmatmul.bf16.gmra.mxu0 %v1655
        %v1924 = vpop.f32.mrf.mxu0
        %v1925 = vadd.f32 %v1701, %v1924
        %v1926 = vpop.f32.mrf.mxu0
        %v1927 = vadd.f32 %v1701, %v1926
        %1928 = vmatmul.bf16.gmra.mxu0 %v1657
        %v1929 = vpop.f32.mrf.mxu0
        %v1930 = vadd.f32 %v1701, %v1929
        %v1931 = vpop.f32.mrf.mxu0
        %v1932 = vadd.f32 %v1701, %v1931
        %1933 = vmatmul.bf16.gmra.mxu0 %v1659
        %v1934 = vpop.f32.mrf.mxu0
        %v1935 = vadd.f32 %v1701, %v1934
        %v1936 = vpop.f32.mrf.mxu0
        %v1937 = vadd.f32 %v1701, %v1936
        %1938 = vmatmul.bf16.gmra.mxu0 %v1661
        %v1939 = vpop.f32.mrf.mxu0
        %v1940 = vadd.f32 %v1701, %v1939
        %v1941 = vpop.f32.mrf.mxu0
        %v1942 = vadd.f32 %v1701, %v1941
        %1943 = vmatmul.bf16.gmra.mxu0 %v1663
        %v1944 = vpop.f32.mrf.mxu0
        %v1945 = vadd.f32 %v1701, %v1944
        %v1946 = vpop.f32.mrf.mxu0
        %v1947 = vadd.f32 %v1701, %v1946
        %1948 = vmatmul.bf16.gmra.mxu0 %v1665
        %v1949 = vpop.f32.mrf.mxu0
        %v1950 = vadd.f32 %v1701, %v1949
        %v1951 = vpop.f32.mrf.mxu0
        %v1952 = vadd.f32 %v1701, %v1951
        %1953 = vdwg.mxu0
        %1954 = vmatpush.bf16.msra.mxu0 %v1831
        %1955 = vmatpush.bf16.msra.mxu0 %v1829
        %1956 = vmatpush.bf16.msra.mxu0 %v1827
        %1957 = vmatpush.bf16.msra.mxu0 %v1825
        %1958 = vmatpush.bf16.msra.mxu0 %v1823
        %1959 = vmatpush.bf16.msra.mxu0 %v1821
        %1960 = vmatpush.bf16.msra.mxu0 %v1819
        %1961 = vmatpush.bf16.msra.mxu0 %v1817
        %1962 = vmatmul.bf16.gmra.mxu0 %v1636
        %v1963 = vpop.f32.mrf.mxu0
        %v1964 = vadd.f32 %v1875, %v1963
        %v1965 = vpop.f32.mrf.mxu0
        %v1966 = vadd.f32 %v1877, %v1965
        %1967 = vmatmul.bf16.gmra.mxu0 %v1638
        %v1968 = vpop.f32.mrf.mxu0
        %v1969 = vadd.f32 %v1880, %v1968
        %v1970 = vpop.f32.mrf.mxu0
        %v1971 = vadd.f32 %v1882, %v1970
        %1972 = vmatmul.bf16.gmra.mxu0 %v1640
        %v1973 = vpop.f32.mrf.mxu0
        %v1974 = vadd.f32 %v1885, %v1973
        %v1975 = vpop.f32.mrf.mxu0
        %v1976 = vadd.f32 %v1887, %v1975
        %1977 = vmatmul.bf16.gmra.mxu0 %v1642
        %v1978 = vpop.f32.mrf.mxu0
        %v1979 = vadd.f32 %v1890, %v1978
        %v1980 = vpop.f32.mrf.mxu0
        %v1981 = vadd.f32 %v1892, %v1980
        %1982 = vmatmul.bf16.gmra.mxu0 %v1644
        %v1983 = vpop.f32.mrf.mxu0
        %v1984 = vadd.f32 %v1895, %v1983
        %v1985 = vpop.f32.mrf.mxu0
        %v1986 = vadd.f32 %v1897, %v1985
        %1987 = vmatmul.bf16.gmra.mxu0 %v1646
        %v1988 = vpop.f32.mrf.mxu0
        %v1989 = vadd.f32 %v1900, %v1988
        %v1990 = vpop.f32.mrf.mxu0
        %v1991 = vadd.f32 %v1902, %v1990
        %1992 = vmatmul.bf16.gmra.mxu0 %v1648
        %v1993 = vpop.f32.mrf.mxu0
        %v1994 = vadd.f32 %v1905, %v1993
        %v1995 = vpop.f32.mrf.mxu0
        %v1996 = vadd.f32 %v1907, %v1995
        %1997 = vmatmul.bf16.gmra.mxu0 %v1650
        %v1998 = vpop.f32.mrf.mxu0
        %v1999 = vadd.f32 %v1910, %v1998
        %v2000 = vpop.f32.mrf.mxu0
        %v2001 = vadd.f32 %v1912, %v2000
        %2002 = vmatmul.bf16.gmra.mxu0 %v1652
        %v2003 = vpop.f32.mrf.mxu0
        %v2004 = vadd.f32 %v1915, %v2003
        %v2005 = vpop.f32.mrf.mxu0
        %v2006 = vadd.f32 %v1917, %v2005
        %2007 = vmatmul.bf16.gmra.mxu0 %v1654
        %v2008 = vpop.f32.mrf.mxu0
        %v2009 = vadd.f32 %v1920, %v2008
        %v2010 = vpop.f32.mrf.mxu0
        %v2011 = vadd.f32 %v1922, %v2010
        %2012 = vmatmul.bf16.gmra.mxu0 %v1656
        %v2013 = vpop.f32.mrf.mxu0
        %v2014 = vadd.f32 %v1925, %v2013
        %v2015 = vpop.f32.mrf.mxu0
        %v2016 = vadd.f32 %v1927, %v2015
        %2017 = vmatmul.bf16.gmra.mxu0 %v1658
        %v2018 = vpop.f32.mrf.mxu0
        %v2019 = vadd.f32 %v1930, %v2018
        %v2020 = vpop.f32.mrf.mxu0
        %v2021 = vadd.f32 %v1932, %v2020
        %2022 = vmatmul.bf16.gmra.mxu0 %v1660
        %v2023 = vpop.f32.mrf.mxu0
        %v2024 = vadd.f32 %v1935, %v2023
        %v2025 = vpop.f32.mrf.mxu0
        %v2026 = vadd.f32 %v1937, %v2025
        %2027 = vmatmul.bf16.gmra.mxu0 %v1662
        %v2028 = vpop.f32.mrf.mxu0
        %v2029 = vadd.f32 %v1940, %v2028
        %v2030 = vpop.f32.mrf.mxu0
        %v2031 = vadd.f32 %v1942, %v2030
        %2032 = vmatmul.bf16.gmra.mxu0 %v1664
        %v2033 = vpop.f32.mrf.mxu0
        %v2034 = vadd.f32 %v1945, %v2033
        %v2035 = vpop.f32.mrf.mxu0
        %v2036 = vadd.f32 %v1947, %v2035
        %2037 = vmatmul.bf16.gmra.mxu0 %v1666
        %v2038 = vpop.f32.mrf.mxu0
        %v2039 = vadd.f32 %v1950, %v2038
        %v2040 = vpop.f32.mrf.mxu0
        %v2041 = vadd.f32 %v1952, %v2040
        %2042 = vdwg.mxu0
        %2043 = vmatpush.bf16.msra.mxu0 %v1816
        %2044 = vmatpush.bf16.msra.mxu0 %v1814
        %2045 = vmatpush.bf16.msra.mxu0 %v1812
        %2046 = vmatpush.bf16.msra.mxu0 %v1810
        %2047 = vmatpush.bf16.msra.mxu0 %v1808
        %2048 = vmatpush.bf16.msra.mxu0 %v1806
        %2049 = vmatpush.bf16.msra.mxu0 %v1804
        %2050 = vmatpush.bf16.msra.mxu0 %v1802
        %2051 = vmatmul.bf16.gmra.mxu0 %v1635
        %v2052 = vpop.f32.mrf.mxu0
        %v2053 = vadd.f32 %v1702, %v2052
        %v2054 = vpop.f32.mrf.mxu0
        %v2055 = vadd.f32 %v1702, %v2054
        %2056 = vmatmul.bf16.gmra.mxu0 %v1637
        %v2057 = vpop.f32.mrf.mxu0
        %v2058 = vadd.f32 %v1702, %v2057
        %v2059 = vpop.f32.mrf.mxu0
        %v2060 = vadd.f32 %v1702, %v2059
        %2061 = vmatmul.bf16.gmra.mxu0 %v1639
        %v2062 = vpop.f32.mrf.mxu0
        %v2063 = vadd.f32 %v1702, %v2062
        %v2064 = vpop.f32.mrf.mxu0
        %v2065 = vadd.f32 %v1702, %v2064
        %2066 = vmatmul.bf16.gmra.mxu0 %v1641
        %v2067 = vpop.f32.mrf.mxu0
        %v2068 = vadd.f32 %v1702, %v2067
        %v2069 = vpop.f32.mrf.mxu0
        %v2070 = vadd.f32 %v1702, %v2069
        %2071 = vmatmul.bf16.gmra.mxu0 %v1643
        %v2072 = vpop.f32.mrf.mxu0
        %v2073 = vadd.f32 %v1702, %v2072
        %v2074 = vpop.f32.mrf.mxu0
        %v2075 = vadd.f32 %v1702, %v2074
        %2076 = vmatmul.bf16.gmra.mxu0 %v1645
        %v2077 = vpop.f32.mrf.mxu0
        %v2078 = vadd.f32 %v1702, %v2077
        %v2079 = vpop.f32.mrf.mxu0
        %v2080 = vadd.f32 %v1702, %v2079
        %2081 = vmatmul.bf16.gmra.mxu0 %v1647
        %v2082 = vpop.f32.mrf.mxu0
        %v2083 = vadd.f32 %v1702, %v2082
        %v2084 = vpop.f32.mrf.mxu0
        %v2085 = vadd.f32 %v1702, %v2084
        %2086 = vmatmul.bf16.gmra.mxu0 %v1649
        %v2087 = vpop.f32.mrf.mxu0
        %v2088 = vadd.f32 %v1702, %v2087
        %v2089 = vpop.f32.mrf.mxu0
        %v2090 = vadd.f32 %v1702, %v2089
        %2091 = vmatmul.bf16.gmra.mxu0 %v1651
        %v2092 = vpop.f32.mrf.mxu0
        %v2093 = vadd.f32 %v1702, %v2092
        %v2094 = vpop.f32.mrf.mxu0
        %v2095 = vadd.f32 %v1702, %v2094
        %2096 = vmatmul.bf16.gmra.mxu0 %v1653
        %v2097 = vpop.f32.mrf.mxu0
        %v2098 = vadd.f32 %v1702, %v2097
        %v2099 = vpop.f32.mrf.mxu0
        %v2100 = vadd.f32 %v1702, %v2099
        %2101 = vmatmul.bf16.gmra.mxu0 %v1655
        %v2102 = vpop.f32.mrf.mxu0
        %v2103 = vadd.f32 %v1702, %v2102
        %v2104 = vpop.f32.mrf.mxu0
        %v2105 = vadd.f32 %v1702, %v2104
        %2106 = vmatmul.bf16.gmra.mxu0 %v1657
        %v2107 = vpop.f32.mrf.mxu0
        %v2108 = vadd.f32 %v1702, %v2107
        %v2109 = vpop.f32.mrf.mxu0
        %v2110 = vadd.f32 %v1702, %v2109
        %2111 = vmatmul.bf16.gmra.mxu0 %v1659
        %v2112 = vpop.f32.mrf.mxu0
        %v2113 = vadd.f32 %v1702, %v2112
        %v2114 = vpop.f32.mrf.mxu0
        %v2115 = vadd.f32 %v1702, %v2114
        %2116 = vmatmul.bf16.gmra.mxu0 %v1661
        %v2117 = vpop.f32.mrf.mxu0
        %v2118 = vadd.f32 %v1702, %v2117
        %v2119 = vpop.f32.mrf.mxu0
        %v2120 = vadd.f32 %v1702, %v2119
        %2121 = vmatmul.bf16.gmra.mxu0 %v1663
        %v2122 = vpop.f32.mrf.mxu0
        %v2123 = vadd.f32 %v1702, %v2122
        %v2124 = vpop.f32.mrf.mxu0
        %v2125 = vadd.f32 %v1702, %v2124
        %2126 = vmatmul.bf16.gmra.mxu0 %v1665
        %v2127 = vpop.f32.mrf.mxu0
        %v2128 = vadd.f32 %v1702, %v2127
        %v2129 = vpop.f32.mrf.mxu0
        %v2130 = vadd.f32 %v1702, %v2129
        %2131 = vdwg.mxu0
        %2132 = vmatpush.bf16.msra.mxu0 %v1832
        %2133 = vmatpush.bf16.msra.mxu0 %v1830
        %2134 = vmatpush.bf16.msra.mxu0 %v1828
        %2135 = vmatpush.bf16.msra.mxu0 %v1826
        %2136 = vmatpush.bf16.msra.mxu0 %v1824
        %2137 = vmatpush.bf16.msra.mxu0 %v1822
        %2138 = vmatpush.bf16.msra.mxu0 %v1820
        %2139 = vmatpush.bf16.msra.mxu0 %v1818
        %2140 = vmatmul.bf16.gmra.mxu0 %v1636
        %v2141 = vpop.f32.mrf.mxu0
        %v2142 = vadd.f32 %v2053, %v2141
        %v2143 = vpop.f32.mrf.mxu0
        %v2144 = vadd.f32 %v2055, %v2143
        %2145 = vmatmul.bf16.gmra.mxu0 %v1638
        %v2146 = vpop.f32.mrf.mxu0
        %v2147 = vadd.f32 %v2058, %v2146
        %v2148 = vpop.f32.mrf.mxu0
        %v2149 = vadd.f32 %v2060, %v2148
        %2150 = vmatmul.bf16.gmra.mxu0 %v1640
        %v2151 = vpop.f32.mrf.mxu0
        %v2152 = vadd.f32 %v2063, %v2151
        %v2153 = vpop.f32.mrf.mxu0
        %v2154 = vadd.f32 %v2065, %v2153
        %2155 = vmatmul.bf16.gmra.mxu0 %v1642
        %v2156 = vpop.f32.mrf.mxu0
        %v2157 = vadd.f32 %v2068, %v2156
        %v2158 = vpop.f32.mrf.mxu0
        %v2159 = vadd.f32 %v2070, %v2158
        %2160 = vmatmul.bf16.gmra.mxu0 %v1644
        %v2161 = vpop.f32.mrf.mxu0
        %v2162 = vadd.f32 %v2073, %v2161
        %v2163 = vpop.f32.mrf.mxu0
        %v2164 = vadd.f32 %v2075, %v2163
        %2165 = vmatmul.bf16.gmra.mxu0 %v1646
        %v2166 = vpop.f32.mrf.mxu0
        %v2167 = vadd.f32 %v2078, %v2166
        %v2168 = vpop.f32.mrf.mxu0
        %v2169 = vadd.f32 %v2080, %v2168
        %2170 = vmatmul.bf16.gmra.mxu0 %v1648
        %v2171 = vpop.f32.mrf.mxu0
        %v2172 = vadd.f32 %v2083, %v2171
        %v2173 = vpop.f32.mrf.mxu0
        %v2174 = vadd.f32 %v2085, %v2173
        %2175 = vmatmul.bf16.gmra.mxu0 %v1650
        %v2176 = vpop.f32.mrf.mxu0
        %v2177 = vadd.f32 %v2088, %v2176
        %v2178 = vpop.f32.mrf.mxu0
        %v2179 = vadd.f32 %v2090, %v2178
        %2180 = vmatmul.bf16.gmra.mxu0 %v1652
        %v2181 = vpop.f32.mrf.mxu0
        %v2182 = vadd.f32 %v2093, %v2181
        %v2183 = vpop.f32.mrf.mxu0
        %v2184 = vadd.f32 %v2095, %v2183
        %2185 = vmatmul.bf16.gmra.mxu0 %v1654
        %v2186 = vpop.f32.mrf.mxu0
        %v2187 = vadd.f32 %v2098, %v2186
        %v2188 = vpop.f32.mrf.mxu0
        %v2189 = vadd.f32 %v2100, %v2188
        %2190 = vmatmul.bf16.gmra.mxu0 %v1656
        %v2191 = vpop.f32.mrf.mxu0
        %v2192 = vadd.f32 %v2103, %v2191
        %v2193 = vpop.f32.mrf.mxu0
        %v2194 = vadd.f32 %v2105, %v2193
        %2195 = vmatmul.bf16.gmra.mxu0 %v1658
        %v2196 = vpop.f32.mrf.mxu0
        %v2197 = vadd.f32 %v2108, %v2196
        %v2198 = vpop.f32.mrf.mxu0
        %v2199 = vadd.f32 %v2110, %v2198
        %2200 = vmatmul.bf16.gmra.mxu0 %v1660
        %v2201 = vpop.f32.mrf.mxu0
        %v2202 = vadd.f32 %v2113, %v2201
        %v2203 = vpop.f32.mrf.mxu0
        %v2204 = vadd.f32 %v2115, %v2203
        %2205 = vmatmul.bf16.gmra.mxu0 %v1662
        %v2206 = vpop.f32.mrf.mxu0
        %v2207 = vadd.f32 %v2118, %v2206
        %v2208 = vpop.f32.mrf.mxu0
        %v2209 = vadd.f32 %v2120, %v2208
        %2210 = vmatmul.bf16.gmra.mxu0 %v1664
        %v2211 = vpop.f32.mrf.mxu0
        %v2212 = vadd.f32 %v2123, %v2211
        %v2213 = vpop.f32.mrf.mxu0
        %v2214 = vadd.f32 %v2125, %v2213
        %2215 = vmatmul.bf16.gmra.mxu0 %v1666
        %v2216 = vpop.f32.mrf.mxu0
        %v2217 = vadd.f32 %v2128, %v2216
        %v2218 = vpop.f32.mrf.mxu0
        %v2219 = vadd.f32 %v2130, %v2218
        %2220 = vdwg.mxu0
        %v2221 = vadd.f32 %v1964, %v817
        %v2222 = vadd.f32 %v2142, %v906
        %v2223 = vadd.f32 %v1966, %v819
        %v2224 = vadd.f32 %v2144, %v908
        %v2225 = vadd.f32 %v1969, %v822
        %v2226 = vadd.f32 %v2147, %v911
        %v2227 = vadd.f32 %v1971, %v824
        %v2228 = vadd.f32 %v2149, %v913
        %v2229 = vadd.f32 %v1974, %v827
        %v2230 = vadd.f32 %v2152, %v916
        %v2231 = vadd.f32 %v1976, %v829
        %v2232 = vadd.f32 %v2154, %v918
        %v2233 = vadd.f32 %v1979, %v832
        %v2234 = vadd.f32 %v2157, %v921
        %v2235 = vadd.f32 %v1981, %v834
        %v2236 = vadd.f32 %v2159, %v923
        %v2237 = vadd.f32 %v1984, %v837
        %v2238 = vadd.f32 %v2162, %v926
        %v2239 = vadd.f32 %v1986, %v839
        %v2240 = vadd.f32 %v2164, %v928
        %v2241 = vadd.f32 %v1989, %v842
        %v2242 = vadd.f32 %v2167, %v931
        %v2243 = vadd.f32 %v1991, %v844
        %v2244 = vadd.f32 %v2169, %v933
        %v2245 = vadd.f32 %v1994, %v847
        %v2246 = vadd.f32 %v2172, %v936
        %v2247 = vadd.f32 %v1996, %v849
        %v2248 = vadd.f32 %v2174, %v938
        %v2249 = vadd.f32 %v1999, %v852
        %v2250 = vadd.f32 %v2177, %v941
        %v2251 = vadd.f32 %v2001, %v854
        %v2252 = vadd.f32 %v2179, %v943
        %v2253 = vadd.f32 %v2004, %v857
        %v2254 = vadd.f32 %v2182, %v946
        %v2255 = vadd.f32 %v2006, %v859
        %v2256 = vadd.f32 %v2184, %v948
        %v2257 = vadd.f32 %v2009, %v862
        %v2258 = vadd.f32 %v2187, %v951
        %v2259 = vadd.f32 %v2011, %v864
        %v2260 = vadd.f32 %v2189, %v953
        %v2261 = vadd.f32 %v2014, %v867
        %v2262 = vadd.f32 %v2192, %v956
        %v2263 = vadd.f32 %v2016, %v869
        %v2264 = vadd.f32 %v2194, %v958
        %v2265 = vadd.f32 %v2019, %v872
        %v2266 = vadd.f32 %v2197, %v961
        %v2267 = vadd.f32 %v2021, %v874
        %v2268 = vadd.f32 %v2199, %v963
        %v2269 = vadd.f32 %v2024, %v877
        %v2270 = vadd.f32 %v2202, %v966
        %v2271 = vadd.f32 %v2026, %v879
        %v2272 = vadd.f32 %v2204, %v968
        %v2273 = vadd.f32 %v2029, %v882
        %v2274 = vadd.f32 %v2207, %v971
        %v2275 = vadd.f32 %v2031, %v884
        %v2276 = vadd.f32 %v2209, %v973
        %v2277 = vadd.f32 %v2034, %v887
        %v2278 = vadd.f32 %v2212, %v976
        %v2279 = vadd.f32 %v2036, %v889
        %v2280 = vadd.f32 %v2214, %v978
        %v2281 = vadd.f32 %v2039, %v892
        %v2282 = vadd.f32 %v2217, %v981
        %v2283 = vadd.f32 %v2041, %v894
        %v2284 = vadd.f32 %v2219, %v983
        %v2285 = vmax.f32 %v2221, 0.0
        %v2286 = vmax.f32 %v2222, 0.0
        %v2287 = vmax.f32 %v2223, 0.0
        %v2288 = vmax.f32 %v2224, 0.0
        %v2289 = vmax.f32 %v2225, 0.0
        %v2290 = vmax.f32 %v2226, 0.0
        %v2291 = vmax.f32 %v2227, 0.0
        %v2292 = vmax.f32 %v2228, 0.0
        %v2293 = vmax.f32 %v2229, 0.0
        %v2294 = vmax.f32 %v2230, 0.0
        %v2295 = vmax.f32 %v2231, 0.0
        %v2296 = vmax.f32 %v2232, 0.0
        %v2297 = vmax.f32 %v2233, 0.0
        %v2298 = vmax.f32 %v2234, 0.0
        %v2299 = vmax.f32 %v2235, 0.0
        %v2300 = vmax.f32 %v2236, 0.0
        %v2301 = vmax.f32 %v2237, 0.0
        %v2302 = vmax.f32 %v2238, 0.0
        %v2303 = vmax.f32 %v2239, 0.0
        %v2304 = vmax.f32 %v2240, 0.0
        %v2305 = vmax.f32 %v2241, 0.0
        %v2306 = vmax.f32 %v2242, 0.0
        %v2307 = vmax.f32 %v2243, 0.0
        %v2308 = vmax.f32 %v2244, 0.0
        %v2309 = vmax.f32 %v2245, 0.0
        %v2310 = vmax.f32 %v2246, 0.0
        %v2311 = vmax.f32 %v2247, 0.0
        %v2312 = vmax.f32 %v2248, 0.0
        %v2313 = vmax.f32 %v2249, 0.0
        %v2314 = vmax.f32 %v2250, 0.0
        %v2315 = vmax.f32 %v2251, 0.0
        %v2316 = vmax.f32 %v2252, 0.0
        %v2317 = vmax.f32 %v2253, 0.0
        %v2318 = vmax.f32 %v2254, 0.0
        %v2319 = vmax.f32 %v2255, 0.0
        %v2320 = vmax.f32 %v2256, 0.0
        %v2321 = vmax.f32 %v2257, 0.0
        %v2322 = vmax.f32 %v2258, 0.0
        %v2323 = vmax.f32 %v2259, 0.0
        %v2324 = vmax.f32 %v2260, 0.0
        %v2325 = vmax.f32 %v2261, 0.0
        %v2326 = vmax.f32 %v2262, 0.0
        %v2327 = vmax.f32 %v2263, 0.0
        %v2328 = vmax.f32 %v2264, 0.0
        %v2329 = vmax.f32 %v2265, 0.0
        %v2330 = vmax.f32 %v2266, 0.0
        %v2331 = vmax.f32 %v2267, 0.0
        %v2332 = vmax.f32 %v2268, 0.0
        %v2333 = vmax.f32 %v2269, 0.0
        %v2334 = vmax.f32 %v2270, 0.0
        %v2335 = vmax.f32 %v2271, 0.0
        %v2336 = vmax.f32 %v2272, 0.0
        %v2337 = vmax.f32 %v2273, 0.0
        %v2338 = vmax.f32 %v2274, 0.0
        %v2339 = vmax.f32 %v2275, 0.0
        %v2340 = vmax.f32 %v2276, 0.0
        %v2341 = vmax.f32 %v2277, 0.0
        %v2342 = vmax.f32 %v2278, 0.0
        %v2343 = vmax.f32 %v2279, 0.0
        %v2344 = vmax.f32 %v2280, 0.0
        %v2345 = vmax.f32 %v2281, 0.0
        %v2346 = vmax.f32 %v2282, 0.0
        %v2347 = vmax.f32 %v2283, 0.0
        %v2348 = vmax.f32 %v2284, 0.0
        %v2349 = vpack.c.bf16 %v2287, %v2285
        %v2350 = vpack.c.bf16 %v2288, %v2286
        %v2351 = vpack.c.bf16 %v2291, %v2289
        %v2352 = vpack.c.bf16 %v2292, %v2290
        %v2353 = vpack.c.bf16 %v2295, %v2293
        %v2354 = vpack.c.bf16 %v2296, %v2294
        %v2355 = vpack.c.bf16 %v2299, %v2297
        %v2356 = vpack.c.bf16 %v2300, %v2298
        %v2357 = vpack.c.bf16 %v2303, %v2301
        %v2358 = vpack.c.bf16 %v2304, %v2302
        %v2359 = vpack.c.bf16 %v2307, %v2305
        %v2360 = vpack.c.bf16 %v2308, %v2306
        %v2361 = vpack.c.bf16 %v2311, %v2309
        %v2362 = vpack.c.bf16 %v2312, %v2310
        %v2363 = vpack.c.bf16 %v2315, %v2313
        %v2364 = vpack.c.bf16 %v2316, %v2314
        %v2365 = vpack.c.bf16 %v2319, %v2317
        %v2366 = vpack.c.bf16 %v2320, %v2318
        %v2367 = vpack.c.bf16 %v2323, %v2321
        %v2368 = vpack.c.bf16 %v2324, %v2322
        %v2369 = vpack.c.bf16 %v2327, %v2325
        %v2370 = vpack.c.bf16 %v2328, %v2326
        %v2371 = vpack.c.bf16 %v2331, %v2329
        %v2372 = vpack.c.bf16 %v2332, %v2330
        %v2373 = vpack.c.bf16 %v2335, %v2333
        %v2374 = vpack.c.bf16 %v2336, %v2334
        %v2375 = vpack.c.bf16 %v2339, %v2337
        %v2376 = vpack.c.bf16 %v2340, %v2338
        %v2377 = vpack.c.bf16 %v2343, %v2341
        %v2378 = vpack.c.bf16 %v2344, %v2342
        %v2379 = vpack.c.bf16 %v2347, %v2345
        %v2380 = vpack.c.bf16 %v2348, %v2346
        %v2381 = vld [vmem:[#allocation11] sm:$0xff]
        %v2382 = vld [vmem:[#allocation11 + $0x8] sm:$0xff]
        %v2383 = vld [vmem:[#allocation11 + $0x10] sm:$0xff]
        %v2384 = vld [vmem:[#allocation11 + $0x18] sm:$0xff]
        %v2385 = vld [vmem:[#allocation11 + $0x20] sm:$0xff]
        %v2386 = vld [vmem:[#allocation11 + $0x28] sm:$0xff]
        %v2387 = vld [vmem:[#allocation11 + $0x30] sm:$0xff]
        %v2388 = vld [vmem:[#allocation11 + $0x38] sm:$0xff]
        %v2389 = vld [vmem:[#allocation11 + $0x40] sm:$0xff]
        %v2390 = vld [vmem:[#allocation11 + $0x48] sm:$0xff]
        %v2391 = vld [vmem:[#allocation11 + $0x50] sm:$0xff]
        %v2392 = vld [vmem:[#allocation11 + $0x58] sm:$0xff]
        %v2393 = vld [vmem:[#allocation11 + $0x60] sm:$0xff]
        %v2394 = vld [vmem:[#allocation11 + $0x68] sm:$0xff]
        %v2395 = vld [vmem:[#allocation11 + $0x70] sm:$0xff]
        %v2396 = vld [vmem:[#allocation11 + $0x78] sm:$0xff]
        %v2397 = vld [vmem:[#allocation11 + $0x80] sm:$0xff]
        %v2398 = vld [vmem:[#allocation11 + $0x88] sm:$0xff]
        %v2399 = vld [vmem:[#allocation11 + $0x90] sm:$0xff]
        %v2400 = vld [vmem:[#allocation11 + $0x98] sm:$0xff]
        %v2401 = vld [vmem:[#allocation11 + $0xa0] sm:$0xff]
        %v2402 = vld [vmem:[#allocation11 + $0xa8] sm:$0xff]
        %v2403 = vld [vmem:[#allocation11 + $0xb0] sm:$0xff]
        %v2404 = vld [vmem:[#allocation11 + $0xb8] sm:$0xff]
        %v2405 = vld [vmem:[#allocation11 + $0xc0] sm:$0xff]
        %v2406 = vld [vmem:[#allocation11 + $0xc8] sm:$0xff]
        %v2407 = vld [vmem:[#allocation11 + $0xd0] sm:$0xff]
        %v2408 = vld [vmem:[#allocation11 + $0xd8] sm:$0xff]
        %v2409 = vld [vmem:[#allocation11 + $0xe0] sm:$0xff]
        %v2410 = vld [vmem:[#allocation11 + $0xe8] sm:$0xff]
        %v2411 = vld [vmem:[#allocation11 + $0xf0] sm:$0xff]
        %v2412 = vld [vmem:[#allocation11 + $0xf8] sm:$0xff]
        %v2413 = vld [vmem:[%s8] sm:$0x3]
        %v2415 = vperm.slane %v2413, 0
        %v2416 = vperm.slane %v2413, 1
        %v2451 = vunpack.c.l.b16 %v2381
        %v2452 = vunpack.c.h.b16 %v2381
        %v2453 = vunpack.c.l.b16 %v2382
        %v2454 = vunpack.c.h.b16 %v2382
        %v2455 = vunpack.c.l.b16 %v2383
        %v2456 = vunpack.c.h.b16 %v2383
        %v2457 = vunpack.c.l.b16 %v2384
        %v2458 = vunpack.c.h.b16 %v2384
        %v2459 = vunpack.c.l.b16 %v2385
        %v2460 = vunpack.c.h.b16 %v2385
        %v2461 = vunpack.c.l.b16 %v2386
        %v2462 = vunpack.c.h.b16 %v2386
        %v2463 = vunpack.c.l.b16 %v2387
        %v2464 = vunpack.c.h.b16 %v2387
        %v2465 = vunpack.c.l.b16 %v2388
        %v2466 = vunpack.c.h.b16 %v2388
        %v2467 = vunpack.c.l.b16 %v2389
        %v2468 = vunpack.c.h.b16 %v2389
        %v2469 = vunpack.c.l.b16 %v2390
        %v2470 = vunpack.c.h.b16 %v2390
        %v2471 = vunpack.c.l.b16 %v2391
        %v2472 = vunpack.c.h.b16 %v2391
        %v2473 = vunpack.c.l.b16 %v2392
        %v2474 = vunpack.c.h.b16 %v2392
        %v2475 = vunpack.c.l.b16 %v2393
        %v2476 = vunpack.c.h.b16 %v2393
        %v2477 = vunpack.c.l.b16 %v2394
        %v2478 = vunpack.c.h.b16 %v2394
        %v2479 = vunpack.c.l.b16 %v2395
        %v2480 = vunpack.c.h.b16 %v2395
        %v2481 = vunpack.c.l.b16 %v2396
        %v2482 = vunpack.c.h.b16 %v2396
        %v2483 = vunpack.c.l.b16 %v2397
        %v2484 = vunpack.c.h.b16 %v2397
        %v2485 = vunpack.c.l.b16 %v2398
        %v2486 = vunpack.c.h.b16 %v2398
        %v2487 = vunpack.c.l.b16 %v2399
        %v2488 = vunpack.c.h.b16 %v2399
        %v2489 = vunpack.c.l.b16 %v2400
        %v2490 = vunpack.c.h.b16 %v2400
        %v2491 = vunpack.c.l.b16 %v2401
        %v2492 = vunpack.c.h.b16 %v2401
        %v2493 = vunpack.c.l.b16 %v2402
        %v2494 = vunpack.c.h.b16 %v2402
        %v2495 = vunpack.c.l.b16 %v2403
        %v2496 = vunpack.c.h.b16 %v2403
        %v2497 = vunpack.c.l.b16 %v2404
        %v2498 = vunpack.c.h.b16 %v2404
        %v2499 = vunpack.c.l.b16 %v2405
        %v2500 = vunpack.c.h.b16 %v2405
        %v2501 = vunpack.c.l.b16 %v2406
        %v2502 = vunpack.c.h.b16 %v2406
        %v2503 = vunpack.c.l.b16 %v2407
        %v2504 = vunpack.c.h.b16 %v2407
        %v2505 = vunpack.c.l.b16 %v2408
        %v2506 = vunpack.c.h.b16 %v2408
        %v2507 = vunpack.c.l.b16 %v2409
        %v2508 = vunpack.c.h.b16 %v2409
        %v2509 = vunpack.c.l.b16 %v2410
        %v2510 = vunpack.c.h.b16 %v2410
        %v2511 = vunpack.c.l.b16 %v2411
        %v2512 = vunpack.c.h.b16 %v2411
        %v2513 = vunpack.c.l.b16 %v2412
        %v2514 = vunpack.c.h.b16 %v2412
        %v2515 = vpack.c.b16 %v2453, %v2451
        %v2516 = vpack.c.b16 %v2454, %v2452
        %v2517 = vpack.c.b16 %v2457, %v2455
        %v2518 = vpack.c.b16 %v2458, %v2456
        %v2519 = vpack.c.b16 %v2461, %v2459
        %v2520 = vpack.c.b16 %v2462, %v2460
        %v2521 = vpack.c.b16 %v2465, %v2463
        %v2522 = vpack.c.b16 %v2466, %v2464
        %v2523 = vpack.c.b16 %v2469, %v2467
        %v2524 = vpack.c.b16 %v2470, %v2468
        %v2525 = vpack.c.b16 %v2473, %v2471
        %v2526 = vpack.c.b16 %v2474, %v2472
        %v2527 = vpack.c.b16 %v2477, %v2475
        %v2528 = vpack.c.b16 %v2478, %v2476
        %v2529 = vpack.c.b16 %v2481, %v2479
        %v2530 = vpack.c.b16 %v2482, %v2480
        %v2531 = vpack.c.b16 %v2485, %v2483
        %v2532 = vpack.c.b16 %v2486, %v2484
        %v2533 = vpack.c.b16 %v2489, %v2487
        %v2534 = vpack.c.b16 %v2490, %v2488
        %v2535 = vpack.c.b16 %v2493, %v2491
        %v2536 = vpack.c.b16 %v2494, %v2492
        %v2537 = vpack.c.b16 %v2497, %v2495
        %v2538 = vpack.c.b16 %v2498, %v2496
        %v2539 = vpack.c.b16 %v2501, %v2499
        %v2540 = vpack.c.b16 %v2502, %v2500
        %v2541 = vpack.c.b16 %v2505, %v2503
        %v2542 = vpack.c.b16 %v2506, %v2504
        %v2543 = vpack.c.b16 %v2509, %v2507
        %v2544 = vpack.c.b16 %v2510, %v2508
        %v2545 = vpack.c.b16 %v2513, %v2511
        %v2546 = vpack.c.b16 %v2514, %v2512
        %2579 = vmatpush.bf16.msra.mxu0 %v2529
        %2580 = vmatpush.bf16.msra.mxu0 %v2527
        %2581 = vmatpush.bf16.msra.mxu0 %v2525
        %2582 = vmatpush.bf16.msra.mxu0 %v2523
        %2583 = vmatpush.bf16.msra.mxu0 %v2521
        %2584 = vmatpush.bf16.msra.mxu0 %v2519
        %2585 = vmatpush.bf16.msra.mxu0 %v2517
        %2586 = vmatpush.bf16.msra.mxu0 %v2515
        %2587 = vmatmul.bf16.gmra.mxu0 %v2349
        %v2588 = vpop.f32.mrf.mxu0
        %v2589 = vadd.f32 %v2415, %v2588
        %v2590 = vpop.f32.mrf.mxu0
        %v2591 = vadd.f32 %v2415, %v2590
        %2592 = vmatmul.bf16.gmra.mxu0 %v2351
        %v2593 = vpop.f32.mrf.mxu0
        %v2594 = vadd.f32 %v2415, %v2593
        %v2595 = vpop.f32.mrf.mxu0
        %v2596 = vadd.f32 %v2415, %v2595
        %2597 = vmatmul.bf16.gmra.mxu0 %v2353
        %v2598 = vpop.f32.mrf.mxu0
        %v2599 = vadd.f32 %v2415, %v2598
        %v2600 = vpop.f32.mrf.mxu0
        %v2601 = vadd.f32 %v2415, %v2600
        %2602 = vmatmul.bf16.gmra.mxu0 %v2355
        %v2603 = vpop.f32.mrf.mxu0
        %v2604 = vadd.f32 %v2415, %v2603
        %v2605 = vpop.f32.mrf.mxu0
        %v2606 = vadd.f32 %v2415, %v2605
        %2607 = vmatmul.bf16.gmra.mxu0 %v2357
        %v2608 = vpop.f32.mrf.mxu0
        %v2609 = vadd.f32 %v2415, %v2608
        %v2610 = vpop.f32.mrf.mxu0
        %v2611 = vadd.f32 %v2415, %v2610
        %2612 = vmatmul.bf16.gmra.mxu0 %v2359
        %v2613 = vpop.f32.mrf.mxu0
        %v2614 = vadd.f32 %v2415, %v2613
        %v2615 = vpop.f32.mrf.mxu0
        %v2616 = vadd.f32 %v2415, %v2615
        %2617 = vmatmul.bf16.gmra.mxu0 %v2361
        %v2618 = vpop.f32.mrf.mxu0
        %v2619 = vadd.f32 %v2415, %v2618
        %v2620 = vpop.f32.mrf.mxu0
        %v2621 = vadd.f32 %v2415, %v2620
        %2622 = vmatmul.bf16.gmra.mxu0 %v2363
        %v2623 = vpop.f32.mrf.mxu0
        %v2624 = vadd.f32 %v2415, %v2623
        %v2625 = vpop.f32.mrf.mxu0
        %v2626 = vadd.f32 %v2415, %v2625
        %2627 = vmatmul.bf16.gmra.mxu0 %v2365
        %v2628 = vpop.f32.mrf.mxu0
        %v2629 = vadd.f32 %v2415, %v2628
        %v2630 = vpop.f32.mrf.mxu0
        %v2631 = vadd.f32 %v2415, %v2630
        %2632 = vmatmul.bf16.gmra.mxu0 %v2367
        %v2633 = vpop.f32.mrf.mxu0
        %v2634 = vadd.f32 %v2415, %v2633
        %v2635 = vpop.f32.mrf.mxu0
        %v2636 = vadd.f32 %v2415, %v2635
        %2637 = vmatmul.bf16.gmra.mxu0 %v2369
        %v2638 = vpop.f32.mrf.mxu0
        %v2639 = vadd.f32 %v2415, %v2638
        %v2640 = vpop.f32.mrf.mxu0
        %v2641 = vadd.f32 %v2415, %v2640
        %2642 = vmatmul.bf16.gmra.mxu0 %v2371
        %v2643 = vpop.f32.mrf.mxu0
        %v2644 = vadd.f32 %v2415, %v2643
        %v2645 = vpop.f32.mrf.mxu0
        %v2646 = vadd.f32 %v2415, %v2645
        %2647 = vmatmul.bf16.gmra.mxu0 %v2373
        %v2648 = vpop.f32.mrf.mxu0
        %v2649 = vadd.f32 %v2415, %v2648
        %v2650 = vpop.f32.mrf.mxu0
        %v2651 = vadd.f32 %v2415, %v2650
        %2652 = vmatmul.bf16.gmra.mxu0 %v2375
        %v2653 = vpop.f32.mrf.mxu0
        %v2654 = vadd.f32 %v2415, %v2653
        %v2655 = vpop.f32.mrf.mxu0
        %v2656 = vadd.f32 %v2415, %v2655
        %2657 = vmatmul.bf16.gmra.mxu0 %v2377
        %v2658 = vpop.f32.mrf.mxu0
        %v2659 = vadd.f32 %v2415, %v2658
        %v2660 = vpop.f32.mrf.mxu0
        %v2661 = vadd.f32 %v2415, %v2660
        %2662 = vmatmul.bf16.gmra.mxu0 %v2379
        %v2663 = vpop.f32.mrf.mxu0
        %v2664 = vadd.f32 %v2415, %v2663
        %v2665 = vpop.f32.mrf.mxu0
        %v2666 = vadd.f32 %v2415, %v2665
        %2667 = vdwg.mxu0
        %2668 = vmatpush.bf16.msra.mxu0 %v2545
        %2669 = vmatpush.bf16.msra.mxu0 %v2543
        %2670 = vmatpush.bf16.msra.mxu0 %v2541
        %2671 = vmatpush.bf16.msra.mxu0 %v2539
        %2672 = vmatpush.bf16.msra.mxu0 %v2537
        %2673 = vmatpush.bf16.msra.mxu0 %v2535
        %2674 = vmatpush.bf16.msra.mxu0 %v2533
        %2675 = vmatpush.bf16.msra.mxu0 %v2531
        %2676 = vmatmul.bf16.gmra.mxu0 %v2350
        %v2677 = vpop.f32.mrf.mxu0
        %v2678 = vadd.f32 %v2589, %v2677
        %v2679 = vpop.f32.mrf.mxu0
        %v2680 = vadd.f32 %v2591, %v2679
        %2681 = vmatmul.bf16.gmra.mxu0 %v2352
        %v2682 = vpop.f32.mrf.mxu0
        %v2683 = vadd.f32 %v2594, %v2682
        %v2684 = vpop.f32.mrf.mxu0
        %v2685 = vadd.f32 %v2596, %v2684
        %2686 = vmatmul.bf16.gmra.mxu0 %v2354
        %v2687 = vpop.f32.mrf.mxu0
        %v2688 = vadd.f32 %v2599, %v2687
        %v2689 = vpop.f32.mrf.mxu0
        %v2690 = vadd.f32 %v2601, %v2689
        %2691 = vmatmul.bf16.gmra.mxu0 %v2356
        %v2692 = vpop.f32.mrf.mxu0
        %v2693 = vadd.f32 %v2604, %v2692
        %v2694 = vpop.f32.mrf.mxu0
        %v2695 = vadd.f32 %v2606, %v2694
        %2696 = vmatmul.bf16.gmra.mxu0 %v2358
        %v2697 = vpop.f32.mrf.mxu0
        %v2698 = vadd.f32 %v2609, %v2697
        %v2699 = vpop.f32.mrf.mxu0
        %v2700 = vadd.f32 %v2611, %v2699
        %2701 = vmatmul.bf16.gmra.mxu0 %v2360
        %v2702 = vpop.f32.mrf.mxu0
        %v2703 = vadd.f32 %v2614, %v2702
        %v2704 = vpop.f32.mrf.mxu0
        %v2705 = vadd.f32 %v2616, %v2704
        %2706 = vmatmul.bf16.gmra.mxu0 %v2362
        %v2707 = vpop.f32.mrf.mxu0
        %v2708 = vadd.f32 %v2619, %v2707
        %v2709 = vpop.f32.mrf.mxu0
        %v2710 = vadd.f32 %v2621, %v2709
        %2711 = vmatmul.bf16.gmra.mxu0 %v2364
        %v2712 = vpop.f32.mrf.mxu0
        %v2713 = vadd.f32 %v2624, %v2712
        %v2714 = vpop.f32.mrf.mxu0
        %v2715 = vadd.f32 %v2626, %v2714
        %2716 = vmatmul.bf16.gmra.mxu0 %v2366
        %v2717 = vpop.f32.mrf.mxu0
        %v2718 = vadd.f32 %v2629, %v2717
        %v2719 = vpop.f32.mrf.mxu0
        %v2720 = vadd.f32 %v2631, %v2719
        %2721 = vmatmul.bf16.gmra.mxu0 %v2368
        %v2722 = vpop.f32.mrf.mxu0
        %v2723 = vadd.f32 %v2634, %v2722
        %v2724 = vpop.f32.mrf.mxu0
        %v2725 = vadd.f32 %v2636, %v2724
        %2726 = vmatmul.bf16.gmra.mxu0 %v2370
        %v2727 = vpop.f32.mrf.mxu0
        %v2728 = vadd.f32 %v2639, %v2727
        %v2729 = vpop.f32.mrf.mxu0
        %v2730 = vadd.f32 %v2641, %v2729
        %2731 = vmatmul.bf16.gmra.mxu0 %v2372
        %v2732 = vpop.f32.mrf.mxu0
        %v2733 = vadd.f32 %v2644, %v2732
        %v2734 = vpop.f32.mrf.mxu0
        %v2735 = vadd.f32 %v2646, %v2734
        %2736 = vmatmul.bf16.gmra.mxu0 %v2374
        %v2737 = vpop.f32.mrf.mxu0
        %v2738 = vadd.f32 %v2649, %v2737
        %v2739 = vpop.f32.mrf.mxu0
        %v2740 = vadd.f32 %v2651, %v2739
        %2741 = vmatmul.bf16.gmra.mxu0 %v2376
        %v2742 = vpop.f32.mrf.mxu0
        %v2743 = vadd.f32 %v2654, %v2742
        %v2744 = vpop.f32.mrf.mxu0
        %v2745 = vadd.f32 %v2656, %v2744
        %2746 = vmatmul.bf16.gmra.mxu0 %v2378
        %v2747 = vpop.f32.mrf.mxu0
        %v2748 = vadd.f32 %v2659, %v2747
        %v2749 = vpop.f32.mrf.mxu0
        %v2750 = vadd.f32 %v2661, %v2749
        %2751 = vmatmul.bf16.gmra.mxu0 %v2380
        %v2752 = vpop.f32.mrf.mxu0
        %v2753 = vadd.f32 %v2664, %v2752
        %v2754 = vpop.f32.mrf.mxu0
        %v2755 = vadd.f32 %v2666, %v2754
        %2756 = vdwg.mxu0
        %2757 = vmatpush.bf16.msra.mxu0 %v2530
        %2758 = vmatpush.bf16.msra.mxu0 %v2528
        %2759 = vmatpush.bf16.msra.mxu0 %v2526
        %2760 = vmatpush.bf16.msra.mxu0 %v2524
        %2761 = vmatpush.bf16.msra.mxu0 %v2522
        %2762 = vmatpush.bf16.msra.mxu0 %v2520
        %2763 = vmatpush.bf16.msra.mxu0 %v2518
        %2764 = vmatpush.bf16.msra.mxu0 %v2516
        %2765 = vmatmul.bf16.gmra.mxu0 %v2349
        %v2766 = vpop.f32.mrf.mxu0
        %v2767 = vadd.f32 %v2416, %v2766
        %v2768 = vpop.f32.mrf.mxu0
        %v2769 = vadd.f32 %v2416, %v2768
        %2770 = vmatmul.bf16.gmra.mxu0 %v2351
        %v2771 = vpop.f32.mrf.mxu0
        %v2772 = vadd.f32 %v2416, %v2771
        %v2773 = vpop.f32.mrf.mxu0
        %v2774 = vadd.f32 %v2416, %v2773
        %2775 = vmatmul.bf16.gmra.mxu0 %v2353
        %v2776 = vpop.f32.mrf.mxu0
        %v2777 = vadd.f32 %v2416, %v2776
        %v2778 = vpop.f32.mrf.mxu0
        %v2779 = vadd.f32 %v2416, %v2778
        %2780 = vmatmul.bf16.gmra.mxu0 %v2355
        %v2781 = vpop.f32.mrf.mxu0
        %v2782 = vadd.f32 %v2416, %v2781
        %v2783 = vpop.f32.mrf.mxu0
        %v2784 = vadd.f32 %v2416, %v2783
        %2785 = vmatmul.bf16.gmra.mxu0 %v2357
        %v2786 = vpop.f32.mrf.mxu0
        %v2787 = vadd.f32 %v2416, %v2786
        %v2788 = vpop.f32.mrf.mxu0
        %v2789 = vadd.f32 %v2416, %v2788
        %2790 = vmatmul.bf16.gmra.mxu0 %v2359
        %v2791 = vpop.f32.mrf.mxu0
        %v2792 = vadd.f32 %v2416, %v2791
        %v2793 = vpop.f32.mrf.mxu0
        %v2794 = vadd.f32 %v2416, %v2793
        %2795 = vmatmul.bf16.gmra.mxu0 %v2361
        %v2796 = vpop.f32.mrf.mxu0
        %v2797 = vadd.f32 %v2416, %v2796
        %v2798 = vpop.f32.mrf.mxu0
        %v2799 = vadd.f32 %v2416, %v2798
        %2800 = vmatmul.bf16.gmra.mxu0 %v2363
        %v2801 = vpop.f32.mrf.mxu0
        %v2802 = vadd.f32 %v2416, %v2801
        %v2803 = vpop.f32.mrf.mxu0
        %v2804 = vadd.f32 %v2416, %v2803
        %2805 = vmatmul.bf16.gmra.mxu0 %v2365
        %v2806 = vpop.f32.mrf.mxu0
        %v2807 = vadd.f32 %v2416, %v2806
        %v2808 = vpop.f32.mrf.mxu0
        %v2809 = vadd.f32 %v2416, %v2808
        %2810 = vmatmul.bf16.gmra.mxu0 %v2367
        %v2811 = vpop.f32.mrf.mxu0
        %v2812 = vadd.f32 %v2416, %v2811
        %v2813 = vpop.f32.mrf.mxu0
        %v2814 = vadd.f32 %v2416, %v2813
        %2815 = vmatmul.bf16.gmra.mxu0 %v2369
        %v2816 = vpop.f32.mrf.mxu0
        %v2817 = vadd.f32 %v2416, %v2816
        %v2818 = vpop.f32.mrf.mxu0
        %v2819 = vadd.f32 %v2416, %v2818
        %2820 = vmatmul.bf16.gmra.mxu0 %v2371
        %v2821 = vpop.f32.mrf.mxu0
        %v2822 = vadd.f32 %v2416, %v2821
        %v2823 = vpop.f32.mrf.mxu0
        %v2824 = vadd.f32 %v2416, %v2823
        %2825 = vmatmul.bf16.gmra.mxu0 %v2373
        %v2826 = vpop.f32.mrf.mxu0
        %v2827 = vadd.f32 %v2416, %v2826
        %v2828 = vpop.f32.mrf.mxu0
        %v2829 = vadd.f32 %v2416, %v2828
        %2830 = vmatmul.bf16.gmra.mxu0 %v2375
        %v2831 = vpop.f32.mrf.mxu0
        %v2832 = vadd.f32 %v2416, %v2831
        %v2833 = vpop.f32.mrf.mxu0
        %v2834 = vadd.f32 %v2416, %v2833
        %2835 = vmatmul.bf16.gmra.mxu0 %v2377
        %v2836 = vpop.f32.mrf.mxu0
        %v2837 = vadd.f32 %v2416, %v2836
        %v2838 = vpop.f32.mrf.mxu0
        %v2839 = vadd.f32 %v2416, %v2838
        %2840 = vmatmul.bf16.gmra.mxu0 %v2379
        %v2841 = vpop.f32.mrf.mxu0
        %v2842 = vadd.f32 %v2416, %v2841
        %v2843 = vpop.f32.mrf.mxu0
        %v2844 = vadd.f32 %v2416, %v2843
        %2845 = vdwg.mxu0
        %2846 = vmatpush.bf16.msra.mxu0 %v2546
        %2847 = vmatpush.bf16.msra.mxu0 %v2544
        %2848 = vmatpush.bf16.msra.mxu0 %v2542
        %2849 = vmatpush.bf16.msra.mxu0 %v2540
        %2850 = vmatpush.bf16.msra.mxu0 %v2538
        %2851 = vmatpush.bf16.msra.mxu0 %v2536
        %2852 = vmatpush.bf16.msra.mxu0 %v2534
        %2853 = vmatpush.bf16.msra.mxu0 %v2532
        %2854 = vmatmul.bf16.gmra.mxu0 %v2350
        %v2855 = vpop.f32.mrf.mxu0
        %v2856 = vadd.f32 %v2767, %v2855
        %v2857 = vpop.f32.mrf.mxu0
        %v2858 = vadd.f32 %v2769, %v2857
        %2859 = vmatmul.bf16.gmra.mxu0 %v2352
        %v2860 = vpop.f32.mrf.mxu0
        %v2861 = vadd.f32 %v2772, %v2860
        %v2862 = vpop.f32.mrf.mxu0
        %v2863 = vadd.f32 %v2774, %v2862
        %2864 = vmatmul.bf16.gmra.mxu0 %v2354
        %v2865 = vpop.f32.mrf.mxu0
        %v2866 = vadd.f32 %v2777, %v2865
        %v2867 = vpop.f32.mrf.mxu0
        %v2868 = vadd.f32 %v2779, %v2867
        %2869 = vmatmul.bf16.gmra.mxu0 %v2356
        %v2870 = vpop.f32.mrf.mxu0
        %v2871 = vadd.f32 %v2782, %v2870
        %v2872 = vpop.f32.mrf.mxu0
        %v2873 = vadd.f32 %v2784, %v2872
        %2874 = vmatmul.bf16.gmra.mxu0 %v2358
        %v2875 = vpop.f32.mrf.mxu0
        %v2876 = vadd.f32 %v2787, %v2875
        %v2877 = vpop.f32.mrf.mxu0
        %v2878 = vadd.f32 %v2789, %v2877
        %2879 = vmatmul.bf16.gmra.mxu0 %v2360
        %v2880 = vpop.f32.mrf.mxu0
        %v2881 = vadd.f32 %v2792, %v2880
        %v2882 = vpop.f32.mrf.mxu0
        %v2883 = vadd.f32 %v2794, %v2882
        %2884 = vmatmul.bf16.gmra.mxu0 %v2362
        %v2885 = vpop.f32.mrf.mxu0
        %v2886 = vadd.f32 %v2797, %v2885
        %v2887 = vpop.f32.mrf.mxu0
        %v2888 = vadd.f32 %v2799, %v2887
        %2889 = vmatmul.bf16.gmra.mxu0 %v2364
        %v2890 = vpop.f32.mrf.mxu0
        %v2891 = vadd.f32 %v2802, %v2890
        %v2892 = vpop.f32.mrf.mxu0
        %v2893 = vadd.f32 %v2804, %v2892
        %2894 = vmatmul.bf16.gmra.mxu0 %v2366
        %v2895 = vpop.f32.mrf.mxu0
        %v2896 = vadd.f32 %v2807, %v2895
        %v2897 = vpop.f32.mrf.mxu0
        %v2898 = vadd.f32 %v2809, %v2897
        %2899 = vmatmul.bf16.gmra.mxu0 %v2368
        %v2900 = vpop.f32.mrf.mxu0
        %v2901 = vadd.f32 %v2812, %v2900
        %v2902 = vpop.f32.mrf.mxu0
        %v2903 = vadd.f32 %v2814, %v2902
        %2904 = vmatmul.bf16.gmra.mxu0 %v2370
        %v2905 = vpop.f32.mrf.mxu0
        %v2906 = vadd.f32 %v2817, %v2905
        %v2907 = vpop.f32.mrf.mxu0
        %v2908 = vadd.f32 %v2819, %v2907
        %2909 = vmatmul.bf16.gmra.mxu0 %v2372
        %v2910 = vpop.f32.mrf.mxu0
        %v2911 = vadd.f32 %v2822, %v2910
        %v2912 = vpop.f32.mrf.mxu0
        %v2913 = vadd.f32 %v2824, %v2912
        %2914 = vmatmul.bf16.gmra.mxu0 %v2374
        %v2915 = vpop.f32.mrf.mxu0
        %v2916 = vadd.f32 %v2827, %v2915
        %v2917 = vpop.f32.mrf.mxu0
        %v2918 = vadd.f32 %v2829, %v2917
        %2919 = vmatmul.bf16.gmra.mxu0 %v2376
        %v2920 = vpop.f32.mrf.mxu0
        %v2921 = vadd.f32 %v2832, %v2920
        %v2922 = vpop.f32.mrf.mxu0
        %v2923 = vadd.f32 %v2834, %v2922
        %2924 = vmatmul.bf16.gmra.mxu0 %v2378
        %v2925 = vpop.f32.mrf.mxu0
        %v2926 = vadd.f32 %v2837, %v2925
        %v2927 = vpop.f32.mrf.mxu0
        %v2928 = vadd.f32 %v2839, %v2927
        %2929 = vmatmul.bf16.gmra.mxu0 %v2380
        %v2930 = vpop.f32.mrf.mxu0
        %v2931 = vadd.f32 %v2842, %v2930
        %v2932 = vpop.f32.mrf.mxu0
        %v2933 = vadd.f32 %v2844, %v2932
        %2934 = vdwg.mxu0
        %v2935 = vmax.f32 %v2678, 0.0
        %v2936 = vmax.f32 %v2856, 0.0
        %v2937 = vmax.f32 %v2680, 0.0
        %v2938 = vmax.f32 %v2858, 0.0
        %v2939 = vmax.f32 %v2683, 0.0
        %v2940 = vmax.f32 %v2861, 0.0
        %v2941 = vmax.f32 %v2685, 0.0
        %v2942 = vmax.f32 %v2863, 0.0
        %v2943 = vmax.f32 %v2688, 0.0
        %v2944 = vmax.f32 %v2866, 0.0
        %v2945 = vmax.f32 %v2690, 0.0
        %v2946 = vmax.f32 %v2868, 0.0
        %v2947 = vmax.f32 %v2693, 0.0
        %v2948 = vmax.f32 %v2871, 0.0
        %v2949 = vmax.f32 %v2695, 0.0
        %v2950 = vmax.f32 %v2873, 0.0
        %v2951 = vmax.f32 %v2698, 0.0
        %v2952 = vmax.f32 %v2876, 0.0
        %v2953 = vmax.f32 %v2700, 0.0
        %v2954 = vmax.f32 %v2878, 0.0
        %v2955 = vmax.f32 %v2703, 0.0
        %v2956 = vmax.f32 %v2881, 0.0
        %v2957 = vmax.f32 %v2705, 0.0
        %v2958 = vmax.f32 %v2883, 0.0
        %v2959 = vmax.f32 %v2708, 0.0
        %v2960 = vmax.f32 %v2886, 0.0
        %v2961 = vmax.f32 %v2710, 0.0
        %v2962 = vmax.f32 %v2888, 0.0
        %v2963 = vmax.f32 %v2713, 0.0
        %v2964 = vmax.f32 %v2891, 0.0
        %v2965 = vmax.f32 %v2715, 0.0
        %v2966 = vmax.f32 %v2893, 0.0
        %v2967 = vmax.f32 %v2718, 0.0
        %v2968 = vmax.f32 %v2896, 0.0
        %v2969 = vmax.f32 %v2720, 0.0
        %v2970 = vmax.f32 %v2898, 0.0
        %v2971 = vmax.f32 %v2723, 0.0
        %v2972 = vmax.f32 %v2901, 0.0
        %v2973 = vmax.f32 %v2725, 0.0
        %v2974 = vmax.f32 %v2903, 0.0
        %v2975 = vmax.f32 %v2728, 0.0
        %v2976 = vmax.f32 %v2906, 0.0
        %v2977 = vmax.f32 %v2730, 0.0
        %v2978 = vmax.f32 %v2908, 0.0
        %v2979 = vmax.f32 %v2733, 0.0
        %v2980 = vmax.f32 %v2911, 0.0
        %v2981 = vmax.f32 %v2735, 0.0
        %v2982 = vmax.f32 %v2913, 0.0
        %v2983 = vmax.f32 %v2738, 0.0
        %v2984 = vmax.f32 %v2916, 0.0
        %v2985 = vmax.f32 %v2740, 0.0
        %v2986 = vmax.f32 %v2918, 0.0
        %v2987 = vmax.f32 %v2743, 0.0
        %v2988 = vmax.f32 %v2921, 0.0
        %v2989 = vmax.f32 %v2745, 0.0
        %v2990 = vmax.f32 %v2923, 0.0
        %v2991 = vmax.f32 %v2748, 0.0
        %v2992 = vmax.f32 %v2926, 0.0
        %v2993 = vmax.f32 %v2750, 0.0
        %v2994 = vmax.f32 %v2928, 0.0
        %v2995 = vmax.f32 %v2753, 0.0
        %v2996 = vmax.f32 %v2931, 0.0
        %v2997 = vmax.f32 %v2755, 0.0
        %v2998 = vmax.f32 %v2933, 0.0
        %v2999 = vpack.c.bf16 %v2937, %v2935
        %v3000 = vpack.c.bf16 %v2938, %v2936
        %v3001 = vpack.c.bf16 %v2941, %v2939
        %v3002 = vpack.c.bf16 %v2942, %v2940
        %v3003 = vpack.c.bf16 %v2945, %v2943
        %v3004 = vpack.c.bf16 %v2946, %v2944
        %v3005 = vpack.c.bf16 %v2949, %v2947
        %v3006 = vpack.c.bf16 %v2950, %v2948
        %v3007 = vpack.c.bf16 %v2953, %v2951
        %v3008 = vpack.c.bf16 %v2954, %v2952
        %v3009 = vpack.c.bf16 %v2957, %v2955
        %v3010 = vpack.c.bf16 %v2958, %v2956
        %v3011 = vpack.c.bf16 %v2961, %v2959
        %v3012 = vpack.c.bf16 %v2962, %v2960
        %v3013 = vpack.c.bf16 %v2965, %v2963
        %v3014 = vpack.c.bf16 %v2966, %v2964
        %v3015 = vpack.c.bf16 %v2969, %v2967
        %v3016 = vpack.c.bf16 %v2970, %v2968
        %v3017 = vpack.c.bf16 %v2973, %v2971
        %v3018 = vpack.c.bf16 %v2974, %v2972
        %v3019 = vpack.c.bf16 %v2977, %v2975
        %v3020 = vpack.c.bf16 %v2978, %v2976
        %v3021 = vpack.c.bf16 %v2981, %v2979
        %v3022 = vpack.c.bf16 %v2982, %v2980
        %v3023 = vpack.c.bf16 %v2985, %v2983
        %v3024 = vpack.c.bf16 %v2986, %v2984
        %v3025 = vpack.c.bf16 %v2989, %v2987
        %v3026 = vpack.c.bf16 %v2990, %v2988
        %v3027 = vpack.c.bf16 %v2993, %v2991
        %v3028 = vpack.c.bf16 %v2994, %v2992
        %v3029 = vpack.c.bf16 %v2997, %v2995
        %v3030 = vpack.c.bf16 %v2998, %v2996
        %v3031 = vld [vmem:[#allocation13] sm:$0xff]
        %v3032 = vld [vmem:[#allocation13 + $0x8] sm:$0xff]
        %v3033 = vld [vmem:[#allocation13 + $0x10] sm:$0xff]
        %v3034 = vld [vmem:[#allocation13 + $0x18] sm:$0xff]
        %v3035 = vld [vmem:[#allocation13 + $0x20] sm:$0xff]
        %v3036 = vld [vmem:[#allocation13 + $0x28] sm:$0xff]
        %v3037 = vld [vmem:[#allocation13 + $0x30] sm:$0xff]
        %v3038 = vld [vmem:[#allocation13 + $0x38] sm:$0xff]
        %v3039 = vld [vmem:[#allocation13 + $0x40] sm:$0xff]
        %v3040 = vld [vmem:[#allocation13 + $0x48] sm:$0xff]
        %v3041 = vld [vmem:[#allocation13 + $0x50] sm:$0xff]
        %v3042 = vld [vmem:[#allocation13 + $0x58] sm:$0xff]
        %v3043 = vld [vmem:[#allocation13 + $0x60] sm:$0xff]
        %v3044 = vld [vmem:[#allocation13 + $0x68] sm:$0xff]
        %v3045 = vld [vmem:[#allocation13 + $0x70] sm:$0xff]
        %v3046 = vld [vmem:[#allocation13 + $0x78] sm:$0xff]
        %v3047 = vld [vmem:[#allocation13 + $0x80] sm:$0xff]
        %v3048 = vld [vmem:[#allocation13 + $0x88] sm:$0xff]
        %v3049 = vld [vmem:[#allocation13 + $0x90] sm:$0xff]
        %v3050 = vld [vmem:[#allocation13 + $0x98] sm:$0xff]
        %v3051 = vld [vmem:[#allocation13 + $0xa0] sm:$0xff]
        %v3052 = vld [vmem:[#allocation13 + $0xa8] sm:$0xff]
        %v3053 = vld [vmem:[#allocation13 + $0xb0] sm:$0xff]
        %v3054 = vld [vmem:[#allocation13 + $0xb8] sm:$0xff]
        %v3055 = vld [vmem:[#allocation13 + $0xc0] sm:$0xff]
        %v3056 = vld [vmem:[#allocation13 + $0xc8] sm:$0xff]
        %v3057 = vld [vmem:[#allocation13 + $0xd0] sm:$0xff]
        %v3058 = vld [vmem:[#allocation13 + $0xd8] sm:$0xff]
        %v3059 = vld [vmem:[#allocation13 + $0xe0] sm:$0xff]
        %v3060 = vld [vmem:[#allocation13 + $0xe8] sm:$0xff]
        %v3061 = vld [vmem:[#allocation13 + $0xf0] sm:$0xff]
        %v3062 = vld [vmem:[#allocation13 + $0xf8] sm:$0xff]
        %v3063 = vld [vmem:[%s10] sm:$0x3]
        %v3065 = vperm.slane %v3063, 0
        %v3066 = vperm.slane %v3063, 1
        %v3101 = vunpack.c.l.b16 %v3031
        %v3102 = vunpack.c.h.b16 %v3031
        %v3103 = vunpack.c.l.b16 %v3032
        %v3104 = vunpack.c.h.b16 %v3032
        %v3105 = vunpack.c.l.b16 %v3033
        %v3106 = vunpack.c.h.b16 %v3033
        %v3107 = vunpack.c.l.b16 %v3034
        %v3108 = vunpack.c.h.b16 %v3034
        %v3109 = vunpack.c.l.b16 %v3035
        %v3110 = vunpack.c.h.b16 %v3035
        %v3111 = vunpack.c.l.b16 %v3036
        %v3112 = vunpack.c.h.b16 %v3036
        %v3113 = vunpack.c.l.b16 %v3037
        %v3114 = vunpack.c.h.b16 %v3037
        %v3115 = vunpack.c.l.b16 %v3038
        %v3116 = vunpack.c.h.b16 %v3038
        %v3117 = vunpack.c.l.b16 %v3039
        %v3118 = vunpack.c.h.b16 %v3039
        %v3119 = vunpack.c.l.b16 %v3040
        %v3120 = vunpack.c.h.b16 %v3040
        %v3121 = vunpack.c.l.b16 %v3041
        %v3122 = vunpack.c.h.b16 %v3041
        %v3123 = vunpack.c.l.b16 %v3042
        %v3124 = vunpack.c.h.b16 %v3042
        %v3125 = vunpack.c.l.b16 %v3043
        %v3126 = vunpack.c.h.b16 %v3043
        %v3127 = vunpack.c.l.b16 %v3044
        %v3128 = vunpack.c.h.b16 %v3044
        %v3129 = vunpack.c.l.b16 %v3045
        %v3130 = vunpack.c.h.b16 %v3045
        %v3131 = vunpack.c.l.b16 %v3046
        %v3132 = vunpack.c.h.b16 %v3046
        %v3133 = vunpack.c.l.b16 %v3047
        %v3134 = vunpack.c.h.b16 %v3047
        %v3135 = vunpack.c.l.b16 %v3048
        %v3136 = vunpack.c.h.b16 %v3048
        %v3137 = vunpack.c.l.b16 %v3049
        %v3138 = vunpack.c.h.b16 %v3049
        %v3139 = vunpack.c.l.b16 %v3050
        %v3140 = vunpack.c.h.b16 %v3050
        %v3141 = vunpack.c.l.b16 %v3051
        %v3142 = vunpack.c.h.b16 %v3051
        %v3143 = vunpack.c.l.b16 %v3052
        %v3144 = vunpack.c.h.b16 %v3052
        %v3145 = vunpack.c.l.b16 %v3053
        %v3146 = vunpack.c.h.b16 %v3053
        %v3147 = vunpack.c.l.b16 %v3054
        %v3148 = vunpack.c.h.b16 %v3054
        %v3149 = vunpack.c.l.b16 %v3055
        %v3150 = vunpack.c.h.b16 %v3055
        %v3151 = vunpack.c.l.b16 %v3056
        %v3152 = vunpack.c.h.b16 %v3056
        %v3153 = vunpack.c.l.b16 %v3057
        %v3154 = vunpack.c.h.b16 %v3057
        %v3155 = vunpack.c.l.b16 %v3058
        %v3156 = vunpack.c.h.b16 %v3058
        %v3157 = vunpack.c.l.b16 %v3059
        %v3158 = vunpack.c.h.b16 %v3059
        %v3159 = vunpack.c.l.b16 %v3060
        %v3160 = vunpack.c.h.b16 %v3060
        %v3161 = vunpack.c.l.b16 %v3061
        %v3162 = vunpack.c.h.b16 %v3061
        %v3163 = vunpack.c.l.b16 %v3062
        %v3164 = vunpack.c.h.b16 %v3062
        %v3165 = vpack.c.b16 %v3103, %v3101
        %v3166 = vpack.c.b16 %v3104, %v3102
        %v3167 = vpack.c.b16 %v3107, %v3105
        %v3168 = vpack.c.b16 %v3108, %v3106
        %v3169 = vpack.c.b16 %v3111, %v3109
        %v3170 = vpack.c.b16 %v3112, %v3110
        %v3171 = vpack.c.b16 %v3115, %v3113
        %v3172 = vpack.c.b16 %v3116, %v3114
        %v3173 = vpack.c.b16 %v3119, %v3117
        %v3174 = vpack.c.b16 %v3120, %v3118
        %v3175 = vpack.c.b16 %v3123, %v3121
        %v3176 = vpack.c.b16 %v3124, %v3122
        %v3177 = vpack.c.b16 %v3127, %v3125
        %v3178 = vpack.c.b16 %v3128, %v3126
        %v3179 = vpack.c.b16 %v3131, %v3129
        %v3180 = vpack.c.b16 %v3132, %v3130
        %v3181 = vpack.c.b16 %v3135, %v3133
        %v3182 = vpack.c.b16 %v3136, %v3134
        %v3183 = vpack.c.b16 %v3139, %v3137
        %v3184 = vpack.c.b16 %v3140, %v3138
        %v3185 = vpack.c.b16 %v3143, %v3141
        %v3186 = vpack.c.b16 %v3144, %v3142
        %v3187 = vpack.c.b16 %v3147, %v3145
        %v3188 = vpack.c.b16 %v3148, %v3146
        %v3189 = vpack.c.b16 %v3151, %v3149
        %v3190 = vpack.c.b16 %v3152, %v3150
        %v3191 = vpack.c.b16 %v3155, %v3153
        %v3192 = vpack.c.b16 %v3156, %v3154
        %v3193 = vpack.c.b16 %v3159, %v3157
        %v3194 = vpack.c.b16 %v3160, %v3158
        %v3195 = vpack.c.b16 %v3163, %v3161
        %v3196 = vpack.c.b16 %v3164, %v3162
        %3229 = vmatpush.bf16.msra.mxu0 %v3179
        %3230 = vmatpush.bf16.msra.mxu0 %v3177
        %3231 = vmatpush.bf16.msra.mxu0 %v3175
        %3232 = vmatpush.bf16.msra.mxu0 %v3173
        %3233 = vmatpush.bf16.msra.mxu0 %v3171
        %3234 = vmatpush.bf16.msra.mxu0 %v3169
        %3235 = vmatpush.bf16.msra.mxu0 %v3167
        %3236 = vmatpush.bf16.msra.mxu0 %v3165
        %3237 = vmatmul.bf16.gmra.mxu0 %v2999
        %v3238 = vpop.f32.mrf.mxu0
        %v3239 = vadd.f32 %v3065, %v3238
        %v3240 = vpop.f32.mrf.mxu0
        %v3241 = vadd.f32 %v3065, %v3240
        %3242 = vmatmul.bf16.gmra.mxu0 %v3001
        %v3243 = vpop.f32.mrf.mxu0
        %v3244 = vadd.f32 %v3065, %v3243
        %v3245 = vpop.f32.mrf.mxu0
        %v3246 = vadd.f32 %v3065, %v3245
        %3247 = vmatmul.bf16.gmra.mxu0 %v3003
        %v3248 = vpop.f32.mrf.mxu0
        %v3249 = vadd.f32 %v3065, %v3248
        %v3250 = vpop.f32.mrf.mxu0
        %v3251 = vadd.f32 %v3065, %v3250
        %3252 = vmatmul.bf16.gmra.mxu0 %v3005
        %v3253 = vpop.f32.mrf.mxu0
        %v3254 = vadd.f32 %v3065, %v3253
        %v3255 = vpop.f32.mrf.mxu0
        %v3256 = vadd.f32 %v3065, %v3255
        %3257 = vmatmul.bf16.gmra.mxu0 %v3007
        %v3258 = vpop.f32.mrf.mxu0
        %v3259 = vadd.f32 %v3065, %v3258
        %v3260 = vpop.f32.mrf.mxu0
        %v3261 = vadd.f32 %v3065, %v3260
        %3262 = vmatmul.bf16.gmra.mxu0 %v3009
        %v3263 = vpop.f32.mrf.mxu0
        %v3264 = vadd.f32 %v3065, %v3263
        %v3265 = vpop.f32.mrf.mxu0
        %v3266 = vadd.f32 %v3065, %v3265
        %3267 = vmatmul.bf16.gmra.mxu0 %v3011
        %v3268 = vpop.f32.mrf.mxu0
        %v3269 = vadd.f32 %v3065, %v3268
        %v3270 = vpop.f32.mrf.mxu0
        %v3271 = vadd.f32 %v3065, %v3270
        %3272 = vmatmul.bf16.gmra.mxu0 %v3013
        %v3273 = vpop.f32.mrf.mxu0
        %v3274 = vadd.f32 %v3065, %v3273
        %v3275 = vpop.f32.mrf.mxu0
        %v3276 = vadd.f32 %v3065, %v3275
        %3277 = vmatmul.bf16.gmra.mxu0 %v3015
        %v3278 = vpop.f32.mrf.mxu0
        %v3279 = vadd.f32 %v3065, %v3278
        %v3280 = vpop.f32.mrf.mxu0
        %v3281 = vadd.f32 %v3065, %v3280
        %3282 = vmatmul.bf16.gmra.mxu0 %v3017
        %v3283 = vpop.f32.mrf.mxu0
        %v3284 = vadd.f32 %v3065, %v3283
        %v3285 = vpop.f32.mrf.mxu0
        %v3286 = vadd.f32 %v3065, %v3285
        %3287 = vmatmul.bf16.gmra.mxu0 %v3019
        %v3288 = vpop.f32.mrf.mxu0
        %v3289 = vadd.f32 %v3065, %v3288
        %v3290 = vpop.f32.mrf.mxu0
        %v3291 = vadd.f32 %v3065, %v3290
        %3292 = vmatmul.bf16.gmra.mxu0 %v3021
        %v3293 = vpop.f32.mrf.mxu0
        %v3294 = vadd.f32 %v3065, %v3293
        %v3295 = vpop.f32.mrf.mxu0
        %v3296 = vadd.f32 %v3065, %v3295
        %3297 = vmatmul.bf16.gmra.mxu0 %v3023
        %v3298 = vpop.f32.mrf.mxu0
        %v3299 = vadd.f32 %v3065, %v3298
        %v3300 = vpop.f32.mrf.mxu0
        %v3301 = vadd.f32 %v3065, %v3300
        %3302 = vmatmul.bf16.gmra.mxu0 %v3025
        %v3303 = vpop.f32.mrf.mxu0
        %v3304 = vadd.f32 %v3065, %v3303
        %v3305 = vpop.f32.mrf.mxu0
        %v3306 = vadd.f32 %v3065, %v3305
        %3307 = vmatmul.bf16.gmra.mxu0 %v3027
        %v3308 = vpop.f32.mrf.mxu0
        %v3309 = vadd.f32 %v3065, %v3308
        %v3310 = vpop.f32.mrf.mxu0
        %v3311 = vadd.f32 %v3065, %v3310
        %3312 = vmatmul.bf16.gmra.mxu0 %v3029
        %v3313 = vpop.f32.mrf.mxu0
        %v3314 = vadd.f32 %v3065, %v3313
        %v3315 = vpop.f32.mrf.mxu0
        %v3316 = vadd.f32 %v3065, %v3315
        %3317 = vdwg.mxu0
        %3318 = vmatpush.bf16.msra.mxu0 %v3195
        %3319 = vmatpush.bf16.msra.mxu0 %v3193
        %3320 = vmatpush.bf16.msra.mxu0 %v3191
        %3321 = vmatpush.bf16.msra.mxu0 %v3189
        %3322 = vmatpush.bf16.msra.mxu0 %v3187
        %3323 = vmatpush.bf16.msra.mxu0 %v3185
        %3324 = vmatpush.bf16.msra.mxu0 %v3183
        %3325 = vmatpush.bf16.msra.mxu0 %v3181
        %3326 = vmatmul.bf16.gmra.mxu0 %v3000
        %v3327 = vpop.f32.mrf.mxu0
        %v3328 = vadd.f32 %v3239, %v3327
        %v3329 = vpop.f32.mrf.mxu0
        %v3330 = vadd.f32 %v3241, %v3329
        %3331 = vmatmul.bf16.gmra.mxu0 %v3002
        %v3332 = vpop.f32.mrf.mxu0
        %v3333 = vadd.f32 %v3244, %v3332
        %v3334 = vpop.f32.mrf.mxu0
        %v3335 = vadd.f32 %v3246, %v3334
        %3336 = vmatmul.bf16.gmra.mxu0 %v3004
        %v3337 = vpop.f32.mrf.mxu0
        %v3338 = vadd.f32 %v3249, %v3337
        %v3339 = vpop.f32.mrf.mxu0
        %v3340 = vadd.f32 %v3251, %v3339
        %3341 = vmatmul.bf16.gmra.mxu0 %v3006
        %v3342 = vpop.f32.mrf.mxu0
        %v3343 = vadd.f32 %v3254, %v3342
        %v3344 = vpop.f32.mrf.mxu0
        %v3345 = vadd.f32 %v3256, %v3344
        %3346 = vmatmul.bf16.gmra.mxu0 %v3008
        %v3347 = vpop.f32.mrf.mxu0
        %v3348 = vadd.f32 %v3259, %v3347
        %v3349 = vpop.f32.mrf.mxu0
        %v3350 = vadd.f32 %v3261, %v3349
        %3351 = vmatmul.bf16.gmra.mxu0 %v3010
        %v3352 = vpop.f32.mrf.mxu0
        %v3353 = vadd.f32 %v3264, %v3352
        %v3354 = vpop.f32.mrf.mxu0
        %v3355 = vadd.f32 %v3266, %v3354
        %3356 = vmatmul.bf16.gmra.mxu0 %v3012
        %v3357 = vpop.f32.mrf.mxu0
        %v3358 = vadd.f32 %v3269, %v3357
        %v3359 = vpop.f32.mrf.mxu0
        %v3360 = vadd.f32 %v3271, %v3359
        %3361 = vmatmul.bf16.gmra.mxu0 %v3014
        %v3362 = vpop.f32.mrf.mxu0
        %v3363 = vadd.f32 %v3274, %v3362
        %v3364 = vpop.f32.mrf.mxu0
        %v3365 = vadd.f32 %v3276, %v3364
        %3366 = vmatmul.bf16.gmra.mxu0 %v3016
        %v3367 = vpop.f32.mrf.mxu0
        %v3368 = vadd.f32 %v3279, %v3367
        %v3369 = vpop.f32.mrf.mxu0
        %v3370 = vadd.f32 %v3281, %v3369
        %3371 = vmatmul.bf16.gmra.mxu0 %v3018
        %v3372 = vpop.f32.mrf.mxu0
        %v3373 = vadd.f32 %v3284, %v3372
        %v3374 = vpop.f32.mrf.mxu0
        %v3375 = vadd.f32 %v3286, %v3374
        %3376 = vmatmul.bf16.gmra.mxu0 %v3020
        %v3377 = vpop.f32.mrf.mxu0
        %v3378 = vadd.f32 %v3289, %v3377
        %v3379 = vpop.f32.mrf.mxu0
        %v3380 = vadd.f32 %v3291, %v3379
        %3381 = vmatmul.bf16.gmra.mxu0 %v3022
        %v3382 = vpop.f32.mrf.mxu0
        %v3383 = vadd.f32 %v3294, %v3382
        %v3384 = vpop.f32.mrf.mxu0
        %v3385 = vadd.f32 %v3296, %v3384
        %3386 = vmatmul.bf16.gmra.mxu0 %v3024
        %v3387 = vpop.f32.mrf.mxu0
        %v3388 = vadd.f32 %v3299, %v3387
        %v3389 = vpop.f32.mrf.mxu0
        %v3390 = vadd.f32 %v3301, %v3389
        %3391 = vmatmul.bf16.gmra.mxu0 %v3026
        %v3392 = vpop.f32.mrf.mxu0
        %v3393 = vadd.f32 %v3304, %v3392
        %v3394 = vpop.f32.mrf.mxu0
        %v3395 = vadd.f32 %v3306, %v3394
        %3396 = vmatmul.bf16.gmra.mxu0 %v3028
        %v3397 = vpop.f32.mrf.mxu0
        %v3398 = vadd.f32 %v3309, %v3397
        %v3399 = vpop.f32.mrf.mxu0
        %v3400 = vadd.f32 %v3311, %v3399
        %3401 = vmatmul.bf16.gmra.mxu0 %v3030
        %v3402 = vpop.f32.mrf.mxu0
        %v3403 = vadd.f32 %v3314, %v3402
        %v3404 = vpop.f32.mrf.mxu0
        %v3405 = vadd.f32 %v3316, %v3404
        %3406 = vdwg.mxu0
        %3407 = vmatpush.bf16.msra.mxu0 %v3180
        %3408 = vmatpush.bf16.msra.mxu0 %v3178
        %3409 = vmatpush.bf16.msra.mxu0 %v3176
        %3410 = vmatpush.bf16.msra.mxu0 %v3174
        %3411 = vmatpush.bf16.msra.mxu0 %v3172
        %3412 = vmatpush.bf16.msra.mxu0 %v3170
        %3413 = vmatpush.bf16.msra.mxu0 %v3168
        %3414 = vmatpush.bf16.msra.mxu0 %v3166
        %3415 = vmatmul.bf16.gmra.mxu0 %v2999
        %v3416 = vpop.f32.mrf.mxu0
        %v3417 = vadd.f32 %v3066, %v3416
        %v3418 = vpop.f32.mrf.mxu0
        %v3419 = vadd.f32 %v3066, %v3418
        %3420 = vmatmul.bf16.gmra.mxu0 %v3001
        %v3421 = vpop.f32.mrf.mxu0
        %v3422 = vadd.f32 %v3066, %v3421
        %v3423 = vpop.f32.mrf.mxu0
        %v3424 = vadd.f32 %v3066, %v3423
        %3425 = vmatmul.bf16.gmra.mxu0 %v3003
        %v3426 = vpop.f32.mrf.mxu0
        %v3427 = vadd.f32 %v3066, %v3426
        %v3428 = vpop.f32.mrf.mxu0
        %v3429 = vadd.f32 %v3066, %v3428
        %3430 = vmatmul.bf16.gmra.mxu0 %v3005
        %v3431 = vpop.f32.mrf.mxu0
        %v3432 = vadd.f32 %v3066, %v3431
        %v3433 = vpop.f32.mrf.mxu0
        %v3434 = vadd.f32 %v3066, %v3433
        %3435 = vmatmul.bf16.gmra.mxu0 %v3007
        %v3436 = vpop.f32.mrf.mxu0
        %v3437 = vadd.f32 %v3066, %v3436
        %v3438 = vpop.f32.mrf.mxu0
        %v3439 = vadd.f32 %v3066, %v3438
        %3440 = vmatmul.bf16.gmra.mxu0 %v3009
        %v3441 = vpop.f32.mrf.mxu0
        %v3442 = vadd.f32 %v3066, %v3441
        %v3443 = vpop.f32.mrf.mxu0
        %v3444 = vadd.f32 %v3066, %v3443
        %3445 = vmatmul.bf16.gmra.mxu0 %v3011
        %v3446 = vpop.f32.mrf.mxu0
        %v3447 = vadd.f32 %v3066, %v3446
        %v3448 = vpop.f32.mrf.mxu0
        %v3449 = vadd.f32 %v3066, %v3448
        %3450 = vmatmul.bf16.gmra.mxu0 %v3013
        %v3451 = vpop.f32.mrf.mxu0
        %v3452 = vadd.f32 %v3066, %v3451
        %v3453 = vpop.f32.mrf.mxu0
        %v3454 = vadd.f32 %v3066, %v3453
        %3455 = vmatmul.bf16.gmra.mxu0 %v3015
        %v3456 = vpop.f32.mrf.mxu0
        %v3457 = vadd.f32 %v3066, %v3456
        %v3458 = vpop.f32.mrf.mxu0
        %v3459 = vadd.f32 %v3066, %v3458
        %3460 = vmatmul.bf16.gmra.mxu0 %v3017
        %v3461 = vpop.f32.mrf.mxu0
        %v3462 = vadd.f32 %v3066, %v3461
        %v3463 = vpop.f32.mrf.mxu0
        %v3464 = vadd.f32 %v3066, %v3463
        %3465 = vmatmul.bf16.gmra.mxu0 %v3019
        %v3466 = vpop.f32.mrf.mxu0
        %v3467 = vadd.f32 %v3066, %v3466
        %v3468 = vpop.f32.mrf.mxu0
        %v3469 = vadd.f32 %v3066, %v3468
        %3470 = vmatmul.bf16.gmra.mxu0 %v3021
        %v3471 = vpop.f32.mrf.mxu0
        %v3472 = vadd.f32 %v3066, %v3471
        %v3473 = vpop.f32.mrf.mxu0
        %v3474 = vadd.f32 %v3066, %v3473
        %3475 = vmatmul.bf16.gmra.mxu0 %v3023
        %v3476 = vpop.f32.mrf.mxu0
        %v3477 = vadd.f32 %v3066, %v3476
        %v3478 = vpop.f32.mrf.mxu0
        %v3479 = vadd.f32 %v3066, %v3478
        %3480 = vmatmul.bf16.gmra.mxu0 %v3025
        %v3481 = vpop.f32.mrf.mxu0
        %v3482 = vadd.f32 %v3066, %v3481
        %v3483 = vpop.f32.mrf.mxu0
        %v3484 = vadd.f32 %v3066, %v3483
        %3485 = vmatmul.bf16.gmra.mxu0 %v3027
        %v3486 = vpop.f32.mrf.mxu0
        %v3487 = vadd.f32 %v3066, %v3486
        %v3488 = vpop.f32.mrf.mxu0
        %v3489 = vadd.f32 %v3066, %v3488
        %3490 = vmatmul.bf16.gmra.mxu0 %v3029
        %v3491 = vpop.f32.mrf.mxu0
        %v3492 = vadd.f32 %v3066, %v3491
        %v3493 = vpop.f32.mrf.mxu0
        %v3494 = vadd.f32 %v3066, %v3493
        %3495 = vdwg.mxu0
        %3496 = vmatpush.bf16.msra.mxu0 %v3196
        %3497 = vmatpush.bf16.msra.mxu0 %v3194
        %3498 = vmatpush.bf16.msra.mxu0 %v3192
        %3499 = vmatpush.bf16.msra.mxu0 %v3190
        %3500 = vmatpush.bf16.msra.mxu0 %v3188
        %3501 = vmatpush.bf16.msra.mxu0 %v3186
        %3502 = vmatpush.bf16.msra.mxu0 %v3184
        %3503 = vmatpush.bf16.msra.mxu0 %v3182
        %3504 = vmatmul.bf16.gmra.mxu0 %v3000
        %v3505 = vpop.f32.mrf.mxu0
        %v3506 = vadd.f32 %v3417, %v3505
        %v3507 = vpop.f32.mrf.mxu0
        %v3508 = vadd.f32 %v3419, %v3507
        %3509 = vmatmul.bf16.gmra.mxu0 %v3002
        %v3510 = vpop.f32.mrf.mxu0
        %v3511 = vadd.f32 %v3422, %v3510
        %v3512 = vpop.f32.mrf.mxu0
        %v3513 = vadd.f32 %v3424, %v3512
        %3514 = vmatmul.bf16.gmra.mxu0 %v3004
        %v3515 = vpop.f32.mrf.mxu0
        %v3516 = vadd.f32 %v3427, %v3515
        %v3517 = vpop.f32.mrf.mxu0
        %v3518 = vadd.f32 %v3429, %v3517
        %3519 = vmatmul.bf16.gmra.mxu0 %v3006
        %v3520 = vpop.f32.mrf.mxu0
        %v3521 = vadd.f32 %v3432, %v3520
        %v3522 = vpop.f32.mrf.mxu0
        %v3523 = vadd.f32 %v3434, %v3522
        %3524 = vmatmul.bf16.gmra.mxu0 %v3008
        %v3525 = vpop.f32.mrf.mxu0
        %v3526 = vadd.f32 %v3437, %v3525
        %v3527 = vpop.f32.mrf.mxu0
        %v3528 = vadd.f32 %v3439, %v3527
        %3529 = vmatmul.bf16.gmra.mxu0 %v3010
        %v3530 = vpop.f32.mrf.mxu0
        %v3531 = vadd.f32 %v3442, %v3530
        %v3532 = vpop.f32.mrf.mxu0
        %v3533 = vadd.f32 %v3444, %v3532
        %3534 = vmatmul.bf16.gmra.mxu0 %v3012
        %v3535 = vpop.f32.mrf.mxu0
        %v3536 = vadd.f32 %v3447, %v3535
        %v3537 = vpop.f32.mrf.mxu0
        %v3538 = vadd.f32 %v3449, %v3537
        %3539 = vmatmul.bf16.gmra.mxu0 %v3014
        %v3540 = vpop.f32.mrf.mxu0
        %v3541 = vadd.f32 %v3452, %v3540
        %v3542 = vpop.f32.mrf.mxu0
        %v3543 = vadd.f32 %v3454, %v3542
        %3544 = vmatmul.bf16.gmra.mxu0 %v3016
        %v3545 = vpop.f32.mrf.mxu0
        %v3546 = vadd.f32 %v3457, %v3545
        %v3547 = vpop.f32.mrf.mxu0
        %v3548 = vadd.f32 %v3459, %v3547
        %3549 = vmatmul.bf16.gmra.mxu0 %v3018
        %v3550 = vpop.f32.mrf.mxu0
        %v3551 = vadd.f32 %v3462, %v3550
        %v3552 = vpop.f32.mrf.mxu0
        %v3553 = vadd.f32 %v3464, %v3552
        %3554 = vmatmul.bf16.gmra.mxu0 %v3020
        %v3555 = vpop.f32.mrf.mxu0
        %v3556 = vadd.f32 %v3467, %v3555
        %v3557 = vpop.f32.mrf.mxu0
        %v3558 = vadd.f32 %v3469, %v3557
        %3559 = vmatmul.bf16.gmra.mxu0 %v3022
        %v3560 = vpop.f32.mrf.mxu0
        %v3561 = vadd.f32 %v3472, %v3560
        %v3562 = vpop.f32.mrf.mxu0
        %v3563 = vadd.f32 %v3474, %v3562
        %3564 = vmatmul.bf16.gmra.mxu0 %v3024
        %v3565 = vpop.f32.mrf.mxu0
        %v3566 = vadd.f32 %v3477, %v3565
        %v3567 = vpop.f32.mrf.mxu0
        %v3568 = vadd.f32 %v3479, %v3567
        %3569 = vmatmul.bf16.gmra.mxu0 %v3026
        %v3570 = vpop.f32.mrf.mxu0
        %v3571 = vadd.f32 %v3482, %v3570
        %v3572 = vpop.f32.mrf.mxu0
        %v3573 = vadd.f32 %v3484, %v3572
        %3574 = vmatmul.bf16.gmra.mxu0 %v3028
        %v3575 = vpop.f32.mrf.mxu0
        %v3576 = vadd.f32 %v3487, %v3575
        %v3577 = vpop.f32.mrf.mxu0
        %v3578 = vadd.f32 %v3489, %v3577
        %3579 = vmatmul.bf16.gmra.mxu0 %v3030
        %v3580 = vpop.f32.mrf.mxu0
        %v3581 = vadd.f32 %v3492, %v3580
        %v3582 = vpop.f32.mrf.mxu0
        %v3583 = vadd.f32 %v3494, %v3582
        %3584 = vdwg.mxu0
        %v3585 = vadd.f32 %v3328, %v2285
        %v3586 = vadd.f32 %v3506, %v2286
        %v3587 = vadd.f32 %v3330, %v2287
        %v3588 = vadd.f32 %v3508, %v2288
        %v3589 = vadd.f32 %v3333, %v2289
        %v3590 = vadd.f32 %v3511, %v2290
        %v3591 = vadd.f32 %v3335, %v2291
        %v3592 = vadd.f32 %v3513, %v2292
        %v3593 = vadd.f32 %v3338, %v2293
        %v3594 = vadd.f32 %v3516, %v2294
        %v3595 = vadd.f32 %v3340, %v2295
        %v3596 = vadd.f32 %v3518, %v2296
        %v3597 = vadd.f32 %v3343, %v2297
        %v3598 = vadd.f32 %v3521, %v2298
        %v3599 = vadd.f32 %v3345, %v2299
        %v3600 = vadd.f32 %v3523, %v2300
        %v3601 = vadd.f32 %v3348, %v2301
        %v3602 = vadd.f32 %v3526, %v2302
        %v3603 = vadd.f32 %v3350, %v2303
        %v3604 = vadd.f32 %v3528, %v2304
        %v3605 = vadd.f32 %v3353, %v2305
        %v3606 = vadd.f32 %v3531, %v2306
        %v3607 = vadd.f32 %v3355, %v2307
        %v3608 = vadd.f32 %v3533, %v2308
        %v3609 = vadd.f32 %v3358, %v2309
        %v3610 = vadd.f32 %v3536, %v2310
        %v3611 = vadd.f32 %v3360, %v2311
        %v3612 = vadd.f32 %v3538, %v2312
        %v3613 = vadd.f32 %v3363, %v2313
        %v3614 = vadd.f32 %v3541, %v2314
        %v3615 = vadd.f32 %v3365, %v2315
        %v3616 = vadd.f32 %v3543, %v2316
        %v3617 = vadd.f32 %v3368, %v2317
        %v3618 = vadd.f32 %v3546, %v2318
        %v3619 = vadd.f32 %v3370, %v2319
        %v3620 = vadd.f32 %v3548, %v2320
        %v3621 = vadd.f32 %v3373, %v2321
        %v3622 = vadd.f32 %v3551, %v2322
        %v3623 = vadd.f32 %v3375, %v2323
        %v3624 = vadd.f32 %v3553, %v2324
        %v3625 = vadd.f32 %v3378, %v2325
        %v3626 = vadd.f32 %v3556, %v2326
        %v3627 = vadd.f32 %v3380, %v2327
        %v3628 = vadd.f32 %v3558, %v2328
        %v3629 = vadd.f32 %v3383, %v2329
        %v3630 = vadd.f32 %v3561, %v2330
        %v3631 = vadd.f32 %v3385, %v2331
        %v3632 = vadd.f32 %v3563, %v2332
        %v3633 = vadd.f32 %v3388, %v2333
        %v3634 = vadd.f32 %v3566, %v2334
        %v3635 = vadd.f32 %v3390, %v2335
        %v3636 = vadd.f32 %v3568, %v2336
        %v3637 = vadd.f32 %v3393, %v2337
        %v3638 = vadd.f32 %v3571, %v2338
        %v3639 = vadd.f32 %v3395, %v2339
        %v3640 = vadd.f32 %v3573, %v2340
        %v3641 = vadd.f32 %v3398, %v2341
        %v3642 = vadd.f32 %v3576, %v2342
        %v3643 = vadd.f32 %v3400, %v2343
        %v3644 = vadd.f32 %v3578, %v2344
        %v3645 = vadd.f32 %v3403, %v2345
        %v3646 = vadd.f32 %v3581, %v2346
        %v3647 = vadd.f32 %v3405, %v2347
        %v3648 = vadd.f32 %v3583, %v2348
        %v3649 = vmax.f32 %v3585, 0.0
        %v3650 = vmax.f32 %v3586, 0.0
        %v3651 = vmax.f32 %v3587, 0.0
        %v3652 = vmax.f32 %v3588, 0.0
        %v3653 = vmax.f32 %v3589, 0.0
        %v3654 = vmax.f32 %v3590, 0.0
        %v3655 = vmax.f32 %v3591, 0.0
        %v3656 = vmax.f32 %v3592, 0.0
        %v3657 = vmax.f32 %v3593, 0.0
        %v3658 = vmax.f32 %v3594, 0.0
        %v3659 = vmax.f32 %v3595, 0.0
        %v3660 = vmax.f32 %v3596, 0.0
        %v3661 = vmax.f32 %v3597, 0.0
        %v3662 = vmax.f32 %v3598, 0.0
        %v3663 = vmax.f32 %v3599, 0.0
        %v3664 = vmax.f32 %v3600, 0.0
        %v3665 = vmax.f32 %v3601, 0.0
        %v3666 = vmax.f32 %v3602, 0.0
        %v3667 = vmax.f32 %v3603, 0.0
        %v3668 = vmax.f32 %v3604, 0.0
        %v3669 = vmax.f32 %v3605, 0.0
        %v3670 = vmax.f32 %v3606, 0.0
        %v3671 = vmax.f32 %v3607, 0.0
        %v3672 = vmax.f32 %v3608, 0.0
        %v3673 = vmax.f32 %v3609, 0.0
        %v3674 = vmax.f32 %v3610, 0.0
        %v3675 = vmax.f32 %v3611, 0.0
        %v3676 = vmax.f32 %v3612, 0.0
        %v3677 = vmax.f32 %v3613, 0.0
        %v3678 = vmax.f32 %v3614, 0.0
        %v3679 = vmax.f32 %v3615, 0.0
        %v3680 = vmax.f32 %v3616, 0.0
        %v3681 = vmax.f32 %v3617, 0.0
        %v3682 = vmax.f32 %v3618, 0.0
        %v3683 = vmax.f32 %v3619, 0.0
        %v3684 = vmax.f32 %v3620, 0.0
        %v3685 = vmax.f32 %v3621, 0.0
        %v3686 = vmax.f32 %v3622, 0.0
        %v3687 = vmax.f32 %v3623, 0.0
        %v3688 = vmax.f32 %v3624, 0.0
        %v3689 = vmax.f32 %v3625, 0.0
        %v3690 = vmax.f32 %v3626, 0.0
        %v3691 = vmax.f32 %v3627, 0.0
        %v3692 = vmax.f32 %v3628, 0.0
        %v3693 = vmax.f32 %v3629, 0.0
        %v3694 = vmax.f32 %v3630, 0.0
        %v3695 = vmax.f32 %v3631, 0.0
        %v3696 = vmax.f32 %v3632, 0.0
        %v3697 = vmax.f32 %v3633, 0.0
        %v3698 = vmax.f32 %v3634, 0.0
        %v3699 = vmax.f32 %v3635, 0.0
        %v3700 = vmax.f32 %v3636, 0.0
        %v3701 = vmax.f32 %v3637, 0.0
        %v3702 = vmax.f32 %v3638, 0.0
        %v3703 = vmax.f32 %v3639, 0.0
        %v3704 = vmax.f32 %v3640, 0.0
        %v3705 = vmax.f32 %v3641, 0.0
        %v3706 = vmax.f32 %v3642, 0.0
        %v3707 = vmax.f32 %v3643, 0.0
        %v3708 = vmax.f32 %v3644, 0.0
        %v3709 = vmax.f32 %v3645, 0.0
        %v3710 = vmax.f32 %v3646, 0.0
        %v3711 = vmax.f32 %v3647, 0.0
        %v3712 = vmax.f32 %v3648, 0.0
        %v3713 = vpack.c.bf16 %v3651, %v3649
        %v3714 = vpack.c.bf16 %v3652, %v3650
        %v3715 = vpack.c.bf16 %v3655, %v3653
        %v3716 = vpack.c.bf16 %v3656, %v3654
        %v3717 = vpack.c.bf16 %v3659, %v3657
        %v3718 = vpack.c.bf16 %v3660, %v3658
        %v3719 = vpack.c.bf16 %v3663, %v3661
        %v3720 = vpack.c.bf16 %v3664, %v3662
        %v3721 = vpack.c.bf16 %v3667, %v3665
        %v3722 = vpack.c.bf16 %v3668, %v3666
        %v3723 = vpack.c.bf16 %v3671, %v3669
        %v3724 = vpack.c.bf16 %v3672, %v3670
        %v3725 = vpack.c.bf16 %v3675, %v3673
        %v3726 = vpack.c.bf16 %v3676, %v3674
        %v3727 = vpack.c.bf16 %v3679, %v3677
        %v3728 = vpack.c.bf16 %v3680, %v3678
        %v3729 = vpack.c.bf16 %v3683, %v3681
        %v3730 = vpack.c.bf16 %v3684, %v3682
        %v3731 = vpack.c.bf16 %v3687, %v3685
        %v3732 = vpack.c.bf16 %v3688, %v3686
        %v3733 = vpack.c.bf16 %v3691, %v3689
        %v3734 = vpack.c.bf16 %v3692, %v3690
        %v3735 = vpack.c.bf16 %v3695, %v3693
        %v3736 = vpack.c.bf16 %v3696, %v3694
        %v3737 = vpack.c.bf16 %v3699, %v3697
        %v3738 = vpack.c.bf16 %v3700, %v3698
        %v3739 = vpack.c.bf16 %v3703, %v3701
        %v3740 = vpack.c.bf16 %v3704, %v3702
        %v3741 = vpack.c.bf16 %v3707, %v3705
        %v3742 = vpack.c.bf16 %v3708, %v3706
        %v3743 = vpack.c.bf16 %v3711, %v3709
        %v3744 = vpack.c.bf16 %v3712, %v3710
        %v3745 = vld [vmem:[#allocation14] sm:$0xf]
        %v3746 = vld [vmem:[#allocation14 + $0x4] sm:$0xf]
        %v3747 = vld [vmem:[#allocation14 + $0x8] sm:$0xf]
        %v3748 = vld [vmem:[#allocation14 + $0xc] sm:$0xf]
        %v3749 = vld [vmem:[#allocation14 + $0x10] sm:$0xf]
        %v3750 = vld [vmem:[#allocation14 + $0x14] sm:$0xf]
        %v3751 = vld [vmem:[#allocation14 + $0x18] sm:$0xf]
        %v3752 = vld [vmem:[#allocation14 + $0x1c] sm:$0xf]
        %v3753 = vld [vmem:[#allocation14 + $0x20] sm:$0xf]
        %v3754 = vld [vmem:[#allocation14 + $0x24] sm:$0xf]
        %v3755 = vld [vmem:[#allocation14 + $0x28] sm:$0xf]
        %v3756 = vld [vmem:[#allocation14 + $0x2c] sm:$0xf]
        %v3757 = vld [vmem:[#allocation14 + $0x30] sm:$0xf]
        %v3758 = vld [vmem:[#allocation14 + $0x34] sm:$0xf]
        %v3759 = vld [vmem:[#allocation14 + $0x38] sm:$0xf]
        %v3760 = vld [vmem:[#allocation14 + $0x3c] sm:$0xf]
        %v3761 = vld [vmem:[#allocation14 + $0x40] sm:$0xf]
        %v3762 = vld [vmem:[#allocation14 + $0x44] sm:$0xf]
        %v3763 = vld [vmem:[#allocation14 + $0x48] sm:$0xf]
        %v3764 = vld [vmem:[#allocation14 + $0x4c] sm:$0xf]
        %v3765 = vld [vmem:[#allocation14 + $0x50] sm:$0xf]
        %v3766 = vld [vmem:[#allocation14 + $0x54] sm:$0xf]
        %v3767 = vld [vmem:[#allocation14 + $0x58] sm:$0xf]
        %v3768 = vld [vmem:[#allocation14 + $0x5c] sm:$0xf]
        %v3769 = vld [vmem:[#allocation14 + $0x60] sm:$0xf]
        %v3770 = vld [vmem:[#allocation14 + $0x64] sm:$0xf]
        %v3771 = vld [vmem:[#allocation14 + $0x68] sm:$0xf]
        %v3772 = vld [vmem:[#allocation14 + $0x6c] sm:$0xf]
        %v3773 = vld [vmem:[#allocation14 + $0x70] sm:$0xf]
        %v3774 = vld [vmem:[#allocation14 + $0x74] sm:$0xf]
        %v3775 = vld [vmem:[#allocation14 + $0x78] sm:$0xf]
        %v3776 = vld [vmem:[#allocation14 + $0x7c] sm:$0xf]
        %v3777 = vld [vmem:[%s12] sm:$0x1]
        %v3779 = vperm.slane %v3777, 0
        %v3813 = vunpack.c.l.b16 %v3745
        %v3814 = vunpack.c.l.b16 %v3746
        %v3815 = vunpack.c.l.b16 %v3747
        %v3816 = vunpack.c.l.b16 %v3748
        %v3817 = vunpack.c.l.b16 %v3749
        %v3818 = vunpack.c.l.b16 %v3750
        %v3819 = vunpack.c.l.b16 %v3751
        %v3820 = vunpack.c.l.b16 %v3752
        %v3821 = vunpack.c.l.b16 %v3753
        %v3822 = vunpack.c.l.b16 %v3754
        %v3823 = vunpack.c.l.b16 %v3755
        %v3824 = vunpack.c.l.b16 %v3756
        %v3825 = vunpack.c.l.b16 %v3757
        %v3826 = vunpack.c.l.b16 %v3758
        %v3827 = vunpack.c.l.b16 %v3759
        %v3828 = vunpack.c.l.b16 %v3760
        %v3829 = vunpack.c.l.b16 %v3761
        %v3830 = vunpack.c.l.b16 %v3762
        %v3831 = vunpack.c.l.b16 %v3763
        %v3832 = vunpack.c.l.b16 %v3764
        %v3833 = vunpack.c.l.b16 %v3765
        %v3834 = vunpack.c.l.b16 %v3766
        %v3835 = vunpack.c.l.b16 %v3767
        %v3836 = vunpack.c.l.b16 %v3768
        %v3837 = vunpack.c.l.b16 %v3769
        %v3838 = vunpack.c.l.b16 %v3770
        %v3839 = vunpack.c.l.b16 %v3771
        %v3840 = vunpack.c.l.b16 %v3772
        %v3841 = vunpack.c.l.b16 %v3773
        %v3842 = vunpack.c.l.b16 %v3774
        %v3843 = vunpack.c.l.b16 %v3775
        %v3844 = vunpack.c.l.b16 %v3776
        %v3845 = vpack.c.b16 %v3814, %v3813
        %v3846 = vpack.c.b16 %v3816, %v3815
        %v3847 = vpack.c.b16 %v3818, %v3817
        %v3848 = vpack.c.b16 %v3820, %v3819
        %v3849 = vpack.c.b16 %v3822, %v3821
        %v3850 = vpack.c.b16 %v3824, %v3823
        %v3851 = vpack.c.b16 %v3826, %v3825
        %v3852 = vpack.c.b16 %v3828, %v3827
        %v3853 = vpack.c.b16 %v3830, %v3829
        %v3854 = vpack.c.b16 %v3832, %v3831
        %v3855 = vpack.c.b16 %v3834, %v3833
        %v3856 = vpack.c.b16 %v3836, %v3835
        %v3857 = vpack.c.b16 %v3838, %v3837
        %v3858 = vpack.c.b16 %v3840, %v3839
        %v3859 = vpack.c.b16 %v3842, %v3841
        %v3860 = vpack.c.b16 %v3844, %v3843
        %3877 = vmatpush.bf16.msra.mxu0 %v3852
        %3878 = vmatpush.bf16.msra.mxu0 %v3851
        %3879 = vmatpush.bf16.msra.mxu0 %v3850
        %3880 = vmatpush.bf16.msra.mxu0 %v3849
        %3881 = vmatpush.bf16.msra.mxu0 %v3848
        %3882 = vmatpush.bf16.msra.mxu0 %v3847
        %3883 = vmatpush.bf16.msra.mxu0 %v3846
        %3884 = vmatpush.bf16.msra.mxu0 %v3845
        %3885 = vmatmul.bf16.gmra.mxu0 %v3713
        %v3886 = vpop.f32.mrf.mxu0
        %v3887 = vadd.f32 %v3779, %v3886
        %v3888 = vpop.f32.mrf.mxu0
        %v3889 = vadd.f32 %v3779, %v3888
        %3890 = vmatmul.bf16.gmra.mxu0 %v3715
        %v3891 = vpop.f32.mrf.mxu0
        %v3892 = vadd.f32 %v3779, %v3891
        %v3893 = vpop.f32.mrf.mxu0
        %v3894 = vadd.f32 %v3779, %v3893
        %3895 = vmatmul.bf16.gmra.mxu0 %v3717
        %v3896 = vpop.f32.mrf.mxu0
        %v3897 = vadd.f32 %v3779, %v3896
        %v3898 = vpop.f32.mrf.mxu0
        %v3899 = vadd.f32 %v3779, %v3898
        %3900 = vmatmul.bf16.gmra.mxu0 %v3719
        %v3901 = vpop.f32.mrf.mxu0
        %v3902 = vadd.f32 %v3779, %v3901
        %v3903 = vpop.f32.mrf.mxu0
        %v3904 = vadd.f32 %v3779, %v3903
        %3905 = vmatmul.bf16.gmra.mxu0 %v3721
        %v3906 = vpop.f32.mrf.mxu0
        %v3907 = vadd.f32 %v3779, %v3906
        %v3908 = vpop.f32.mrf.mxu0
        %v3909 = vadd.f32 %v3779, %v3908
        %3910 = vmatmul.bf16.gmra.mxu0 %v3723
        %v3911 = vpop.f32.mrf.mxu0
        %v3912 = vadd.f32 %v3779, %v3911
        %v3913 = vpop.f32.mrf.mxu0
        %v3914 = vadd.f32 %v3779, %v3913
        %3915 = vmatmul.bf16.gmra.mxu0 %v3725
        %v3916 = vpop.f32.mrf.mxu0
        %v3917 = vadd.f32 %v3779, %v3916
        %v3918 = vpop.f32.mrf.mxu0
        %v3919 = vadd.f32 %v3779, %v3918
        %3920 = vmatmul.bf16.gmra.mxu0 %v3727
        %v3921 = vpop.f32.mrf.mxu0
        %v3922 = vadd.f32 %v3779, %v3921
        %v3923 = vpop.f32.mrf.mxu0
        %v3924 = vadd.f32 %v3779, %v3923
        %3925 = vmatmul.bf16.gmra.mxu0 %v3729
        %v3926 = vpop.f32.mrf.mxu0
        %v3927 = vadd.f32 %v3779, %v3926
        %v3928 = vpop.f32.mrf.mxu0
        %v3929 = vadd.f32 %v3779, %v3928
        %3930 = vmatmul.bf16.gmra.mxu0 %v3731
        %v3931 = vpop.f32.mrf.mxu0
        %v3932 = vadd.f32 %v3779, %v3931
        %v3933 = vpop.f32.mrf.mxu0
        %v3934 = vadd.f32 %v3779, %v3933
        %3935 = vmatmul.bf16.gmra.mxu0 %v3733
        %v3936 = vpop.f32.mrf.mxu0
        %v3937 = vadd.f32 %v3779, %v3936
        %v3938 = vpop.f32.mrf.mxu0
        %v3939 = vadd.f32 %v3779, %v3938
        %3940 = vmatmul.bf16.gmra.mxu0 %v3735
        %v3941 = vpop.f32.mrf.mxu0
        %v3942 = vadd.f32 %v3779, %v3941
        %v3943 = vpop.f32.mrf.mxu0
        %v3944 = vadd.f32 %v3779, %v3943
        %3945 = vmatmul.bf16.gmra.mxu0 %v3737
        %v3946 = vpop.f32.mrf.mxu0
        %v3947 = vadd.f32 %v3779, %v3946
        %v3948 = vpop.f32.mrf.mxu0
        %v3949 = vadd.f32 %v3779, %v3948
        %3950 = vmatmul.bf16.gmra.mxu0 %v3739
        %v3951 = vpop.f32.mrf.mxu0
        %v3952 = vadd.f32 %v3779, %v3951
        %v3953 = vpop.f32.mrf.mxu0
        %v3954 = vadd.f32 %v3779, %v3953
        %3955 = vmatmul.bf16.gmra.mxu0 %v3741
        %v3956 = vpop.f32.mrf.mxu0
        %v3957 = vadd.f32 %v3779, %v3956
        %v3958 = vpop.f32.mrf.mxu0
        %v3959 = vadd.f32 %v3779, %v3958
        %3960 = vmatmul.bf16.gmra.mxu0 %v3743
        %v3961 = vpop.f32.mrf.mxu0
        %v3962 = vadd.f32 %v3779, %v3961
        %v3963 = vpop.f32.mrf.mxu0
        %v3964 = vadd.f32 %v3779, %v3963
        %3965 = vdwg.mxu0
        %3966 = vmatpush.bf16.msra.mxu0 %v3860
        %3967 = vmatpush.bf16.msra.mxu0 %v3859
        %3968 = vmatpush.bf16.msra.mxu0 %v3858
        %3969 = vmatpush.bf16.msra.mxu0 %v3857
        %3970 = vmatpush.bf16.msra.mxu0 %v3856
        %3971 = vmatpush.bf16.msra.mxu0 %v3855
        %3972 = vmatpush.bf16.msra.mxu0 %v3854
        %3973 = vmatpush.bf16.msra.mxu0 %v3853
        %3974 = vmatmul.bf16.gmra.mxu0 %v3714
        %v3975 = vpop.f32.mrf.mxu0
        %v3976 = vadd.f32 %v3887, %v3975
        %v3977 = vpop.f32.mrf.mxu0
        %v3978 = vadd.f32 %v3889, %v3977
        %3979 = vmatmul.bf16.gmra.mxu0 %v3716
        %v3980 = vpop.f32.mrf.mxu0
        %v3981 = vadd.f32 %v3892, %v3980
        %v3982 = vpop.f32.mrf.mxu0
        %v3983 = vadd.f32 %v3894, %v3982
        %3984 = vmatmul.bf16.gmra.mxu0 %v3718
        %v3985 = vpop.f32.mrf.mxu0
        %v3986 = vadd.f32 %v3897, %v3985
        %v3987 = vpop.f32.mrf.mxu0
        %v3988 = vadd.f32 %v3899, %v3987
        %3989 = vmatmul.bf16.gmra.mxu0 %v3720
        %v3990 = vpop.f32.mrf.mxu0
        %v3991 = vadd.f32 %v3902, %v3990
        %v3992 = vpop.f32.mrf.mxu0
        %v3993 = vadd.f32 %v3904, %v3992
        %3994 = vmatmul.bf16.gmra.mxu0 %v3722
        %v3995 = vpop.f32.mrf.mxu0
        %v3996 = vadd.f32 %v3907, %v3995
        %v3997 = vpop.f32.mrf.mxu0
        %v3998 = vadd.f32 %v3909, %v3997
        %3999 = vmatmul.bf16.gmra.mxu0 %v3724
        %v4000 = vpop.f32.mrf.mxu0
        %v4001 = vadd.f32 %v3912, %v4000
        %v4002 = vpop.f32.mrf.mxu0
        %v4003 = vadd.f32 %v3914, %v4002
        %4004 = vmatmul.bf16.gmra.mxu0 %v3726
        %v4005 = vpop.f32.mrf.mxu0
        %v4006 = vadd.f32 %v3917, %v4005
        %v4007 = vpop.f32.mrf.mxu0
        %v4008 = vadd.f32 %v3919, %v4007
        %4009 = vmatmul.bf16.gmra.mxu0 %v3728
        %v4010 = vpop.f32.mrf.mxu0
        %v4011 = vadd.f32 %v3922, %v4010
        %v4012 = vpop.f32.mrf.mxu0
        %v4013 = vadd.f32 %v3924, %v4012
        %4014 = vmatmul.bf16.gmra.mxu0 %v3730
        %v4015 = vpop.f32.mrf.mxu0
        %v4016 = vadd.f32 %v3927, %v4015
        %v4017 = vpop.f32.mrf.mxu0
        %v4018 = vadd.f32 %v3929, %v4017
        %4019 = vmatmul.bf16.gmra.mxu0 %v3732
        %v4020 = vpop.f32.mrf.mxu0
        %v4021 = vadd.f32 %v3932, %v4020
        %v4022 = vpop.f32.mrf.mxu0
        %v4023 = vadd.f32 %v3934, %v4022
        %4024 = vmatmul.bf16.gmra.mxu0 %v3734
        %v4025 = vpop.f32.mrf.mxu0
        %v4026 = vadd.f32 %v3937, %v4025
        %v4027 = vpop.f32.mrf.mxu0
        %v4028 = vadd.f32 %v3939, %v4027
        %4029 = vmatmul.bf16.gmra.mxu0 %v3736
        %v4030 = vpop.f32.mrf.mxu0
        %v4031 = vadd.f32 %v3942, %v4030
        %v4032 = vpop.f32.mrf.mxu0
        %v4033 = vadd.f32 %v3944, %v4032
        %4034 = vmatmul.bf16.gmra.mxu0 %v3738
        %v4035 = vpop.f32.mrf.mxu0
        %v4036 = vadd.f32 %v3947, %v4035
        %v4037 = vpop.f32.mrf.mxu0
        %v4038 = vadd.f32 %v3949, %v4037
        %4039 = vmatmul.bf16.gmra.mxu0 %v3740
        %v4040 = vpop.f32.mrf.mxu0
        %v4041 = vadd.f32 %v3952, %v4040
        %v4042 = vpop.f32.mrf.mxu0
        %v4043 = vadd.f32 %v3954, %v4042
        %4044 = vmatmul.bf16.gmra.mxu0 %v3742
        %v4045 = vpop.f32.mrf.mxu0
        %v4046 = vadd.f32 %v3957, %v4045
        %v4047 = vpop.f32.mrf.mxu0
        %v4048 = vadd.f32 %v3959, %v4047
        %4049 = vmatmul.bf16.gmra.mxu0 %v3744
        %v4050 = vpop.f32.mrf.mxu0
        %v4051 = vadd.f32 %v3962, %v4050
        %v4052 = vpop.f32.mrf.mxu0
        %v4053 = vadd.f32 %v3964, %v4052
        %4054 = vdwg.mxu0
        %4055 = vst [vmem:[%s574] sm:$0xff] %v3976
        %4056 = vst [vmem:[%s574 + $0x8] sm:$0xff] %v3978
        %4057 = vst [vmem:[%s574 + $0x10] sm:$0xff] %v3981
        %4058 = vst [vmem:[%s574 + $0x18] sm:$0xff] %v3983
        %4059 = vst [vmem:[%s574 + $0x20] sm:$0xff] %v3986
        %4060 = vst [vmem:[%s574 + $0x28] sm:$0xff] %v3988
        %4061 = vst [vmem:[%s574 + $0x30] sm:$0xff] %v3991
        %4062 = vst [vmem:[%s574 + $0x38] sm:$0xff] %v3993
        %4063 = vst [vmem:[%s574 + $0x40] sm:$0xff] %v3996
        %4064 = vst [vmem:[%s574 + $0x48] sm:$0xff] %v3998
        %4065 = vst [vmem:[%s574 + $0x50] sm:$0xff] %v4001
        %4066 = vst [vmem:[%s574 + $0x58] sm:$0xff] %v4003
        %4067 = vst [vmem:[%s574 + $0x60] sm:$0xff] %v4006
        %4068 = vst [vmem:[%s574 + $0x68] sm:$0xff] %v4008
        %4069 = vst [vmem:[%s574 + $0x70] sm:$0xff] %v4011
        %4070 = vst [vmem:[%s574 + $0x78] sm:$0xff] %v4013
        %4071 = vst [vmem:[%s574 + $0x80] sm:$0xff] %v4016
        %4072 = vst [vmem:[%s574 + $0x88] sm:$0xff] %v4018
        %4073 = vst [vmem:[%s574 + $0x90] sm:$0xff] %v4021
        %4074 = vst [vmem:[%s574 + $0x98] sm:$0xff] %v4023
        %4075 = vst [vmem:[%s574 + $0xa0] sm:$0xff] %v4026
        %4076 = vst [vmem:[%s574 + $0xa8] sm:$0xff] %v4028
        %4077 = vst [vmem:[%s574 + $0xb0] sm:$0xff] %v4031
        %4078 = vst [vmem:[%s574 + $0xb8] sm:$0xff] %v4033
        %4079 = vst [vmem:[%s574 + $0xc0] sm:$0xff] %v4036
        %4080 = vst [vmem:[%s574 + $0xc8] sm:$0xff] %v4038
        %4081 = vst [vmem:[%s574 + $0xd0] sm:$0xff] %v4041
        %4082 = vst [vmem:[%s574 + $0xd8] sm:$0xff] %v4043
        %4083 = vst [vmem:[%s574 + $0xe0] sm:$0xff] %v4046
        %4084 = vst [vmem:[%s574 + $0xe8] sm:$0xff] %v4048
        %4085 = vst [vmem:[%s574 + $0xf0] sm:$0xff] %v4051
        %4086 = vst [vmem:[%s574 + $0xf8] sm:$0xff] %v4053
        %s4087 = sand.u32 %s320, 1
        %s4088 = scalar_lea.sflag [#allocation4], %s4087
        %s4089 = sand.u32 %s320, 1
        %s4090 = smul.addr %s4089, 256
        %s4091 = scalar_lea.vmem [#allocation16], %s4090
        // Predicated region
        $region105: #{tpu_custom_call.1} parent=71 // pred_check
          %p4092 = pneg %p330
        $region106: #{tpu_custom_call.1} parent=71 // pred_check_branch
          %4094 = sbr.rel (%p4092) target = $region108
        $region107: #{tpu_custom_call.1} parent=71 // pred_region
          %s4095 = smul.u32 32, %s34
          %4097 = vsyncadd %s4088, 0
          %s4098 = smul.addr %s4095, 8
          %s4099 = scalar_lea.hbm %s13, %s4098
          %s4100 = sshll.u32 %s4091, 4
          %s4101 = int_to_ptr.vmem [resolvable:$true] %s4100
          %s4102 = sshll.u32 %s4099, 4
          %s4103 = int_to_ptr.hbm [resolvable:$true] %s4102
          %4108 = dma.vmem_to_hbm [thread:$0]  %s4101, 4096, %s4103, %s4088, 128, 128, 8
        $region108: #{tpu_custom_call.1} parent=71 // pred_fallthru
          _
      $region72: #{tpu_custom_call.1} parent=5 // pred_fallthru
        _
      %p4109 = scmp.le.s32.totalorder 2, %s29
      // Predicated region
      $region109: #{tpu_custom_call.1} parent=5 // pred_check
        %p4110 = pneg %p4109
      $region110: #{tpu_custom_call.1} parent=5 // pred_check_branch
        %4112 = sbr.rel (%p4110) target = $region112
      $region111: #{tpu_custom_call.1} parent=5 // pred_region
        %s4113 = ssub.s32 %s29, 2
        // Predicated region
        $region113: #{tpu_custom_call.1} parent=111 // pred_check
          %p4114 = pneg %p336
        $region114: #{tpu_custom_call.1} parent=111 // pred_check_branch
          %4116 = sbr.rel (%p4114) target = $region116
        $region115: #{tpu_custom_call.1} parent=111 // pred_region
          %s4117 = sand.u32 %s321, 1
          %s4118 = scalar_lea.sflag [#allocation4], %s4117
          %s4119 = sand.u32 %s321, 1
          %s4120 = smul.addr %s4119, 256
          %s4121 = scalar_lea.vmem [#allocation16], %s4120
          %4123 = dma.done %s4118, 4096
        $region116: #{tpu_custom_call.1} parent=111 // pred_fallthru
          _
      $region112: #{tpu_custom_call.1} parent=5 // pred_fallthru
        _
    $region6: #{tpu_custom_call.1} parent=1 // loop_footer
      %s33 = sadd.s32 1, %s29
    $region7: #{tpu_custom_call.1} parent=1 // loop_footer_branch
      %28 = sbr.rel target = $region3
    $region8: #{tpu_custom_call.1} parent=1 // loop_exit
      _
    %4124 = vsyncpa [#allocation3], 1
    %s4125 = scalar_lea.sflag [#allocation3], 1
    %4126 = vsyncpa %s4125, 1
    %4127 = vsyncpa [#allocation6], 1
    %4128 = vsyncpa [#allocation9], 1
    %4129 = vsyncpa [#allocation12], 1
    %4130 = vsyncpa [#allocation15], 1
    %4131 = vsyncpa [#allocation4], 1
    %s4132 = scalar_lea.sflag [#allocation4], 1
    %4133 = vsyncpa %s4132, 1

// kernel: tpu_custom_call.1
$region0: #{tpu_custom_call.1}
  #allocation0 [shape = 'u32[]', space=smem, size = 0x4, offset = 0x4, fixed_abs, tag = 'smem constant byte address 0x4 - core index']
  #allocation1 [shape = 'u32[72,128]{1,0:T(1,128)}', space=vmem, size = 0x9000, scoped, tag = 'internal scratch']
  %s0 = inlined_call_operand.hbm [shape: bf16[512,128], index: 0, kind: input, shape index: {}]
  %s1 = inlined_call_operand.hbm [shape: bf16[128,256], index: 1, kind: input, shape index: {}]
  %s2 = inlined_call_operand.hbm [shape: f32[1,256], index: 2, kind: input, shape index: {}]
  %s3 = inlined_call_operand.hbm [shape: bf16[256,256], index: 3, kind: input, shape index: {}]
  %s4 = inlined_call_operand.vmem [shape: f32[1,256], index: 4, kind: input, shape index: {}]
  %s5 = inlined_call_operand.hbm [shape: bf16[256,256], index: 5, kind: input, shape index: {}]
  %s6 = inlined_call_operand.vmem [shape: f32[1,256], index: 6, kind: input, shape index: {}]
  %s7 = inlined_call_operand.hbm [shape: bf16[256,256], index: 7, kind: input, shape index: {}]
  %s8 = inlined_call_operand.vmem [shape: f32[1,256], index: 8, kind: input, shape index: {}]
  %s9 = inlined_call_operand.hbm [shape: bf16[256,256], index: 9, kind: input, shape index: {}]
  %s10 = inlined_call_operand.vmem [shape: f32[1,256], index: 10, kind: input, shape index: {}]
  %s11 = inlined_call_operand.hbm [shape: bf16[256,128], index: 11, kind: input, shape index: {}]
  %s12 = inlined_call_operand.vmem [shape: f32[1,128], index: 12, kind: input, shape index: {}]
  %s13 = inlined_call_operand.hbm [shape: f32[512,128], index: 13, kind: output, shape index: {}]
  %s14 = sld [smem:[#allocation0]]
  $region117: #{tpu_custom_call.1} parent=0
    _
  %s16 = ssub.s32 1, %s14
  %s17 = scalar_select 0, %s16, %s14
  $region1: #{tpu_custom_call.1} parent=0
    #allocation2 [shape = 'u8[131072]{0}', space=vmem, size = 0x20000, scoped, tag = 'input window, operand 0']
    #allocation3 [shape = 's32[2]{0}', space=sflag, size = 0x8, scoped, tag = 'scoped memory for tpu_custom_call.1']
    #allocation4 [shape = 's32[2]{0}', space=sflag, size = 0x8, scoped, tag = 'scoped memory for tpu_custom_call.1']
    #allocation5 [shape = 'u8[65536]{0}', space=vmem, size = 0x10000, scoped, tag = 'input window, operand 1, single buffered']
    #allocation6 [shape = 's32[1]{0}', space=sflag, size = 0x4, scoped, tag = 'scoped memory for tpu_custom_call.1']
    #allocation7 [shape = 'u8[1024]{0}', space=vmem, size = 0x400, scoped, tag = 'input window, operand 2, single buffered']
    #allocation8 [shape = 'u8[131072]{0}', space=vmem, size = 0x20000, scoped, tag = 'input window, operand 3, single buffered']
    #allocation9 [shape = 's32[1]{0}', space=sflag, size = 0x4, scoped, tag = 'scoped memory for tpu_custom_call.1']
    #allocation10 [shape = 'u8[131072]{0}', space=vmem, size = 0x20000, scoped, tag = 'input window, operand 5, single buffered']
    #allocation11 [shape = 'u8[131072]{0}', space=vmem, size = 0x20000, scoped, tag = 'input window, operand 7, single buffered']
    #allocation12 [shape = 's32[1]{0}', space=sflag, size = 0x4, scoped, tag = 'scoped memory for tpu_custom_call.1']
    #allocation13 [shape = 'u8[131072]{0}', space=vmem, size = 0x20000, scoped, tag = 'input window, operand 9, single buffered']
    #allocation14 [shape = 'u8[65536]{0}', space=vmem, size = 0x10000, scoped, tag = 'input window, operand 11, single buffered']
    #allocation15 [shape = 's32[1]{0}', space=sflag, size = 0x4, scoped, tag = 'scoped memory for tpu_custom_call.1']
    #allocation16 [shape = 'u8[262144]{0}', space=vmem, size = 0x40000, scoped, tag = 'output window, operand 0']
    %18 = vsyncpa [#allocation3], 0
    %s19 = scalar_lea.sflag [#allocation3], 1
    %20 = vsyncpa %s19, 0
    %21 = vsyncpa [#allocation6], 0
    %22 = vsyncpa [#allocation9], 0
    %23 = vsyncpa [#allocation12], 0
    %24 = vsyncpa [#allocation15], 0
    %25 = vsyncpa [#allocation4], 0
    %s26 = scalar_lea.sflag [#allocation4], 1
    %27 = vsyncpa %s26, 0
    loop: start=0, step=1, limit=4
    $region2: #{tpu_custom_call.1} parent=1 // loop_pre_header
      _
    $region3: #{tpu_custom_call.1} parent=1 // loop_header
      %s29 = sphi 0, %s33
      %p30 = scmp.ge.s32.totalorder %s29, 4
      %s39 = sphi 0, %s41
      %s42 = sphi 0, %s39
      %s43 = sphi 0, %s42
      %s59 = sphi 0, %s43
      %s63 = sphi 0, %s63
      %s65 = sphi 0, %s63
      %s66 = sphi 0, %s65
      %s80 = sphi 0, %s66
      %s84 = sphi 0, %s84
      %s86 = sphi 0, %s84
      %s87 = sphi 0, %s86
      %s101 = sphi 0, %s87
      %s105 = sphi 0, %s105
      %s107 = sphi 0, %s105
      %s108 = sphi 0, %s107
      %s122 = sphi 0, %s108
      %s126 = sphi 0, %s126
      %s128 = sphi 0, %s126
      %s129 = sphi 0, %s128
      %s143 = sphi 0, %s129
      %s147 = sphi 0, %s147
      %s149 = sphi 0, %s147
      %s150 = sphi 0, %s149
      %s164 = sphi 0, %s150
      %s168 = sphi 0, %s168
      %s170 = sphi 0, %s168
      %s171 = sphi 0, %s170
      %s185 = sphi 0, %s171
      %s189 = sphi 0, %s189
      %s191 = sphi 0, %s189
      %s192 = sphi 0, %s191
      %s206 = sphi 0, %s192
      %s210 = sphi 0, %s210
      %s212 = sphi 0, %s210
      %s213 = sphi 0, %s212
      %s227 = sphi 0, %s213
      %s231 = sphi 0, %s231
      %s233 = sphi 0, %s231
      %s234 = sphi 0, %s233
      %s248 = sphi 0, %s234
      %s252 = sphi 0, %s252
      %s254 = sphi 0, %s252
      %s255 = sphi 0, %s254
      %s269 = sphi 0, %s255
      %s273 = sphi 0, %s273
      %s275 = sphi 0, %s273
      %s276 = sphi 0, %s275
      %s290 = sphi 0, %s276
      %s294 = sphi 0, %s294
      %s296 = sphi 0, %s294
      %s297 = sphi 0, %s296
      %s311 = sphi 0, %s297
      %s317 = sphi 0, %s319
      %s320 = sphi 0, %s317
      %s321 = sphi 0, %s320
      %s337 = sphi 0, %s321
    $region4: #{tpu_custom_call.1} parent=1 // loop_header_branch
      %32 = sbr.rel (%p30) target = $region8
    $region5: #{tpu_custom_call.1} parent=1 // loop_body
      %s34 = ssub.s32 %s29, 1
      %s35 = ssub.s32 %s29, 2
      %s36 = sadd.s32 %s29, 1
      %s37 = ssub.s32 %s29, %s36
      %p38 = scmp.eq.s32.totalorder %s37, 0
      %s40 = sadd.s32 %s39, 1
      %s41 = scalar_select %p38, %s39, %s40
      %p44 = pneg %p38
      %p45 = scmp.eq.s32.totalorder %s29, 1
      %p46 = por %p44, %p45
      %p47 = scmp.ne.s32.totalorder %s39, %s42
      %p48 = scmp.eq.s32.totalorder %s29, 0
      %p49 = por %p47, %p48
      %p50 = scmp.ne.s32.totalorder %s39, %s42
      %p51 = scmp.eq.s32.totalorder %s34, 1
      %p52 = por %p50, %p51
      %p53 = scmp.ne.s32.totalorder %s42, %s43
      %p54 = scmp.eq.s32.totalorder %s34, 0
      %p55 = por %p53, %p54
      %p56 = scmp.ne.s32.totalorder %s42, %s43
      %p57 = scmp.eq.s32.totalorder %s35, 1
      %p58 = por %p56, %p57
      %p60 = scmp.ne.s32.totalorder %s43, %s59
      %p61 = scmp.eq.s32.totalorder %s35, 0
      %p62 = por %p60, %p61
      %s64 = sadd.s32 %s63, 1
      %p67 = scmp.eq.s32.totalorder %s29, 1
      %p68 = scmp.ne.s32.totalorder %s63, %s65
      %p69 = scmp.eq.s32.totalorder %s29, 0
      %p70 = por %p68, %p69
      %p71 = scmp.ne.s32.totalorder %s63, %s65
      %p72 = scmp.eq.s32.totalorder %s34, 1
      %p73 = por %p71, %p72
      %p74 = scmp.ne.s32.totalorder %s65, %s66
      %p75 = scmp.eq.s32.totalorder %s34, 0
      %p76 = por %p74, %p75
      %p77 = scmp.ne.s32.totalorder %s65, %s66
      %p78 = scmp.eq.s32.totalorder %s35, 1
      %p79 = por %p77, %p78
      %p81 = scmp.ne.s32.totalorder %s66, %s80
      %p82 = scmp.eq.s32.totalorder %s35, 0
      %p83 = por %p81, %p82
      %s85 = sadd.s32 %s84, 1
      %p88 = scmp.eq.s32.totalorder %s29, 1
      %p89 = scmp.ne.s32.totalorder %s84, %s86
      %p90 = scmp.eq.s32.totalorder %s29, 0
      %p91 = por %p89, %p90
      %p92 = scmp.ne.s32.totalorder %s84, %s86
      %p93 = scmp.eq.s32.totalorder %s34, 1
      %p94 = por %p92, %p93
      %p95 = scmp.ne.s32.totalorder %s86, %s87
      %p96 = scmp.eq.s32.totalorder %s34, 0
      %p97 = por %p95, %p96
      %p98 = scmp.ne.s32.totalorder %s86, %s87
      %p99 = scmp.eq.s32.totalorder %s35, 1
      %p100 = por %p98, %p99
      %p102 = scmp.ne.s32.totalorder %s87, %s101
      %p103 = scmp.eq.s32.totalorder %s35, 0
      %p104 = por %p102, %p103
      %s106 = sadd.s32 %s105, 1
      %p109 = scmp.eq.s32.totalorder %s29, 1
      %p110 = scmp.ne.s32.totalorder %s105, %s107
      %p111 = scmp.eq.s32.totalorder %s29, 0
      %p112 = por %p110, %p111
      %p113 = scmp.ne.s32.totalorder %s105, %s107
      %p114 = scmp.eq.s32.totalorder %s34, 1
      %p115 = por %p113, %p114
      %p116 = scmp.ne.s32.totalorder %s107, %s108
      %p117 = scmp.eq.s32.totalorder %s34, 0
      %p118 = por %p116, %p117
      %p119 = scmp.ne.s32.totalorder %s107, %s108
      %p120 = scmp.eq.s32.totalorder %s35, 1
      %p121 = por %p119, %p120
      %p123 = scmp.ne.s32.totalorder %s108, %s122
      %p124 = scmp.eq.s32.totalorder %s35, 0
      %p125 = por %p123, %p124
      %s127 = sadd.s32 %s126, 1
      %p130 = scmp.eq.s32.totalorder %s29, 1
      %p131 = scmp.ne.s32.totalorder %s126, %s128
      %p132 = scmp.eq.s32.totalorder %s29, 0
      %p133 = por %p131, %p132
      %p134 = scmp.ne.s32.totalorder %s126, %s128
      %p135 = scmp.eq.s32.totalorder %s34, 1
      %p136 = por %p134, %p135
      %p137 = scmp.ne.s32.totalorder %s128, %s129
      %p138 = scmp.eq.s32.totalorder %s34, 0
      %p139 = por %p137, %p138
      %p140 = scmp.ne.s32.totalorder %s128, %s129
      %p141 = scmp.eq.s32.totalorder %s35, 1
      %p142 = por %p140, %p141
      %p144 = scmp.ne.s32.totalorder %s129, %s143
      %p145 = scmp.eq.s32.totalorder %s35, 0
      %p146 = por %p144, %p145
      %s148 = sadd.s32 %s147, 1
      %p151 = scmp.eq.s32.totalorder %s29, 1
      %p152 = scmp.ne.s32.totalorder %s147, %s149
      %p153 = scmp.eq.s32.totalorder %s29, 0
      %p154 = por %p152, %p153
      %p155 = scmp.ne.s32.totalorder %s147, %s149
      %p156 = scmp.eq.s32.totalorder %s34, 1
      %p157 = por %p155, %p156
      %p158 = scmp.ne.s32.totalorder %s149, %s150
      %p159 = scmp.eq.s32.totalorder %s34, 0
      %p160 = por %p158, %p159
      %p161 = scmp.ne.s32.totalorder %s149, %s150
      %p162 = scmp.eq.s32.totalorder %s35, 1
      %p163 = por %p161, %p162
      %p165 = scmp.ne.s32.totalorder %s150, %s164
      %p166 = scmp.eq.s32.totalorder %s35, 0
      %p167 = por %p165, %p166
      %s169 = sadd.s32 %s168, 1
      %p172 = scmp.eq.s32.totalorder %s29, 1
      %p173 = scmp.ne.s32.totalorder %s168, %s170
      %p174 = scmp.eq.s32.totalorder %s29, 0
      %p175 = por %p173, %p174
      %p176 = scmp.ne.s32.totalorder %s168, %s170
      %p177 = scmp.eq.s32.totalorder %s34, 1
      %p178 = por %p176, %p177
      %p179 = scmp.ne.s32.totalorder %s170, %s171
      %p180 = scmp.eq.s32.totalorder %s34, 0
      %p181 = por %p179, %p180
      %p182 = scmp.ne.s32.totalorder %s170, %s171
      %p183 = scmp.eq.s32.totalorder %s35, 1
      %p184 = por %p182, %p183
      %p186 = scmp.ne.s32.totalorder %s171, %s185
      %p187 = scmp.eq.s32.totalorder %s35, 0
      %p188 = por %p186, %p187
      %s190 = sadd.s32 %s189, 1
      %p193 = scmp.eq.s32.totalorder %s29, 1
      %p194 = scmp.ne.s32.totalorder %s189, %s191
      %p195 = scmp.eq.s32.totalorder %s29, 0
      %p196 = por %p194, %p195
      %p197 = scmp.ne.s32.totalorder %s189, %s191
      %p198 = scmp.eq.s32.totalorder %s34, 1
      %p199 = por %p197, %p198
      %p200 = scmp.ne.s32.totalorder %s191, %s192
      %p201 = scmp.eq.s32.totalorder %s34, 0
      %p202 = por %p200, %p201
      %p203 = scmp.ne.s32.totalorder %s191, %s192
      %p204 = scmp.eq.s32.totalorder %s35, 1
      %p205 = por %p203, %p204
      %p207 = scmp.ne.s32.totalorder %s192, %s206
      %p208 = scmp.eq.s32.totalorder %s35, 0
      %p209 = por %p207, %p208
      %s211 = sadd.s32 %s210, 1
      %p214 = scmp.eq.s32.totalorder %s29, 1
      %p215 = scmp.ne.s32.totalorder %s210, %s212
      %p216 = scmp.eq.s32.totalorder %s29, 0
      %p217 = por %p215, %p216
      %p218 = scmp.ne.s32.totalorder %s210, %s212
      %p219 = scmp.eq.s32.totalorder %s34, 1
      %p220 = por %p218, %p219
      %p221 = scmp.ne.s32.totalorder %s212, %s213
      %p222 = scmp.eq.s32.totalorder %s34, 0
      %p223 = por %p221, %p222
      %p224 = scmp.ne.s32.totalorder %s212, %s213
      %p225 = scmp.eq.s32.totalorder %s35, 1
      %p226 = por %p224, %p225
      %p228 = scmp.ne.s32.totalorder %s213, %s227
      %p229 = scmp.eq.s32.totalorder %s35, 0
      %p230 = por %p228, %p229
      %s232 = sadd.s32 %s231, 1
      %p235 = scmp.eq.s32.totalorder %s29, 1
      %p236 = scmp.ne.s32.totalorder %s231, %s233
      %p237 = scmp.eq.s32.totalorder %s29, 0
      %p238 = por %p236, %p237
      %p239 = scmp.ne.s32.totalorder %s231, %s233
      %p240 = scmp.eq.s32.totalorder %s34, 1
      %p241 = por %p239, %p240
      %p242 = scmp.ne.s32.totalorder %s233, %s234
      %p243 = scmp.eq.s32.totalorder %s34, 0
      %p244 = por %p242, %p243
      %p245 = scmp.ne.s32.totalorder %s233, %s234
      %p246 = scmp.eq.s32.totalorder %s35, 1
      %p247 = por %p245, %p246
      %p249 = scmp.ne.s32.totalorder %s234, %s248
      %p250 = scmp.eq.s32.totalorder %s35, 0
      %p251 = por %p249, %p250
      %s253 = sadd.s32 %s252, 1
      %p256 = scmp.eq.s32.totalorder %s29, 1
      %p257 = scmp.ne.s32.totalorder %s252, %s254
      %p258 = scmp.eq.s32.totalorder %s29, 0
      %p259 = por %p257, %p258
      %p260 = scmp.ne.s32.totalorder %s252, %s254
      %p261 = scmp.eq.s32.totalorder %s34, 1
      %p262 = por %p260, %p261
      %p263 = scmp.ne.s32.totalorder %s254, %s255
      %p264 = scmp.eq.s32.totalorder %s34, 0
      %p265 = por %p263, %p264
      %p266 = scmp.ne.s32.totalorder %s254, %s255
      %p267 = scmp.eq.s32.totalorder %s35, 1
      %p268 = por %p266, %p267
      %p270 = scmp.ne.s32.totalorder %s255, %s269
      %p271 = scmp.eq.s32.totalorder %s35, 0
      %p272 = por %p270, %p271
      %s274 = sadd.s32 %s273, 1
      %p277 = scmp.eq.s32.totalorder %s29, 1
      %p278 = scmp.ne.s32.totalorder %s273, %s275
      %p279 = scmp.eq.s32.totalorder %s29, 0
      %p280 = por %p278, %p279
      %p281 = scmp.ne.s32.totalorder %s273, %s275
      %p282 = scmp.eq.s32.totalorder %s34, 1
      %p283 = por %p281, %p282
      %p284 = scmp.ne.s32.totalorder %s275, %s276
      %p285 = scmp.eq.s32.totalorder %s34, 0
      %p286 = por %p284, %p285
      %p287 = scmp.ne.s32.totalorder %s275, %s276
      %p288 = scmp.eq.s32.totalorder %s35, 1
      %p289 = por %p287, %p288
      %p291 = scmp.ne.s32.totalorder %s276, %s290
      %p292 = scmp.eq.s32.totalorder %s35, 0
      %p293 = por %p291, %p292
      %s295 = sadd.s32 %s294, 1
      %p298 = scmp.eq.s32.totalorder %s29, 1
      %p299 = scmp.ne.s32.totalorder %s294, %s296
      %p300 = scmp.eq.s32.totalorder %s29, 0
      %p301 = por %p299, %p300
      %p302 = scmp.ne.s32.totalorder %s294, %s296
      %p303 = scmp.eq.s32.totalorder %s34, 1
      %p304 = por %p302, %p303
      %p305 = scmp.ne.s32.totalorder %s296, %s297
      %p306 = scmp.eq.s32.totalorder %s34, 0
      %p307 = por %p305, %p306
      %p308 = scmp.ne.s32.totalorder %s296, %s297
      %p309 = scmp.eq.s32.totalorder %s35, 1
      %p310 = por %p308, %p309
      %p312 = scmp.ne.s32.totalorder %s297, %s311
      %p313 = scmp.eq.s32.totalorder %s35, 0
      %p314 = por %p312, %p313
      %s315 = ssub.s32 %s29, %s36
      %p316 = scmp.eq.s32.totalorder %s315, 0
      %s318 = sadd.s32 %s317, 1
      %s319 = scalar_select %p316, %s317, %s318
      %p322 = pneg %p316
      %p323 = scmp.eq.s32.totalorder %s29, 1
      %p324 = por %p322, %p323
      %p325 = scmp.ne.s32.totalorder %s317, %s320
      %p326 = scmp.eq.s32.totalorder %s29, 0
      %p327 = por %p325, %p326
      %p328 = scmp.ne.s32.totalorder %s317, %s320
      %p329 = scmp.eq.s32.totalorder %s34, 1
      %p330 = por %p328, %p329
      %p331 = scmp.ne.s32.totalorder %s320, %s321
      %p332 = scmp.eq.s32.totalorder %s34, 0
      %p333 = por %p331, %p332
      %p334 = scmp.ne.s32.totalorder %s320, %s321
      %p335 = scmp.eq.s32.totalorder %s35, 1
      %p336 = por %p334, %p335
      %p338 = scmp.ne.s32.totalorder %s321, %s337
      %p339 = scmp.eq.s32.totalorder %s35, 0
      %p340 = por %p338, %p339
      %p341 = scmp.le.s32.totalorder 1, %s29
      %p342 = scmp.lt.s32.totalorder %s29, 3
      %p343 = pnand %p341, %p342
      %p344 = pneg %p343
      // Predicated region
      $region9: #{tpu_custom_call.1} parent=5 // pred_check
        _
      $region10: #{tpu_custom_call.1} parent=5 // pred_check_branch
        %346 = sbr.rel (%p343) target = $region12
      $region11: #{tpu_custom_call.1} parent=5 // pred_region
        %s347 = ssub.s32 %s29, 1
        // Predicated region
        $region13: #{tpu_custom_call.1} parent=11 // pred_check
          %p348 = pneg %p76
        $region14: #{tpu_custom_call.1} parent=11 // pred_check_branch
          %350 = sbr.rel (%p348) target = $region16
        $region15: #{tpu_custom_call.1} parent=11 // pred_region
          %352 = vsyncadd [#allocation6], 0
          %s353 = sshll.u32 %s1, 4
          %s354 = int_to_ptr.hbm [resolvable:$true] %s353
          %s355 = sshll.u32 [#allocation5], 4
          %s356 = int_to_ptr.vmem [resolvable:$true] %s355
          %361 = dma.hbm_to_vmem [thread:$0]  %s354, 2048, %s356, [#allocation6], 128, 128, 8
        $region16: #{tpu_custom_call.1} parent=11 // pred_fallthru
          _
        // Predicated region
        $region17: #{tpu_custom_call.1} parent=11 // pred_check
          %p362 = pneg %p97
        $region18: #{tpu_custom_call.1} parent=11 // pred_check_branch
          %364 = sbr.rel (%p362) target = $region20
        $region19: #{tpu_custom_call.1} parent=11 // pred_region
          %366 = vsyncadd [#allocation6], 0
          %s368 = sshll.u32 %s2, 4
          %s369 = int_to_ptr.hbm [resolvable:$true] %s368
          %s370 = sshll.u32 [#allocation7], 4
          %s371 = int_to_ptr.vmem [resolvable:$true] %s370
          %373 = dma.hbm_to_vmem [thread:$0]  %s369, 32, %s371, [#allocation6]
        $region20: #{tpu_custom_call.1} parent=11 // pred_fallthru
          _
        // Predicated region
        $region21: #{tpu_custom_call.1} parent=11 // pred_check
          %p374 = pneg %p118
        $region22: #{tpu_custom_call.1} parent=11 // pred_check_branch
          %376 = sbr.rel (%p374) target = $region24
        $region23: #{tpu_custom_call.1} parent=11 // pred_region
          %378 = vsyncadd [#allocation9], 0
          %s379 = sshll.u32 %s3, 4
          %s380 = int_to_ptr.hbm [resolvable:$true] %s379
          %s381 = sshll.u32 [#allocation8], 4
          %s382 = int_to_ptr.vmem [resolvable:$true] %s381
          %387 = dma.hbm_to_vmem [thread:$0]  %s380, 4096, %s382, [#allocation9], 128, 128, 8
        $region24: #{tpu_custom_call.1} parent=11 // pred_fallthru
          _
        // Predicated region
        $region25: #{tpu_custom_call.1} parent=11 // pred_check
          %p388 = pneg %p139
        $region26: #{tpu_custom_call.1} parent=11 // pred_check_branch
          %390 = sbr.rel (%p388) target = $region28
        $region27: #{tpu_custom_call.1} parent=11 // pred_region
          _
        $region28: #{tpu_custom_call.1} parent=11 // pred_fallthru
          _
        // Predicated region
        $region29: #{tpu_custom_call.1} parent=11 // pred_check
          %p391 = pneg %p160
        $region30: #{tpu_custom_call.1} parent=11 // pred_check_branch
          %393 = sbr.rel (%p391) target = $region32
        $region31: #{tpu_custom_call.1} parent=11 // pred_region
          %395 = vsyncadd [#allocation9], 0
          %s396 = sshll.u32 %s5, 4
          %s397 = int_to_ptr.hbm [resolvable:$true] %s396
          %s398 = sshll.u32 [#allocation10], 4
          %s399 = int_to_ptr.vmem [resolvable:$true] %s398
          %404 = dma.hbm_to_vmem [thread:$0]  %s397, 4096, %s399, [#allocation9], 128, 128, 8
        $region32: #{tpu_custom_call.1} parent=11 // pred_fallthru
          _
        // Predicated region
        $region33: #{tpu_custom_call.1} parent=11 // pred_check
          %p405 = pneg %p181
        $region34: #{tpu_custom_call.1} parent=11 // pred_check_branch
          %407 = sbr.rel (%p405) target = $region36
        $region35: #{tpu_custom_call.1} parent=11 // pred_region
          _
        $region36: #{tpu_custom_call.1} parent=11 // pred_fallthru
          _
        // Predicated region
        $region37: #{tpu_custom_call.1} parent=11 // pred_check
          %p408 = pneg %p202
        $region38: #{tpu_custom_call.1} parent=11 // pred_check_branch
          %410 = sbr.rel (%p408) target = $region40
        $region39: #{tpu_custom_call.1} parent=11 // pred_region
          %412 = vsyncadd [#allocation12], 0
          %s413 = sshll.u32 %s7, 4
          %s414 = int_to_ptr.hbm [resolvable:$true] %s413
          %s415 = sshll.u32 [#allocation11], 4
          %s416 = int_to_ptr.vmem [resolvable:$true] %s415
          %421 = dma.hbm_to_vmem [thread:$0]  %s414, 4096, %s416, [#allocation12], 128, 128, 8
        $region40: #{tpu_custom_call.1} parent=11 // pred_fallthru
          _
        // Predicated region
        $region41: #{tpu_custom_call.1} parent=11 // pred_check
          %p422 = pneg %p223
        $region42: #{tpu_custom_call.1} parent=11 // pred_check_branch
          %424 = sbr.rel (%p422) target = $region44
        $region43: #{tpu_custom_call.1} parent=11 // pred_region
          _
        $region44: #{tpu_custom_call.1} parent=11 // pred_fallthru
          _
        // Predicated region
        $region45: #{tpu_custom_call.1} parent=11 // pred_check
          %p425 = pneg %p244
        $region46: #{tpu_custom_call.1} parent=11 // pred_check_branch
          %427 = sbr.rel (%p425) target = $region48
        $region47: #{tpu_custom_call.1} parent=11 // pred_region
          %429 = vsyncadd [#allocation12], 0
          %s430 = sshll.u32 %s9, 4
          %s431 = int_to_ptr.hbm [resolvable:$true] %s430
          %s432 = sshll.u32 [#allocation13], 4
          %s433 = int_to_ptr.vmem [resolvable:$true] %s432
          %438 = dma.hbm_to_vmem [thread:$0]  %s431, 4096, %s433, [#allocation12], 128, 128, 8
        $region48: #{tpu_custom_call.1} parent=11 // pred_fallthru
          _
        // Predicated region
        $region49: #{tpu_custom_call.1} parent=11 // pred_check
          %p439 = pneg %p265
        $region50: #{tpu_custom_call.1} parent=11 // pred_check_branch
          %441 = sbr.rel (%p439) target = $region52
        $region51: #{tpu_custom_call.1} parent=11 // pred_region
          _
        $region52: #{tpu_custom_call.1} parent=11 // pred_fallthru
          _
        // Predicated region
        $region53: #{tpu_custom_call.1} parent=11 // pred_check
          %p442 = pneg %p286
        $region54: #{tpu_custom_call.1} parent=11 // pred_check_branch
          %444 = sbr.rel (%p442) target = $region56
        $region55: #{tpu_custom_call.1} parent=11 // pred_region
          %446 = vsyncadd [#allocation15], 0
          %s447 = sshll.u32 %s11, 4
          %s448 = int_to_ptr.hbm [resolvable:$true] %s447
          %s449 = sshll.u32 [#allocation14], 4
          %s450 = int_to_ptr.vmem [resolvable:$true] %s449
          %455 = dma.hbm_to_vmem [thread:$0]  %s448, 2048, %s450, [#allocation15], 64, 64, 4
        $region56: #{tpu_custom_call.1} parent=11 // pred_fallthru
          _
        // Predicated region
        $region57: #{tpu_custom_call.1} parent=11 // pred_check
          %p456 = pneg %p307
        $region58: #{tpu_custom_call.1} parent=11 // pred_check_branch
          %458 = sbr.rel (%p456) target = $region60
        $region59: #{tpu_custom_call.1} parent=11 // pred_region
          _
        $region60: #{tpu_custom_call.1} parent=11 // pred_fallthru
          _
      $region12: #{tpu_custom_call.1} parent=5 // pred_fallthru
        _
      %p459 = scmp.lt.s32.totalorder %s29, 2
      // Predicated region
      $region61: #{tpu_custom_call.1} parent=5 // pred_check
        %p460 = pneg %p459
      $region62: #{tpu_custom_call.1} parent=5 // pred_check_branch
        %462 = sbr.rel (%p460) target = $region64
      $region63: #{tpu_custom_call.1} parent=5 // pred_region
        // Predicated region
        $region65: #{tpu_custom_call.1} parent=63 // pred_check
          %p463 = pneg %p49
        $region66: #{tpu_custom_call.1} parent=63 // pred_check_branch
          %465 = sbr.rel (%p463) target = $region68
        $region67: #{tpu_custom_call.1} parent=63 // pred_region
          %s466 = sand.u32 %s39, 1
          %s467 = scalar_lea.sflag [#allocation3], %s466
          %s468 = sand.u32 %s39, 1
          %s469 = smul.addr %s468, 128
          %s470 = scalar_lea.vmem [#allocation2], %s469
          %s471 = smul.u32 32, %s29
          %473 = vsyncadd %s467, 0
          %s474 = smul.addr %s471, 4
          %s475 = scalar_lea.hbm %s0, %s474
          %s476 = sshll.u32 %s475, 4
          %s477 = int_to_ptr.hbm [resolvable:$true] %s476
          %s478 = sshll.u32 %s470, 4
          %s479 = int_to_ptr.vmem [resolvable:$true] %s478
          %484 = dma.hbm_to_vmem [thread:$0]  %s477, 2048, %s479, %s467, 64, 64, 4
        $region68: #{tpu_custom_call.1} parent=63 // pred_fallthru
          _
      $region64: #{tpu_custom_call.1} parent=5 // pred_fallthru
        _
      %p485 = scmp.le.s32.totalorder 1, %s29
      %p486 = scmp.lt.s32.totalorder %s29, 3
      %p487 = pnand %p485, %p486
      %p488 = pneg %p487
      // Predicated region
      $region69: #{tpu_custom_call.1} parent=5 // pred_check
        _
      $region70: #{tpu_custom_call.1} parent=5 // pred_check_branch
        %490 = sbr.rel (%p487) target = $region72
      $region71: #{tpu_custom_call.1} parent=5 // pred_region
        %s491 = ssub.s32 %s29, 1
        %s492 = sand.u32 %s42, 1
        %s493 = scalar_lea.sflag [#allocation3], %s492
        %s494 = sand.u32 %s42, 1
        %s495 = smul.addr %s494, 128
        %s496 = scalar_lea.vmem [#allocation2], %s495
        // Predicated region
        $region73: #{tpu_custom_call.1} parent=71 // pred_check
          %p497 = pneg %p55
        $region74: #{tpu_custom_call.1} parent=71 // pred_check_branch
          %499 = sbr.rel (%p497) target = $region76
        $region75: #{tpu_custom_call.1} parent=71 // pred_region
          %501 = dma.done %s493, 2048
        $region76: #{tpu_custom_call.1} parent=71 // pred_fallthru
          _
        // Predicated region
        $region77: #{tpu_custom_call.1} parent=71 // pred_check
          %p502 = pneg %p76
        $region78: #{tpu_custom_call.1} parent=71 // pred_check_branch
          %504 = sbr.rel (%p502) target = $region80
        $region79: #{tpu_custom_call.1} parent=71 // pred_region
          %506 = dma.done [#allocation6], 2048
        $region80: #{tpu_custom_call.1} parent=71 // pred_fallthru
          _
        // Predicated region
        $region81: #{tpu_custom_call.1} parent=71 // pred_check
          %p507 = pneg %p97
        $region82: #{tpu_custom_call.1} parent=71 // pred_check_branch
          %509 = sbr.rel (%p507) target = $region84
        $region83: #{tpu_custom_call.1} parent=71 // pred_region
          %511 = dma.done [#allocation6], 32
        $region84: #{tpu_custom_call.1} parent=71 // pred_fallthru
          _
        // Predicated region
        $region85: #{tpu_custom_call.1} parent=71 // pred_check
          %p512 = pneg %p118
        $region86: #{tpu_custom_call.1} parent=71 // pred_check_branch
          %514 = sbr.rel (%p512) target = $region88
        $region87: #{tpu_custom_call.1} parent=71 // pred_region
          %516 = dma.done [#allocation9], 4096
        $region88: #{tpu_custom_call.1} parent=71 // pred_fallthru
          _
        // Predicated region
        $region89: #{tpu_custom_call.1} parent=71 // pred_check
          %p517 = pneg %p160
        $region90: #{tpu_custom_call.1} parent=71 // pred_check_branch
          %519 = sbr.rel (%p517) target = $region92
        $region91: #{tpu_custom_call.1} parent=71 // pred_region
          %521 = dma.done [#allocation9], 4096
        $region92: #{tpu_custom_call.1} parent=71 // pred_fallthru
          _
        // Predicated region
        $region93: #{tpu_custom_call.1} parent=71 // pred_check
          %p522 = pneg %p202
        $region94: #{tpu_custom_call.1} parent=71 // pred_check_branch
          %524 = sbr.rel (%p522) target = $region96
        $region95: #{tpu_custom_call.1} parent=71 // pred_region
          %526 = dma.done [#allocation12], 4096
        $region96: #{tpu_custom_call.1} parent=71 // pred_fallthru
          _
        // Predicated region
        $region97: #{tpu_custom_call.1} parent=71 // pred_check
          %p527 = pneg %p244
        $region98: #{tpu_custom_call.1} parent=71 // pred_check_branch
          %529 = sbr.rel (%p527) target = $region100
        $region99: #{tpu_custom_call.1} parent=71 // pred_region
          %531 = dma.done [#allocation12], 4096
        $region100: #{tpu_custom_call.1} parent=71 // pred_fallthru
          _
        // Predicated region
        $region101: #{tpu_custom_call.1} parent=71 // pred_check
          %p532 = pneg %p286
        $region102: #{tpu_custom_call.1} parent=71 // pred_check_branch
          %534 = sbr.rel (%p532) target = $region104
        $region103: #{tpu_custom_call.1} parent=71 // pred_region
          %536 = dma.done [#allocation15], 2048
        $region104: #{tpu_custom_call.1} parent=71 // pred_fallthru
          _
        %s537 = sand.u32 %s42, 1
        %s538 = scalar_lea.sflag [#allocation3], %s537
        %s539 = sand.u32 %s42, 1
        %s540 = smul.addr %s539, 128
        %s541 = scalar_lea.vmem [#allocation2], %s540
        %p542 = pneg %p55
        %p543 = pneg %p52
        %p544 = pneg %p76
        %p545 = pneg %p73
        %p546 = pneg %p97
        %p547 = pneg %p94
        %p548 = pneg %p118
        %p549 = pneg %p115
        %p550 = pneg %p139
        %p551 = pneg %p136
        %p552 = pneg %p160
        %p553 = pneg %p157
        %p554 = pneg %p181
        %p555 = pneg %p178
        %p556 = pneg %p202
        %p557 = pneg %p199
        %p558 = pneg %p223
        %p559 = pneg %p220
        %p560 = pneg %p244
        %p561 = pneg %p241
        %p562 = pneg %p265
        %p563 = pneg %p262
        %p564 = pneg %p286
        %p565 = pneg %p283
        %p566 = pneg %p307
        %p567 = pneg %p304
        %p568 = pneg %p333
        %p569 = pneg %p330
        %s570 = sand.u32 %s320, 1
        %s571 = scalar_lea.sflag [#allocation4], %s570
        %s572 = sand.u32 %s320, 1
        %s573 = smul.addr %s572, 256
        %s574 = scalar_lea.vmem [#allocation16], %s573
        %s575 = smul.u32 32, %s34
        %s576 = smul.u32 32, %s34
        %v577 = vld [vmem:[%s496] sm:$0xf]
        %v578 = vld [vmem:[%s496 + $0x4] sm:$0xf]
        %v579 = vld [vmem:[%s496 + $0x8] sm:$0xf]
        %v580 = vld [vmem:[%s496 + $0xc] sm:$0xf]
        %v581 = vld [vmem:[%s496 + $0x10] sm:$0xf]
        %v582 = vld [vmem:[%s496 + $0x14] sm:$0xf]
        %v583 = vld [vmem:[%s496 + $0x18] sm:$0xf]
        %v584 = vld [vmem:[%s496 + $0x1c] sm:$0xf]
        %v585 = vld [vmem:[%s496 + $0x20] sm:$0xf]
        %v586 = vld [vmem:[%s496 + $0x24] sm:$0xf]
        %v587 = vld [vmem:[%s496 + $0x28] sm:$0xf]
        %v588 = vld [vmem:[%s496 + $0x2c] sm:$0xf]
        %v589 = vld [vmem:[%s496 + $0x30] sm:$0xf]
        %v590 = vld [vmem:[%s496 + $0x34] sm:$0xf]
        %v591 = vld [vmem:[%s496 + $0x38] sm:$0xf]
        %v592 = vld [vmem:[%s496 + $0x3c] sm:$0xf]
        %v593 = vld [vmem:[%s496 + $0x40] sm:$0xf]
        %v594 = vld [vmem:[%s496 + $0x44] sm:$0xf]
        %v595 = vld [vmem:[%s496 + $0x48] sm:$0xf]
        %v596 = vld [vmem:[%s496 + $0x4c] sm:$0xf]
        %v597 = vld [vmem:[%s496 + $0x50] sm:$0xf]
        %v598 = vld [vmem:[%s496 + $0x54] sm:$0xf]
        %v599 = vld [vmem:[%s496 + $0x58] sm:$0xf]
        %v600 = vld [vmem:[%s496 + $0x5c] sm:$0xf]
        %v601 = vld [vmem:[%s496 + $0x60] sm:$0xf]
        %v602 = vld [vmem:[%s496 + $0x64] sm:$0xf]
        %v603 = vld [vmem:[%s496 + $0x68] sm:$0xf]
        %v604 = vld [vmem:[%s496 + $0x6c] sm:$0xf]
        %v605 = vld [vmem:[%s496 + $0x70] sm:$0xf]
        %v606 = vld [vmem:[%s496 + $0x74] sm:$0xf]
        %v607 = vld [vmem:[%s496 + $0x78] sm:$0xf]
        %v608 = vld [vmem:[%s496 + $0x7c] sm:$0xf]
        %v609 = vld [vmem:[#allocation5] sm:$0xff]
        %v610 = vld [vmem:[#allocation5 + $0x8] sm:$0xff]
        %v611 = vld [vmem:[#allocation5 + $0x10] sm:$0xff]
        %v612 = vld [vmem:[#allocation5 + $0x18] sm:$0xff]
        %v613 = vld [vmem:[#allocation5 + $0x20] sm:$0xff]
        %v614 = vld [vmem:[#allocation5 + $0x28] sm:$0xff]
        %v615 = vld [vmem:[#allocation5 + $0x30] sm:$0xff]
        %v616 = vld [vmem:[#allocation5 + $0x38] sm:$0xff]
        %v617 = vld [vmem:[#allocation5 + $0x40] sm:$0xff]
        %v618 = vld [vmem:[#allocation5 + $0x48] sm:$0xff]
        %v619 = vld [vmem:[#allocation5 + $0x50] sm:$0xff]
        %v620 = vld [vmem:[#allocation5 + $0x58] sm:$0xff]
        %v621 = vld [vmem:[#allocation5 + $0x60] sm:$0xff]
        %v622 = vld [vmem:[#allocation5 + $0x68] sm:$0xff]
        %v623 = vld [vmem:[#allocation5 + $0x70] sm:$0xff]
        %v624 = vld [vmem:[#allocation5 + $0x78] sm:$0xff]
        %v625 = vld [vmem:[#allocation7] sm:$0x3]
        %v627 = vperm.slane %v625, 0
        %v628 = vperm.slane %v625, 1
        %v663 = vunpack.c.l.b16 %v577
        %v664 = vunpack.c.l.b16 %v578
        %v665 = vunpack.c.l.b16 %v579
        %v666 = vunpack.c.l.b16 %v580
        %v667 = vunpack.c.l.b16 %v581
        %v668 = vunpack.c.l.b16 %v582
        %v669 = vunpack.c.l.b16 %v583
        %v670 = vunpack.c.l.b16 %v584
        %v671 = vunpack.c.l.b16 %v585
        %v672 = vunpack.c.l.b16 %v586
        %v673 = vunpack.c.l.b16 %v587
        %v674 = vunpack.c.l.b16 %v588
        %v675 = vunpack.c.l.b16 %v589
        %v676 = vunpack.c.l.b16 %v590
        %v677 = vunpack.c.l.b16 %v591
        %v678 = vunpack.c.l.b16 %v592
        %v679 = vunpack.c.l.b16 %v593
        %v680 = vunpack.c.l.b16 %v594
        %v681 = vunpack.c.l.b16 %v595
        %v682 = vunpack.c.l.b16 %v596
        %v683 = vunpack.c.l.b16 %v597
        %v684 = vunpack.c.l.b16 %v598
        %v685 = vunpack.c.l.b16 %v599
        %v686 = vunpack.c.l.b16 %v600
        %v687 = vunpack.c.l.b16 %v601
        %v688 = vunpack.c.l.b16 %v602
        %v689 = vunpack.c.l.b16 %v603
        %v690 = vunpack.c.l.b16 %v604
        %v691 = vunpack.c.l.b16 %v605
        %v692 = vunpack.c.l.b16 %v606
        %v693 = vunpack.c.l.b16 %v607
        %v694 = vunpack.c.l.b16 %v608
        %v695 = vpack.c.b16 %v664, %v663
        %v696 = vpack.c.b16 %v666, %v665
        %v697 = vpack.c.b16 %v668, %v667
        %v698 = vpack.c.b16 %v670, %v669
        %v699 = vpack.c.b16 %v672, %v671
        %v700 = vpack.c.b16 %v674, %v673
        %v701 = vpack.c.b16 %v676, %v675
        %v702 = vpack.c.b16 %v678, %v677
        %v703 = vpack.c.b16 %v680, %v679
        %v704 = vpack.c.b16 %v682, %v681
        %v705 = vpack.c.b16 %v684, %v683
        %v706 = vpack.c.b16 %v686, %v685
        %v707 = vpack.c.b16 %v688, %v687
        %v708 = vpack.c.b16 %v690, %v689
        %v709 = vpack.c.b16 %v692, %v691
        %v710 = vpack.c.b16 %v694, %v693
        %v743 = vunpack.c.l.b16 %v609
        %v744 = vunpack.c.h.b16 %v609
        %v745 = vunpack.c.l.b16 %v610
        %v746 = vunpack.c.h.b16 %v610
        %v747 = vunpack.c.l.b16 %v611
        %v748 = vunpack.c.h.b16 %v611
        %v749 = vunpack.c.l.b16 %v612
        %v750 = vunpack.c.h.b16 %v612
        %v751 = vunpack.c.l.b16 %v613
        %v752 = vunpack.c.h.b16 %v613
        %v753 = vunpack.c.l.b16 %v614
        %v754 = vunpack.c.h.b16 %v614
        %v755 = vunpack.c.l.b16 %v615
        %v756 = vunpack.c.h.b16 %v615
        %v757 = vunpack.c.l.b16 %v616
        %v758 = vunpack.c.h.b16 %v616
        %v759 = vunpack.c.l.b16 %v617
        %v760 = vunpack.c.h.b16 %v617
        %v761 = vunpack.c.l.b16 %v618
        %v762 = vunpack.c.h.b16 %v618
        %v763 = vunpack.c.l.b16 %v619
        %v764 = vunpack.c.h.b16 %v619
        %v765 = vunpack.c.l.b16 %v620
        %v766 = vunpack.c.h.b16 %v620
        %v767 = vunpack.c.l.b16 %v621
        %v768 = vunpack.c.h.b16 %v621
        %v769 = vunpack.c.l.b16 %v622
        %v770 = vunpack.c.h.b16 %v622
        %v771 = vunpack.c.l.b16 %v623
        %v772 = vunpack.c.h.b16 %v623
        %v773 = vunpack.c.l.b16 %v624
        %v774 = vunpack.c.h.b16 %v624
        %v775 = vpack.c.b16 %v745, %v743
        %v776 = vpack.c.b16 %v746, %v744
        %v777 = vpack.c.b16 %v749, %v747
        %v778 = vpack.c.b16 %v750, %v748
        %v779 = vpack.c.b16 %v753, %v751
        %v780 = vpack.c.b16 %v754, %v752
        %v781 = vpack.c.b16 %v757, %v755
        %v782 = vpack.c.b16 %v758, %v756
        %v783 = vpack.c.b16 %v761, %v759
        %v784 = vpack.c.b16 %v762, %v760
        %v785 = vpack.c.b16 %v765, %v763
        %v786 = vpack.c.b16 %v766, %v764
        %v787 = vpack.c.b16 %v769, %v767
        %v788 = vpack.c.b16 %v770, %v768
        %v789 = vpack.c.b16 %v773, %v771
        %v790 = vpack.c.b16 %v774, %v772
        %807 = vmatpush.bf16.msra.mxu0 %v789
        %808 = vmatpush.bf16.msra.mxu0 %v787
        %809 = vmatpush.bf16.msra.mxu0 %v785
        %810 = vmatpush.bf16.msra.mxu0 %v783
        %811 = vmatpush.bf16.msra.mxu0 %v781
        %812 = vmatpush.bf16.msra.mxu0 %v779
        %813 = vmatpush.bf16.msra.mxu0 %v777
        %814 = vmatpush.bf16.msra.mxu0 %v775
        %815 = vmatmul.bf16.gmra.mxu0 %v695
        %v816 = vpop.f32.mrf.mxu0
        %v817 = vadd.f32 %v627, %v816
        %v818 = vpop.f32.mrf.mxu0
        %v819 = vadd.f32 %v627, %v818
        %820 = vmatmul.bf16.gmra.mxu0 %v696
        %v821 = vpop.f32.mrf.mxu0
        %v822 = vadd.f32 %v627, %v821
        %v823 = vpop.f32.mrf.mxu0
        %v824 = vadd.f32 %v627, %v823
        %825 = vmatmul.bf16.gmra.mxu0 %v697
        %v826 = vpop.f32.mrf.mxu0
        %v827 = vadd.f32 %v627, %v826
        %v828 = vpop.f32.mrf.mxu0
        %v829 = vadd.f32 %v627, %v828
        %830 = vmatmul.bf16.gmra.mxu0 %v698
        %v831 = vpop.f32.mrf.mxu0
        %v832 = vadd.f32 %v627, %v831
        %v833 = vpop.f32.mrf.mxu0
        %v834 = vadd.f32 %v627, %v833
        %835 = vmatmul.bf16.gmra.mxu0 %v699
        %v836 = vpop.f32.mrf.mxu0
        %v837 = vadd.f32 %v627, %v836
        %v838 = vpop.f32.mrf.mxu0
        %v839 = vadd.f32 %v627, %v838
        %840 = vmatmul.bf16.gmra.mxu0 %v700
        %v841 = vpop.f32.mrf.mxu0
        %v842 = vadd.f32 %v627, %v841
        %v843 = vpop.f32.mrf.mxu0
        %v844 = vadd.f32 %v627, %v843
        %845 = vmatmul.bf16.gmra.mxu0 %v701
        %v846 = vpop.f32.mrf.mxu0
        %v847 = vadd.f32 %v627, %v846
        %v848 = vpop.f32.mrf.mxu0
        %v849 = vadd.f32 %v627, %v848
        %850 = vmatmul.bf16.gmra.mxu0 %v702
        %v851 = vpop.f32.mrf.mxu0
        %v852 = vadd.f32 %v627, %v851
        %v853 = vpop.f32.mrf.mxu0
        %v854 = vadd.f32 %v627, %v853
        %855 = vmatmul.bf16.gmra.mxu0 %v703
        %v856 = vpop.f32.mrf.mxu0
        %v857 = vadd.f32 %v627, %v856
        %v858 = vpop.f32.mrf.mxu0
        %v859 = vadd.f32 %v627, %v858
        %860 = vmatmul.bf16.gmra.mxu0 %v704
        %v861 = vpop.f32.mrf.mxu0
        %v862 = vadd.f32 %v627, %v861
        %v863 = vpop.f32.mrf.mxu0
        %v864 = vadd.f32 %v627, %v863
        %865 = vmatmul.bf16.gmra.mxu0 %v705
        %v866 = vpop.f32.mrf.mxu0
        %v867 = vadd.f32 %v627, %v866
        %v868 = vpop.f32.mrf.mxu0
        %v869 = vadd.f32 %v627, %v868
        %870 = vmatmul.bf16.gmra.mxu0 %v706
        %v871 = vpop.f32.mrf.mxu0
        %v872 = vadd.f32 %v627, %v871
        %v873 = vpop.f32.mrf.mxu0
        %v874 = vadd.f32 %v627, %v873
        %875 = vmatmul.bf16.gmra.mxu0 %v707
        %v876 = vpop.f32.mrf.mxu0
        %v877 = vadd.f32 %v627, %v876
        %v878 = vpop.f32.mrf.mxu0
        %v879 = vadd.f32 %v627, %v878
        %880 = vmatmul.bf16.gmra.mxu0 %v708
        %v881 = vpop.f32.mrf.mxu0
        %v882 = vadd.f32 %v627, %v881
        %v883 = vpop.f32.mrf.mxu0
        %v884 = vadd.f32 %v627, %v883
        %885 = vmatmul.bf16.gmra.mxu0 %v709
        %v886 = vpop.f32.mrf.mxu0
        %v887 = vadd.f32 %v627, %v886
        %v888 = vpop.f32.mrf.mxu0
        %v889 = vadd.f32 %v627, %v888
        %890 = vmatmul.bf16.gmra.mxu0 %v710
        %v891 = vpop.f32.mrf.mxu0
        %v892 = vadd.f32 %v627, %v891
        %v893 = vpop.f32.mrf.mxu0
        %v894 = vadd.f32 %v627, %v893
        %895 = vdwg.mxu0
        %896 = vmatpush.bf16.msra.mxu0 %v790
        %897 = vmatpush.bf16.msra.mxu0 %v788
        %898 = vmatpush.bf16.msra.mxu0 %v786
        %899 = vmatpush.bf16.msra.mxu0 %v784
        %900 = vmatpush.bf16.msra.mxu0 %v782
        %901 = vmatpush.bf16.msra.mxu0 %v780
        %902 = vmatpush.bf16.msra.mxu0 %v778
        %903 = vmatpush.bf16.msra.mxu0 %v776
        %904 = vmatmul.bf16.gmra.mxu0 %v695
        %v905 = vpop.f32.mrf.mxu0
        %v906 = vadd.f32 %v628, %v905
        %v907 = vpop.f32.mrf.mxu0
        %v908 = vadd.f32 %v628, %v907
        %909 = vmatmul.bf16.gmra.mxu0 %v696
        %v910 = vpop.f32.mrf.mxu0
        %v911 = vadd.f32 %v628, %v910
        %v912 = vpop.f32.mrf.mxu0
        %v913 = vadd.f32 %v628, %v912
        %914 = vmatmul.bf16.gmra.mxu0 %v697
        %v915 = vpop.f32.mrf.mxu0
        %v916 = vadd.f32 %v628, %v915
        %v917 = vpop.f32.mrf.mxu0
        %v918 = vadd.f32 %v628, %v917
        %919 = vmatmul.bf16.gmra.mxu0 %v698
        %v920 = vpop.f32.mrf.mxu0
        %v921 = vadd.f32 %v628, %v920
        %v922 = vpop.f32.mrf.mxu0
        %v923 = vadd.f32 %v628, %v922
        %924 = vmatmul.bf16.gmra.mxu0 %v699
        %v925 = vpop.f32.mrf.mxu0
        %v926 = vadd.f32 %v628, %v925
        %v927 = vpop.f32.mrf.mxu0
        %v928 = vadd.f32 %v628, %v927
        %929 = vmatmul.bf16.gmra.mxu0 %v700
        %v930 = vpop.f32.mrf.mxu0
        %v931 = vadd.f32 %v628, %v930
        %v932 = vpop.f32.mrf.mxu0
        %v933 = vadd.f32 %v628, %v932
        %934 = vmatmul.bf16.gmra.mxu0 %v701
        %v935 = vpop.f32.mrf.mxu0
        %v936 = vadd.f32 %v628, %v935
        %v937 = vpop.f32.mrf.mxu0
        %v938 = vadd.f32 %v628, %v937
        %939 = vmatmul.bf16.gmra.mxu0 %v702
        %v940 = vpop.f32.mrf.mxu0
        %v941 = vadd.f32 %v628, %v940
        %v942 = vpop.f32.mrf.mxu0
        %v943 = vadd.f32 %v628, %v942
        %944 = vmatmul.bf16.gmra.mxu0 %v703
        %v945 = vpop.f32.mrf.mxu0
        %v946 = vadd.f32 %v628, %v945
        %v947 = vpop.f32.mrf.mxu0
        %v948 = vadd.f32 %v628, %v947
        %949 = vmatmul.bf16.gmra.mxu0 %v704
        %v950 = vpop.f32.mrf.mxu0
        %v951 = vadd.f32 %v628, %v950
        %v952 = vpop.f32.mrf.mxu0
        %v953 = vadd.f32 %v628, %v952
        %954 = vmatmul.bf16.gmra.mxu0 %v705
        %v955 = vpop.f32.mrf.mxu0
        %v956 = vadd.f32 %v628, %v955
        %v957 = vpop.f32.mrf.mxu0
        %v958 = vadd.f32 %v628, %v957
        %959 = vmatmul.bf16.gmra.mxu0 %v706
        %v960 = vpop.f32.mrf.mxu0
        %v961 = vadd.f32 %v628, %v960
        %v962 = vpop.f32.mrf.mxu0
        %v963 = vadd.f32 %v628, %v962
        %964 = vmatmul.bf16.gmra.mxu0 %v707
        %v965 = vpop.f32.mrf.mxu0
        %v966 = vadd.f32 %v628, %v965
        %v967 = vpop.f32.mrf.mxu0
        %v968 = vadd.f32 %v628, %v967
        %969 = vmatmul.bf16.gmra.mxu0 %v708
        %v970 = vpop.f32.mrf.mxu0
        %v971 = vadd.f32 %v628, %v970
        %v972 = vpop.f32.mrf.mxu0
        %v973 = vadd.f32 %v628, %v972
        %974 = vmatmul.bf16.gmra.mxu0 %v709
        %v975 = vpop.f32.mrf.mxu0
        %v976 = vadd.f32 %v628, %v975
        %v977 = vpop.f32.mrf.mxu0
        %v978 = vadd.f32 %v628, %v977
        %979 = vmatmul.bf16.gmra.mxu0 %v710
        %v980 = vpop.f32.mrf.mxu0
        %v981 = vadd.f32 %v628, %v980
        %v982 = vpop.f32.mrf.mxu0
        %v983 = vadd.f32 %v628, %v982
        %984 = vdwg.mxu0
        %v985 = vpack.c.bf16 %v819, %v817
        %v986 = vpack.c.bf16 %v908, %v906
        %v987 = vpack.c.bf16 %v824, %v822
        %v988 = vpack.c.bf16 %v913, %v911
        %v989 = vpack.c.bf16 %v829, %v827
        %v990 = vpack.c.bf16 %v918, %v916
        %v991 = vpack.c.bf16 %v834, %v832
        %v992 = vpack.c.bf16 %v923, %v921
        %v993 = vpack.c.bf16 %v839, %v837
        %v994 = vpack.c.bf16 %v928, %v926
        %v995 = vpack.c.bf16 %v844, %v842
        %v996 = vpack.c.bf16 %v933, %v931
        %v997 = vpack.c.bf16 %v849, %v847
        %v998 = vpack.c.bf16 %v938, %v936
        %v999 = vpack.c.bf16 %v854, %v852
        %v1000 = vpack.c.bf16 %v943, %v941
        %v1001 = vpack.c.bf16 %v859, %v857
        %v1002 = vpack.c.bf16 %v948, %v946
        %v1003 = vpack.c.bf16 %v864, %v862
        %v1004 = vpack.c.bf16 %v953, %v951
        %v1005 = vpack.c.bf16 %v869, %v867
        %v1006 = vpack.c.bf16 %v958, %v956
        %v1007 = vpack.c.bf16 %v874, %v872
        %v1008 = vpack.c.bf16 %v963, %v961
        %v1009 = vpack.c.bf16 %v879, %v877
        %v1010 = vpack.c.bf16 %v968, %v966
        %v1011 = vpack.c.bf16 %v884, %v882
        %v1012 = vpack.c.bf16 %v973, %v971
        %v1013 = vpack.c.bf16 %v889, %v887
        %v1014 = vpack.c.bf16 %v978, %v976
        %v1015 = vpack.c.bf16 %v894, %v892
        %v1016 = vpack.c.bf16 %v983, %v981
        %v1017 = vld [vmem:[#allocation8] sm:$0xff]
        %v1018 = vld [vmem:[#allocation8 + $0x8] sm:$0xff]
        %v1019 = vld [vmem:[#allocation8 + $0x10] sm:$0xff]
        %v1020 = vld [vmem:[#allocation8 + $0x18] sm:$0xff]
        %v1021 = vld [vmem:[#allocation8 + $0x20] sm:$0xff]
        %v1022 = vld [vmem:[#allocation8 + $0x28] sm:$0xff]
        %v1023 = vld [vmem:[#allocation8 + $0x30] sm:$0xff]
        %v1024 = vld [vmem:[#allocation8 + $0x38] sm:$0xff]
        %v1025 = vld [vmem:[#allocation8 + $0x40] sm:$0xff]
        %v1026 = vld [vmem:[#allocation8 + $0x48] sm:$0xff]
        %v1027 = vld [vmem:[#allocation8 + $0x50] sm:$0xff]
        %v1028 = vld [vmem:[#allocation8 + $0x58] sm:$0xff]
        %v1029 = vld [vmem:[#allocation8 + $0x60] sm:$0xff]
        %v1030 = vld [vmem:[#allocation8 + $0x68] sm:$0xff]
        %v1031 = vld [vmem:[#allocation8 + $0x70] sm:$0xff]
        %v1032 = vld [vmem:[#allocation8 + $0x78] sm:$0xff]
        %v1033 = vld [vmem:[#allocation8 + $0x80] sm:$0xff]
        %v1034 = vld [vmem:[#allocation8 + $0x88] sm:$0xff]
        %v1035 = vld [vmem:[#allocation8 + $0x90] sm:$0xff]
        %v1036 = vld [vmem:[#allocation8 + $0x98] sm:$0xff]
        %v1037 = vld [vmem:[#allocation8 + $0xa0] sm:$0xff]
        %v1038 = vld [vmem:[#allocation8 + $0xa8] sm:$0xff]
        %v1039 = vld [vmem:[#allocation8 + $0xb0] sm:$0xff]
        %v1040 = vld [vmem:[#allocation8 + $0xb8] sm:$0xff]
        %v1041 = vld [vmem:[#allocation8 + $0xc0] sm:$0xff]
        %v1042 = vld [vmem:[#allocation8 + $0xc8] sm:$0xff]
        %v1043 = vld [vmem:[#allocation8 + $0xd0] sm:$0xff]
        %v1044 = vld [vmem:[#allocation8 + $0xd8] sm:$0xff]
        %v1045 = vld [vmem:[#allocation8 + $0xe0] sm:$0xff]
        %v1046 = vld [vmem:[#allocation8 + $0xe8] sm:$0xff]
        %v1047 = vld [vmem:[#allocation8 + $0xf0] sm:$0xff]
        %v1048 = vld [vmem:[#allocation8 + $0xf8] sm:$0xff]
        %v1049 = vld [vmem:[%s4] sm:$0x3]
        %v1051 = vperm.slane %v1049, 0
        %v1052 = vperm.slane %v1049, 1
        %v1087 = vunpack.c.l.b16 %v1017
        %v1088 = vunpack.c.h.b16 %v1017
        %v1089 = vunpack.c.l.b16 %v1018
        %v1090 = vunpack.c.h.b16 %v1018
        %v1091 = vunpack.c.l.b16 %v1019
        %v1092 = vunpack.c.h.b16 %v1019
        %v1093 = vunpack.c.l.b16 %v1020
        %v1094 = vunpack.c.h.b16 %v1020
        %v1095 = vunpack.c.l.b16 %v1021
        %v1096 = vunpack.c.h.b16 %v1021
        %v1097 = vunpack.c.l.b16 %v1022
        %v1098 = vunpack.c.h.b16 %v1022
        %v1099 = vunpack.c.l.b16 %v1023
        %v1100 = vunpack.c.h.b16 %v1023
        %v1101 = vunpack.c.l.b16 %v1024
        %v1102 = vunpack.c.h.b16 %v1024
        %v1103 = vunpack.c.l.b16 %v1025
        %v1104 = vunpack.c.h.b16 %v1025
        %v1105 = vunpack.c.l.b16 %v1026
        %v1106 = vunpack.c.h.b16 %v1026
        %v1107 = vunpack.c.l.b16 %v1027
        %v1108 = vunpack.c.h.b16 %v1027
        %v1109 = vunpack.c.l.b16 %v1028
        %v1110 = vunpack.c.h.b16 %v1028
        %v1111 = vunpack.c.l.b16 %v1029
        %v1112 = vunpack.c.h.b16 %v1029
        %v1113 = vunpack.c.l.b16 %v1030
        %v1114 = vunpack.c.h.b16 %v1030
        %v1115 = vunpack.c.l.b16 %v1031
        %v1116 = vunpack.c.h.b16 %v1031
        %v1117 = vunpack.c.l.b16 %v1032
        %v1118 = vunpack.c.h.b16 %v1032
        %v1119 = vunpack.c.l.b16 %v1033
        %v1120 = vunpack.c.h.b16 %v1033
        %v1121 = vunpack.c.l.b16 %v1034
        %v1122 = vunpack.c.h.b16 %v1034
        %v1123 = vunpack.c.l.b16 %v1035
        %v1124 = vunpack.c.h.b16 %v1035
        %v1125 = vunpack.c.l.b16 %v1036
        %v1126 = vunpack.c.h.b16 %v1036
        %v1127 = vunpack.c.l.b16 %v1037
        %v1128 = vunpack.c.h.b16 %v1037
        %v1129 = vunpack.c.l.b16 %v1038
        %v1130 = vunpack.c.h.b16 %v1038
        %v1131 = vunpack.c.l.b16 %v1039
        %v1132 = vunpack.c.h.b16 %v1039
        %v1133 = vunpack.c.l.b16 %v1040
        %v1134 = vunpack.c.h.b16 %v1040
        %v1135 = vunpack.c.l.b16 %v1041
        %v1136 = vunpack.c.h.b16 %v1041
        %v1137 = vunpack.c.l.b16 %v1042
        %v1138 = vunpack.c.h.b16 %v1042
        %v1139 = vunpack.c.l.b16 %v1043
        %v1140 = vunpack.c.h.b16 %v1043
        %v1141 = vunpack.c.l.b16 %v1044
        %v1142 = vunpack.c.h.b16 %v1044
        %v1143 = vunpack.c.l.b16 %v1045
        %v1144 = vunpack.c.h.b16 %v1045
        %v1145 = vunpack.c.l.b16 %v1046
        %v1146 = vunpack.c.h.b16 %v1046
        %v1147 = vunpack.c.l.b16 %v1047
        %v1148 = vunpack.c.h.b16 %v1047
        %v1149 = vunpack.c.l.b16 %v1048
        %v1150 = vunpack.c.h.b16 %v1048
        %v1151 = vpack.c.b16 %v1089, %v1087
        %v1152 = vpack.c.b16 %v1090, %v1088
        %v1153 = vpack.c.b16 %v1093, %v1091
        %v1154 = vpack.c.b16 %v1094, %v1092
        %v1155 = vpack.c.b16 %v1097, %v1095
        %v1156 = vpack.c.b16 %v1098, %v1096
        %v1157 = vpack.c.b16 %v1101, %v1099
        %v1158 = vpack.c.b16 %v1102, %v1100
        %v1159 = vpack.c.b16 %v1105, %v1103
        %v1160 = vpack.c.b16 %v1106, %v1104
        %v1161 = vpack.c.b16 %v1109, %v1107
        %v1162 = vpack.c.b16 %v1110, %v1108
        %v1163 = vpack.c.b16 %v1113, %v1111
        %v1164 = vpack.c.b16 %v1114, %v1112
        %v1165 = vpack.c.b16 %v1117, %v1115
        %v1166 = vpack.c.b16 %v1118, %v1116
        %v1167 = vpack.c.b16 %v1121, %v1119
        %v1168 = vpack.c.b16 %v1122, %v1120
        %v1169 = vpack.c.b16 %v1125, %v1123
        %v1170 = vpack.c.b16 %v1126, %v1124
        %v1171 = vpack.c.b16 %v1129, %v1127
        %v1172 = vpack.c.b16 %v1130, %v1128
        %v1173 = vpack.c.b16 %v1133, %v1131
        %v1174 = vpack.c.b16 %v1134, %v1132
        %v1175 = vpack.c.b16 %v1137, %v1135
        %v1176 = vpack.c.b16 %v1138, %v1136
        %v1177 = vpack.c.b16 %v1141, %v1139
        %v1178 = vpack.c.b16 %v1142, %v1140
        %v1179 = vpack.c.b16 %v1145, %v1143
        %v1180 = vpack.c.b16 %v1146, %v1144
        %v1181 = vpack.c.b16 %v1149, %v1147
        %v1182 = vpack.c.b16 %v1150, %v1148
        %1215 = vmatpush.bf16.msra.mxu0 %v1165
        %1216 = vmatpush.bf16.msra.mxu0 %v1163
        %1217 = vmatpush.bf16.msra.mxu0 %v1161
        %1218 = vmatpush.bf16.msra.mxu0 %v1159
        %1219 = vmatpush.bf16.msra.mxu0 %v1157
        %1220 = vmatpush.bf16.msra.mxu0 %v1155
        %1221 = vmatpush.bf16.msra.mxu0 %v1153
        %1222 = vmatpush.bf16.msra.mxu0 %v1151
        %1223 = vmatmul.bf16.gmra.mxu0 %v985
        %v1224 = vpop.f32.mrf.mxu0
        %v1225 = vadd.f32 %v1051, %v1224
        %v1226 = vpop.f32.mrf.mxu0
        %v1227 = vadd.f32 %v1051, %v1226
        %1228 = vmatmul.bf16.gmra.mxu0 %v987
        %v1229 = vpop.f32.mrf.mxu0
        %v1230 = vadd.f32 %v1051, %v1229
        %v1231 = vpop.f32.mrf.mxu0
        %v1232 = vadd.f32 %v1051, %v1231
        %1233 = vmatmul.bf16.gmra.mxu0 %v989
        %v1234 = vpop.f32.mrf.mxu0
        %v1235 = vadd.f32 %v1051, %v1234
        %v1236 = vpop.f32.mrf.mxu0
        %v1237 = vadd.f32 %v1051, %v1236
        %1238 = vmatmul.bf16.gmra.mxu0 %v991
        %v1239 = vpop.f32.mrf.mxu0
        %v1240 = vadd.f32 %v1051, %v1239
        %v1241 = vpop.f32.mrf.mxu0
        %v1242 = vadd.f32 %v1051, %v1241
        %1243 = vmatmul.bf16.gmra.mxu0 %v993
        %v1244 = vpop.f32.mrf.mxu0
        %v1245 = vadd.f32 %v1051, %v1244
        %v1246 = vpop.f32.mrf.mxu0
        %v1247 = vadd.f32 %v1051, %v1246
        %1248 = vmatmul.bf16.gmra.mxu0 %v995
        %v1249 = vpop.f32.mrf.mxu0
        %v1250 = vadd.f32 %v1051, %v1249
        %v1251 = vpop.f32.mrf.mxu0
        %v1252 = vadd.f32 %v1051, %v1251
        %1253 = vmatmul.bf16.gmra.mxu0 %v997
        %v1254 = vpop.f32.mrf.mxu0
        %v1255 = vadd.f32 %v1051, %v1254
        %v1256 = vpop.f32.mrf.mxu0
        %v1257 = vadd.f32 %v1051, %v1256
        %1258 = vmatmul.bf16.gmra.mxu0 %v999
        %v1259 = vpop.f32.mrf.mxu0
        %v1260 = vadd.f32 %v1051, %v1259
        %v1261 = vpop.f32.mrf.mxu0
        %v1262 = vadd.f32 %v1051, %v1261
        %1263 = vmatmul.bf16.gmra.mxu0 %v1001
        %v1264 = vpop.f32.mrf.mxu0
        %v1265 = vadd.f32 %v1051, %v1264
        %v1266 = vpop.f32.mrf.mxu0
        %v1267 = vadd.f32 %v1051, %v1266
        %1268 = vmatmul.bf16.gmra.mxu0 %v1003
        %v1269 = vpop.f32.mrf.mxu0
        %v1270 = vadd.f32 %v1051, %v1269
        %v1271 = vpop.f32.mrf.mxu0
        %v1272 = vadd.f32 %v1051, %v1271
        %1273 = vmatmul.bf16.gmra.mxu0 %v1005
        %v1274 = vpop.f32.mrf.mxu0
        %v1275 = vadd.f32 %v1051, %v1274
        %v1276 = vpop.f32.mrf.mxu0
        %v1277 = vadd.f32 %v1051, %v1276
        %1278 = vmatmul.bf16.gmra.mxu0 %v1007
        %v1279 = vpop.f32.mrf.mxu0
        %v1280 = vadd.f32 %v1051, %v1279
        %v1281 = vpop.f32.mrf.mxu0
        %v1282 = vadd.f32 %v1051, %v1281
        %1283 = vmatmul.bf16.gmra.mxu0 %v1009
        %v1284 = vpop.f32.mrf.mxu0
        %v1285 = vadd.f32 %v1051, %v1284
        %v1286 = vpop.f32.mrf.mxu0
        %v1287 = vadd.f32 %v1051, %v1286
        %1288 = vmatmul.bf16.gmra.mxu0 %v1011
        %v1289 = vpop.f32.mrf.mxu0
        %v1290 = vadd.f32 %v1051, %v1289
        %v1291 = vpop.f32.mrf.mxu0
        %v1292 = vadd.f32 %v1051, %v1291
        %1293 = vmatmul.bf16.gmra.mxu0 %v1013
        %v1294 = vpop.f32.mrf.mxu0
        %v1295 = vadd.f32 %v1051, %v1294
        %v1296 = vpop.f32.mrf.mxu0
        %v1297 = vadd.f32 %v1051, %v1296
        %1298 = vmatmul.bf16.gmra.mxu0 %v1015
        %v1299 = vpop.f32.mrf.mxu0
        %v1300 = vadd.f32 %v1051, %v1299
        %v1301 = vpop.f32.mrf.mxu0
        %v1302 = vadd.f32 %v1051, %v1301
        %1303 = vdwg.mxu0
        %1304 = vmatpush.bf16.msra.mxu0 %v1181
        %1305 = vmatpush.bf16.msra.mxu0 %v1179
        %1306 = vmatpush.bf16.msra.mxu0 %v1177
        %1307 = vmatpush.bf16.msra.mxu0 %v1175
        %1308 = vmatpush.bf16.msra.mxu0 %v1173
        %1309 = vmatpush.bf16.msra.mxu0 %v1171
        %1310 = vmatpush.bf16.msra.mxu0 %v1169
        %1311 = vmatpush.bf16.msra.mxu0 %v1167
        %1312 = vmatmul.bf16.gmra.mxu0 %v986
        %v1313 = vpop.f32.mrf.mxu0
        %v1314 = vadd.f32 %v1225, %v1313
        %v1315 = vpop.f32.mrf.mxu0
        %v1316 = vadd.f32 %v1227, %v1315
        %1317 = vmatmul.bf16.gmra.mxu0 %v988
        %v1318 = vpop.f32.mrf.mxu0
        %v1319 = vadd.f32 %v1230, %v1318
        %v1320 = vpop.f32.mrf.mxu0
        %v1321 = vadd.f32 %v1232, %v1320
        %1322 = vmatmul.bf16.gmra.mxu0 %v990
        %v1323 = vpop.f32.mrf.mxu0
        %v1324 = vadd.f32 %v1235, %v1323
        %v1325 = vpop.f32.mrf.mxu0
        %v1326 = vadd.f32 %v1237, %v1325
        %1327 = vmatmul.bf16.gmra.mxu0 %v992
        %v1328 = vpop.f32.mrf.mxu0
        %v1329 = vadd.f32 %v1240, %v1328
        %v1330 = vpop.f32.mrf.mxu0
        %v1331 = vadd.f32 %v1242, %v1330
        %1332 = vmatmul.bf16.gmra.mxu0 %v994
        %v1333 = vpop.f32.mrf.mxu0
        %v1334 = vadd.f32 %v1245, %v1333
        %v1335 = vpop.f32.mrf.mxu0
        %v1336 = vadd.f32 %v1247, %v1335
        %1337 = vmatmul.bf16.gmra.mxu0 %v996
        %v1338 = vpop.f32.mrf.mxu0
        %v1339 = vadd.f32 %v1250, %v1338
        %v1340 = vpop.f32.mrf.mxu0
        %v1341 = vadd.f32 %v1252, %v1340
        %1342 = vmatmul.bf16.gmra.mxu0 %v998
        %v1343 = vpop.f32.mrf.mxu0
        %v1344 = vadd.f32 %v1255, %v1343
        %v1345 = vpop.f32.mrf.mxu0
        %v1346 = vadd.f32 %v1257, %v1345
        %1347 = vmatmul.bf16.gmra.mxu0 %v1000
        %v1348 = vpop.f32.mrf.mxu0
        %v1349 = vadd.f32 %v1260, %v1348
        %v1350 = vpop.f32.mrf.mxu0
        %v1351 = vadd.f32 %v1262, %v1350
        %1352 = vmatmul.bf16.gmra.mxu0 %v1002
        %v1353 = vpop.f32.mrf.mxu0
        %v1354 = vadd.f32 %v1265, %v1353
        %v1355 = vpop.f32.mrf.mxu0
        %v1356 = vadd.f32 %v1267, %v1355
        %1357 = vmatmul.bf16.gmra.mxu0 %v1004
        %v1358 = vpop.f32.mrf.mxu0
        %v1359 = vadd.f32 %v1270, %v1358
        %v1360 = vpop.f32.mrf.mxu0
        %v1361 = vadd.f32 %v1272, %v1360
        %1362 = vmatmul.bf16.gmra.mxu0 %v1006
        %v1363 = vpop.f32.mrf.mxu0
        %v1364 = vadd.f32 %v1275, %v1363
        %v1365 = vpop.f32.mrf.mxu0
        %v1366 = vadd.f32 %v1277, %v1365
        %1367 = vmatmul.bf16.gmra.mxu0 %v1008
        %v1368 = vpop.f32.mrf.mxu0
        %v1369 = vadd.f32 %v1280, %v1368
        %v1370 = vpop.f32.mrf.mxu0
        %v1371 = vadd.f32 %v1282, %v1370
        %1372 = vmatmul.bf16.gmra.mxu0 %v1010
        %v1373 = vpop.f32.mrf.mxu0
        %v1374 = vadd.f32 %v1285, %v1373
        %v1375 = vpop.f32.mrf.mxu0
        %v1376 = vadd.f32 %v1287, %v1375
        %1377 = vmatmul.bf16.gmra.mxu0 %v1012
        %v1378 = vpop.f32.mrf.mxu0
        %v1379 = vadd.f32 %v1290, %v1378
        %v1380 = vpop.f32.mrf.mxu0
        %v1381 = vadd.f32 %v1292, %v1380
        %1382 = vmatmul.bf16.gmra.mxu0 %v1014
        %v1383 = vpop.f32.mrf.mxu0
        %v1384 = vadd.f32 %v1295, %v1383
        %v1385 = vpop.f32.mrf.mxu0
        %v1386 = vadd.f32 %v1297, %v1385
        %1387 = vmatmul.bf16.gmra.mxu0 %v1016
        %v1388 = vpop.f32.mrf.mxu0
        %v1389 = vadd.f32 %v1300, %v1388
        %v1390 = vpop.f32.mrf.mxu0
        %v1391 = vadd.f32 %v1302, %v1390
        %1392 = vdwg.mxu0
        %1393 = vmatpush.bf16.msra.mxu0 %v1166
        %1394 = vmatpush.bf16.msra.mxu0 %v1164
        %1395 = vmatpush.bf16.msra.mxu0 %v1162
        %1396 = vmatpush.bf16.msra.mxu0 %v1160
        %1397 = vmatpush.bf16.msra.mxu0 %v1158
        %1398 = vmatpush.bf16.msra.mxu0 %v1156
        %1399 = vmatpush.bf16.msra.mxu0 %v1154
        %1400 = vmatpush.bf16.msra.mxu0 %v1152
        %1401 = vmatmul.bf16.gmra.mxu0 %v985
        %v1402 = vpop.f32.mrf.mxu0
        %v1403 = vadd.f32 %v1052, %v1402
        %v1404 = vpop.f32.mrf.mxu0
        %v1405 = vadd.f32 %v1052, %v1404
        %1406 = vmatmul.bf16.gmra.mxu0 %v987
        %v1407 = vpop.f32.mrf.mxu0
        %v1408 = vadd.f32 %v1052, %v1407
        %v1409 = vpop.f32.mrf.mxu0
        %v1410 = vadd.f32 %v1052, %v1409
        %1411 = vmatmul.bf16.gmra.mxu0 %v989
        %v1412 = vpop.f32.mrf.mxu0
        %v1413 = vadd.f32 %v1052, %v1412
        %v1414 = vpop.f32.mrf.mxu0
        %v1415 = vadd.f32 %v1052, %v1414
        %1416 = vmatmul.bf16.gmra.mxu0 %v991
        %v1417 = vpop.f32.mrf.mxu0
        %v1418 = vadd.f32 %v1052, %v1417
        %v1419 = vpop.f32.mrf.mxu0
        %v1420 = vadd.f32 %v1052, %v1419
        %1421 = vmatmul.bf16.gmra.mxu0 %v993
        %v1422 = vpop.f32.mrf.mxu0
        %v1423 = vadd.f32 %v1052, %v1422
        %v1424 = vpop.f32.mrf.mxu0
        %v1425 = vadd.f32 %v1052, %v1424
        %1426 = vmatmul.bf16.gmra.mxu0 %v995
        %v1427 = vpop.f32.mrf.mxu0
        %v1428 = vadd.f32 %v1052, %v1427
        %v1429 = vpop.f32.mrf.mxu0
        %v1430 = vadd.f32 %v1052, %v1429
        %1431 = vmatmul.bf16.gmra.mxu0 %v997
        %v1432 = vpop.f32.mrf.mxu0
        %v1433 = vadd.f32 %v1052, %v1432
        %v1434 = vpop.f32.mrf.mxu0
        %v1435 = vadd.f32 %v1052, %v1434
        %1436 = vmatmul.bf16.gmra.mxu0 %v999
        %v1437 = vpop.f32.mrf.mxu0
        %v1438 = vadd.f32 %v1052, %v1437
        %v1439 = vpop.f32.mrf.mxu0
        %v1440 = vadd.f32 %v1052, %v1439
        %1441 = vmatmul.bf16.gmra.mxu0 %v1001
        %v1442 = vpop.f32.mrf.mxu0
        %v1443 = vadd.f32 %v1052, %v1442
        %v1444 = vpop.f32.mrf.mxu0
        %v1445 = vadd.f32 %v1052, %v1444
        %1446 = vmatmul.bf16.gmra.mxu0 %v1003
        %v1447 = vpop.f32.mrf.mxu0
        %v1448 = vadd.f32 %v1052, %v1447
        %v1449 = vpop.f32.mrf.mxu0
        %v1450 = vadd.f32 %v1052, %v1449
        %1451 = vmatmul.bf16.gmra.mxu0 %v1005
        %v1452 = vpop.f32.mrf.mxu0
        %v1453 = vadd.f32 %v1052, %v1452
        %v1454 = vpop.f32.mrf.mxu0
        %v1455 = vadd.f32 %v1052, %v1454
        %1456 = vmatmul.bf16.gmra.mxu0 %v1007
        %v1457 = vpop.f32.mrf.mxu0
        %v1458 = vadd.f32 %v1052, %v1457
        %v1459 = vpop.f32.mrf.mxu0
        %v1460 = vadd.f32 %v1052, %v1459
        %1461 = vmatmul.bf16.gmra.mxu0 %v1009
        %v1462 = vpop.f32.mrf.mxu0
        %v1463 = vadd.f32 %v1052, %v1462
        %v1464 = vpop.f32.mrf.mxu0
        %v1465 = vadd.f32 %v1052, %v1464
        %1466 = vmatmul.bf16.gmra.mxu0 %v1011
        %v1467 = vpop.f32.mrf.mxu0
        %v1468 = vadd.f32 %v1052, %v1467
        %v1469 = vpop.f32.mrf.mxu0
        %v1470 = vadd.f32 %v1052, %v1469
        %1471 = vmatmul.bf16.gmra.mxu0 %v1013
        %v1472 = vpop.f32.mrf.mxu0
        %v1473 = vadd.f32 %v1052, %v1472
        %v1474 = vpop.f32.mrf.mxu0
        %v1475 = vadd.f32 %v1052, %v1474
        %1476 = vmatmul.bf16.gmra.mxu0 %v1015
        %v1477 = vpop.f32.mrf.mxu0
        %v1478 = vadd.f32 %v1052, %v1477
        %v1479 = vpop.f32.mrf.mxu0
        %v1480 = vadd.f32 %v1052, %v1479
        %1481 = vdwg.mxu0
        %1482 = vmatpush.bf16.msra.mxu0 %v1182
        %1483 = vmatpush.bf16.msra.mxu0 %v1180
        %1484 = vmatpush.bf16.msra.mxu0 %v1178
        %1485 = vmatpush.bf16.msra.mxu0 %v1176
        %1486 = vmatpush.bf16.msra.mxu0 %v1174
        %1487 = vmatpush.bf16.msra.mxu0 %v1172
        %1488 = vmatpush.bf16.msra.mxu0 %v1170
        %1489 = vmatpush.bf16.msra.mxu0 %v1168
        %1490 = vmatmul.bf16.gmra.mxu0 %v986
        %v1491 = vpop.f32.mrf.mxu0
        %v1492 = vadd.f32 %v1403, %v1491
        %v1493 = vpop.f32.mrf.mxu0
        %v1494 = vadd.f32 %v1405, %v1493
        %1495 = vmatmul.bf16.gmra.mxu0 %v988
        %v1496 = vpop.f32.mrf.mxu0
        %v1497 = vadd.f32 %v1408, %v1496
        %v1498 = vpop.f32.mrf.mxu0
        %v1499 = vadd.f32 %v1410, %v1498
        %1500 = vmatmul.bf16.gmra.mxu0 %v990
        %v1501 = vpop.f32.mrf.mxu0
        %v1502 = vadd.f32 %v1413, %v1501
        %v1503 = vpop.f32.mrf.mxu0
        %v1504 = vadd.f32 %v1415, %v1503
        %1505 = vmatmul.bf16.gmra.mxu0 %v992
        %v1506 = vpop.f32.mrf.mxu0
        %v1507 = vadd.f32 %v1418, %v1506
        %v1508 = vpop.f32.mrf.mxu0
        %v1509 = vadd.f32 %v1420, %v1508
        %1510 = vmatmul.bf16.gmra.mxu0 %v994
        %v1511 = vpop.f32.mrf.mxu0
        %v1512 = vadd.f32 %v1423, %v1511
        %v1513 = vpop.f32.mrf.mxu0
        %v1514 = vadd.f32 %v1425, %v1513
        %1515 = vmatmul.bf16.gmra.mxu0 %v996
        %v1516 = vpop.f32.mrf.mxu0
        %v1517 = vadd.f32 %v1428, %v1516
        %v1518 = vpop.f32.mrf.mxu0
        %v1519 = vadd.f32 %v1430, %v1518
        %1520 = vmatmul.bf16.gmra.mxu0 %v998
        %v1521 = vpop.f32.mrf.mxu0
        %v1522 = vadd.f32 %v1433, %v1521
        %v1523 = vpop.f32.mrf.mxu0
        %v1524 = vadd.f32 %v1435, %v1523
        %1525 = vmatmul.bf16.gmra.mxu0 %v1000
        %v1526 = vpop.f32.mrf.mxu0
        %v1527 = vadd.f32 %v1438, %v1526
        %v1528 = vpop.f32.mrf.mxu0
        %v1529 = vadd.f32 %v1440, %v1528
        %1530 = vmatmul.bf16.gmra.mxu0 %v1002
        %v1531 = vpop.f32.mrf.mxu0
        %v1532 = vadd.f32 %v1443, %v1531
        %v1533 = vpop.f32.mrf.mxu0
        %v1534 = vadd.f32 %v1445, %v1533
        %1535 = vmatmul.bf16.gmra.mxu0 %v1004
        %v1536 = vpop.f32.mrf.mxu0
        %v1537 = vadd.f32 %v1448, %v1536
        %v1538 = vpop.f32.mrf.mxu0
        %v1539 = vadd.f32 %v1450, %v1538
        %1540 = vmatmul.bf16.gmra.mxu0 %v1006
        %v1541 = vpop.f32.mrf.mxu0
        %v1542 = vadd.f32 %v1453, %v1541
        %v1543 = vpop.f32.mrf.mxu0
        %v1544 = vadd.f32 %v1455, %v1543
        %1545 = vmatmul.bf16.gmra.mxu0 %v1008
        %v1546 = vpop.f32.mrf.mxu0
        %v1547 = vadd.f32 %v1458, %v1546
        %v1548 = vpop.f32.mrf.mxu0
        %v1549 = vadd.f32 %v1460, %v1548
        %1550 = vmatmul.bf16.gmra.mxu0 %v1010
        %v1551 = vpop.f32.mrf.mxu0
        %v1552 = vadd.f32 %v1463, %v1551
        %v1553 = vpop.f32.mrf.mxu0
        %v1554 = vadd.f32 %v1465, %v1553
        %1555 = vmatmul.bf16.gmra.mxu0 %v1012
        %v1556 = vpop.f32.mrf.mxu0
        %v1557 = vadd.f32 %v1468, %v1556
        %v1558 = vpop.f32.mrf.mxu0
        %v1559 = vadd.f32 %v1470, %v1558
        %1560 = vmatmul.bf16.gmra.mxu0 %v1014
        %v1561 = vpop.f32.mrf.mxu0
        %v1562 = vadd.f32 %v1473, %v1561
        %v1563 = vpop.f32.mrf.mxu0
        %v1564 = vadd.f32 %v1475, %v1563
        %1565 = vmatmul.bf16.gmra.mxu0 %v1016
        %v1566 = vpop.f32.mrf.mxu0
        %v1567 = vadd.f32 %v1478, %v1566
        %v1568 = vpop.f32.mrf.mxu0
        %v1569 = vadd.f32 %v1480, %v1568
        %1570 = vdwg.mxu0
        %v1571 = vmax.f32 %v1314, 0.0
        %v1572 = vmax.f32 %v1492, 0.0
        %v1573 = vmax.f32 %v1316, 0.0
        %v1574 = vmax.f32 %v1494, 0.0
        %v1575 = vmax.f32 %v1319, 0.0
        %v1576 = vmax.f32 %v1497, 0.0
        %v1577 = vmax.f32 %v1321, 0.0
        %v1578 = vmax.f32 %v1499, 0.0
        %v1579 = vmax.f32 %v1324, 0.0
        %v1580 = vmax.f32 %v1502, 0.0
        %v1581 = vmax.f32 %v1326, 0.0
        %v1582 = vmax.f32 %v1504, 0.0
        %v1583 = vmax.f32 %v1329, 0.0
        %v1584 = vmax.f32 %v1507, 0.0
        %v1585 = vmax.f32 %v1331, 0.0
        %v1586 = vmax.f32 %v1509, 0.0
        %v1587 = vmax.f32 %v1334, 0.0
        %v1588 = vmax.f32 %v1512, 0.0
        %v1589 = vmax.f32 %v1336, 0.0
        %v1590 = vmax.f32 %v1514, 0.0
        %v1591 = vmax.f32 %v1339, 0.0
        %v1592 = vmax.f32 %v1517, 0.0
        %v1593 = vmax.f32 %v1341, 0.0
        %v1594 = vmax.f32 %v1519, 0.0
        %v1595 = vmax.f32 %v1344, 0.0
        %v1596 = vmax.f32 %v1522, 0.0
        %v1597 = vmax.f32 %v1346, 0.0
        %v1598 = vmax.f32 %v1524, 0.0
        %v1599 = vmax.f32 %v1349, 0.0
        %v1600 = vmax.f32 %v1527, 0.0
        %v1601 = vmax.f32 %v1351, 0.0
        %v1602 = vmax.f32 %v1529, 0.0
        %v1603 = vmax.f32 %v1354, 0.0
        %v1604 = vmax.f32 %v1532, 0.0
        %v1605 = vmax.f32 %v1356, 0.0
        %v1606 = vmax.f32 %v1534, 0.0
        %v1607 = vmax.f32 %v1359, 0.0
        %v1608 = vmax.f32 %v1537, 0.0
        %v1609 = vmax.f32 %v1361, 0.0
        %v1610 = vmax.f32 %v1539, 0.0
        %v1611 = vmax.f32 %v1364, 0.0
        %v1612 = vmax.f32 %v1542, 0.0
        %v1613 = vmax.f32 %v1366, 0.0
        %v1614 = vmax.f32 %v1544, 0.0
        %v1615 = vmax.f32 %v1369, 0.0
        %v1616 = vmax.f32 %v1547, 0.0
        %v1617 = vmax.f32 %v1371, 0.0
        %v1618 = vmax.f32 %v1549, 0.0
        %v1619 = vmax.f32 %v1374, 0.0
        %v1620 = vmax.f32 %v1552, 0.0
        %v1621 = vmax.f32 %v1376, 0.0
        %v1622 = vmax.f32 %v1554, 0.0
        %v1623 = vmax.f32 %v1379, 0.0
        %v1624 = vmax.f32 %v1557, 0.0
        %v1625 = vmax.f32 %v1381, 0.0
        %v1626 = vmax.f32 %v1559, 0.0
        %v1627 = vmax.f32 %v1384, 0.0
        %v1628 = vmax.f32 %v1562, 0.0
        %v1629 = vmax.f32 %v1386, 0.0
        %v1630 = vmax.f32 %v1564, 0.0
        %v1631 = vmax.f32 %v1389, 0.0
        %v1632 = vmax.f32 %v1567, 0.0
        %v1633 = vmax.f32 %v1391, 0.0
        %v1634 = vmax.f32 %v1569, 0.0
        %v1635 = vpack.c.bf16 %v1573, %v1571
        %v1636 = vpack.c.bf16 %v1574, %v1572
        %v1637 = vpack.c.bf16 %v1577, %v1575
        %v1638 = vpack.c.bf16 %v1578, %v1576
        %v1639 = vpack.c.bf16 %v1581, %v1579
        %v1640 = vpack.c.bf16 %v1582, %v1580
        %v1641 = vpack.c.bf16 %v1585, %v1583
        %v1642 = vpack.c.bf16 %v1586, %v1584
        %v1643 = vpack.c.bf16 %v1589, %v1587
        %v1644 = vpack.c.bf16 %v1590, %v1588
        %v1645 = vpack.c.bf16 %v1593, %v1591
        %v1646 = vpack.c.bf16 %v1594, %v1592
        %v1647 = vpack.c.bf16 %v1597, %v1595
        %v1648 = vpack.c.bf16 %v1598, %v1596
        %v1649 = vpack.c.bf16 %v1601, %v1599
        %v1650 = vpack.c.bf16 %v1602, %v1600
        %v1651 = vpack.c.bf16 %v1605, %v1603
        %v1652 = vpack.c.bf16 %v1606, %v1604
        %v1653 = vpack.c.bf16 %v1609, %v1607
        %v1654 = vpack.c.bf16 %v1610, %v1608
        %v1655 = vpack.c.bf16 %v1613, %v1611
        %v1656 = vpack.c.bf16 %v1614, %v1612
        %v1657 = vpack.c.bf16 %v1617, %v1615
        %v1658 = vpack.c.bf16 %v1618, %v1616
        %v1659 = vpack.c.bf16 %v1621, %v1619
        %v1660 = vpack.c.bf16 %v1622, %v1620
        %v1661 = vpack.c.bf16 %v1625, %v1623
        %v1662 = vpack.c.bf16 %v1626, %v1624
        %v1663 = vpack.c.bf16 %v1629, %v1627
        %v1664 = vpack.c.bf16 %v1630, %v1628
        %v1665 = vpack.c.bf16 %v1633, %v1631
        %v1666 = vpack.c.bf16 %v1634, %v1632
        %v1667 = vld [vmem:[#allocation10] sm:$0xff]
        %v1668 = vld [vmem:[#allocation10 + $0x8] sm:$0xff]
        %v1669 = vld [vmem:[#allocation10 + $0x10] sm:$0xff]
        %v1670 = vld [vmem:[#allocation10 + $0x18] sm:$0xff]
        %v1671 = vld [vmem:[#allocation10 + $0x20] sm:$0xff]
        %v1672 = vld [vmem:[#allocation10 + $0x28] sm:$0xff]
        %v1673 = vld [vmem:[#allocation10 + $0x30] sm:$0xff]
        %v1674 = vld [vmem:[#allocation10 + $0x38] sm:$0xff]
        %v1675 = vld [vmem:[#allocation10 + $0x40] sm:$0xff]
        %v1676 = vld [vmem:[#allocation10 + $0x48] sm:$0xff]
        %v1677 = vld [vmem:[#allocation10 + $0x50] sm:$0xff]
        %v1678 = vld [vmem:[#allocation10 + $0x58] sm:$0xff]
        %v1679 = vld [vmem:[#allocation10 + $0x60] sm:$0xff]
        %v1680 = vld [vmem:[#allocation10 + $0x68] sm:$0xff]
        %v1681 = vld [vmem:[#allocation10 + $0x70] sm:$0xff]
        %v1682 = vld [vmem:[#allocation10 + $0x78] sm:$0xff]
        %v1683 = vld [vmem:[#allocation10 + $0x80] sm:$0xff]
        %v1684 = vld [vmem:[#allocation10 + $0x88] sm:$0xff]
        %v1685 = vld [vmem:[#allocation10 + $0x90] sm:$0xff]
        %v1686 = vld [vmem:[#allocation10 + $0x98] sm:$0xff]
        %v1687 = vld [vmem:[#allocation10 + $0xa0] sm:$0xff]
        %v1688 = vld [vmem:[#allocation10 + $0xa8] sm:$0xff]
        %v1689 = vld [vmem:[#allocation10 + $0xb0] sm:$0xff]
        %v1690 = vld [vmem:[#allocation10 + $0xb8] sm:$0xff]
        %v1691 = vld [vmem:[#allocation10 + $0xc0] sm:$0xff]
        %v1692 = vld [vmem:[#allocation10 + $0xc8] sm:$0xff]
        %v1693 = vld [vmem:[#allocation10 + $0xd0] sm:$0xff]
        %v1694 = vld [vmem:[#allocation10 + $0xd8] sm:$0xff]
        %v1695 = vld [vmem:[#allocation10 + $0xe0] sm:$0xff]
        %v1696 = vld [vmem:[#allocation10 + $0xe8] sm:$0xff]
        %v1697 = vld [vmem:[#allocation10 + $0xf0] sm:$0xff]
        %v1698 = vld [vmem:[#allocation10 + $0xf8] sm:$0xff]
        %v1699 = vld [vmem:[%s6] sm:$0x3]
        %v1701 = vperm.slane %v1699, 0
        %v1702 = vperm.slane %v1699, 1
        %v1737 = vunpack.c.l.b16 %v1667
        %v1738 = vunpack.c.h.b16 %v1667
        %v1739 = vunpack.c.l.b16 %v1668
        %v1740 = vunpack.c.h.b16 %v1668
        %v1741 = vunpack.c.l.b16 %v1669
        %v1742 = vunpack.c.h.b16 %v1669
        %v1743 = vunpack.c.l.b16 %v1670
        %v1744 = vunpack.c.h.b16 %v1670
        %v1745 = vunpack.c.l.b16 %v1671
        %v1746 = vunpack.c.h.b16 %v1671
        %v1747 = vunpack.c.l.b16 %v1672
        %v1748 = vunpack.c.h.b16 %v1672
        %v1749 = vunpack.c.l.b16 %v1673
        %v1750 = vunpack.c.h.b16 %v1673
        %v1751 = vunpack.c.l.b16 %v1674
        %v1752 = vunpack.c.h.b16 %v1674
        %v1753 = vunpack.c.l.b16 %v1675
        %v1754 = vunpack.c.h.b16 %v1675
        %v1755 = vunpack.c.l.b16 %v1676
        %v1756 = vunpack.c.h.b16 %v1676
        %v1757 = vunpack.c.l.b16 %v1677
        %v1758 = vunpack.c.h.b16 %v1677
        %v1759 = vunpack.c.l.b16 %v1678
        %v1760 = vunpack.c.h.b16 %v1678
        %v1761 = vunpack.c.l.b16 %v1679
        %v1762 = vunpack.c.h.b16 %v1679
        %v1763 = vunpack.c.l.b16 %v1680
        %v1764 = vunpack.c.h.b16 %v1680
        %v1765 = vunpack.c.l.b16 %v1681
        %v1766 = vunpack.c.h.b16 %v1681
        %v1767 = vunpack.c.l.b16 %v1682
        %v1768 = vunpack.c.h.b16 %v1682
        %v1769 = vunpack.c.l.b16 %v1683
        %v1770 = vunpack.c.h.b16 %v1683
        %v1771 = vunpack.c.l.b16 %v1684
        %v1772 = vunpack.c.h.b16 %v1684
        %v1773 = vunpack.c.l.b16 %v1685
        %v1774 = vunpack.c.h.b16 %v1685
        %v1775 = vunpack.c.l.b16 %v1686
        %v1776 = vunpack.c.h.b16 %v1686
        %v1777 = vunpack.c.l.b16 %v1687
        %v1778 = vunpack.c.h.b16 %v1687
        %v1779 = vunpack.c.l.b16 %v1688
        %v1780 = vunpack.c.h.b16 %v1688
        %v1781 = vunpack.c.l.b16 %v1689
        %v1782 = vunpack.c.h.b16 %v1689
        %v1783 = vunpack.c.l.b16 %v1690
        %v1784 = vunpack.c.h.b16 %v1690
        %v1785 = vunpack.c.l.b16 %v1691
        %v1786 = vunpack.c.h.b16 %v1691
        %v1787 = vunpack.c.l.b16 %v1692
        %v1788 = vunpack.c.h.b16 %v1692
        %v1789 = vunpack.c.l.b16 %v1693
        %v1790 = vunpack.c.h.b16 %v1693
        %v1791 = vunpack.c.l.b16 %v1694
        %v1792 = vunpack.c.h.b16 %v1694
        %v1793 = vunpack.c.l.b16 %v1695
        %v1794 = vunpack.c.h.b16 %v1695
        %v1795 = vunpack.c.l.b16 %v1696
        %v1796 = vunpack.c.h.b16 %v1696
        %v1797 = vunpack.c.l.b16 %v1697
        %v1798 = vunpack.c.h.b16 %v1697
        %v1799 = vunpack.c.l.b16 %v1698
        %v1800 = vunpack.c.h.b16 %v1698
        %v1801 = vpack.c.b16 %v1739, %v1737
        %v1802 = vpack.c.b16 %v1740, %v1738
        %v1803 = vpack.c.b16 %v1743, %v1741
        %v1804 = vpack.c.b16 %v1744, %v1742
        %v1805 = vpack.c.b16 %v1747, %v1745
        %v1806 = vpack.c.b16 %v1748, %v1746
        %v1807 = vpack.c.b16 %v1751, %v1749
        %v1808 = vpack.c.b16 %v1752, %v1750
        %v1809 = vpack.c.b16 %v1755, %v1753
        %v1810 = vpack.c.b16 %v1756, %v1754
        %v1811 = vpack.c.b16 %v1759, %v1757
        %v1812 = vpack.c.b16 %v1760, %v1758
        %v1813 = vpack.c.b16 %v1763, %v1761
        %v1814 = vpack.c.b16 %v1764, %v1762
        %v1815 = vpack.c.b16 %v1767, %v1765
        %v1816 = vpack.c.b16 %v1768, %v1766
        %v1817 = vpack.c.b16 %v1771, %v1769
        %v1818 = vpack.c.b16 %v1772, %v1770
        %v1819 = vpack.c.b16 %v1775, %v1773
        %v1820 = vpack.c.b16 %v1776, %v1774
        %v1821 = vpack.c.b16 %v1779, %v1777
        %v1822 = vpack.c.b16 %v1780, %v1778
        %v1823 = vpack.c.b16 %v1783, %v1781
        %v1824 = vpack.c.b16 %v1784, %v1782
        %v1825 = vpack.c.b16 %v1787, %v1785
        %v1826 = vpack.c.b16 %v1788, %v1786
        %v1827 = vpack.c.b16 %v1791, %v1789
        %v1828 = vpack.c.b16 %v1792, %v1790
        %v1829 = vpack.c.b16 %v1795, %v1793
        %v1830 = vpack.c.b16 %v1796, %v1794
        %v1831 = vpack.c.b16 %v1799, %v1797
        %v1832 = vpack.c.b16 %v1800, %v1798
        %1865 = vmatpush.bf16.msra.mxu0 %v1815
        %1866 = vmatpush.bf16.msra.mxu0 %v1813
        %1867 = vmatpush.bf16.msra.mxu0 %v1811
        %1868 = vmatpush.bf16.msra.mxu0 %v1809
        %1869 = vmatpush.bf16.msra.mxu0 %v1807
        %1870 = vmatpush.bf16.msra.mxu0 %v1805
        %1871 = vmatpush.bf16.msra.mxu0 %v1803
        %1872 = vmatpush.bf16.msra.mxu0 %v1801
        %1873 = vmatmul.bf16.gmra.mxu0 %v1635
        %v1874 = vpop.f32.mrf.mxu0
        %v1875 = vadd.f32 %v1701, %v1874
        %v1876 = vpop.f32.mrf.mxu0
        %v1877 = vadd.f32 %v1701, %v1876
        %1878 = vmatmul.bf16.gmra.mxu0 %v1637
        %v1879 = vpop.f32.mrf.mxu0
        %v1880 = vadd.f32 %v1701, %v1879
        %v1881 = vpop.f32.mrf.mxu0
        %v1882 = vadd.f32 %v1701, %v1881
        %1883 = vmatmul.bf16.gmra.mxu0 %v1639
        %v1884 = vpop.f32.mrf.mxu0
        %v1885 = vadd.f32 %v1701, %v1884
        %v1886 = vpop.f32.mrf.mxu0
        %v1887 = vadd.f32 %v1701, %v1886
        %1888 = vmatmul.bf16.gmra.mxu0 %v1641
        %v1889 = vpop.f32.mrf.mxu0
        %v1890 = vadd.f32 %v1701, %v1889
        %v1891 = vpop.f32.mrf.mxu0
        %v1892 = vadd.f32 %v1701, %v1891
        %1893 = vmatmul.bf16.gmra.mxu0 %v1643
        %v1894 = vpop.f32.mrf.mxu0
        %v1895 = vadd.f32 %v1701, %v1894
        %v1896 = vpop.f32.mrf.mxu0
        %v1897 = vadd.f32 %v1701, %v1896
        %1898 = vmatmul.bf16.gmra.mxu0 %v1645
        %v1899 = vpop.f32.mrf.mxu0
        %v1900 = vadd.f32 %v1701, %v1899
        %v1901 = vpop.f32.mrf.mxu0
        %v1902 = vadd.f32 %v1701, %v1901
        %1903 = vmatmul.bf16.gmra.mxu0 %v1647
        %v1904 = vpop.f32.mrf.mxu0
        %v1905 = vadd.f32 %v1701, %v1904
        %v1906 = vpop.f32.mrf.mxu0
        %v1907 = vadd.f32 %v1701, %v1906
        %1908 = vmatmul.bf16.gmra.mxu0 %v1649
        %v1909 = vpop.f32.mrf.mxu0
        %v1910 = vadd.f32 %v1701, %v1909
        %v1911 = vpop.f32.mrf.mxu0
        %v1912 = vadd.f32 %v1701, %v1911
        %1913 = vmatmul.bf16.gmra.mxu0 %v1651
        %v1914 = vpop.f32.mrf.mxu0
        %v1915 = vadd.f32 %v1701, %v1914
        %v1916 = vpop.f32.mrf.mxu0
        %v1917 = vadd.f32 %v1701, %v1916
        %1918 = vmatmul.bf16.gmra.mxu0 %v1653
        %v1919 = vpop.f32.mrf.mxu0
        %v1920 = vadd.f32 %v1701, %v1919
        %v1921 = vpop.f32.mrf.mxu0
        %v1922 = vadd.f32 %v1701, %v1921
        %1923 = vmatmul.bf16.gmra.mxu0 %v1655
        %v1924 = vpop.f32.mrf.mxu0
        %v1925 = vadd.f32 %v1701, %v1924
        %v1926 = vpop.f32.mrf.mxu0
        %v1927 = vadd.f32 %v1701, %v1926
        %1928 = vmatmul.bf16.gmra.mxu0 %v1657
        %v1929 = vpop.f32.mrf.mxu0
        %v1930 = vadd.f32 %v1701, %v1929
        %v1931 = vpop.f32.mrf.mxu0
        %v1932 = vadd.f32 %v1701, %v1931
        %1933 = vmatmul.bf16.gmra.mxu0 %v1659
        %v1934 = vpop.f32.mrf.mxu0
        %v1935 = vadd.f32 %v1701, %v1934
        %v1936 = vpop.f32.mrf.mxu0
        %v1937 = vadd.f32 %v1701, %v1936
        %1938 = vmatmul.bf16.gmra.mxu0 %v1661
        %v1939 = vpop.f32.mrf.mxu0
        %v1940 = vadd.f32 %v1701, %v1939
        %v1941 = vpop.f32.mrf.mxu0
        %v1942 = vadd.f32 %v1701, %v1941
        %1943 = vmatmul.bf16.gmra.mxu0 %v1663
        %v1944 = vpop.f32.mrf.mxu0
        %v1945 = vadd.f32 %v1701, %v1944
        %v1946 = vpop.f32.mrf.mxu0
        %v1947 = vadd.f32 %v1701, %v1946
        %1948 = vmatmul.bf16.gmra.mxu0 %v1665
        %v1949 = vpop.f32.mrf.mxu0
        %v1950 = vadd.f32 %v1701, %v1949
        %v1951 = vpop.f32.mrf.mxu0
        %v1952 = vadd.f32 %v1701, %v1951
        %1953 = vdwg.mxu0
        %1954 = vmatpush.bf16.msra.mxu0 %v1831
        %1955 = vmatpush.bf16.msra.mxu0 %v1829
        %1956 = vmatpush.bf16.msra.mxu0 %v1827
        %1957 = vmatpush.bf16.msra.mxu0 %v1825
        %1958 = vmatpush.bf16.msra.mxu0 %v1823
        %1959 = vmatpush.bf16.msra.mxu0 %v1821
        %1960 = vmatpush.bf16.msra.mxu0 %v1819
        %1961 = vmatpush.bf16.msra.mxu0 %v1817
        %1962 = vmatmul.bf16.gmra.mxu0 %v1636
        %v1963 = vpop.f32.mrf.mxu0
        %v1964 = vadd.f32 %v1875, %v1963
        %v1965 = vpop.f32.mrf.mxu0
        %v1966 = vadd.f32 %v1877, %v1965
        %1967 = vmatmul.bf16.gmra.mxu0 %v1638
        %v1968 = vpop.f32.mrf.mxu0
        %v1969 = vadd.f32 %v1880, %v1968
        %v1970 = vpop.f32.mrf.mxu0
        %v1971 = vadd.f32 %v1882, %v1970
        %1972 = vmatmul.bf16.gmra.mxu0 %v1640
        %v1973 = vpop.f32.mrf.mxu0
        %v1974 = vadd.f32 %v1885, %v1973
        %v1975 = vpop.f32.mrf.mxu0
        %v1976 = vadd.f32 %v1887, %v1975
        %1977 = vmatmul.bf16.gmra.mxu0 %v1642
        %v1978 = vpop.f32.mrf.mxu0
        %v1979 = vadd.f32 %v1890, %v1978
        %v1980 = vpop.f32.mrf.mxu0
        %v1981 = vadd.f32 %v1892, %v1980
        %1982 = vmatmul.bf16.gmra.mxu0 %v1644
        %v1983 = vpop.f32.mrf.mxu0
        %v1984 = vadd.f32 %v1895, %v1983
        %v1985 = vpop.f32.mrf.mxu0
        %v1986 = vadd.f32 %v1897, %v1985
        %1987 = vmatmul.bf16.gmra.mxu0 %v1646
        %v1988 = vpop.f32.mrf.mxu0
        %v1989 = vadd.f32 %v1900, %v1988
        %v1990 = vpop.f32.mrf.mxu0
        %v1991 = vadd.f32 %v1902, %v1990
        %1992 = vmatmul.bf16.gmra.mxu0 %v1648
        %v1993 = vpop.f32.mrf.mxu0
        %v1994 = vadd.f32 %v1905, %v1993
        %v1995 = vpop.f32.mrf.mxu0
        %v1996 = vadd.f32 %v1907, %v1995
        %1997 = vmatmul.bf16.gmra.mxu0 %v1650
        %v1998 = vpop.f32.mrf.mxu0
        %v1999 = vadd.f32 %v1910, %v1998
        %v2000 = vpop.f32.mrf.mxu0
        %v2001 = vadd.f32 %v1912, %v2000
        %2002 = vmatmul.bf16.gmra.mxu0 %v1652
        %v2003 = vpop.f32.mrf.mxu0
        %v2004 = vadd.f32 %v1915, %v2003
        %v2005 = vpop.f32.mrf.mxu0
        %v2006 = vadd.f32 %v1917, %v2005
        %2007 = vmatmul.bf16.gmra.mxu0 %v1654
        %v2008 = vpop.f32.mrf.mxu0
        %v2009 = vadd.f32 %v1920, %v2008
        %v2010 = vpop.f32.mrf.mxu0
        %v2011 = vadd.f32 %v1922, %v2010
        %2012 = vmatmul.bf16.gmra.mxu0 %v1656
        %v2013 = vpop.f32.mrf.mxu0
        %v2014 = vadd.f32 %v1925, %v2013
        %v2015 = vpop.f32.mrf.mxu0
        %v2016 = vadd.f32 %v1927, %v2015
        %2017 = vmatmul.bf16.gmra.mxu0 %v1658
        %v2018 = vpop.f32.mrf.mxu0
        %v2019 = vadd.f32 %v1930, %v2018
        %v2020 = vpop.f32.mrf.mxu0
        %v2021 = vadd.f32 %v1932, %v2020
        %2022 = vmatmul.bf16.gmra.mxu0 %v1660
        %v2023 = vpop.f32.mrf.mxu0
        %v2024 = vadd.f32 %v1935, %v2023
        %v2025 = vpop.f32.mrf.mxu0
        %v2026 = vadd.f32 %v1937, %v2025
        %2027 = vmatmul.bf16.gmra.mxu0 %v1662
        %v2028 = vpop.f32.mrf.mxu0
        %v2029 = vadd.f32 %v1940, %v2028
        %v2030 = vpop.f32.mrf.mxu0
        %v2031 = vadd.f32 %v1942, %v2030
        %2032 = vmatmul.bf16.gmra.mxu0 %v1664
        %v2033 = vpop.f32.mrf.mxu0
        %v2034 = vadd.f32 %v1945, %v2033
        %v2035 = vpop.f32.mrf.mxu0
        %v2036 = vadd.f32 %v1947, %v2035
        %2037 = vmatmul.bf16.gmra.mxu0 %v1666
        %v2038 = vpop.f32.mrf.mxu0
        %v2039 = vadd.f32 %v1950, %v2038
        %v2040 = vpop.f32.mrf.mxu0
        %v2041 = vadd.f32 %v1952, %v2040
        %2042 = vdwg.mxu0
        %2043 = vmatpush.bf16.msra.mxu0 %v1816
        %2044 = vmatpush.bf16.msra.mxu0 %v1814
        %2045 = vmatpush.bf16.msra.mxu0 %v1812
        %2046 = vmatpush.bf16.msra.mxu0 %v1810
        %2047 = vmatpush.bf16.msra.mxu0 %v1808
        %2048 = vmatpush.bf16.msra.mxu0 %v1806
        %2049 = vmatpush.bf16.msra.mxu0 %v1804
        %2050 = vmatpush.bf16.msra.mxu0 %v1802
        %2051 = vmatmul.bf16.gmra.mxu0 %v1635
        %v2052 = vpop.f32.mrf.mxu0
        %v2053 = vadd.f32 %v1702, %v2052
        %v2054 = vpop.f32.mrf.mxu0
        %v2055 = vadd.f32 %v1702, %v2054
        %2056 = vmatmul.bf16.gmra.mxu0 %v1637
        %v2057 = vpop.f32.mrf.mxu0
        %v2058 = vadd.f32 %v1702, %v2057
        %v2059 = vpop.f32.mrf.mxu0
        %v2060 = vadd.f32 %v1702, %v2059
        %2061 = vmatmul.bf16.gmra.mxu0 %v1639
        %v2062 = vpop.f32.mrf.mxu0
        %v2063 = vadd.f32 %v1702, %v2062
        %v2064 = vpop.f32.mrf.mxu0
        %v2065 = vadd.f32 %v1702, %v2064
        %2066 = vmatmul.bf16.gmra.mxu0 %v1641
        %v2067 = vpop.f32.mrf.mxu0
        %v2068 = vadd.f32 %v1702, %v2067
        %v2069 = vpop.f32.mrf.mxu0
        %v2070 = vadd.f32 %v1702, %v2069
        %2071 = vmatmul.bf16.gmra.mxu0 %v1643
        %v2072 = vpop.f32.mrf.mxu0
        %v2073 = vadd.f32 %v1702, %v2072
        %v2074 = vpop.f32.mrf.mxu0
        %v2075 = vadd.f32 %v1702, %v2074
        %2076 = vmatmul.bf16.gmra.mxu0 %v1645
        %v2077 = vpop.f32.mrf.mxu0
        %v2078 = vadd.f32 %v1702, %v2077
        %v2079 = vpop.f32.mrf.mxu0
        %v2080 = vadd.f32 %v1702, %v2079
        %2081 = vmatmul.bf16.gmra.mxu0 %v1647
        %v2082 = vpop.f32.mrf.mxu0
        %v2083 = vadd.f32 %v1702, %v2082
        %v2084 = vpop.f32.mrf.mxu0
        %v2085 = vadd.f32 %v1702, %v2084
        %2086 = vmatmul.bf16.gmra.mxu0 %v1649
        %v2087 = vpop.f32.mrf.mxu0
        %v2088 = vadd.f32 %v1702, %v2087
        %v2089 = vpop.f32.mrf.mxu0
        %v2090 = vadd.f32 %v1702, %v2089
        %2091 = vmatmul.bf16.gmra.mxu0 %v1651
        %v2092 = vpop.f32.mrf.mxu0
        %v2093 = vadd.f32 %v1702, %v2092
        %v2094 = vpop.f32.mrf.mxu0
        %v2095 = vadd.f32 %v1702, %v2094
        %2096 = vmatmul.bf16.gmra.mxu0 %v1653
        %v2097 = vpop.f32.mrf.mxu0
        %v2098 = vadd.f32 %v1702, %v2097
        %v2099 = vpop.f32.mrf.mxu0
        %v2100 = vadd.f32 %v1702, %v2099
        %2101 = vmatmul.bf16.gmra.mxu0 %v1655
        %v2102 = vpop.f32.mrf.mxu0
        %v2103 = vadd.f32 %v1702, %v2102
        %v2104 = vpop.f32.mrf.mxu0
        %v2105 = vadd.f32 %v1702, %v2104
        %2106 = vmatmul.bf16.gmra.mxu0 %v1657
        %v2107 = vpop.f32.mrf.mxu0
        %v2108 = vadd.f32 %v1702, %v2107
        %v2109 = vpop.f32.mrf.mxu0
        %v2110 = vadd.f32 %v1702, %v2109
        %2111 = vmatmul.bf16.gmra.mxu0 %v1659
        %v2112 = vpop.f32.mrf.mxu0
        %v2113 = vadd.f32 %v1702, %v2112
        %v2114 = vpop.f32.mrf.mxu0
        %v2115 = vadd.f32 %v1702, %v2114
        %2116 = vmatmul.bf16.gmra.mxu0 %v1661
        %v2117 = vpop.f32.mrf.mxu0
        %v2118 = vadd.f32 %v1702, %v2117
        %v2119 = vpop.f32.mrf.mxu0
        %v2120 = vadd.f32 %v1702, %v2119
        %2121 = vmatmul.bf16.gmra.mxu0 %v1663
        %v2122 = vpop.f32.mrf.mxu0
        %v2123 = vadd.f32 %v1702, %v2122
        %v2124 = vpop.f32.mrf.mxu0
        %v2125 = vadd.f32 %v1702, %v2124
        %2126 = vmatmul.bf16.gmra.mxu0 %v1665
        %v2127 = vpop.f32.mrf.mxu0
        %v2128 = vadd.f32 %v1702, %v2127
        %v2129 = vpop.f32.mrf.mxu0
        %v2130 = vadd.f32 %v1702, %v2129
        %2131 = vdwg.mxu0
        %2132 = vmatpush.bf16.msra.mxu0 %v1832
        %2133 = vmatpush.bf16.msra.mxu0 %v1830
        %2134 = vmatpush.bf16.msra.mxu0 %v1828
        %2135 = vmatpush.bf16.msra.mxu0 %v1826
        %2136 = vmatpush.bf16.msra.mxu0 %v1824
        %2137 = vmatpush.bf16.msra.mxu0 %v1822
        %2138 = vmatpush.bf16.msra.mxu0 %v1820
        %2139 = vmatpush.bf16.msra.mxu0 %v1818
        %2140 = vmatmul.bf16.gmra.mxu0 %v1636
        %v2141 = vpop.f32.mrf.mxu0
        %v2142 = vadd.f32 %v2053, %v2141
        %v2143 = vpop.f32.mrf.mxu0
        %v2144 = vadd.f32 %v2055, %v2143
        %2145 = vmatmul.bf16.gmra.mxu0 %v1638
        %v2146 = vpop.f32.mrf.mxu0
        %v2147 = vadd.f32 %v2058, %v2146
        %v2148 = vpop.f32.mrf.mxu0
        %v2149 = vadd.f32 %v2060, %v2148
        %2150 = vmatmul.bf16.gmra.mxu0 %v1640
        %v2151 = vpop.f32.mrf.mxu0
        %v2152 = vadd.f32 %v2063, %v2151
        %v2153 = vpop.f32.mrf.mxu0
        %v2154 = vadd.f32 %v2065, %v2153
        %2155 = vmatmul.bf16.gmra.mxu0 %v1642
        %v2156 = vpop.f32.mrf.mxu0
        %v2157 = vadd.f32 %v2068, %v2156
        %v2158 = vpop.f32.mrf.mxu0
        %v2159 = vadd.f32 %v2070, %v2158
        %2160 = vmatmul.bf16.gmra.mxu0 %v1644
        %v2161 = vpop.f32.mrf.mxu0
        %v2162 = vadd.f32 %v2073, %v2161
        %v2163 = vpop.f32.mrf.mxu0
        %v2164 = vadd.f32 %v2075, %v2163
        %2165 = vmatmul.bf16.gmra.mxu0 %v1646
        %v2166 = vpop.f32.mrf.mxu0
        %v2167 = vadd.f32 %v2078, %v2166
        %v2168 = vpop.f32.mrf.mxu0
        %v2169 = vadd.f32 %v2080, %v2168
        %2170 = vmatmul.bf16.gmra.mxu0 %v1648
        %v2171 = vpop.f32.mrf.mxu0
        %v2172 = vadd.f32 %v2083, %v2171
        %v2173 = vpop.f32.mrf.mxu0
        %v2174 = vadd.f32 %v2085, %v2173
        %2175 = vmatmul.bf16.gmra.mxu0 %v1650
        %v2176 = vpop.f32.mrf.mxu0
        %v2177 = vadd.f32 %v2088, %v2176
        %v2178 = vpop.f32.mrf.mxu0
        %v2179 = vadd.f32 %v2090, %v2178
        %2180 = vmatmul.bf16.gmra.mxu0 %v1652
        %v2181 = vpop.f32.mrf.mxu0
        %v2182 = vadd.f32 %v2093, %v2181
        %v2183 = vpop.f32.mrf.mxu0
        %v2184 = vadd.f32 %v2095, %v2183
        %2185 = vmatmul.bf16.gmra.mxu0 %v1654
        %v2186 = vpop.f32.mrf.mxu0
        %v2187 = vadd.f32 %v2098, %v2186
        %v2188 = vpop.f32.mrf.mxu0
        %v2189 = vadd.f32 %v2100, %v2188
        %2190 = vmatmul.bf16.gmra.mxu0 %v1656
        %v2191 = vpop.f32.mrf.mxu0
        %v2192 = vadd.f32 %v2103, %v2191
        %v2193 = vpop.f32.mrf.mxu0
        %v2194 = vadd.f32 %v2105, %v2193
        %2195 = vmatmul.bf16.gmra.mxu0 %v1658
        %v2196 = vpop.f32.mrf.mxu0
        %v2197 = vadd.f32 %v2108, %v2196
        %v2198 = vpop.f32.mrf.mxu0
        %v2199 = vadd.f32 %v2110, %v2198
        %2200 = vmatmul.bf16.gmra.mxu0 %v1660
        %v2201 = vpop.f32.mrf.mxu0
        %v2202 = vadd.f32 %v2113, %v2201
        %v2203 = vpop.f32.mrf.mxu0
        %v2204 = vadd.f32 %v2115, %v2203
        %2205 = vmatmul.bf16.gmra.mxu0 %v1662
        %v2206 = vpop.f32.mrf.mxu0
        %v2207 = vadd.f32 %v2118, %v2206
        %v2208 = vpop.f32.mrf.mxu0
        %v2209 = vadd.f32 %v2120, %v2208
        %2210 = vmatmul.bf16.gmra.mxu0 %v1664
        %v2211 = vpop.f32.mrf.mxu0
        %v2212 = vadd.f32 %v2123, %v2211
        %v2213 = vpop.f32.mrf.mxu0
        %v2214 = vadd.f32 %v2125, %v2213
        %2215 = vmatmul.bf16.gmra.mxu0 %v1666
        %v2216 = vpop.f32.mrf.mxu0
        %v2217 = vadd.f32 %v2128, %v2216
        %v2218 = vpop.f32.mrf.mxu0
        %v2219 = vadd.f32 %v2130, %v2218
        %2220 = vdwg.mxu0
        %v2221 = vadd.f32 %v1964, %v817
        %v2222 = vadd.f32 %v2142, %v906
        %v2223 = vadd.f32 %v1966, %v819
        %v2224 = vadd.f32 %v2144, %v908
        %v2225 = vadd.f32 %v1969, %v822
        %v2226 = vadd.f32 %v2147, %v911
        %v2227 = vadd.f32 %v1971, %v824
        %v2228 = vadd.f32 %v2149, %v913
        %v2229 = vadd.f32 %v1974, %v827
        %v2230 = vadd.f32 %v2152, %v916
        %v2231 = vadd.f32 %v1976, %v829
        %v2232 = vadd.f32 %v2154, %v918
        %v2233 = vadd.f32 %v1979, %v832
        %v2234 = vadd.f32 %v2157, %v921
        %v2235 = vadd.f32 %v1981, %v834
        %v2236 = vadd.f32 %v2159, %v923
        %v2237 = vadd.f32 %v1984, %v837
        %v2238 = vadd.f32 %v2162, %v926
        %v2239 = vadd.f32 %v1986, %v839
        %v2240 = vadd.f32 %v2164, %v928
        %v2241 = vadd.f32 %v1989, %v842
        %v2242 = vadd.f32 %v2167, %v931
        %v2243 = vadd.f32 %v1991, %v844
        %v2244 = vadd.f32 %v2169, %v933
        %v2245 = vadd.f32 %v1994, %v847
        %v2246 = vadd.f32 %v2172, %v936
        %v2247 = vadd.f32 %v1996, %v849
        %v2248 = vadd.f32 %v2174, %v938
        %v2249 = vadd.f32 %v1999, %v852
        %v2250 = vadd.f32 %v2177, %v941
        %v2251 = vadd.f32 %v2001, %v854
        %v2252 = vadd.f32 %v2179, %v943
        %v2253 = vadd.f32 %v2004, %v857
        %v2254 = vadd.f32 %v2182, %v946
        %v2255 = vadd.f32 %v2006, %v859
        %v2256 = vadd.f32 %v2184, %v948
        %v2257 = vadd.f32 %v2009, %v862
        %v2258 = vadd.f32 %v2187, %v951
        %v2259 = vadd.f32 %v2011, %v864
        %v2260 = vadd.f32 %v2189, %v953
        %v2261 = vadd.f32 %v2014, %v867
        %v2262 = vadd.f32 %v2192, %v956
        %v2263 = vadd.f32 %v2016, %v869
        %v2264 = vadd.f32 %v2194, %v958
        %v2265 = vadd.f32 %v2019, %v872
        %v2266 = vadd.f32 %v2197, %v961
        %v2267 = vadd.f32 %v2021, %v874
        %v2268 = vadd.f32 %v2199, %v963
        %v2269 = vadd.f32 %v2024, %v877
        %v2270 = vadd.f32 %v2202, %v966
        %v2271 = vadd.f32 %v2026, %v879
        %v2272 = vadd.f32 %v2204, %v968
        %v2273 = vadd.f32 %v2029, %v882
        %v2274 = vadd.f32 %v2207, %v971
        %v2275 = vadd.f32 %v2031, %v884
        %v2276 = vadd.f32 %v2209, %v973
        %v2277 = vadd.f32 %v2034, %v887
        %v2278 = vadd.f32 %v2212, %v976
        %v2279 = vadd.f32 %v2036, %v889
        %v2280 = vadd.f32 %v2214, %v978
        %v2281 = vadd.f32 %v2039, %v892
        %v2282 = vadd.f32 %v2217, %v981
        %v2283 = vadd.f32 %v2041, %v894
        %v2284 = vadd.f32 %v2219, %v983
        %v2285 = vmax.f32 %v2221, 0.0
        %v2286 = vmax.f32 %v2222, 0.0
        %v2287 = vmax.f32 %v2223, 0.0
        %v2288 = vmax.f32 %v2224, 0.0
        %v2289 = vmax.f32 %v2225, 0.0
        %v2290 = vmax.f32 %v2226, 0.0
        %v2291 = vmax.f32 %v2227, 0.0
        %v2292 = vmax.f32 %v2228, 0.0
        %v2293 = vmax.f32 %v2229, 0.0
        %v2294 = vmax.f32 %v2230, 0.0
        %v2295 = vmax.f32 %v2231, 0.0
        %v2296 = vmax.f32 %v2232, 0.0
        %v2297 = vmax.f32 %v2233, 0.0
        %v2298 = vmax.f32 %v2234, 0.0
        %v2299 = vmax.f32 %v2235, 0.0
        %v2300 = vmax.f32 %v2236, 0.0
        %v2301 = vmax.f32 %v2237, 0.0
        %v2302 = vmax.f32 %v2238, 0.0
        %v2303 = vmax.f32 %v2239, 0.0
        %v2304 = vmax.f32 %v2240, 0.0
        %v2305 = vmax.f32 %v2241, 0.0
        %v2306 = vmax.f32 %v2242, 0.0
        %v2307 = vmax.f32 %v2243, 0.0
        %v2308 = vmax.f32 %v2244, 0.0
        %v2309 = vmax.f32 %v2245, 0.0
        %v2310 = vmax.f32 %v2246, 0.0
        %v2311 = vmax.f32 %v2247, 0.0
        %v2312 = vmax.f32 %v2248, 0.0
        %v2313 = vmax.f32 %v2249, 0.0
        %v2314 = vmax.f32 %v2250, 0.0
        %v2315 = vmax.f32 %v2251, 0.0
        %v2316 = vmax.f32 %v2252, 0.0
        %v2317 = vmax.f32 %v2253, 0.0
        %v2318 = vmax.f32 %v2254, 0.0
        %v2319 = vmax.f32 %v2255, 0.0
        %v2320 = vmax.f32 %v2256, 0.0
        %v2321 = vmax.f32 %v2257, 0.0
        %v2322 = vmax.f32 %v2258, 0.0
        %v2323 = vmax.f32 %v2259, 0.0
        %v2324 = vmax.f32 %v2260, 0.0
        %v2325 = vmax.f32 %v2261, 0.0
        %v2326 = vmax.f32 %v2262, 0.0
        %v2327 = vmax.f32 %v2263, 0.0
        %v2328 = vmax.f32 %v2264, 0.0
        %v2329 = vmax.f32 %v2265, 0.0
        %v2330 = vmax.f32 %v2266, 0.0
        %v2331 = vmax.f32 %v2267, 0.0
        %v2332 = vmax.f32 %v2268, 0.0
        %v2333 = vmax.f32 %v2269, 0.0
        %v2334 = vmax.f32 %v2270, 0.0
        %v2335 = vmax.f32 %v2271, 0.0
        %v2336 = vmax.f32 %v2272, 0.0
        %v2337 = vmax.f32 %v2273, 0.0
        %v2338 = vmax.f32 %v2274, 0.0
        %v2339 = vmax.f32 %v2275, 0.0
        %v2340 = vmax.f32 %v2276, 0.0
        %v2341 = vmax.f32 %v2277, 0.0
        %v2342 = vmax.f32 %v2278, 0.0
        %v2343 = vmax.f32 %v2279, 0.0
        %v2344 = vmax.f32 %v2280, 0.0
        %v2345 = vmax.f32 %v2281, 0.0
        %v2346 = vmax.f32 %v2282, 0.0
        %v2347 = vmax.f32 %v2283, 0.0
        %v2348 = vmax.f32 %v2284, 0.0
        %v2349 = vpack.c.bf16 %v2287, %v2285
        %v2350 = vpack.c.bf16 %v2288, %v2286
        %v2351 = vpack.c.bf16 %v2291, %v2289
        %v2352 = vpack.c.bf16 %v2292, %v2290
        %v2353 = vpack.c.bf16 %v2295, %v2293
        %v2354 = vpack.c.bf16 %v2296, %v2294
        %v2355 = vpack.c.bf16 %v2299, %v2297
        %v2356 = vpack.c.bf16 %v2300, %v2298
        %v2357 = vpack.c.bf16 %v2303, %v2301
        %v2358 = vpack.c.bf16 %v2304, %v2302
        %v2359 = vpack.c.bf16 %v2307, %v2305
        %v2360 = vpack.c.bf16 %v2308, %v2306
        %v2361 = vpack.c.bf16 %v2311, %v2309
        %v2362 = vpack.c.bf16 %v2312, %v2310
        %v2363 = vpack.c.bf16 %v2315, %v2313
        %v2364 = vpack.c.bf16 %v2316, %v2314
        %v2365 = vpack.c.bf16 %v2319, %v2317
        %v2366 = vpack.c.bf16 %v2320, %v2318
        %v2367 = vpack.c.bf16 %v2323, %v2321
        %v2368 = vpack.c.bf16 %v2324, %v2322
        %v2369 = vpack.c.bf16 %v2327, %v2325
        %v2370 = vpack.c.bf16 %v2328, %v2326
        %v2371 = vpack.c.bf16 %v2331, %v2329
        %v2372 = vpack.c.bf16 %v2332, %v2330
        %v2373 = vpack.c.bf16 %v2335, %v2333
        %v2374 = vpack.c.bf16 %v2336, %v2334
        %v2375 = vpack.c.bf16 %v2339, %v2337
        %v2376 = vpack.c.bf16 %v2340, %v2338
        %v2377 = vpack.c.bf16 %v2343, %v2341
        %v2378 = vpack.c.bf16 %v2344, %v2342
        %v2379 = vpack.c.bf16 %v2347, %v2345
        %v2380 = vpack.c.bf16 %v2348, %v2346
        %v2381 = vld [vmem:[#allocation11] sm:$0xff]
        %v2382 = vld [vmem:[#allocation11 + $0x8] sm:$0xff]
        %v2383 = vld [vmem:[#allocation11 + $0x10] sm:$0xff]
        %v2384 = vld [vmem:[#allocation11 + $0x18] sm:$0xff]
        %v2385 = vld [vmem:[#allocation11 + $0x20] sm:$0xff]
        %v2386 = vld [vmem:[#allocation11 + $0x28] sm:$0xff]
        %v2387 = vld [vmem:[#allocation11 + $0x30] sm:$0xff]
        %v2388 = vld [vmem:[#allocation11 + $0x38] sm:$0xff]
        %v2389 = vld [vmem:[#allocation11 + $0x40] sm:$0xff]
        %v2390 = vld [vmem:[#allocation11 + $0x48] sm:$0xff]
        %v2391 = vld [vmem:[#allocation11 + $0x50] sm:$0xff]
        %v2392 = vld [vmem:[#allocation11 + $0x58] sm:$0xff]
        %v2393 = vld [vmem:[#allocation11 + $0x60] sm:$0xff]
        %v2394 = vld [vmem:[#allocation11 + $0x68] sm:$0xff]
        %v2395 = vld [vmem:[#allocation11 + $0x70] sm:$0xff]
        %v2396 = vld [vmem:[#allocation11 + $0x78] sm:$0xff]
        %v2397 = vld [vmem:[#allocation11 + $0x80] sm:$0xff]
        %v2398 = vld [vmem:[#allocation11 + $0x88] sm:$0xff]
        %v2399 = vld [vmem:[#allocation11 + $0x90] sm:$0xff]
        %v2400 = vld [vmem:[#allocation11 + $0x98] sm:$0xff]
        %v2401 = vld [vmem:[#allocation11 + $0xa0] sm:$0xff]
        %v2402 = vld [vmem:[#allocation11 + $0xa8] sm:$0xff]
        %v2403 = vld [vmem:[#allocation11 + $0xb0] sm:$0xff]
        %v2404 = vld [vmem:[#allocation11 + $0xb8] sm:$0xff]
        %v2405 = vld [vmem:[#allocation11 + $0xc0] sm:$0xff]
        %v2406 = vld [vmem:[#allocation11 + $0xc8] sm:$0xff]
        %v2407 = vld [vmem:[#allocation11 + $0xd0] sm:$0xff]
        %v2408 = vld [vmem:[#allocation11 + $0xd8] sm:$0xff]
        %v2409 = vld [vmem:[#allocation11 + $0xe0] sm:$0xff]
        %v2410 = vld [vmem:[#allocation11 + $0xe8] sm:$0xff]
        %v2411 = vld [vmem:[#allocation11 + $0xf0] sm:$0xff]
        %v2412 = vld [vmem:[#allocation11 + $0xf8] sm:$0xff]
        %v2413 = vld [vmem:[%s8] sm:$0x3]
        %v2415 = vperm.slane %v2413, 0
        %v2416 = vperm.slane %v2413, 1
        %v2451 = vunpack.c.l.b16 %v2381
        %v2452 = vunpack.c.h.b16 %v2381
        %v2453 = vunpack.c.l.b16 %v2382
        %v2454 = vunpack.c.h.b16 %v2382
        %v2455 = vunpack.c.l.b16 %v2383
        %v2456 = vunpack.c.h.b16 %v2383
        %v2457 = vunpack.c.l.b16 %v2384
        %v2458 = vunpack.c.h.b16 %v2384
        %v2459 = vunpack.c.l.b16 %v2385
        %v2460 = vunpack.c.h.b16 %v2385
        %v2461 = vunpack.c.l.b16 %v2386
        %v2462 = vunpack.c.h.b16 %v2386
        %v2463 = vunpack.c.l.b16 %v2387
        %v2464 = vunpack.c.h.b16 %v2387
        %v2465 = vunpack.c.l.b16 %v2388
        %v2466 = vunpack.c.h.b16 %v2388
        %v2467 = vunpack.c.l.b16 %v2389
        %v2468 = vunpack.c.h.b16 %v2389
        %v2469 = vunpack.c.l.b16 %v2390
        %v2470 = vunpack.c.h.b16 %v2390
        %v2471 = vunpack.c.l.b16 %v2391
        %v2472 = vunpack.c.h.b16 %v2391
        %v2473 = vunpack.c.l.b16 %v2392
        %v2474 = vunpack.c.h.b16 %v2392
        %v2475 = vunpack.c.l.b16 %v2393
        %v2476 = vunpack.c.h.b16 %v2393
        %v2477 = vunpack.c.l.b16 %v2394
        %v2478 = vunpack.c.h.b16 %v2394
        %v2479 = vunpack.c.l.b16 %v2395
        %v2480 = vunpack.c.h.b16 %v2395
        %v2481 = vunpack.c.l.b16 %v2396
        %v2482 = vunpack.c.h.b16 %v2396
        %v2483 = vunpack.c.l.b16 %v2397
        %v2484 = vunpack.c.h.b16 %v2397
        %v2485 = vunpack.c.l.b16 %v2398
        %v2486 = vunpack.c.h.b16 %v2398
        %v2487 = vunpack.c.l.b16 %v2399
        %v2488 = vunpack.c.h.b16 %v2399
        %v2489 = vunpack.c.l.b16 %v2400
        %v2490 = vunpack.c.h.b16 %v2400
        %v2491 = vunpack.c.l.b16 %v2401
        %v2492 = vunpack.c.h.b16 %v2401
        %v2493 = vunpack.c.l.b16 %v2402
        %v2494 = vunpack.c.h.b16 %v2402
        %v2495 = vunpack.c.l.b16 %v2403
        %v2496 = vunpack.c.h.b16 %v2403
        %v2497 = vunpack.c.l.b16 %v2404
        %v2498 = vunpack.c.h.b16 %v2404
        %v2499 = vunpack.c.l.b16 %v2405
        %v2500 = vunpack.c.h.b16 %v2405
        %v2501 = vunpack.c.l.b16 %v2406
        %v2502 = vunpack.c.h.b16 %v2406
        %v2503 = vunpack.c.l.b16 %v2407
        %v2504 = vunpack.c.h.b16 %v2407
        %v2505 = vunpack.c.l.b16 %v2408
        %v2506 = vunpack.c.h.b16 %v2408
        %v2507 = vunpack.c.l.b16 %v2409
        %v2508 = vunpack.c.h.b16 %v2409
        %v2509 = vunpack.c.l.b16 %v2410
        %v2510 = vunpack.c.h.b16 %v2410
        %v2511 = vunpack.c.l.b16 %v2411
        %v2512 = vunpack.c.h.b16 %v2411
        %v2513 = vunpack.c.l.b16 %v2412
        %v2514 = vunpack.c.h.b16 %v2412
        %v2515 = vpack.c.b16 %v2453, %v2451
        %v2516 = vpack.c.b16 %v2454, %v2452
        %v2517 = vpack.c.b16 %v2457, %v2455
        %v2518 = vpack.c.b16 %v2458, %v2456
        %v2519 = vpack.c.b16 %v2461, %v2459
        %v2520 = vpack.c.b16 %v2462, %v2460
        %v2521 = vpack.c.b16 %v2465, %v2463
        %v2522 = vpack.c.b16 %v2466, %v2464
        %v2523 = vpack.c.b16 %v2469, %v2467
        %v2524 = vpack.c.b16 %v2470, %v2468
        %v2525 = vpack.c.b16 %v2473, %v2471
        %v2526 = vpack.c.b16 %v2474, %v2472
        %v2527 = vpack.c.b16 %v2477, %v2475
        %v2528 = vpack.c.b16 %v2478, %v2476
        %v2529 = vpack.c.b16 %v2481, %v2479
        %v2530 = vpack.c.b16 %v2482, %v2480
        %v2531 = vpack.c.b16 %v2485, %v2483
        %v2532 = vpack.c.b16 %v2486, %v2484
        %v2533 = vpack.c.b16 %v2489, %v2487
        %v2534 = vpack.c.b16 %v2490, %v2488
        %v2535 = vpack.c.b16 %v2493, %v2491
        %v2536 = vpack.c.b16 %v2494, %v2492
        %v2537 = vpack.c.b16 %v2497, %v2495
        %v2538 = vpack.c.b16 %v2498, %v2496
        %v2539 = vpack.c.b16 %v2501, %v2499
        %v2540 = vpack.c.b16 %v2502, %v2500
        %v2541 = vpack.c.b16 %v2505, %v2503
        %v2542 = vpack.c.b16 %v2506, %v2504
        %v2543 = vpack.c.b16 %v2509, %v2507
        %v2544 = vpack.c.b16 %v2510, %v2508
        %v2545 = vpack.c.b16 %v2513, %v2511
        %v2546 = vpack.c.b16 %v2514, %v2512
        %2579 = vmatpush.bf16.msra.mxu0 %v2529
        %2580 = vmatpush.bf16.msra.mxu0 %v2527
        %2581 = vmatpush.bf16.msra.mxu0 %v2525
        %2582 = vmatpush.bf16.msra.mxu0 %v2523
        %2583 = vmatpush.bf16.msra.mxu0 %v2521
        %2584 = vmatpush.bf16.msra.mxu0 %v2519
        %2585 = vmatpush.bf16.msra.mxu0 %v2517
        %2586 = vmatpush.bf16.msra.mxu0 %v2515
        %2587 = vmatmul.bf16.gmra.mxu0 %v2349
        %v2588 = vpop.f32.mrf.mxu0
        %v2589 = vadd.f32 %v2415, %v2588
        %v2590 = vpop.f32.mrf.mxu0
        %v2591 = vadd.f32 %v2415, %v2590
        %2592 = vmatmul.bf16.gmra.mxu0 %v2351
        %v2593 = vpop.f32.mrf.mxu0
        %v2594 = vadd.f32 %v2415, %v2593
        %v2595 = vpop.f32.mrf.mxu0
        %v2596 = vadd.f32 %v2415, %v2595
        %2597 = vmatmul.bf16.gmra.mxu0 %v2353
        %v2598 = vpop.f32.mrf.mxu0
        %v2599 = vadd.f32 %v2415, %v2598
        %v2600 = vpop.f32.mrf.mxu0
        %v2601 = vadd.f32 %v2415, %v2600
        %2602 = vmatmul.bf16.gmra.mxu0 %v2355
        %v2603 = vpop.f32.mrf.mxu0
        %v2604 = vadd.f32 %v2415, %v2603
        %v2605 = vpop.f32.mrf.mxu0
        %v2606 = vadd.f32 %v2415, %v2605
        %2607 = vmatmul.bf16.gmra.mxu0 %v2357
        %v2608 = vpop.f32.mrf.mxu0
        %v2609 = vadd.f32 %v2415, %v2608
        %v2610 = vpop.f32.mrf.mxu0
        %v2611 = vadd.f32 %v2415, %v2610
        %2612 = vmatmul.bf16.gmra.mxu0 %v2359
        %v2613 = vpop.f32.mrf.mxu0
        %v2614 = vadd.f32 %v2415, %v2613
        %v2615 = vpop.f32.mrf.mxu0
        %v2616 = vadd.f32 %v2415, %v2615
        %2617 = vmatmul.bf16.gmra.mxu0 %v2361
        %v2618 = vpop.f32.mrf.mxu0
        %v2619 = vadd.f32 %v2415, %v2618
        %v2620 = vpop.f32.mrf.mxu0
        %v2621 = vadd.f32 %v2415, %v2620
        %2622 = vmatmul.bf16.gmra.mxu0 %v2363
        %v2623 = vpop.f32.mrf.mxu0
        %v2624 = vadd.f32 %v2415, %v2623
        %v2625 = vpop.f32.mrf.mxu0
        %v2626 = vadd.f32 %v2415, %v2625
        %2627 = vmatmul.bf16.gmra.mxu0 %v2365
        %v2628 = vpop.f32.mrf.mxu0
        %v2629 = vadd.f32 %v2415, %v2628
        %v2630 = vpop.f32.mrf.mxu0
        %v2631 = vadd.f32 %v2415, %v2630
        %2632 = vmatmul.bf16.gmra.mxu0 %v2367
        %v2633 = vpop.f32.mrf.mxu0
        %v2634 = vadd.f32 %v2415, %v2633
        %v2635 = vpop.f32.mrf.mxu0
        %v2636 = vadd.f32 %v2415, %v2635
        %2637 = vmatmul.bf16.gmra.mxu0 %v2369
        %v2638 = vpop.f32.mrf.mxu0
        %v2639 = vadd.f32 %v2415, %v2638
        %v2640 = vpop.f32.mrf.mxu0
        %v2641 = vadd.f32 %v2415, %v2640
        %2642 = vmatmul.bf16.gmra.mxu0 %v2371
        %v2643 = vpop.f32.mrf.mxu0
        %v2644 = vadd.f32 %v2415, %v2643
        %v2645 = vpop.f32.mrf.mxu0
        %v2646 = vadd.f32 %v2415, %v2645
        %2647 = vmatmul.bf16.gmra.mxu0 %v2373
        %v2648 = vpop.f32.mrf.mxu0
        %v2649 = vadd.f32 %v2415, %v2648
        %v2650 = vpop.f32.mrf.mxu0
        %v2651 = vadd.f32 %v2415, %v2650
        %2652 = vmatmul.bf16.gmra.mxu0 %v2375
        %v2653 = vpop.f32.mrf.mxu0
        %v2654 = vadd.f32 %v2415, %v2653
        %v2655 = vpop.f32.mrf.mxu0
        %v2656 = vadd.f32 %v2415, %v2655
        %2657 = vmatmul.bf16.gmra.mxu0 %v2377
        %v2658 = vpop.f32.mrf.mxu0
        %v2659 = vadd.f32 %v2415, %v2658
        %v2660 = vpop.f32.mrf.mxu0
        %v2661 = vadd.f32 %v2415, %v2660
        %2662 = vmatmul.bf16.gmra.mxu0 %v2379
        %v2663 = vpop.f32.mrf.mxu0
        %v2664 = vadd.f32 %v2415, %v2663
        %v2665 = vpop.f32.mrf.mxu0
        %v2666 = vadd.f32 %v2415, %v2665
        %2667 = vdwg.mxu0
        %2668 = vmatpush.bf16.msra.mxu0 %v2545
        %2669 = vmatpush.bf16.msra.mxu0 %v2543
        %2670 = vmatpush.bf16.msra.mxu0 %v2541
        %2671 = vmatpush.bf16.msra.mxu0 %v2539
        %2672 = vmatpush.bf16.msra.mxu0 %v2537
        %2673 = vmatpush.bf16.msra.mxu0 %v2535
        %2674 = vmatpush.bf16.msra.mxu0 %v2533
        %2675 = vmatpush.bf16.msra.mxu0 %v2531
        %2676 = vmatmul.bf16.gmra.mxu0 %v2350
        %v2677 = vpop.f32.mrf.mxu0
        %v2678 = vadd.f32 %v2589, %v2677
        %v2679 = vpop.f32.mrf.mxu0
        %v2680 = vadd.f32 %v2591, %v2679
        %2681 = vmatmul.bf16.gmra.mxu0 %v2352
        %v2682 = vpop.f32.mrf.mxu0
        %v2683 = vadd.f32 %v2594, %v2682
        %v2684 = vpop.f32.mrf.mxu0
        %v2685 = vadd.f32 %v2596, %v2684
        %2686 = vmatmul.bf16.gmra.mxu0 %v2354
        %v2687 = vpop.f32.mrf.mxu0
        %v2688 = vadd.f32 %v2599, %v2687
        %v2689 = vpop.f32.mrf.mxu0
        %v2690 = vadd.f32 %v2601, %v2689
        %2691 = vmatmul.bf16.gmra.mxu0 %v2356
        %v2692 = vpop.f32.mrf.mxu0
        %v2693 = vadd.f32 %v2604, %v2692
        %v2694 = vpop.f32.mrf.mxu0
        %v2695 = vadd.f32 %v2606, %v2694
        %2696 = vmatmul.bf16.gmra.mxu0 %v2358
        %v2697 = vpop.f32.mrf.mxu0
        %v2698 = vadd.f32 %v2609, %v2697
        %v2699 = vpop.f32.mrf.mxu0
        %v2700 = vadd.f32 %v2611, %v2699
        %2701 = vmatmul.bf16.gmra.mxu0 %v2360
        %v2702 = vpop.f32.mrf.mxu0
        %v2703 = vadd.f32 %v2614, %v2702
        %v2704 = vpop.f32.mrf.mxu0
        %v2705 = vadd.f32 %v2616, %v2704
        %2706 = vmatmul.bf16.gmra.mxu0 %v2362
        %v2707 = vpop.f32.mrf.mxu0
        %v2708 = vadd.f32 %v2619, %v2707
        %v2709 = vpop.f32.mrf.mxu0
        %v2710 = vadd.f32 %v2621, %v2709
        %2711 = vmatmul.bf16.gmra.mxu0 %v2364
        %v2712 = vpop.f32.mrf.mxu0
        %v2713 = vadd.f32 %v2624, %v2712
        %v2714 = vpop.f32.mrf.mxu0
        %v2715 = vadd.f32 %v2626, %v2714
        %2716 = vmatmul.bf16.gmra.mxu0 %v2366
        %v2717 = vpop.f32.mrf.mxu0
        %v2718 = vadd.f32 %v2629, %v2717
        %v2719 = vpop.f32.mrf.mxu0
        %v2720 = vadd.f32 %v2631, %v2719
        %2721 = vmatmul.bf16.gmra.mxu0 %v2368
        %v2722 = vpop.f32.mrf.mxu0
        %v2723 = vadd.f32 %v2634, %v2722
        %v2724 = vpop.f32.mrf.mxu0
        %v2725 = vadd.f32 %v2636, %v2724
        %2726 = vmatmul.bf16.gmra.mxu0 %v2370
        %v2727 = vpop.f32.mrf.mxu0
        %v2728 = vadd.f32 %v2639, %v2727
        %v2729 = vpop.f32.mrf.mxu0
        %v2730 = vadd.f32 %v2641, %v2729
        %2731 = vmatmul.bf16.gmra.mxu0 %v2372
        %v2732 = vpop.f32.mrf.mxu0
        %v2733 = vadd.f32 %v2644, %v2732
        %v2734 = vpop.f32.mrf.mxu0
        %v2735 = vadd.f32 %v2646, %v2734
        %2736 = vmatmul.bf16.gmra.mxu0 %v2374
        %v2737 = vpop.f32.mrf.mxu0
        %v2738 = vadd.f32 %v2649, %v2737
        %v2739 = vpop.f32.mrf.mxu0
        %v2740 = vadd.f32 %v2651, %v2739
        %2741 = vmatmul.bf16.gmra.mxu0 %v2376
        %v2742 = vpop.f32.mrf.mxu0
        %v2743 = vadd.f32 %v2654, %v2742
        %v2744 = vpop.f32.mrf.mxu0
        %v2745 = vadd.f32 %v2656, %v2744
        %2746 = vmatmul.bf16.gmra.mxu0 %v2378
        %v2747 = vpop.f32.mrf.mxu0
        %v2748 = vadd.f32 %v2659, %v2747
        %v2749 = vpop.f32.mrf.mxu0
        %v2750 = vadd.f32 %v2661, %v2749
        %2751 = vmatmul.bf16.gmra.mxu0 %v2380
        %v2752 = vpop.f32.mrf.mxu0
        %v2753 = vadd.f32 %v2664, %v2752
        %v2754 = vpop.f32.mrf.mxu0
        %v2755 = vadd.f32 %v2666, %v2754
        %2756 = vdwg.mxu0
        %2757 = vmatpush.bf16.msra.mxu0 %v2530
        %2758 = vmatpush.bf16.msra.mxu0 %v2528
        %2759 = vmatpush.bf16.msra.mxu0 %v2526
        %2760 = vmatpush.bf16.msra.mxu0 %v2524
        %2761 = vmatpush.bf16.msra.mxu0 %v2522
        %2762 = vmatpush.bf16.msra.mxu0 %v2520
        %2763 = vmatpush.bf16.msra.mxu0 %v2518
        %2764 = vmatpush.bf16.msra.mxu0 %v2516
        %2765 = vmatmul.bf16.gmra.mxu0 %v2349
        %v2766 = vpop.f32.mrf.mxu0
        %v2767 = vadd.f32 %v2416, %v2766
        %v2768 = vpop.f32.mrf.mxu0
        %v2769 = vadd.f32 %v2416, %v2768
        %2770 = vmatmul.bf16.gmra.mxu0 %v2351
        %v2771 = vpop.f32.mrf.mxu0
        %v2772 = vadd.f32 %v2416, %v2771
        %v2773 = vpop.f32.mrf.mxu0
        %v2774 = vadd.f32 %v2416, %v2773
        %2775 = vmatmul.bf16.gmra.mxu0 %v2353
        %v2776 = vpop.f32.mrf.mxu0
        %v2777 = vadd.f32 %v2416, %v2776
        %v2778 = vpop.f32.mrf.mxu0
        %v2779 = vadd.f32 %v2416, %v2778
        %2780 = vmatmul.bf16.gmra.mxu0 %v2355
        %v2781 = vpop.f32.mrf.mxu0
        %v2782 = vadd.f32 %v2416, %v2781
        %v2783 = vpop.f32.mrf.mxu0
        %v2784 = vadd.f32 %v2416, %v2783
        %2785 = vmatmul.bf16.gmra.mxu0 %v2357
        %v2786 = vpop.f32.mrf.mxu0
        %v2787 = vadd.f32 %v2416, %v2786
        %v2788 = vpop.f32.mrf.mxu0
        %v2789 = vadd.f32 %v2416, %v2788
        %2790 = vmatmul.bf16.gmra.mxu0 %v2359
        %v2791 = vpop.f32.mrf.mxu0
        %v2792 = vadd.f32 %v2416, %v2791
        %v2793 = vpop.f32.mrf.mxu0
        %v2794 = vadd.f32 %v2416, %v2793
        %2795 = vmatmul.bf16.gmra.mxu0 %v2361
        %v2796 = vpop.f32.mrf.mxu0
        %v2797 = vadd.f32 %v2416, %v2796
        %v2798 = vpop.f32.mrf.mxu0
        %v2799 = vadd.f32 %v2416, %v2798
        %2800 = vmatmul.bf16.gmra.mxu0 %v2363
        %v2801 = vpop.f32.mrf.mxu0
        %v2802 = vadd.f32 %v2416, %v2801
        %v2803 = vpop.f32.mrf.mxu0
        %v2804 = vadd.f32 %v2416, %v2803
        %2805 = vmatmul.bf16.gmra.mxu0 %v2365
        %v2806 = vpop.f32.mrf.mxu0
        %v2807 = vadd.f32 %v2416, %v2806
        %v2808 = vpop.f32.mrf.mxu0
        %v2809 = vadd.f32 %v2416, %v2808
        %2810 = vmatmul.bf16.gmra.mxu0 %v2367
        %v2811 = vpop.f32.mrf.mxu0
        %v2812 = vadd.f32 %v2416, %v2811
        %v2813 = vpop.f32.mrf.mxu0
        %v2814 = vadd.f32 %v2416, %v2813
        %2815 = vmatmul.bf16.gmra.mxu0 %v2369
        %v2816 = vpop.f32.mrf.mxu0
        %v2817 = vadd.f32 %v2416, %v2816
        %v2818 = vpop.f32.mrf.mxu0
        %v2819 = vadd.f32 %v2416, %v2818
        %2820 = vmatmul.bf16.gmra.mxu0 %v2371
        %v2821 = vpop.f32.mrf.mxu0
        %v2822 = vadd.f32 %v2416, %v2821
        %v2823 = vpop.f32.mrf.mxu0
        %v2824 = vadd.f32 %v2416, %v2823
        %2825 = vmatmul.bf16.gmra.mxu0 %v2373
        %v2826 = vpop.f32.mrf.mxu0
        %v2827 = vadd.f32 %v2416, %v2826
        %v2828 = vpop.f32.mrf.mxu0
        %v2829 = vadd.f32 %v2416, %v2828
        %2830 = vmatmul.bf16.gmra.mxu0 %v2375
        %v2831 = vpop.f32.mrf.mxu0
        %v2832 = vadd.f32 %v2416, %v2831
        %v2833 = vpop.f32.mrf.mxu0
        %v2834 = vadd.f32 %v2416, %v2833
        %2835 = vmatmul.bf16.gmra.mxu0 %v2377
        %v2836 = vpop.f32.mrf.mxu0
        %v2837 = vadd.f32 %v2416, %v2836
        %v2838 = vpop.f32.mrf.mxu0
        %v2839 = vadd.f32 %v2416, %v2838
        %2840 = vmatmul.bf16.gmra.mxu0 %v2379
        %v2841 = vpop.f32.mrf.mxu0
        %v2842 = vadd.f32 %v2416, %v2841
        %v2843 = vpop.f32.mrf.mxu0
        %v2844 = vadd.f32 %v2416, %v2843
        %2845 = vdwg.mxu0
        %2846 = vmatpush.bf16.msra.mxu0 %v2546
        %2847 = vmatpush.bf16.msra.mxu0 %v2544
        %2848 = vmatpush.bf16.msra.mxu0 %v2542
        %2849 = vmatpush.bf16.msra.mxu0 %v2540
        %2850 = vmatpush.bf16.msra.mxu0 %v2538
        %2851 = vmatpush.bf16.msra.mxu0 %v2536
        %2852 = vmatpush.bf16.msra.mxu0 %v2534
        %2853 = vmatpush.bf16.msra.mxu0 %v2532
        %2854 = vmatmul.bf16.gmra.mxu0 %v2350
        %v2855 = vpop.f32.mrf.mxu0
        %v2856 = vadd.f32 %v2767, %v2855
        %v2857 = vpop.f32.mrf.mxu0
        %v2858 = vadd.f32 %v2769, %v2857
        %2859 = vmatmul.bf16.gmra.mxu0 %v2352
        %v2860 = vpop.f32.mrf.mxu0
        %v2861 = vadd.f32 %v2772, %v2860
        %v2862 = vpop.f32.mrf.mxu0
        %v2863 = vadd.f32 %v2774, %v2862
        %2864 = vmatmul.bf16.gmra.mxu0 %v2354
        %v2865 = vpop.f32.mrf.mxu0
        %v2866 = vadd.f32 %v2777, %v2865
        %v2867 = vpop.f32.mrf.mxu0
        %v2868 = vadd.f32 %v2779, %v2867
        %2869 = vmatmul.bf16.gmra.mxu0 %v2356
        %v2870 = vpop.f32.mrf.mxu0
        %v2871 = vadd.f32 %v2782, %v2870
        %v2872 = vpop.f32.mrf.mxu0
        %v2873 = vadd.f32 %v2784, %v2872
        %2874 = vmatmul.bf16.gmra.mxu0 %v2358
        %v2875 = vpop.f32.mrf.mxu0
        %v2876 = vadd.f32 %v2787, %v2875
        %v2877 = vpop.f32.mrf.mxu0
        %v2878 = vadd.f32 %v2789, %v2877
        %2879 = vmatmul.bf16.gmra.mxu0 %v2360
        %v2880 = vpop.f32.mrf.mxu0
        %v2881 = vadd.f32 %v2792, %v2880
        %v2882 = vpop.f32.mrf.mxu0
        %v2883 = vadd.f32 %v2794, %v2882
        %2884 = vmatmul.bf16.gmra.mxu0 %v2362
        %v2885 = vpop.f32.mrf.mxu0
        %v2886 = vadd.f32 %v2797, %v2885
        %v2887 = vpop.f32.mrf.mxu0
        %v2888 = vadd.f32 %v2799, %v2887
        %2889 = vmatmul.bf16.gmra.mxu0 %v2364
        %v2890 = vpop.f32.mrf.mxu0
        %v2891 = vadd.f32 %v2802, %v2890
        %v2892 = vpop.f32.mrf.mxu0
        %v2893 = vadd.f32 %v2804, %v2892
        %2894 = vmatmul.bf16.gmra.mxu0 %v2366
        %v2895 = vpop.f32.mrf.mxu0
        %v2896 = vadd.f32 %v2807, %v2895
        %v2897 = vpop.f32.mrf.mxu0
        %v2898 = vadd.f32 %v2809, %v2897
        %2899 = vmatmul.bf16.gmra.mxu0 %v2368
        %v2900 = vpop.f32.mrf.mxu0
        %v2901 = vadd.f32 %v2812, %v2900
        %v2902 = vpop.f32.mrf.mxu0
        %v2903 = vadd.f32 %v2814, %v2902
        %2904 = vmatmul.bf16.gmra.mxu0 %v2370
        %v2905 = vpop.f32.mrf.mxu0
        %v2906 = vadd.f32 %v2817, %v2905
        %v2907 = vpop.f32.mrf.mxu0
        %v2908 = vadd.f32 %v2819, %v2907
        %2909 = vmatmul.bf16.gmra.mxu0 %v2372
        %v2910 = vpop.f32.mrf.mxu0
        %v2911 = vadd.f32 %v2822, %v2910
        %v2912 = vpop.f32.mrf.mxu0
        %v2913 = vadd.f32 %v2824, %v2912
        %2914 = vmatmul.bf16.gmra.mxu0 %v2374
        %v2915 = vpop.f32.mrf.mxu0
        %v2916 = vadd.f32 %v2827, %v2915
        %v2917 = vpop.f32.mrf.mxu0
        %v2918 = vadd.f32 %v2829, %v2917
        %2919 = vmatmul.bf16.gmra.mxu0 %v2376
        %v2920 = vpop.f32.mrf.mxu0
        %v2921 = vadd.f32 %v2832, %v2920
        %v2922 = vpop.f32.mrf.mxu0
        %v2923 = vadd.f32 %v2834, %v2922
        %2924 = vmatmul.bf16.gmra.mxu0 %v2378
        %v2925 = vpop.f32.mrf.mxu0
        %v2926 = vadd.f32 %v2837, %v2925
        %v2927 = vpop.f32.mrf.mxu0
        %v2928 = vadd.f32 %v2839, %v2927
        %2929 = vmatmul.bf16.gmra.mxu0 %v2380
        %v2930 = vpop.f32.mrf.mxu0
        %v2931 = vadd.f32 %v2842, %v2930
        %v2932 = vpop.f32.mrf.mxu0
        %v2933 = vadd.f32 %v2844, %v2932
        %2934 = vdwg.mxu0
        %v2935 = vmax.f32 %v2678, 0.0
        %v2936 = vmax.f32 %v2856, 0.0
        %v2937 = vmax.f32 %v2680, 0.0
        %v2938 = vmax.f32 %v2858, 0.0
        %v2939 = vmax.f32 %v2683, 0.0
        %v2940 = vmax.f32 %v2861, 0.0
        %v2941 = vmax.f32 %v2685, 0.0
        %v2942 = vmax.f32 %v2863, 0.0
        %v2943 = vmax.f32 %v2688, 0.0
        %v2944 = vmax.f32 %v2866, 0.0
        %v2945 = vmax.f32 %v2690, 0.0
        %v2946 = vmax.f32 %v2868, 0.0
        %v2947 = vmax.f32 %v2693, 0.0
        %v2948 = vmax.f32 %v2871, 0.0
        %v2949 = vmax.f32 %v2695, 0.0
        %v2950 = vmax.f32 %v2873, 0.0
        %v2951 = vmax.f32 %v2698, 0.0
        %v2952 = vmax.f32 %v2876, 0.0
        %v2953 = vmax.f32 %v2700, 0.0
        %v2954 = vmax.f32 %v2878, 0.0
        %v2955 = vmax.f32 %v2703, 0.0
        %v2956 = vmax.f32 %v2881, 0.0
        %v2957 = vmax.f32 %v2705, 0.0
        %v2958 = vmax.f32 %v2883, 0.0
        %v2959 = vmax.f32 %v2708, 0.0
        %v2960 = vmax.f32 %v2886, 0.0
        %v2961 = vmax.f32 %v2710, 0.0
        %v2962 = vmax.f32 %v2888, 0.0
        %v2963 = vmax.f32 %v2713, 0.0
        %v2964 = vmax.f32 %v2891, 0.0
        %v2965 = vmax.f32 %v2715, 0.0
        %v2966 = vmax.f32 %v2893, 0.0
        %v2967 = vmax.f32 %v2718, 0.0
        %v2968 = vmax.f32 %v2896, 0.0
        %v2969 = vmax.f32 %v2720, 0.0
        %v2970 = vmax.f32 %v2898, 0.0
        %v2971 = vmax.f32 %v2723, 0.0
        %v2972 = vmax.f32 %v2901, 0.0
        %v2973 = vmax.f32 %v2725, 0.0
        %v2974 = vmax.f32 %v2903, 0.0
        %v2975 = vmax.f32 %v2728, 0.0
        %v2976 = vmax.f32 %v2906, 0.0
        %v2977 = vmax.f32 %v2730, 0.0
        %v2978 = vmax.f32 %v2908, 0.0
        %v2979 = vmax.f32 %v2733, 0.0
        %v2980 = vmax.f32 %v2911, 0.0
        %v2981 = vmax.f32 %v2735, 0.0
        %v2982 = vmax.f32 %v2913, 0.0
        %v2983 = vmax.f32 %v2738, 0.0
        %v2984 = vmax.f32 %v2916, 0.0
        %v2985 = vmax.f32 %v2740, 0.0
        %v2986 = vmax.f32 %v2918, 0.0
        %v2987 = vmax.f32 %v2743, 0.0
        %v2988 = vmax.f32 %v2921, 0.0
        %v2989 = vmax.f32 %v2745, 0.0
        %v2990 = vmax.f32 %v2923, 0.0
        %v2991 = vmax.f32 %v2748, 0.0
        %v2992 = vmax.f32 %v2926, 0.0
        %v2993 = vmax.f32 %v2750, 0.0
        %v2994 = vmax.f32 %v2928, 0.0
        %v2995 = vmax.f32 %v2753, 0.0
        %v2996 = vmax.f32 %v2931, 0.0
        %v2997 = vmax.f32 %v2755, 0.0
        %v2998 = vmax.f32 %v2933, 0.0
        %v2999 = vpack.c.bf16 %v2937, %v2935
        %v3000 = vpack.c.bf16 %v2938, %v2936
        %v3001 = vpack.c.bf16 %v2941, %v2939
        %v3002 = vpack.c.bf16 %v2942, %v2940
        %v3003 = vpack.c.bf16 %v2945, %v2943
        %v3004 = vpack.c.bf16 %v2946, %v2944
        %v3005 = vpack.c.bf16 %v2949, %v2947
        %v3006 = vpack.c.bf16 %v2950, %v2948
        %v3007 = vpack.c.bf16 %v2953, %v2951
        %v3008 = vpack.c.bf16 %v2954, %v2952
        %v3009 = vpack.c.bf16 %v2957, %v2955
        %v3010 = vpack.c.bf16 %v2958, %v2956
        %v3011 = vpack.c.bf16 %v2961, %v2959
        %v3012 = vpack.c.bf16 %v2962, %v2960
        %v3013 = vpack.c.bf16 %v2965, %v2963
        %v3014 = vpack.c.bf16 %v2966, %v2964
        %v3015 = vpack.c.bf16 %v2969, %v2967
        %v3016 = vpack.c.bf16 %v2970, %v2968
        %v3017 = vpack.c.bf16 %v2973, %v2971
        %v3018 = vpack.c.bf16 %v2974, %v2972
        %v3019 = vpack.c.bf16 %v2977, %v2975
        %v3020 = vpack.c.bf16 %v2978, %v2976
        %v3021 = vpack.c.bf16 %v2981, %v2979
        %v3022 = vpack.c.bf16 %v2982, %v2980
        %v3023 = vpack.c.bf16 %v2985, %v2983
        %v3024 = vpack.c.bf16 %v2986, %v2984
        %v3025 = vpack.c.bf16 %v2989, %v2987
        %v3026 = vpack.c.bf16 %v2990, %v2988
        %v3027 = vpack.c.bf16 %v2993, %v2991
        %v3028 = vpack.c.bf16 %v2994, %v2992
        %v3029 = vpack.c.bf16 %v2997, %v2995
        %v3030 = vpack.c.bf16 %v2998, %v2996
        %v3031 = vld [vmem:[#allocation13] sm:$0xff]
        %v3032 = vld [vmem:[#allocation13 + $0x8] sm:$0xff]
        %v3033 = vld [vmem:[#allocation13 + $0x10] sm:$0xff]
        %v3034 = vld [vmem:[#allocation13 + $0x18] sm:$0xff]
        %v3035 = vld [vmem:[#allocation13 + $0x20] sm:$0xff]
        %v3036 = vld [vmem:[#allocation13 + $0x28] sm:$0xff]
        %v3037 = vld [vmem:[#allocation13 + $0x30] sm:$0xff]
        %v3038 = vld [vmem:[#allocation13 + $0x38] sm:$0xff]
        %v3039 = vld [vmem:[#allocation13 + $0x40] sm:$0xff]
        %v3040 = vld [vmem:[#allocation13 + $0x48] sm:$0xff]
        %v3041 = vld [vmem:[#allocation13 + $0x50] sm:$0xff]
        %v3042 = vld [vmem:[#allocation13 + $0x58] sm:$0xff]
        %v3043 = vld [vmem:[#allocation13 + $0x60] sm:$0xff]
        %v3044 = vld [vmem:[#allocation13 + $0x68] sm:$0xff]
        %v3045 = vld [vmem:[#allocation13 + $0x70] sm:$0xff]
        %v3046 = vld [vmem:[#allocation13 + $0x78] sm:$0xff]
        %v3047 = vld [vmem:[#allocation13 + $0x80] sm:$0xff]
        %v3048 = vld [vmem:[#allocation13 + $0x88] sm:$0xff]
        %v3049 = vld [vmem:[#allocation13 + $0x90] sm:$0xff]
        %v3050 = vld [vmem:[#allocation13 + $0x98] sm:$0xff]
        %v3051 = vld [vmem:[#allocation13 + $0xa0] sm:$0xff]
        %v3052 = vld [vmem:[#allocation13 + $0xa8] sm:$0xff]
        %v3053 = vld [vmem:[#allocation13 + $0xb0] sm:$0xff]
        %v3054 = vld [vmem:[#allocation13 + $0xb8] sm:$0xff]
        %v3055 = vld [vmem:[#allocation13 + $0xc0] sm:$0xff]
        %v3056 = vld [vmem:[#allocation13 + $0xc8] sm:$0xff]
        %v3057 = vld [vmem:[#allocation13 + $0xd0] sm:$0xff]
        %v3058 = vld [vmem:[#allocation13 + $0xd8] sm:$0xff]
        %v3059 = vld [vmem:[#allocation13 + $0xe0] sm:$0xff]
        %v3060 = vld [vmem:[#allocation13 + $0xe8] sm:$0xff]
        %v3061 = vld [vmem:[#allocation13 + $0xf0] sm:$0xff]
        %v3062 = vld [vmem:[#allocation13 + $0xf8] sm:$0xff]
        %v3063 = vld [vmem:[%s10] sm:$0x3]
        %v3065 = vperm.slane %v3063, 0
        %v3066 = vperm.slane %v3063, 1
        %v3101 = vunpack.c.l.b16 %v3031
        %v3102 = vunpack.c.h.b16 %v3031
        %v3103 = vunpack.c.l.b16 %v3032
        %v3104 = vunpack.c.h.b16 %v3032
        %v3105 = vunpack.c.l.b16 %v3033
        %v3106 = vunpack.c.h.b16 %v3033
        %v3107 = vunpack.c.l.b16 %v3034
        %v3108 = vunpack.c.h.b16 %v3034
        %v3109 = vunpack.c.l.b16 %v3035
        %v3110 = vunpack.c.h.b16 %v3035
        %v3111 = vunpack.c.l.b16 %v3036
        %v3112 = vunpack.c.h.b16 %v3036
        %v3113 = vunpack.c.l.b16 %v3037
        %v3114 = vunpack.c.h.b16 %v3037
        %v3115 = vunpack.c.l.b16 %v3038
        %v3116 = vunpack.c.h.b16 %v3038
        %v3117 = vunpack.c.l.b16 %v3039
        %v3118 = vunpack.c.h.b16 %v3039
        %v3119 = vunpack.c.l.b16 %v3040
        %v3120 = vunpack.c.h.b16 %v3040
        %v3121 = vunpack.c.l.b16 %v3041
        %v3122 = vunpack.c.h.b16 %v3041
        %v3123 = vunpack.c.l.b16 %v3042
        %v3124 = vunpack.c.h.b16 %v3042
        %v3125 = vunpack.c.l.b16 %v3043
        %v3126 = vunpack.c.h.b16 %v3043
        %v3127 = vunpack.c.l.b16 %v3044
        %v3128 = vunpack.c.h.b16 %v3044
        %v3129 = vunpack.c.l.b16 %v3045
        %v3130 = vunpack.c.h.b16 %v3045
        %v3131 = vunpack.c.l.b16 %v3046
        %v3132 = vunpack.c.h.b16 %v3046
        %v3133 = vunpack.c.l.b16 %v3047
        %v3134 = vunpack.c.h.b16 %v3047
        %v3135 = vunpack.c.l.b16 %v3048
        %v3136 = vunpack.c.h.b16 %v3048
        %v3137 = vunpack.c.l.b16 %v3049
        %v3138 = vunpack.c.h.b16 %v3049
        %v3139 = vunpack.c.l.b16 %v3050
        %v3140 = vunpack.c.h.b16 %v3050
        %v3141 = vunpack.c.l.b16 %v3051
        %v3142 = vunpack.c.h.b16 %v3051
        %v3143 = vunpack.c.l.b16 %v3052
        %v3144 = vunpack.c.h.b16 %v3052
        %v3145 = vunpack.c.l.b16 %v3053
        %v3146 = vunpack.c.h.b16 %v3053
        %v3147 = vunpack.c.l.b16 %v3054
        %v3148 = vunpack.c.h.b16 %v3054
        %v3149 = vunpack.c.l.b16 %v3055
        %v3150 = vunpack.c.h.b16 %v3055
        %v3151 = vunpack.c.l.b16 %v3056
        %v3152 = vunpack.c.h.b16 %v3056
        %v3153 = vunpack.c.l.b16 %v3057
        %v3154 = vunpack.c.h.b16 %v3057
        %v3155 = vunpack.c.l.b16 %v3058
        %v3156 = vunpack.c.h.b16 %v3058
        %v3157 = vunpack.c.l.b16 %v3059
        %v3158 = vunpack.c.h.b16 %v3059
        %v3159 = vunpack.c.l.b16 %v3060
        %v3160 = vunpack.c.h.b16 %v3060
        %v3161 = vunpack.c.l.b16 %v3061
        %v3162 = vunpack.c.h.b16 %v3061
        %v3163 = vunpack.c.l.b16 %v3062
        %v3164 = vunpack.c.h.b16 %v3062
        %v3165 = vpack.c.b16 %v3103, %v3101
        %v3166 = vpack.c.b16 %v3104, %v3102
        %v3167 = vpack.c.b16 %v3107, %v3105
        %v3168 = vpack.c.b16 %v3108, %v3106
        %v3169 = vpack.c.b16 %v3111, %v3109
        %v3170 = vpack.c.b16 %v3112, %v3110
        %v3171 = vpack.c.b16 %v3115, %v3113
        %v3172 = vpack.c.b16 %v3116, %v3114
        %v3173 = vpack.c.b16 %v3119, %v3117
        %v3174 = vpack.c.b16 %v3120, %v3118
        %v3175 = vpack.c.b16 %v3123, %v3121
        %v3176 = vpack.c.b16 %v3124, %v3122
        %v3177 = vpack.c.b16 %v3127, %v3125
        %v3178 = vpack.c.b16 %v3128, %v3126
        %v3179 = vpack.c.b16 %v3131, %v3129
        %v3180 = vpack.c.b16 %v3132, %v3130
        %v3181 = vpack.c.b16 %v3135, %v3133
        %v3182 = vpack.c.b16 %v3136, %v3134
        %v3183 = vpack.c.b16 %v3139, %v3137
        %v3184 = vpack.c.b16 %v3140, %v3138
        %v3185 = vpack.c.b16 %v3143, %v3141
        %v3186 = vpack.c.b16 %v3144, %v3142
        %v3187 = vpack.c.b16 %v3147, %v3145
        %v3188 = vpack.c.b16 %v3148, %v3146
        %v3189 = vpack.c.b16 %v3151, %v3149
        %v3190 = vpack.c.b16 %v3152, %v3150
        %v3191 = vpack.c.b16 %v3155, %v3153
        %v3192 = vpack.c.b16 %v3156, %v3154
        %v3193 = vpack.c.b16 %v3159, %v3157
        %v3194 = vpack.c.b16 %v3160, %v3158
        %v3195 = vpack.c.b16 %v3163, %v3161
        %v3196 = vpack.c.b16 %v3164, %v3162
        %3229 = vmatpush.bf16.msra.mxu0 %v3179
        %3230 = vmatpush.bf16.msra.mxu0 %v3177
        %3231 = vmatpush.bf16.msra.mxu0 %v3175
        %3232 = vmatpush.bf16.msra.mxu0 %v3173
        %3233 = vmatpush.bf16.msra.mxu0 %v3171
        %3234 = vmatpush.bf16.msra.mxu0 %v3169
        %3235 = vmatpush.bf16.msra.mxu0 %v3167
        %3236 = vmatpush.bf16.msra.mxu0 %v3165
        %3237 = vmatmul.bf16.gmra.mxu0 %v2999
        %v3238 = vpop.f32.mrf.mxu0
        %v3239 = vadd.f32 %v3065, %v3238
        %v3240 = vpop.f32.mrf.mxu0
        %v3241 = vadd.f32 %v3065, %v3240
        %3242 = vmatmul.bf16.gmra.mxu0 %v3001
        %v3243 = vpop.f32.mrf.mxu0
        %v3244 = vadd.f32 %v3065, %v3243
        %v3245 = vpop.f32.mrf.mxu0
        %v3246 = vadd.f32 %v3065, %v3245
        %3247 = vmatmul.bf16.gmra.mxu0 %v3003
        %v3248 = vpop.f32.mrf.mxu0
        %v3249 = vadd.f32 %v3065, %v3248
        %v3250 = vpop.f32.mrf.mxu0
        %v3251 = vadd.f32 %v3065, %v3250
        %3252 = vmatmul.bf16.gmra.mxu0 %v3005
        %v3253 = vpop.f32.mrf.mxu0
        %v3254 = vadd.f32 %v3065, %v3253
        %v3255 = vpop.f32.mrf.mxu0
        %v3256 = vadd.f32 %v3065, %v3255
        %3257 = vmatmul.bf16.gmra.mxu0 %v3007
        %v3258 = vpop.f32.mrf.mxu0
        %v3259 = vadd.f32 %v3065, %v3258
        %v3260 = vpop.f32.mrf.mxu0
        %v3261 = vadd.f32 %v3065, %v3260
        %3262 = vmatmul.bf16.gmra.mxu0 %v3009
        %v3263 = vpop.f32.mrf.mxu0
        %v3264 = vadd.f32 %v3065, %v3263
        %v3265 = vpop.f32.mrf.mxu0
        %v3266 = vadd.f32 %v3065, %v3265
        %3267 = vmatmul.bf16.gmra.mxu0 %v3011
        %v3268 = vpop.f32.mrf.mxu0
        %v3269 = vadd.f32 %v3065, %v3268
        %v3270 = vpop.f32.mrf.mxu0
        %v3271 = vadd.f32 %v3065, %v3270
        %3272 = vmatmul.bf16.gmra.mxu0 %v3013
        %v3273 = vpop.f32.mrf.mxu0
        %v3274 = vadd.f32 %v3065, %v3273
        %v3275 = vpop.f32.mrf.mxu0
        %v3276 = vadd.f32 %v3065, %v3275
        %3277 = vmatmul.bf16.gmra.mxu0 %v3015
        %v3278 = vpop.f32.mrf.mxu0
        %v3279 = vadd.f32 %v3065, %v3278
        %v3280 = vpop.f32.mrf.mxu0
        %v3281 = vadd.f32 %v3065, %v3280
        %3282 = vmatmul.bf16.gmra.mxu0 %v3017
        %v3283 = vpop.f32.mrf.mxu0
        %v3284 = vadd.f32 %v3065, %v3283
        %v3285 = vpop.f32.mrf.mxu0
        %v3286 = vadd.f32 %v3065, %v3285
        %3287 = vmatmul.bf16.gmra.mxu0 %v3019
        %v3288 = vpop.f32.mrf.mxu0
        %v3289 = vadd.f32 %v3065, %v3288
        %v3290 = vpop.f32.mrf.mxu0
        %v3291 = vadd.f32 %v3065, %v3290
        %3292 = vmatmul.bf16.gmra.mxu0 %v3021
        %v3293 = vpop.f32.mrf.mxu0
        %v3294 = vadd.f32 %v3065, %v3293
        %v3295 = vpop.f32.mrf.mxu0
        %v3296 = vadd.f32 %v3065, %v3295
        %3297 = vmatmul.bf16.gmra.mxu0 %v3023
        %v3298 = vpop.f32.mrf.mxu0
        %v3299 = vadd.f32 %v3065, %v3298
        %v3300 = vpop.f32.mrf.mxu0
        %v3301 = vadd.f32 %v3065, %v3300
        %3302 = vmatmul.bf16.gmra.mxu0 %v3025
        %v3303 = vpop.f32.mrf.mxu0
        %v3304 = vadd.f32 %v3065, %v3303
        %v3305 = vpop.f32.mrf.mxu0
        %v3306 = vadd.f32 %v3065, %v3305
        %3307 = vmatmul.bf16.gmra.mxu0 %v3027
        %v3308 = vpop.f32.mrf.mxu0
        %v3309 = vadd.f32 %v3065, %v3308
        %v3310 = vpop.f32.mrf.mxu0
        %v3311 = vadd.f32 %v3065, %v3310
        %3312 = vmatmul.bf16.gmra.mxu0 %v3029
        %v3313 = vpop.f32.mrf.mxu0
        %v3314 = vadd.f32 %v3065, %v3313
        %v3315 = vpop.f32.mrf.mxu0
        %v3316 = vadd.f32 %v3065, %v3315
        %3317 = vdwg.mxu0
        %3318 = vmatpush.bf16.msra.mxu0 %v3195
        %3319 = vmatpush.bf16.msra.mxu0 %v3193
        %3320 = vmatpush.bf16.msra.mxu0 %v3191
        %3321 = vmatpush.bf16.msra.mxu0 %v3189
        %3322 = vmatpush.bf16.msra.mxu0 %v3187
        %3323 = vmatpush.bf16.msra.mxu0 %v3185
        %3324 = vmatpush.bf16.msra.mxu0 %v3183
        %3325 = vmatpush.bf16.msra.mxu0 %v3181
        %3326 = vmatmul.bf16.gmra.mxu0 %v3000
        %v3327 = vpop.f32.mrf.mxu0
        %v3328 = vadd.f32 %v3239, %v3327
        %v3329 = vpop.f32.mrf.mxu0
        %v3330 = vadd.f32 %v3241, %v3329
        %3331 = vmatmul.bf16.gmra.mxu0 %v3002
        %v3332 = vpop.f32.mrf.mxu0
        %v3333 = vadd.f32 %v3244, %v3332
        %v3334 = vpop.f32.mrf.mxu0
        %v3335 = vadd.f32 %v3246, %v3334
        %3336 = vmatmul.bf16.gmra.mxu0 %v3004
        %v3337 = vpop.f32.mrf.mxu0
        %v3338 = vadd.f32 %v3249, %v3337
        %v3339 = vpop.f32.mrf.mxu0
        %v3340 = vadd.f32 %v3251, %v3339
        %3341 = vmatmul.bf16.gmra.mxu0 %v3006
        %v3342 = vpop.f32.mrf.mxu0
        %v3343 = vadd.f32 %v3254, %v3342
        %v3344 = vpop.f32.mrf.mxu0
        %v3345 = vadd.f32 %v3256, %v3344
        %3346 = vmatmul.bf16.gmra.mxu0 %v3008
        %v3347 = vpop.f32.mrf.mxu0
        %v3348 = vadd.f32 %v3259, %v3347
        %v3349 = vpop.f32.mrf.mxu0
        %v3350 = vadd.f32 %v3261, %v3349
        %3351 = vmatmul.bf16.gmra.mxu0 %v3010
        %v3352 = vpop.f32.mrf.mxu0
        %v3353 = vadd.f32 %v3264, %v3352
        %v3354 = vpop.f32.mrf.mxu0
        %v3355 = vadd.f32 %v3266, %v3354
        %3356 = vmatmul.bf16.gmra.mxu0 %v3012
        %v3357 = vpop.f32.mrf.mxu0
        %v3358 = vadd.f32 %v3269, %v3357
        %v3359 = vpop.f32.mrf.mxu0
        %v3360 = vadd.f32 %v3271, %v3359
        %3361 = vmatmul.bf16.gmra.mxu0 %v3014
        %v3362 = vpop.f32.mrf.mxu0
        %v3363 = vadd.f32 %v3274, %v3362
        %v3364 = vpop.f32.mrf.mxu0
        %v3365 = vadd.f32 %v3276, %v3364
        %3366 = vmatmul.bf16.gmra.mxu0 %v3016
        %v3367 = vpop.f32.mrf.mxu0
        %v3368 = vadd.f32 %v3279, %v3367
        %v3369 = vpop.f32.mrf.mxu0
        %v3370 = vadd.f32 %v3281, %v3369
        %3371 = vmatmul.bf16.gmra.mxu0 %v3018
        %v3372 = vpop.f32.mrf.mxu0
        %v3373 = vadd.f32 %v3284, %v3372
        %v3374 = vpop.f32.mrf.mxu0
        %v3375 = vadd.f32 %v3286, %v3374
        %3376 = vmatmul.bf16.gmra.mxu0 %v3020
        %v3377 = vpop.f32.mrf.mxu0
        %v3378 = vadd.f32 %v3289, %v3377
        %v3379 = vpop.f32.mrf.mxu0
        %v3380 = vadd.f32 %v3291, %v3379
        %3381 = vmatmul.bf16.gmra.mxu0 %v3022
        %v3382 = vpop.f32.mrf.mxu0
        %v3383 = vadd.f32 %v3294, %v3382
        %v3384 = vpop.f32.mrf.mxu0
        %v3385 = vadd.f32 %v3296, %v3384
        %3386 = vmatmul.bf16.gmra.mxu0 %v3024
        %v3387 = vpop.f32.mrf.mxu0
        %v3388 = vadd.f32 %v3299, %v3387
        %v3389 = vpop.f32.mrf.mxu0
        %v3390 = vadd.f32 %v3301, %v3389
        %3391 = vmatmul.bf16.gmra.mxu0 %v3026
        %v3392 = vpop.f32.mrf.mxu0
        %v3393 = vadd.f32 %v3304, %v3392
        %v3394 = vpop.f32.mrf.mxu0
        %v3395 = vadd.f32 %v3306, %v3394
        %3396 = vmatmul.bf16.gmra.mxu0 %v3028
        %v3397 = vpop.f32.mrf.mxu0
        %v3398 = vadd.f32 %v3309, %v3397
        %v3399 = vpop.f32.mrf.mxu0
        %v3400 = vadd.f32 %v3311, %v3399
        %3401 = vmatmul.bf16.gmra.mxu0 %v3030
        %v3402 = vpop.f32.mrf.mxu0
        %v3403 = vadd.f32 %v3314, %v3402
        %v3404 = vpop.f32.mrf.mxu0
        %v3405 = vadd.f32 %v3316, %v3404
        %3406 = vdwg.mxu0
        %3407 = vmatpush.bf16.msra.mxu0 %v3180
        %3408 = vmatpush.bf16.msra.mxu0 %v3178
        %3409 = vmatpush.bf16.msra.mxu0 %v3176
        %3410 = vmatpush.bf16.msra.mxu0 %v3174
        %3411 = vmatpush.bf16.msra.mxu0 %v3172
        %3412 = vmatpush.bf16.msra.mxu0 %v3170
        %3413 = vmatpush.bf16.msra.mxu0 %v3168
        %3414 = vmatpush.bf16.msra.mxu0 %v3166
        %3415 = vmatmul.bf16.gmra.mxu0 %v2999
        %v3416 = vpop.f32.mrf.mxu0
        %v3417 = vadd.f32 %v3066, %v3416
        %v3418 = vpop.f32.mrf.mxu0
        %v3419 = vadd.f32 %v3066, %v3418
        %3420 = vmatmul.bf16.gmra.mxu0 %v3001
        %v3421 = vpop.f32.mrf.mxu0
        %v3422 = vadd.f32 %v3066, %v3421
        %v3423 = vpop.f32.mrf.mxu0
        %v3424 = vadd.f32 %v3066, %v3423
        %3425 = vmatmul.bf16.gmra.mxu0 %v3003
        %v3426 = vpop.f32.mrf.mxu0
        %v3427 = vadd.f32 %v3066, %v3426
        %v3428 = vpop.f32.mrf.mxu0
        %v3429 = vadd.f32 %v3066, %v3428
        %3430 = vmatmul.bf16.gmra.mxu0 %v3005
        %v3431 = vpop.f32.mrf.mxu0
        %v3432 = vadd.f32 %v3066, %v3431
        %v3433 = vpop.f32.mrf.mxu0
        %v3434 = vadd.f32 %v3066, %v3433
        %3435 = vmatmul.bf16.gmra.mxu0 %v3007
        %v3436 = vpop.f32.mrf.mxu0
        %v3437 = vadd.f32 %v3066, %v3436
        %v3438 = vpop.f32.mrf.mxu0
        %v3439 = vadd.f32 %v3066, %v3438
        %3440 = vmatmul.bf16.gmra.mxu0 %v3009
        %v3441 = vpop.f32.mrf.mxu0
        %v3442 = vadd.f32 %v3066, %v3441
        %v3443 = vpop.f32.mrf.mxu0
        %v3444 = vadd.f32 %v3066, %v3443
        %3445 = vmatmul.bf16.gmra.mxu0 %v3011
        %v3446 = vpop.f32.mrf.mxu0
        %v3447 = vadd.f32 %v3066, %v3446
        %v3448 = vpop.f32.mrf.mxu0
        %v3449 = vadd.f32 %v3066, %v3448
        %3450 = vmatmul.bf16.gmra.mxu0 %v3013
        %v3451 = vpop.f32.mrf.mxu0
        %v3452 = vadd.f32 %v3066, %v3451
        %v3453 = vpop.f32.mrf.mxu0
        %v3454 = vadd.f32 %v3066, %v3453
        %3455 = vmatmul.bf16.gmra.mxu0 %v3015
        %v3456 = vpop.f32.mrf.mxu0
        %v3457 = vadd.f32 %v3066, %v3456
        %v3458 = vpop.f32.mrf.mxu0
        %v3459 = vadd.f32 %v3066, %v3458
        %3460 = vmatmul.bf16.gmra.mxu0 %v3017
        %v3461 = vpop.f32.mrf.mxu0
        %v3462 = vadd.f32 %v3066, %v3461
        %v3463 = vpop.f32.mrf.mxu0
        %v3464 = vadd.f32 %v3066, %v3463
        %3465 = vmatmul.bf16.gmra.mxu0 %v3019
        %v3466 = vpop.f32.mrf.mxu0
        %v3467 = vadd.f32 %v3066, %v3466
        %v3468 = vpop.f32.mrf.mxu0
        %v3469 = vadd.f32 %v3066, %v3468
        %3470 = vmatmul.bf16.gmra.mxu0 %v3021
        %v3471 = vpop.f32.mrf.mxu0
        %v3472 = vadd.f32 %v3066, %v3471
        %v3473 = vpop.f32.mrf.mxu0
        %v3474 = vadd.f32 %v3066, %v3473
        %3475 = vmatmul.bf16.gmra.mxu0 %v3023
        %v3476 = vpop.f32.mrf.mxu0
        %v3477 = vadd.f32 %v3066, %v3476
        %v3478 = vpop.f32.mrf.mxu0
        %v3479 = vadd.f32 %v3066, %v3478
        %3480 = vmatmul.bf16.gmra.mxu0 %v3025
        %v3481 = vpop.f32.mrf.mxu0
        %v3482 = vadd.f32 %v3066, %v3481
        %v3483 = vpop.f32.mrf.mxu0
        %v3484 = vadd.f32 %v3066, %v3483
        %3485 = vmatmul.bf16.gmra.mxu0 %v3027
        %v3486 = vpop.f32.mrf.mxu0
        %v3487 = vadd.f32 %v3066, %v3486
        %v3488 = vpop.f32.mrf.mxu0
        %v3489 = vadd.f32 %v3066, %v3488
        %3490 = vmatmul.bf16.gmra.mxu0 %v3029
        %v3491 = vpop.f32.mrf.mxu0
        %v3492 = vadd.f32 %v3066, %v3491
        %v3493 = vpop.f32.mrf.mxu0
        %v3494 = vadd.f32 %v3066, %v3493
        %3495 = vdwg.mxu0
        %3496 = vmatpush.bf16.msra.mxu0 %v3196
        %3497 = vmatpush.bf16.msra.mxu0 %v3194
        %3498 = vmatpush.bf16.msra.mxu0 %v3192
        %3499 = vmatpush.bf16.msra.mxu0 %v3190
        %3500 = vmatpush.bf16.msra.mxu0 %v3188
        %3501 = vmatpush.bf16.msra.mxu0 %v3186
        %3502 = vmatpush.bf16.msra.mxu0 %v3184
        %3503 = vmatpush.bf16.msra.mxu0 %v3182
        %3504 = vmatmul.bf16.gmra.mxu0 %v3000
        %v3505 = vpop.f32.mrf.mxu0
        %v3506 = vadd.f32 %v3417, %v3505
        %v3507 = vpop.f32.mrf.mxu0
        %v3508 = vadd.f32 %v3419, %v3507
        %3509 = vmatmul.bf16.gmra.mxu0 %v3002
        %v3510 = vpop.f32.mrf.mxu0
        %v3511 = vadd.f32 %v3422, %v3510
        %v3512 = vpop.f32.mrf.mxu0
        %v3513 = vadd.f32 %v3424, %v3512
        %3514 = vmatmul.bf16.gmra.mxu0 %v3004
        %v3515 = vpop.f32.mrf.mxu0
        %v3516 = vadd.f32 %v3427, %v3515
        %v3517 = vpop.f32.mrf.mxu0
        %v3518 = vadd.f32 %v3429, %v3517
        %3519 = vmatmul.bf16.gmra.mxu0 %v3006
        %v3520 = vpop.f32.mrf.mxu0
        %v3521 = vadd.f32 %v3432, %v3520
        %v3522 = vpop.f32.mrf.mxu0
        %v3523 = vadd.f32 %v3434, %v3522
        %3524 = vmatmul.bf16.gmra.mxu0 %v3008
        %v3525 = vpop.f32.mrf.mxu0
        %v3526 = vadd.f32 %v3437, %v3525
        %v3527 = vpop.f32.mrf.mxu0
        %v3528 = vadd.f32 %v3439, %v3527
        %3529 = vmatmul.bf16.gmra.mxu0 %v3010
        %v3530 = vpop.f32.mrf.mxu0
        %v3531 = vadd.f32 %v3442, %v3530
        %v3532 = vpop.f32.mrf.mxu0
        %v3533 = vadd.f32 %v3444, %v3532
        %3534 = vmatmul.bf16.gmra.mxu0 %v3012
        %v3535 = vpop.f32.mrf.mxu0
        %v3536 = vadd.f32 %v3447, %v3535
        %v3537 = vpop.f32.mrf.mxu0
        %v3538 = vadd.f32 %v3449, %v3537
        %3539 = vmatmul.bf16.gmra.mxu0 %v3014
        %v3540 = vpop.f32.mrf.mxu0
        %v3541 = vadd.f32 %v3452, %v3540
        %v3542 = vpop.f32.mrf.mxu0
        %v3543 = vadd.f32 %v3454, %v3542
        %3544 = vmatmul.bf16.gmra.mxu0 %v3016
        %v3545 = vpop.f32.mrf.mxu0
        %v3546 = vadd.f32 %v3457, %v3545
        %v3547 = vpop.f32.mrf.mxu0
        %v3548 = vadd.f32 %v3459, %v3547
        %3549 = vmatmul.bf16.gmra.mxu0 %v3018
        %v3550 = vpop.f32.mrf.mxu0
        %v3551 = vadd.f32 %v3462, %v3550
        %v3552 = vpop.f32.mrf.mxu0
        %v3553 = vadd.f32 %v3464, %v3552
        %3554 = vmatmul.bf16.gmra.mxu0 %v3020
        %v3555 = vpop.f32.mrf.mxu0
        %v3556 = vadd.f32 %v3467, %v3555
        %v3557 = vpop.f32.mrf.mxu0
        %v3558 = vadd.f32 %v3469, %v3557
        %3559 = vmatmul.bf16.gmra.mxu0 %v3022
        %v3560 = vpop.f32.mrf.mxu0
        %v3561 = vadd.f32 %v3472, %v3560
        %v3562 = vpop.f32.mrf.mxu0
        %v3563 = vadd.f32 %v3474, %v3562
        %3564 = vmatmul.bf16.gmra.mxu0 %v3024
        %v3565 = vpop.f32.mrf.mxu0
        %v3566 = vadd.f32 %v3477, %v3565
        %v3567 = vpop.f32.mrf.mxu0
        %v3568 = vadd.f32 %v3479, %v3567
        %3569 = vmatmul.bf16.gmra.mxu0 %v3026
        %v3570 = vpop.f32.mrf.mxu0
        %v3571 = vadd.f32 %v3482, %v3570
        %v3572 = vpop.f32.mrf.mxu0
        %v3573 = vadd.f32 %v3484, %v3572
        %3574 = vmatmul.bf16.gmra.mxu0 %v3028
        %v3575 = vpop.f32.mrf.mxu0
        %v3576 = vadd.f32 %v3487, %v3575
        %v3577 = vpop.f32.mrf.mxu0
        %v3578 = vadd.f32 %v3489, %v3577
        %3579 = vmatmul.bf16.gmra.mxu0 %v3030
        %v3580 = vpop.f32.mrf.mxu0
        %v3581 = vadd.f32 %v3492, %v3580
        %v3582 = vpop.f32.mrf.mxu0
        %v3583 = vadd.f32 %v3494, %v3582
        %3584 = vdwg.mxu0
        %v3585 = vadd.f32 %v3328, %v2285
        %v3586 = vadd.f32 %v3506, %v2286
        %v3587 = vadd.f32 %v3330, %v2287
        %v3588 = vadd.f32 %v3508, %v2288
        %v3589 = vadd.f32 %v3333, %v2289
        %v3590 = vadd.f32 %v3511, %v2290
        %v3591 = vadd.f32 %v3335, %v2291
        %v3592 = vadd.f32 %v3513, %v2292
        %v3593 = vadd.f32 %v3338, %v2293
        %v3594 = vadd.f32 %v3516, %v2294
        %v3595 = vadd.f32 %v3340, %v2295
        %v3596 = vadd.f32 %v3518, %v2296
        %v3597 = vadd.f32 %v3343, %v2297
        %v3598 = vadd.f32 %v3521, %v2298
        %v3599 = vadd.f32 %v3345, %v2299
        %v3600 = vadd.f32 %v3523, %v2300
        %v3601 = vadd.f32 %v3348, %v2301
        %v3602 = vadd.f32 %v3526, %v2302
        %v3603 = vadd.f32 %v3350, %v2303
        %v3604 = vadd.f32 %v3528, %v2304
        %v3605 = vadd.f32 %v3353, %v2305
        %v3606 = vadd.f32 %v3531, %v2306
        %v3607 = vadd.f32 %v3355, %v2307
        %v3608 = vadd.f32 %v3533, %v2308
        %v3609 = vadd.f32 %v3358, %v2309
        %v3610 = vadd.f32 %v3536, %v2310
        %v3611 = vadd.f32 %v3360, %v2311
        %v3612 = vadd.f32 %v3538, %v2312
        %v3613 = vadd.f32 %v3363, %v2313
        %v3614 = vadd.f32 %v3541, %v2314
        %v3615 = vadd.f32 %v3365, %v2315
        %v3616 = vadd.f32 %v3543, %v2316
        %v3617 = vadd.f32 %v3368, %v2317
        %v3618 = vadd.f32 %v3546, %v2318
        %v3619 = vadd.f32 %v3370, %v2319
        %v3620 = vadd.f32 %v3548, %v2320
        %v3621 = vadd.f32 %v3373, %v2321
        %v3622 = vadd.f32 %v3551, %v2322
        %v3623 = vadd.f32 %v3375, %v2323
        %v3624 = vadd.f32 %v3553, %v2324
        %v3625 = vadd.f32 %v3378, %v2325
        %v3626 = vadd.f32 %v3556, %v2326
        %v3627 = vadd.f32 %v3380, %v2327
        %v3628 = vadd.f32 %v3558, %v2328
        %v3629 = vadd.f32 %v3383, %v2329
        %v3630 = vadd.f32 %v3561, %v2330
        %v3631 = vadd.f32 %v3385, %v2331
        %v3632 = vadd.f32 %v3563, %v2332
        %v3633 = vadd.f32 %v3388, %v2333
        %v3634 = vadd.f32 %v3566, %v2334
        %v3635 = vadd.f32 %v3390, %v2335
        %v3636 = vadd.f32 %v3568, %v2336
        %v3637 = vadd.f32 %v3393, %v2337
        %v3638 = vadd.f32 %v3571, %v2338
        %v3639 = vadd.f32 %v3395, %v2339
        %v3640 = vadd.f32 %v3573, %v2340
        %v3641 = vadd.f32 %v3398, %v2341
        %v3642 = vadd.f32 %v3576, %v2342
        %v3643 = vadd.f32 %v3400, %v2343
        %v3644 = vadd.f32 %v3578, %v2344
        %v3645 = vadd.f32 %v3403, %v2345
        %v3646 = vadd.f32 %v3581, %v2346
        %v3647 = vadd.f32 %v3405, %v2347
        %v3648 = vadd.f32 %v3583, %v2348
        %v3649 = vmax.f32 %v3585, 0.0
        %v3650 = vmax.f32 %v3586, 0.0
        %v3651 = vmax.f32 %v3587, 0.0
        %v3652 = vmax.f32 %v3588, 0.0
        %v3653 = vmax.f32 %v3589, 0.0
        %v3654 = vmax.f32 %v3590, 0.0
        %v3655 = vmax.f32 %v3591, 0.0
        %v3656 = vmax.f32 %v3592, 0.0
        %v3657 = vmax.f32 %v3593, 0.0
        %v3658 = vmax.f32 %v3594, 0.0
        %v3659 = vmax.f32 %v3595, 0.0
        %v3660 = vmax.f32 %v3596, 0.0
        %v3661 = vmax.f32 %v3597, 0.0
        %v3662 = vmax.f32 %v3598, 0.0
        %v3663 = vmax.f32 %v3599, 0.0
        %v3664 = vmax.f32 %v3600, 0.0
        %v3665 = vmax.f32 %v3601, 0.0
        %v3666 = vmax.f32 %v3602, 0.0
        %v3667 = vmax.f32 %v3603, 0.0
        %v3668 = vmax.f32 %v3604, 0.0
        %v3669 = vmax.f32 %v3605, 0.0
        %v3670 = vmax.f32 %v3606, 0.0
        %v3671 = vmax.f32 %v3607, 0.0
        %v3672 = vmax.f32 %v3608, 0.0
        %v3673 = vmax.f32 %v3609, 0.0
        %v3674 = vmax.f32 %v3610, 0.0
        %v3675 = vmax.f32 %v3611, 0.0
        %v3676 = vmax.f32 %v3612, 0.0
        %v3677 = vmax.f32 %v3613, 0.0
        %v3678 = vmax.f32 %v3614, 0.0
        %v3679 = vmax.f32 %v3615, 0.0
        %v3680 = vmax.f32 %v3616, 0.0
        %v3681 = vmax.f32 %v3617, 0.0
        %v3682 = vmax.f32 %v3618, 0.0
        %v3683 = vmax.f32 %v3619, 0.0
        %v3684 = vmax.f32 %v3620, 0.0
        %v3685 = vmax.f32 %v3621, 0.0
        %v3686 = vmax.f32 %v3622, 0.0
        %v3687 = vmax.f32 %v3623, 0.0
        %v3688 = vmax.f32 %v3624, 0.0
        %v3689 = vmax.f32 %v3625, 0.0
        %v3690 = vmax.f32 %v3626, 0.0
        %v3691 = vmax.f32 %v3627, 0.0
        %v3692 = vmax.f32 %v3628, 0.0
        %v3693 = vmax.f32 %v3629, 0.0
        %v3694 = vmax.f32 %v3630, 0.0
        %v3695 = vmax.f32 %v3631, 0.0
        %v3696 = vmax.f32 %v3632, 0.0
        %v3697 = vmax.f32 %v3633, 0.0
        %v3698 = vmax.f32 %v3634, 0.0
        %v3699 = vmax.f32 %v3635, 0.0
        %v3700 = vmax.f32 %v3636, 0.0
        %v3701 = vmax.f32 %v3637, 0.0
        %v3702 = vmax.f32 %v3638, 0.0
        %v3703 = vmax.f32 %v3639, 0.0
        %v3704 = vmax.f32 %v3640, 0.0
        %v3705 = vmax.f32 %v3641, 0.0
        %v3706 = vmax.f32 %v3642, 0.0
        %v3707 = vmax.f32 %v3643, 0.0
        %v3708 = vmax.f32 %v3644, 0.0
        %v3709 = vmax.f32 %v3645, 0.0
        %v3710 = vmax.f32 %v3646, 0.0
        %v3711 = vmax.f32 %v3647, 0.0
        %v3712 = vmax.f32 %v3648, 0.0
        %v3713 = vpack.c.bf16 %v3651, %v3649
        %v3714 = vpack.c.bf16 %v3652, %v3650
        %v3715 = vpack.c.bf16 %v3655, %v3653
        %v3716 = vpack.c.bf16 %v3656, %v3654
        %v3717 = vpack.c.bf16 %v3659, %v3657
        %v3718 = vpack.c.bf16 %v3660, %v3658
        %v3719 = vpack.c.bf16 %v3663, %v3661
        %v3720 = vpack.c.bf16 %v3664, %v3662
        %v3721 = vpack.c.bf16 %v3667, %v3665
        %v3722 = vpack.c.bf16 %v3668, %v3666
        %v3723 = vpack.c.bf16 %v3671, %v3669
        %v3724 = vpack.c.bf16 %v3672, %v3670
        %v3725 = vpack.c.bf16 %v3675, %v3673
        %v3726 = vpack.c.bf16 %v3676, %v3674
        %v3727 = vpack.c.bf16 %v3679, %v3677
        %v3728 = vpack.c.bf16 %v3680, %v3678
        %v3729 = vpack.c.bf16 %v3683, %v3681
        %v3730 = vpack.c.bf16 %v3684, %v3682
        %v3731 = vpack.c.bf16 %v3687, %v3685
        %v3732 = vpack.c.bf16 %v3688, %v3686
        %v3733 = vpack.c.bf16 %v3691, %v3689
        %v3734 = vpack.c.bf16 %v3692, %v3690
        %v3735 = vpack.c.bf16 %v3695, %v3693
        %v3736 = vpack.c.bf16 %v3696, %v3694
        %v3737 = vpack.c.bf16 %v3699, %v3697
        %v3738 = vpack.c.bf16 %v3700, %v3698
        %v3739 = vpack.c.bf16 %v3703, %v3701
        %v3740 = vpack.c.bf16 %v3704, %v3702
        %v3741 = vpack.c.bf16 %v3707, %v3705
        %v3742 = vpack.c.bf16 %v3708, %v3706
        %v3743 = vpack.c.bf16 %v3711, %v3709
        %v3744 = vpack.c.bf16 %v3712, %v3710
        %v3745 = vld [vmem:[#allocation14] sm:$0xf]
        %v3746 = vld [vmem:[#allocation14 + $0x4] sm:$0xf]
        %v3747 = vld [vmem:[#allocation14 + $0x8] sm:$0xf]
        %v3748 = vld [vmem:[#allocation14 + $0xc] sm:$0xf]
        %v3749 = vld [vmem:[#allocation14 + $0x10] sm:$0xf]
        %v3750 = vld [vmem:[#allocation14 + $0x14] sm:$0xf]
        %v3751 = vld [vmem:[#allocation14 + $0x18] sm:$0xf]
        %v3752 = vld [vmem:[#allocation14 + $0x1c] sm:$0xf]
        %v3753 = vld [vmem:[#allocation14 + $0x20] sm:$0xf]
        %v3754 = vld [vmem:[#allocation14 + $0x24] sm:$0xf]
        %v3755 = vld [vmem:[#allocation14 + $0x28] sm:$0xf]
        %v3756 = vld [vmem:[#allocation14 + $0x2c] sm:$0xf]
        %v3757 = vld [vmem:[#allocation14 + $0x30] sm:$0xf]
        %v3758 = vld [vmem:[#allocation14 + $0x34] sm:$0xf]
        %v3759 = vld [vmem:[#allocation14 + $0x38] sm:$0xf]
        %v3760 = vld [vmem:[#allocation14 + $0x3c] sm:$0xf]
        %v3761 = vld [vmem:[#allocation14 + $0x40] sm:$0xf]
        %v3762 = vld [vmem:[#allocation14 + $0x44] sm:$0xf]
        %v3763 = vld [vmem:[#allocation14 + $0x48] sm:$0xf]
        %v3764 = vld [vmem:[#allocation14 + $0x4c] sm:$0xf]
        %v3765 = vld [vmem:[#allocation14 + $0x50] sm:$0xf]
        %v3766 = vld [vmem:[#allocation14 + $0x54] sm:$0xf]
        %v3767 = vld [vmem:[#allocation14 + $0x58] sm:$0xf]
        %v3768 = vld [vmem:[#allocation14 + $0x5c] sm:$0xf]
        %v3769 = vld [vmem:[#allocation14 + $0x60] sm:$0xf]
        %v3770 = vld [vmem:[#allocation14 + $0x64] sm:$0xf]
        %v3771 = vld [vmem:[#allocation14 + $0x68] sm:$0xf]
        %v3772 = vld [vmem:[#allocation14 + $0x6c] sm:$0xf]
        %v3773 = vld [vmem:[#allocation14 + $0x70] sm:$0xf]
        %v3774 = vld [vmem:[#allocation14 + $0x74] sm:$0xf]
        %v3775 = vld [vmem:[#allocation14 + $0x78] sm:$0xf]
        %v3776 = vld [vmem:[#allocation14 + $0x7c] sm:$0xf]
        %v3777 = vld [vmem:[%s12] sm:$0x1]
        %v3779 = vperm.slane %v3777, 0
        %v3813 = vunpack.c.l.b16 %v3745
        %v3814 = vunpack.c.l.b16 %v3746
        %v3815 = vunpack.c.l.b16 %v3747
        %v3816 = vunpack.c.l.b16 %v3748
        %v3817 = vunpack.c.l.b16 %v3749
        %v3818 = vunpack.c.l.b16 %v3750
        %v3819 = vunpack.c.l.b16 %v3751
        %v3820 = vunpack.c.l.b16 %v3752
        %v3821 = vunpack.c.l.b16 %v3753
        %v3822 = vunpack.c.l.b16 %v3754
        %v3823 = vunpack.c.l.b16 %v3755
        %v3824 = vunpack.c.l.b16 %v3756
        %v3825 = vunpack.c.l.b16 %v3757
        %v3826 = vunpack.c.l.b16 %v3758
        %v3827 = vunpack.c.l.b16 %v3759
        %v3828 = vunpack.c.l.b16 %v3760
        %v3829 = vunpack.c.l.b16 %v3761
        %v3830 = vunpack.c.l.b16 %v3762
        %v3831 = vunpack.c.l.b16 %v3763
        %v3832 = vunpack.c.l.b16 %v3764
        %v3833 = vunpack.c.l.b16 %v3765
        %v3834 = vunpack.c.l.b16 %v3766
        %v3835 = vunpack.c.l.b16 %v3767
        %v3836 = vunpack.c.l.b16 %v3768
        %v3837 = vunpack.c.l.b16 %v3769
        %v3838 = vunpack.c.l.b16 %v3770
        %v3839 = vunpack.c.l.b16 %v3771
        %v3840 = vunpack.c.l.b16 %v3772
        %v3841 = vunpack.c.l.b16 %v3773
        %v3842 = vunpack.c.l.b16 %v3774
        %v3843 = vunpack.c.l.b16 %v3775
        %v3844 = vunpack.c.l.b16 %v3776
        %v3845 = vpack.c.b16 %v3814, %v3813
        %v3846 = vpack.c.b16 %v3816, %v3815
        %v3847 = vpack.c.b16 %v3818, %v3817
        %v3848 = vpack.c.b16 %v3820, %v3819
        %v3849 = vpack.c.b16 %v3822, %v3821
        %v3850 = vpack.c.b16 %v3824, %v3823
        %v3851 = vpack.c.b16 %v3826, %v3825
        %v3852 = vpack.c.b16 %v3828, %v3827
        %v3853 = vpack.c.b16 %v3830, %v3829
        %v3854 = vpack.c.b16 %v3832, %v3831
        %v3855 = vpack.c.b16 %v3834, %v3833
        %v3856 = vpack.c.b16 %v3836, %v3835
        %v3857 = vpack.c.b16 %v3838, %v3837
        %v3858 = vpack.c.b16 %v3840, %v3839
        %v3859 = vpack.c.b16 %v3842, %v3841
        %v3860 = vpack.c.b16 %v3844, %v3843
        %3877 = vmatpush.bf16.msra.mxu0 %v3852
        %3878 = vmatpush.bf16.msra.mxu0 %v3851
        %3879 = vmatpush.bf16.msra.mxu0 %v3850
        %3880 = vmatpush.bf16.msra.mxu0 %v3849
        %3881 = vmatpush.bf16.msra.mxu0 %v3848
        %3882 = vmatpush.bf16.msra.mxu0 %v3847
        %3883 = vmatpush.bf16.msra.mxu0 %v3846
        %3884 = vmatpush.bf16.msra.mxu0 %v3845
        %3885 = vmatmul.bf16.gmra.mxu0 %v3713
        %v3886 = vpop.f32.mrf.mxu0
        %v3887 = vadd.f32 %v3779, %v3886
        %v3888 = vpop.f32.mrf.mxu0
        %v3889 = vadd.f32 %v3779, %v3888
        %3890 = vmatmul.bf16.gmra.mxu0 %v3715
        %v3891 = vpop.f32.mrf.mxu0
        %v3892 = vadd.f32 %v3779, %v3891
        %v3893 = vpop.f32.mrf.mxu0
        %v3894 = vadd.f32 %v3779, %v3893
        %3895 = vmatmul.bf16.gmra.mxu0 %v3717
        %v3896 = vpop.f32.mrf.mxu0
        %v3897 = vadd.f32 %v3779, %v3896
        %v3898 = vpop.f32.mrf.mxu0
        %v3899 = vadd.f32 %v3779, %v3898
        %3900 = vmatmul.bf16.gmra.mxu0 %v3719
        %v3901 = vpop.f32.mrf.mxu0
        %v3902 = vadd.f32 %v3779, %v3901
        %v3903 = vpop.f32.mrf.mxu0
        %v3904 = vadd.f32 %v3779, %v3903
        %3905 = vmatmul.bf16.gmra.mxu0 %v3721
        %v3906 = vpop.f32.mrf.mxu0
        %v3907 = vadd.f32 %v3779, %v3906
        %v3908 = vpop.f32.mrf.mxu0
        %v3909 = vadd.f32 %v3779, %v3908
        %3910 = vmatmul.bf16.gmra.mxu0 %v3723
        %v3911 = vpop.f32.mrf.mxu0
        %v3912 = vadd.f32 %v3779, %v3911
        %v3913 = vpop.f32.mrf.mxu0
        %v3914 = vadd.f32 %v3779, %v3913
        %3915 = vmatmul.bf16.gmra.mxu0 %v3725
        %v3916 = vpop.f32.mrf.mxu0
        %v3917 = vadd.f32 %v3779, %v3916
        %v3918 = vpop.f32.mrf.mxu0
        %v3919 = vadd.f32 %v3779, %v3918
        %3920 = vmatmul.bf16.gmra.mxu0 %v3727
        %v3921 = vpop.f32.mrf.mxu0
        %v3922 = vadd.f32 %v3779, %v3921
        %v3923 = vpop.f32.mrf.mxu0
        %v3924 = vadd.f32 %v3779, %v3923
        %3925 = vmatmul.bf16.gmra.mxu0 %v3729
        %v3926 = vpop.f32.mrf.mxu0
        %v3927 = vadd.f32 %v3779, %v3926
        %v3928 = vpop.f32.mrf.mxu0
        %v3929 = vadd.f32 %v3779, %v3928
        %3930 = vmatmul.bf16.gmra.mxu0 %v3731
        %v3931 = vpop.f32.mrf.mxu0
        %v3932 = vadd.f32 %v3779, %v3931
        %v3933 = vpop.f32.mrf.mxu0
        %v3934 = vadd.f32 %v3779, %v3933
        %3935 = vmatmul.bf16.gmra.mxu0 %v3733
        %v3936 = vpop.f32.mrf.mxu0
        %v3937 = vadd.f32 %v3779, %v3936
        %v3938 = vpop.f32.mrf.mxu0
        %v3939 = vadd.f32 %v3779, %v3938
        %3940 = vmatmul.bf16.gmra.mxu0 %v3735
        %v3941 = vpop.f32.mrf.mxu0
        %v3942 = vadd.f32 %v3779, %v3941
        %v3943 = vpop.f32.mrf.mxu0
        %v3944 = vadd.f32 %v3779, %v3943
        %3945 = vmatmul.bf16.gmra.mxu0 %v3737
        %v3946 = vpop.f32.mrf.mxu0
        %v3947 = vadd.f32 %v3779, %v3946
        %v3948 = vpop.f32.mrf.mxu0
        %v3949 = vadd.f32 %v3779, %v3948
        %3950 = vmatmul.bf16.gmra.mxu0 %v3739
        %v3951 = vpop.f32.mrf.mxu0
        %v3952 = vadd.f32 %v3779, %v3951
        %v3953 = vpop.f32.mrf.mxu0
        %v3954 = vadd.f32 %v3779, %v3953
        %3955 = vmatmul.bf16.gmra.mxu0 %v3741
        %v3956 = vpop.f32.mrf.mxu0
        %v3957 = vadd.f32 %v3779, %v3956
        %v3958 = vpop.f32.mrf.mxu0
        %v3959 = vadd.f32 %v3779, %v3958
        %3960 = vmatmul.bf16.gmra.mxu0 %v3743
        %v3961 = vpop.f32.mrf.mxu0
        %v3962 = vadd.f32 %v3779, %v3961
        %v3963 = vpop.f32.mrf.mxu0
        %v3964 = vadd.f32 %v3779, %v3963
        %3965 = vdwg.mxu0
        %3966 = vmatpush.bf16.msra.mxu0 %v3860
        %3967 = vmatpush.bf16.msra.mxu0 %v3859
        %3968 = vmatpush.bf16.msra.mxu0 %v3858
        %3969 = vmatpush.bf16.msra.mxu0 %v3857
        %3970 = vmatpush.bf16.msra.mxu0 %v3856
        %3971 = vmatpush.bf16.msra.mxu0 %v3855
        %3972 = vmatpush.bf16.msra.mxu0 %v3854
        %3973 = vmatpush.bf16.msra.mxu0 %v3853
        %3974 = vmatmul.bf16.gmra.mxu0 %v3714
        %v3975 = vpop.f32.mrf.mxu0
        %v3976 = vadd.f32 %v3887, %v3975
        %v3977 = vpop.f32.mrf.mxu0
        %v3978 = vadd.f32 %v3889, %v3977
        %3979 = vmatmul.bf16.gmra.mxu0 %v3716
        %v3980 = vpop.f32.mrf.mxu0
        %v3981 = vadd.f32 %v3892, %v3980
        %v3982 = vpop.f32.mrf.mxu0
        %v3983 = vadd.f32 %v3894, %v3982
        %3984 = vmatmul.bf16.gmra.mxu0 %v3718
        %v3985 = vpop.f32.mrf.mxu0
        %v3986 = vadd.f32 %v3897, %v3985
        %v3987 = vpop.f32.mrf.mxu0
        %v3988 = vadd.f32 %v3899, %v3987
        %3989 = vmatmul.bf16.gmra.mxu0 %v3720
        %v3990 = vpop.f32.mrf.mxu0
        %v3991 = vadd.f32 %v3902, %v3990
        %v3992 = vpop.f32.mrf.mxu0
        %v3993 = vadd.f32 %v3904, %v3992
        %3994 = vmatmul.bf16.gmra.mxu0 %v3722
        %v3995 = vpop.f32.mrf.mxu0
        %v3996 = vadd.f32 %v3907, %v3995
        %v3997 = vpop.f32.mrf.mxu0
        %v3998 = vadd.f32 %v3909, %v3997
        %3999 = vmatmul.bf16.gmra.mxu0 %v3724
        %v4000 = vpop.f32.mrf.mxu0
        %v4001 = vadd.f32 %v3912, %v4000
        %v4002 = vpop.f32.mrf.mxu0
        %v4003 = vadd.f32 %v3914, %v4002
        %4004 = vmatmul.bf16.gmra.mxu0 %v3726
        %v4005 = vpop.f32.mrf.mxu0
        %v4006 = vadd.f32 %v3917, %v4005
        %v4007 = vpop.f32.mrf.mxu0
        %v4008 = vadd.f32 %v3919, %v4007
        %4009 = vmatmul.bf16.gmra.mxu0 %v3728
        %v4010 = vpop.f32.mrf.mxu0
        %v4011 = vadd.f32 %v3922, %v4010
        %v4012 = vpop.f32.mrf.mxu0
        %v4013 = vadd.f32 %v3924, %v4012
        %4014 = vmatmul.bf16.gmra.mxu0 %v3730
        %v4015 = vpop.f32.mrf.mxu0
        %v4016 = vadd.f32 %v3927, %v4015
        %v4017 = vpop.f32.mrf.mxu0
        %v4018 = vadd.f32 %v3929, %v4017
        %4019 = vmatmul.bf16.gmra.mxu0 %v3732
        %v4020 = vpop.f32.mrf.mxu0
        %v4021 = vadd.f32 %v3932, %v4020
        %v4022 = vpop.f32.mrf.mxu0
        %v4023 = vadd.f32 %v3934, %v4022
        %4024 = vmatmul.bf16.gmra.mxu0 %v3734
        %v4025 = vpop.f32.mrf.mxu0
        %v4026 = vadd.f32 %v3937, %v4025
        %v4027 = vpop.f32.mrf.mxu0
        %v4028 = vadd.f32 %v3939, %v4027
        %4029 = vmatmul.bf16.gmra.mxu0 %v3736
        %v4030 = vpop.f32.mrf.mxu0
        %v4031 = vadd.f32 %v3942, %v4030
        %v4032 = vpop.f32.mrf.mxu0
        %v4033 = vadd.f32 %v3944, %v4032
        %4034 = vmatmul.bf16.gmra.mxu0 %v3738
        %v4035 = vpop.f32.mrf.mxu0
        %v4036 = vadd.f32 %v3947, %v4035
        %v4037 = vpop.f32.mrf.mxu0
        %v4038 = vadd.f32 %v3949, %v4037
        %4039 = vmatmul.bf16.gmra.mxu0 %v3740
        %v4040 = vpop.f32.mrf.mxu0
        %v4041 = vadd.f32 %v3952, %v4040
        %v4042 = vpop.f32.mrf.mxu0
        %v4043 = vadd.f32 %v3954, %v4042
        %4044 = vmatmul.bf16.gmra.mxu0 %v3742
        %v4045 = vpop.f32.mrf.mxu0
        %v4046 = vadd.f32 %v3957, %v4045
        %v4047 = vpop.f32.mrf.mxu0
        %v4048 = vadd.f32 %v3959, %v4047
        %4049 = vmatmul.bf16.gmra.mxu0 %v3744
        %v4050 = vpop.f32.mrf.mxu0
        %v4051 = vadd.f32 %v3962, %v4050
        %v4052 = vpop.f32.mrf.mxu0
        %v4053 = vadd.f32 %v3964, %v4052
        %4054 = vdwg.mxu0
        %4055 = vst [vmem:[%s574] sm:$0xff] %v3976
        %4056 = vst [vmem:[%s574 + $0x8] sm:$0xff] %v3978
        %4057 = vst [vmem:[%s574 + $0x10] sm:$0xff] %v3981
        %4058 = vst [vmem:[%s574 + $0x18] sm:$0xff] %v3983
        %4059 = vst [vmem:[%s574 + $0x20] sm:$0xff] %v3986
        %4060 = vst [vmem:[%s574 + $0x28] sm:$0xff] %v3988
        %4061 = vst [vmem:[%s574 + $0x30] sm:$0xff] %v3991
        %4062 = vst [vmem:[%s574 + $0x38] sm:$0xff] %v3993
        %4063 = vst [vmem:[%s574 + $0x40] sm:$0xff] %v3996
        %4064 = vst [vmem:[%s574 + $0x48] sm:$0xff] %v3998
        %4065 = vst [vmem:[%s574 + $0x50] sm:$0xff] %v4001
        %4066 = vst [vmem:[%s574 + $0x58] sm:$0xff] %v4003
        %4067 = vst [vmem:[%s574 + $0x60] sm:$0xff] %v4006
        %4068 = vst [vmem:[%s574 + $0x68] sm:$0xff] %v4008
        %4069 = vst [vmem:[%s574 + $0x70] sm:$0xff] %v4011
        %4070 = vst [vmem:[%s574 + $0x78] sm:$0xff] %v4013
        %4071 = vst [vmem:[%s574 + $0x80] sm:$0xff] %v4016
        %4072 = vst [vmem:[%s574 + $0x88] sm:$0xff] %v4018
        %4073 = vst [vmem:[%s574 + $0x90] sm:$0xff] %v4021
        %4074 = vst [vmem:[%s574 + $0x98] sm:$0xff] %v4023
        %4075 = vst [vmem:[%s574 + $0xa0] sm:$0xff] %v4026
        %4076 = vst [vmem:[%s574 + $0xa8] sm:$0xff] %v4028
        %4077 = vst [vmem:[%s574 + $0xb0] sm:$0xff] %v4031
        %4078 = vst [vmem:[%s574 + $0xb8] sm:$0xff] %v4033
        %4079 = vst [vmem:[%s574 + $0xc0] sm:$0xff] %v4036
        %4080 = vst [vmem:[%s574 + $0xc8] sm:$0xff] %v4038
        %4081 = vst [vmem:[%s574 + $0xd0] sm:$0xff] %v4041
        %4082 = vst [vmem:[%s574 + $0xd8] sm:$0xff] %v4043
        %4083 = vst [vmem:[%s574 + $0xe0] sm:$0xff] %v4046
        %4084 = vst [vmem:[%s574 + $0xe8] sm:$0xff] %v4048
        %4085 = vst [vmem:[%s574 + $0xf0] sm:$0xff] %v4051
        %4086 = vst [vmem:[%s574 + $0xf8] sm:$0xff] %v4053
        %s4087 = sand.u32 %s320, 1
        %s4088 = scalar_lea.sflag [#allocation4], %s4087
        %s4089 = sand.u32 %s320, 1
        %s4090 = smul.addr %s4089, 256
        %s4091 = scalar_lea.vmem [#allocation16], %s4090
        // Predicated region
        $region105: #{tpu_custom_call.1} parent=71 // pred_check
          %p4092 = pneg %p330
        $region106: #{tpu_custom_call.1} parent=71 // pred_check_branch
          %4094 = sbr.rel (%p4092) target = $region108
        $region107: #{tpu_custom_call.1} parent=71 // pred_region
          %s4095 = smul.u32 32, %s34
          %4097 = vsyncadd %s4088, 0
          %s4098 = smul.addr %s4095, 8
          %s4099 = scalar_lea.hbm %s13, %s4098
          %s4100 = sshll.u32 %s4091, 4
          %s4101 = int_to_ptr.vmem [resolvable:$true] %s4100
          %s4102 = sshll.u32 %s4099, 4
          %s4103 = int_to_ptr.hbm [resolvable:$true] %s4102
          %4108 = dma.vmem_to_hbm [thread:$0]  %s4101, 4096, %s4103, %s4088, 128, 128, 8
        $region108: #{tpu_custom_call.1} parent=71 // pred_fallthru
          _
      $region72: #{tpu_custom_call.1} parent=5 // pred_fallthru
        _
      %p4109 = scmp.le.s32.totalorder 2, %s29
      // Predicated region
      $region109: #{tpu_custom_call.1} parent=5 // pred_check
        %p4110 = pneg %p4109
      $region110: #{tpu_custom_call.1} parent=5 // pred_check_branch
        %4112 = sbr.rel (%p4110) target = $region112
      $region111: #{tpu_custom_call.1} parent=5 // pred_region
        %s4113 = ssub.s32 %s29, 2
        // Predicated region
        $region113: #{tpu_custom_call.1} parent=111 // pred_check
          %p4114 = pneg %p336
        $region114: #{tpu_custom_call.1} parent=111 // pred_check_branch
          %4116 = sbr.rel (%p4114) target = $region116
        $region115: #{tpu_custom_call.1} parent=111 // pred_region
          %s4117 = sand.u32 %s321, 1
          %s4118 = scalar_lea.sflag [#allocation4], %s4117
          %s4119 = sand.u32 %s321, 1
          %s4120 = smul.addr %s4119, 256
          %s4121 = scalar_lea.vmem [#allocation16], %s4120
          %4123 = dma.done %s4118, 4096
        $region116: #{tpu_custom_call.1} parent=111 // pred_fallthru
          _
      $region112: #{tpu_custom_call.1} parent=5 // pred_fallthru
        _
    $region6: #{tpu_custom_call.1} parent=1 // loop_footer
      %s33 = sadd.s32 1, %s29
    $region7: #{tpu_custom_call.1} parent=1 // loop_footer_branch
      %28 = sbr.rel target = $region3
    $region8: #{tpu_custom_call.1} parent=1 // loop_exit
      _
    %4124 = vsyncpa [#allocation3], 1
    %s4125 = scalar_lea.sflag [#allocation3], 1
    %4126 = vsyncpa %s4125, 1
    %4127 = vsyncpa [#allocation6], 1
    %4128 = vsyncpa [#allocation9], 1
    %4129 = vsyncpa [#allocation12], 1
    %4130 = vsyncpa [#allocation15], 1
    %4131 = vsyncpa [#allocation4], 1
    %s4132 = scalar_lea.sflag [#allocation4], 1
    %4133 = vsyncpa %s4132, 1

</llo_original>
